<compile_context>
chip_gen: v5e
topology: v5e:2x2
jax: 0.10.0
libtpu: 0.0.40
codegen_flags: <defaults>
</compile_context>

<pallas_src>
import jax
import jax.numpy as jnp
from jax.experimental import pallas as pl
from jax.experimental.pallas import tpu as pltpu

BATCH = 5          # BatchSize in the reference script
SEQ = 8            # sequence length (small, chosen for the demo)
EMBED = 64         # embeddingDimentions
HIDDEN = 128       # hiddenDimentions
LAYERS = 4         # numberOfLayers
OUT = 2            # outputSize
VOCAB = 50         # small synthetic vocab

B_PAD = 8          # pad batch (sublane dim) 5 -> 8: full (8,128) f32 tiles
E_PAD = 128        # lane-pad layer-0 input 64 -> 128 (zero columns)
HEAD_PAD = 128     # lane-dense head output; real logits live in columns [:OUT]


# ----------------------------- fused model kernel -----------------------------
def _fused_kernel(x_ref, h0_ref, c0_ref, wih_ref, whh_ref, b_ref,
                  wh_ref, bh_ref, out_ref, hT_ref, cT_ref, act_sc, gx_sc):
    """Embedded input -> 4 stacked LSTM layers -> Linear -> Linear -> sigmoid.

    x_ref   : (SEQ*B_PAD, E_PAD)       time-major, lane/sublane dense
    h0/c0   : (LAYERS, B_PAD, HIDDEN)
    wih/whh : (LAYERS, HIDDEN, 4*HIDDEN)   transposed, layer-0 w_ih zero-row-padded
    b       : (LAYERS, 1, 4*HIDDEN)        b_ih + b_hh folded
    wh/bh   : (2, HIDDEN, HEAD_PAD) / (2, 1, HEAD_PAD)   head (layer1, layer2-padded)
    """
    B, H, T = B_PAD, HIDDEN, SEQ

    h = None
    for l in range(LAYERS):
        # Input projection hoisted out of the recurrence: one (T*B, 4H) matmul
        # per layer, bias (b_ih + b_hh) folded in exactly once.
        x_in = x_ref[...] if l == 0 else act_sc[...]
        gx_sc[...] = (jnp.dot(x_in, wih_ref[l],
                              preferred_element_type=jnp.float32)
                      + b_ref[l])

        whh = whh_ref[l]                                 # hoisted weight load
        h = h0_ref[l]
        c = c0_ref[l]
        for t in range(T):                               # static unroll (serial dep)
            gates = (jnp.dot(h, whh, preferred_element_type=jnp.float32)
                     + gx_sc[t * B:(t + 1) * B, :])      # (B, 4H)
            i = jax.nn.sigmoid(gates[:, 0 * H:1 * H])    # PyTorch gate order i,f,g,o
            f = jax.nn.sigmoid(gates[:, 1 * H:2 * H])
            g = jnp.tanh(gates[:, 2 * H:3 * H])
            o = jax.nn.sigmoid(gates[:, 3 * H:4 * H])
            c = f * c + i * g
            h = o * jnp.tanh(c)
            if l < LAYERS - 1:                           # last layer's seq output unused
                act_sc[t * B:(t + 1) * B, :] = h
        hT_ref[l] = h
        cT_ref[l] = c

    # MLP head only on the last timestep of the last layer: the reference's
    # .view(BatchSize, -1)[:, -1] keeps only sigmoid(logit[:, T-1, OUT-1]).
    # TODO(synk): nn.Dropout(0.3) treated as identity (eval-mode semantics).
    z = jnp.dot(h, wh_ref[0], preferred_element_type=jnp.float32) + bh_ref[0]
    y = jnp.dot(z, wh_ref[1], preferred_element_type=jnp.float32) + bh_ref[1]
    out_ref[...] = jax.nn.sigmoid(y)                     # (B_PAD, 128), lane-dense


def _fused_call(*arrays):
    vmem = pl.BlockSpec(memory_space=pltpu.MemorySpace.VMEM)
    return pl.pallas_call(
        _fused_kernel,
        out_shape=(jax.ShapeDtypeStruct((B_PAD, HEAD_PAD), jnp.float32),
                   jax.ShapeDtypeStruct((LAYERS, B_PAD, HIDDEN), jnp.float32),
                   jax.ShapeDtypeStruct((LAYERS, B_PAD, HIDDEN), jnp.float32)),
        in_specs=[vmem] * 8,
        out_specs=(vmem, vmem, vmem),
        scratch_shapes=[pltpu.VMEM((SEQ * B_PAD, HIDDEN), jnp.float32),       # act
                        pltpu.VMEM((SEQ * B_PAD, 4 * HIDDEN), jnp.float32)],  # gates_x
    )(*arrays)


# ------------------------------ parameter setup -------------------------------
def init_params(key):
    params = {}
    k_emb, key = jax.random.split(key)
    params["embedding"] = jax.random.normal(k_emb, (VOCAB, EMBED), jnp.float32)

    bound = 1.0 / jnp.sqrt(HIDDEN)
    w_ih_list, w_hh_list, b_list = [], [], []
    for l in range(LAYERS):
        d_in = EMBED if l == 0 else HIDDEN
        k1, k2, k3, k4, key = jax.random.split(key, 5)
        w_ih = jax.random.uniform(k1, (4 * HIDDEN, d_in), jnp.float32, -bound, bound)
        w_hh = jax.random.uniform(k2, (4 * HIDDEN, HIDDEN), jnp.float32, -bound, bound)
        b_ih = jax.random.uniform(k3, (4 * HIDDEN,), jnp.float32, -bound, bound)
        b_hh = jax.random.uniform(k4, (4 * HIDDEN,), jnp.float32, -bound, bound)
        w_ih_t = w_ih.T                                     # (d_in, 4H)
        if d_in < HIDDEN:                                   # layer 0: zero-row pad 64->128
            w_ih_t = jnp.pad(w_ih_t, ((0, HIDDEN - d_in), (0, 0)))
        w_ih_list.append(w_ih_t)                            # (128, 4H)
        w_hh_list.append(w_hh.T)                            # (128, 4H)
        b_list.append((b_ih + b_hh).reshape(1, 4 * HIDDEN))  # (1, 4H)
    params["w_ih_all"] = jnp.stack(w_ih_list)               # (LAYERS, 128, 512)
    params["w_hh_all"] = jnp.stack(w_hh_list)               # (LAYERS, 128, 512)
    params["b_all"] = jnp.stack(b_list)                     # (LAYERS, 1, 512)

    k1, k2, k3, k4, key = jax.random.split(key, 5)
    b1l = 1.0 / jnp.sqrt(HIDDEN)
    w1_t = jax.random.uniform(k1, (HIDDEN, 128), jnp.float32, -b1l, b1l)
    b1 = jax.random.uniform(k2, (1, 128), jnp.float32, -b1l, b1l)
    b2l = 1.0 / jnp.sqrt(128.0)
    w2_t = jax.random.uniform(k3, (128, OUT), jnp.float32, -b2l, b2l)
    b2 = jax.random.uniform(k4, (1, OUT), jnp.float32, -b2l, b2l)
    # lane-pad the final layer so the kernel's output store is lane-dense
    w2p_t = jnp.pad(w2_t, ((0, 0), (0, HEAD_PAD - OUT)))
    b2p = jnp.pad(b2, ((0, 0), (0, HEAD_PAD - OUT)))
    params["w_head"] = jnp.stack([w1_t, w2p_t])              # (2, 128, 128)
    params["b_head"] = jnp.stack([b1, b2p])                  # (2, 1, 128)
    return params


# --------------------------------- forward -----------------------------------
def init_hidden(batch_size):
    h0 = jnp.zeros((LAYERS, batch_size, HIDDEN), jnp.float32)
    c0 = jnp.zeros((LAYERS, batch_size, HIDDEN), jnp.float32)
    return h0, c0


@jax.jit
def sentiment_forward(params, token_ids, hidden):
    h0, c0 = hidden
    # Embedding lookup (tiny gather) stays in plain JAX glue.
    x = jnp.take(params["embedding"], token_ids, axis=0)        # (B, T, E)

    # time-major, batch padded to 8 sublanes, embed lane-padded 64 -> 128
    x_tm = jnp.transpose(x, (1, 0, 2))                          # (T, B, E)
    x_tm = jnp.pad(x_tm, ((0, 0), (0, B_PAD - BATCH), (0, E_PAD - EMBED)))
    x_flat = x_tm.reshape(SEQ * B_PAD, E_PAD)                   # (T*8, 128)
    h0p = jnp.pad(h0, ((0, 0), (0, B_PAD - BATCH), (0, 0)))
    c0p = jnp.pad(c0, ((0, 0), (0, B_PAD - BATCH), (0, 0)))

    out_pad, hT, cT = _fused_call(
        x_flat, h0p, c0p,
        params["w_ih_all"], params["w_hh_all"], params["b_all"],
        params["w_head"], params["b_head"])

    # Equivalent to reference: sigmoid(head(lstm_out)).view(B, -1)[:, -1]
    out = out_pad[:BATCH, OUT - 1]
    new_hidden = (hT[:, :BATCH, :], cT[:, :BATCH, :])
    return out, new_hidden


if __name__ == "__main__":
    key = jax.random.PRNGKey(0)
    k_param, k_tok = jax.random.split(key)
    params = init_params(k_param)
    token_ids = jax.random.randint(k_tok, (BATCH, SEQ), 0, VOCAB, jnp.int32)
    hidden = init_hidden(BATCH)

    out, new_hidden = sentiment_forward(params, token_ids, hidden)
    jax.block_until_ready(out)
    jax.block_until_ready(new_hidden)

    assert out.shape == (BATCH,)
    assert new_hidden[0].shape == (LAYERS, BATCH, HIDDEN)
    assert new_hidden[1].shape == (LAYERS, BATCH, HIDDEN)
    assert bool(jnp.all(jnp.isfinite(out)))
    assert bool(jnp.all(jnp.isfinite(new_hidden[0])))
    assert bool(jnp.all(jnp.isfinite(new_hidden[1])))
    print("KERNEL_OK")
</pallas_src>

<mosaic_0001>
module attributes {stable_mosaic.version = 11 : i64} {
  func.func @_fused_kernel(%arg0: memref<64x128xf32, #tpu.memory_space<vmem>>, %arg1: memref<4x8x128xf32, #tpu.memory_space<vmem>>, %arg2: memref<4x8x128xf32, #tpu.memory_space<vmem>>, %arg3: memref<4x128x512xf32, #tpu.memory_space<vmem>>, %arg4: memref<4x128x512xf32, #tpu.memory_space<vmem>>, %arg5: memref<4x1x512xf32, #tpu.memory_space<vmem>>, %arg6: memref<2x128x128xf32, #tpu.memory_space<vmem>>, %arg7: memref<2x1x128xf32, #tpu.memory_space<vmem>>, %arg8: memref<8x128xf32, #tpu.memory_space<vmem>>, %arg9: memref<4x8x128xf32, #tpu.memory_space<vmem>>, %arg10: memref<4x8x128xf32, #tpu.memory_space<vmem>>, %arg11: memref<64x128xf32, #tpu.memory_space<vmem>>, %arg12: memref<64x512xf32, #tpu.memory_space<vmem>>) attributes {dimension_semantics = [], scalar_prefetch = 0 : i64, scratch_operands = 2 : i64, tpu.core_type = #tpu.core_type<tc>} {
    %c0 = arith.constant 0 : index
    %c0_0 = arith.constant 0 : index
    %0 = vector.load %arg0[%c0, %c0_0] : memref<64x128xf32, #tpu.memory_space<vmem>>, vector<64x128xf32>
    %c0_1 = arith.constant 0 : index
    %c0_2 = arith.constant 0 : index
    %c0_3 = arith.constant 0 : index
    %1 = vector.load %arg3[%c0_1, %c0_2, %c0_3] : memref<4x128x512xf32, #tpu.memory_space<vmem>>, vector<1x128x512xf32>
    %2 = vector.shape_cast %1 : vector<1x128x512xf32> to vector<128x512xf32>
    %cst = arith.constant dense<0.000000e+00> : vector<64x512xf32>
    %3 = tpu.matmul %0, %2, %cst {dimension_numbers = #tpu.dot_dimension_numbers<[1], [0], [0], [1], [0, 0, 1, 1], [], []>} : vector<64x128xf32>, vector<128x512xf32>, vector<64x512xf32> -> vector<64x512xf32>
    %c0_4 = arith.constant 0 : index
    %c0_5 = arith.constant 0 : index
    %c0_6 = arith.constant 0 : index
    %4 = vector.load %arg5[%c0_4, %c0_5, %c0_6] : memref<4x1x512xf32, #tpu.memory_space<vmem>>, vector<1x1x512xf32>
    %5 = vector.shape_cast %4 : vector<1x1x512xf32> to vector<1x512xf32>
    %6 = vector.broadcast %5 : vector<1x512xf32> to vector<64x512xf32>
    %7 = arith.addf %3, %6 : vector<64x512xf32>
    %c0_7 = arith.constant 0 : index
    %c0_8 = arith.constant 0 : index
    %8 = vector.load %arg12[%c0_7, %c0_8] : memref<64x512xf32, #tpu.memory_space<vmem>>, vector<64x512xf32>
    tpu.vector_store %arg12[%c0_7, %c0_8], %7 {strides = array<i32>} : memref<64x512xf32, #tpu.memory_space<vmem>>, vector<64x512xf32>,
    %c0_9 = arith.constant 0 : index
    %c0_10 = arith.constant 0 : index
    %c0_11 = arith.constant 0 : index
    %9 = vector.load %arg4[%c0_9, %c0_10, %c0_11] : memref<4x128x512xf32, #tpu.memory_space<vmem>>, vector<1x128x512xf32>
    %10 = vector.shape_cast %9 : vector<1x128x512xf32> to vector<128x512xf32>
    %c0_12 = arith.constant 0 : index
    %c0_13 = arith.constant 0 : index
    %c0_14 = arith.constant 0 : index
    %11 = vector.load %arg1[%c0_12, %c0_13, %c0_14] : memref<4x8x128xf32, #tpu.memory_space<vmem>>, vector<1x8x128xf32>
    %12 = vector.shape_cast %11 : vector<1x8x128xf32> to vector<8x128xf32>
    %c0_15 = arith.constant 0 : index
    %c0_16 = arith.constant 0 : index
    %c0_17 = arith.constant 0 : index
    %13 = vector.load %arg2[%c0_15, %c0_16, %c0_17] : memref<4x8x128xf32, #tpu.memory_space<vmem>>, vector<1x8x128xf32>
    %14 = vector.shape_cast %13 : vector<1x8x128xf32> to vector<8x128xf32>
    %cst_18 = arith.constant dense<0.000000e+00> : vector<8x512xf32>
    %15 = tpu.matmul %12, %10, %cst_18 {dimension_numbers = #tpu.dot_dimension_numbers<[1], [0], [0], [1], [0, 0, 1, 1], [], []>} : vector<8x128xf32>, vector<128x512xf32>, vector<8x512xf32> -> vector<8x512xf32>
    %c0_19 = arith.constant 0 : index
    %c0_20 = arith.constant 0 : index
    %16 = vector.load %arg12[%c0_19, %c0_20] : memref<64x512xf32, #tpu.memory_space<vmem>>, vector<8x512xf32>
    %17 = arith.addf %15, %16 : vector<8x512xf32>
    %18 = vector.extract_strided_slice %17 {offsets = [0, 0], sizes = [8, 128], strides = [1, 1]} : vector<8x512xf32> to vector<8x128xf32>
    %19 = arith.negf %18 : vector<8x128xf32>
    %20 = math.exp %19 : vector<8x128xf32>
    %cst_21 = arith.constant 1.000000e+00 : f32
    %21 = vector.broadcast %cst_21 : f32 to vector<8x128xf32>
    %22 = arith.addf %21, %20 : vector<8x128xf32>
    %23 = arith.divf %21, %22 : vector<8x128xf32>
    %24 = vector.extract_strided_slice %17 {offsets = [0, 128], sizes = [8, 128], strides = [1, 1]} : vector<8x512xf32> to vector<8x128xf32>
    %25 = arith.negf %24 : vector<8x128xf32>
    %26 = math.exp %25 : vector<8x128xf32>
    %cst_22 = arith.constant 1.000000e+00 : f32
    %27 = vector.broadcast %cst_22 : f32 to vector<8x128xf32>
    %28 = arith.addf %27, %26 : vector<8x128xf32>
    %29 = arith.divf %27, %28 : vector<8x128xf32>
    %30 = vector.extract_strided_slice %17 {offsets = [0, 256], sizes = [8, 128], strides = [1, 1]} : vector<8x512xf32> to vector<8x128xf32>
    %31 = math.tanh %30 : vector<8x128xf32>
    %32 = vector.extract_strided_slice %17 {offsets = [0, 384], sizes = [8, 128], strides = [1, 1]} : vector<8x512xf32> to vector<8x128xf32>
    %33 = arith.negf %32 : vector<8x128xf32>
    %34 = math.exp %33 : vector<8x128xf32>
    %cst_23 = arith.constant 1.000000e+00 : f32
    %35 = vector.broadcast %cst_23 : f32 to vector<8x128xf32>
    %36 = arith.addf %35, %34 : vector<8x128xf32>
    %37 = arith.divf %35, %36 : vector<8x128xf32>
    %38 = arith.mulf %29, %14 : vector<8x128xf32>
    %39 = arith.mulf %23, %31 : vector<8x128xf32>
    %40 = arith.addf %38, %39 : vector<8x128xf32>
    %41 = math.tanh %40 : vector<8x128xf32>
    %42 = arith.mulf %37, %41 : vector<8x128xf32>
    %c0_24 = arith.constant 0 : index
    %c0_25 = arith.constant 0 : index
    %43 = vector.load %arg11[%c0_24, %c0_25] : memref<64x128xf32, #tpu.memory_space<vmem>>, vector<8x128xf32>
    tpu.vector_store %arg11[%c0_24, %c0_25], %42 {strides = array<i32>} : memref<64x128xf32, #tpu.memory_space<vmem>>, vector<8x128xf32>,
    %cst_26 = arith.constant dense<0.000000e+00> : vector<8x512xf32>
    %44 = tpu.matmul %42, %10, %cst_26 {dimension_numbers = #tpu.dot_dimension_numbers<[1], [0], [0], [1], [0, 0, 1, 1], [], []>} : vector<8x128xf32>, vector<128x512xf32>, vector<8x512xf32> -> vector<8x512xf32>
    %c8 = arith.constant 8 : index
    %c0_27 = arith.constant 0 : index
    %45 = vector.load %arg12[%c8, %c0_27] : memref<64x512xf32, #tpu.memory_space<vmem>>, vector<8x512xf32>
    %46 = arith.addf %44, %45 : vector<8x512xf32>
    %47 = vector.extract_strided_slice %46 {offsets = [0, 0], sizes = [8, 128], strides = [1, 1]} : vector<8x512xf32> to vector<8x128xf32>
    %48 = arith.negf %47 : vector<8x128xf32>
    %49 = math.exp %48 : vector<8x128xf32>
    %cst_28 = arith.constant 1.000000e+00 : f32
    %50 = vector.broadcast %cst_28 : f32 to vector<8x128xf32>
    %51 = arith.addf %50, %49 : vector<8x128xf32>
    %52 = arith.divf %50, %51 : vector<8x128xf32>
    %53 = vector.extract_strided_slice %46 {offsets = [0, 128], sizes = [8, 128], strides = [1, 1]} : vector<8x512xf32> to vector<8x128xf32>
    %54 = arith.negf %53 : vector<8x128xf32>
    %55 = math.exp %54 : vector<8x128xf32>
    %cst_29 = arith.constant 1.000000e+00 : f32
    %56 = vector.broadcast %cst_29 : f32 to vector<8x128xf32>
    %57 = arith.addf %56, %55 : vector<8x128xf32>
    %58 = arith.divf %56, %57 : vector<8x128xf32>
    %59 = vector.extract_strided_slice %46 {offsets = [0, 256], sizes = [8, 128], strides = [1, 1]} : vector<8x512xf32> to vector<8x128xf32>
    %60 = math.tanh %59 : vector<8x128xf32>
    %61 = vector.extract_strided_slice %46 {offsets = [0, 384], sizes = [8, 128], strides = [1, 1]} : vector<8x512xf32> to vector<8x128xf32>
    %62 = arith.negf %61 : vector<8x128xf32>
    %63 = math.exp %62 : vector<8x128xf32>
    %cst_30 = arith.constant 1.000000e+00 : f32
    %64 = vector.broadcast %cst_30 : f32 to vector<8x128xf32>
    %65 = arith.addf %64, %63 : vector<8x128xf32>
    %66 = arith.divf %64, %65 : vector<8x128xf32>
    %67 = arith.mulf %58, %40 : vector<8x128xf32>
    %68 = arith.mulf %52, %60 : vector<8x128xf32>
    %69 = arith.addf %67, %68 : vector<8x128xf32>
    %70 = math.tanh %69 : vector<8x128xf32>
    %71 = arith.mulf %66, %70 : vector<8x128xf32>
    %c8_31 = arith.constant 8 : index
    %c0_32 = arith.constant 0 : index
    %72 = vector.load %arg11[%c8_31, %c0_32] : memref<64x128xf32, #tpu.memory_space<vmem>>, vector<8x128xf32>
    tpu.vector_store %arg11[%c8_31, %c0_32], %71 {strides = array<i32>} : memref<64x128xf32, #tpu.memory_space<vmem>>, vector<8x128xf32>,
    %cst_33 = arith.constant dense<0.000000e+00> : vector<8x512xf32>
    %73 = tpu.matmul %71, %10, %cst_33 {dimension_numbers = #tpu.dot_dimension_numbers<[1], [0], [0], [1], [0, 0, 1, 1], [], []>} : vector<8x128xf32>, vector<128x512xf32>, vector<8x512xf32> -> vector<8x512xf32>
    %c16 = arith.constant 16 : index
    %c0_34 = arith.constant 0 : index
    %74 = vector.load %arg12[%c16, %c0_34] : memref<64x512xf32, #tpu.memory_space<vmem>>, vector<8x512xf32>
    %75 = arith.addf %73, %74 : vector<8x512xf32>
    %76 = vector.extract_strided_slice %75 {offsets = [0, 0], sizes = [8, 128], strides = [1, 1]} : vector<8x512xf32> to vector<8x128xf32>
    %77 = arith.negf %76 : vector<8x128xf32>
    %78 = math.exp %77 : vector<8x128xf32>
    %cst_35 = arith.constant 1.000000e+00 : f32
    %79 = vector.broadcast %cst_35 : f32 to vector<8x128xf32>
    %80 = arith.addf %79, %78 : vector<8x128xf32>
    %81 = arith.divf %79, %80 : vector<8x128xf32>
    %82 = vector.extract_strided_slice %75 {offsets = [0, 128], sizes = [8, 128], strides = [1, 1]} : vector<8x512xf32> to vector<8x128xf32>
    %83 = arith.negf %82 : vector<8x128xf32>
    %84 = math.exp %83 : vector<8x128xf32>
    %cst_36 = arith.constant 1.000000e+00 : f32
    %85 = vector.broadcast %cst_36 : f32 to vector<8x128xf32>
    %86 = arith.addf %85, %84 : vector<8x128xf32>
    %87 = arith.divf %85, %86 : vector<8x128xf32>
    %88 = vector.extract_strided_slice %75 {offsets = [0, 256], sizes = [8, 128], strides = [1, 1]} : vector<8x512xf32> to vector<8x128xf32>
    %89 = math.tanh %88 : vector<8x128xf32>
    %90 = vector.extract_strided_slice %75 {offsets = [0, 384], sizes = [8, 128], strides = [1, 1]} : vector<8x512xf32> to vector<8x128xf32>
    %91 = arith.negf %90 : vector<8x128xf32>
    %92 = math.exp %91 : vector<8x128xf32>
    %cst_37 = arith.constant 1.000000e+00 : f32
    %93 = vector.broadcast %cst_37 : f32 to vector<8x128xf32>
    %94 = arith.addf %93, %92 : vector<8x128xf32>
    %95 = arith.divf %93, %94 : vector<8x128xf32>
    %96 = arith.mulf %87, %69 : vector<8x128xf32>
    %97 = arith.mulf %81, %89 : vector<8x128xf32>
    %98 = arith.addf %96, %97 : vector<8x128xf32>
    %99 = math.tanh %98 : vector<8x128xf32>
    %100 = arith.mulf %95, %99 : vector<8x128xf32>
    %c16_38 = arith.constant 16 : index
    %c0_39 = arith.constant 0 : index
    %101 = vector.load %arg11[%c16_38, %c0_39] : memref<64x128xf32, #tpu.memory_space<vmem>>, vector<8x128xf32>
    tpu.vector_store %arg11[%c16_38, %c0_39], %100 {strides = array<i32>} : memref<64x128xf32, #tpu.memory_space<vmem>>, vector<8x128xf32>,
    %cst_40 = arith.constant dense<0.000000e+00> : vector<8x512xf32>
    %102 = tpu.matmul %100, %10, %cst_40 {dimension_numbers = #tpu.dot_dimension_numbers<[1], [0], [0], [1], [0, 0, 1, 1], [], []>} : vector<8x128xf32>, vector<128x512xf32>, vector<8x512xf32> -> vector<8x512xf32>
    %c24 = arith.constant 24 : index
    %c0_41 = arith.constant 0 : index
    %103 = vector.load %arg12[%c24, %c0_41] : memref<64x512xf32, #tpu.memory_space<vmem>>, vector<8x512xf32>
    %104 = arith.addf %102, %103 : vector<8x512xf32>
    %105 = vector.extract_strided_slice %104 {offsets = [0, 0], sizes = [8, 128], strides = [1, 1]} : vector<8x512xf32> to vector<8x128xf32>
    %106 = arith.negf %105 : vector<8x128xf32>
    %107 = math.exp %106 : vector<8x128xf32>
    %cst_42 = arith.constant 1.000000e+00 : f32
    %108 = vector.broadcast %cst_42 : f32 to vector<8x128xf32>
    %109 = arith.addf %108, %107 : vector<8x128xf32>
    %110 = arith.divf %108, %109 : vector<8x128xf32>
    %111 = vector.extract_strided_slice %104 {offsets = [0, 128], sizes = [8, 128], strides = [1, 1]} : vector<8x512xf32> to vector<8x128xf32>
    %112 = arith.negf %111 : vector<8x128xf32>
    %113 = math.exp %112 : vector<8x128xf32>
    %cst_43 = arith.constant 1.000000e+00 : f32
    %114 = vector.broadcast %cst_43 : f32 to vector<8x128xf32>
    %115 = arith.addf %114, %113 : vector<8x128xf32>
    %116 = arith.divf %114, %115 : vector<8x128xf32>
    %117 = vector.extract_strided_slice %104 {offsets = [0, 256], sizes = [8, 128], strides = [1, 1]} : vector<8x512xf32> to vector<8x128xf32>
    %118 = math.tanh %117 : vector<8x128xf32>
    %119 = vector.extract_strided_slice %104 {offsets = [0, 384], sizes = [8, 128], strides = [1, 1]} : vector<8x512xf32> to vector<8x128xf32>
    %120 = arith.negf %119 : vector<8x128xf32>
    %121 = math.exp %120 : vector<8x128xf32>
    %cst_44 = arith.constant 1.000000e+00 : f32
    %122 = vector.broadcast %cst_44 : f32 to vector<8x128xf32>
    %123 = arith.addf %122, %121 : vector<8x128xf32>
    %124 = arith.divf %122, %123 : vector<8x128xf32>
    %125 = arith.mulf %116, %98 : vector<8x128xf32>
    %126 = arith.mulf %110, %118 : vector<8x128xf32>
    %127 = arith.addf %125, %126 : vector<8x128xf32>
    %128 = math.tanh %127 : vector<8x128xf32>
    %129 = arith.mulf %124, %128 : vector<8x128xf32>
    %c24_45 = arith.constant 24 : index
    %c0_46 = arith.constant 0 : index
    %130 = vector.load %arg11[%c24_45, %c0_46] : memref<64x128xf32, #tpu.memory_space<vmem>>, vector<8x128xf32>
    tpu.vector_store %arg11[%c24_45, %c0_46], %129 {strides = array<i32>} : memref<64x128xf32, #tpu.memory_space<vmem>>, vector<8x128xf32>,
    %cst_47 = arith.constant dense<0.000000e+00> : vector<8x512xf32>
    %131 = tpu.matmul %129, %10, %cst_47 {dimension_numbers = #tpu.dot_dimension_numbers<[1], [0], [0], [1], [0, 0, 1, 1], [], []>} : vector<8x128xf32>, vector<128x512xf32>, vector<8x512xf32> -> vector<8x512xf32>
    %c32 = arith.constant 32 : index
    %c0_48 = arith.constant 0 : index
    %132 = vector.load %arg12[%c32, %c0_48] : memref<64x512xf32, #tpu.memory_space<vmem>>, vector<8x512xf32>
    %133 = arith.addf %131, %132 : vector<8x512xf32>
    %134 = vector.extract_strided_slice %133 {offsets = [0, 0], sizes = [8, 128], strides = [1, 1]} : vector<8x512xf32> to vector<8x128xf32>
    %135 = arith.negf %134 : vector<8x128xf32>
    %136 = math.exp %135 : vector<8x128xf32>
    %cst_49 = arith.constant 1.000000e+00 : f32
    %137 = vector.broadcast %cst_49 : f32 to vector<8x128xf32>
    %138 = arith.addf %137, %136 : vector<8x128xf32>
    %139 = arith.divf %137, %138 : vector<8x128xf32>
    %140 = vector.extract_strided_slice %133 {offsets = [0, 128], sizes = [8, 128], strides = [1, 1]} : vector<8x512xf32> to vector<8x128xf32>
    %141 = arith.negf %140 : vector<8x128xf32>
    %142 = math.exp %141 : vector<8x128xf32>
    %cst_50 = arith.constant 1.000000e+00 : f32
    %143 = vector.broadcast %cst_50 : f32 to vector<8x128xf32>
    %144 = arith.addf %143, %142 : vector<8x128xf32>
    %145 = arith.divf %143, %144 : vector<8x128xf32>
    %146 = vector.extract_strided_slice %133 {offsets = [0, 256], sizes = [8, 128], strides = [1, 1]} : vector<8x512xf32> to vector<8x128xf32>
    %147 = math.tanh %146 : vector<8x128xf32>
    %148 = vector.extract_strided_slice %133 {offsets = [0, 384], sizes = [8, 128], strides = [1, 1]} : vector<8x512xf32> to vector<8x128xf32>
    %149 = arith.negf %148 : vector<8x128xf32>
    %150 = math.exp %149 : vector<8x128xf32>
    %cst_51 = arith.constant 1.000000e+00 : f32
    %151 = vector.broadcast %cst_51 : f32 to vector<8x128xf32>
    %152 = arith.addf %151, %150 : vector<8x128xf32>
    %153 = arith.divf %151, %152 : vector<8x128xf32>
    %154 = arith.mulf %145, %127 : vector<8x128xf32>
    %155 = arith.mulf %139, %147 : vector<8x128xf32>
    %156 = arith.addf %154, %155 : vector<8x128xf32>
    %157 = math.tanh %156 : vector<8x128xf32>
    %158 = arith.mulf %153, %157 : vector<8x128xf32>
    %c32_52 = arith.constant 32 : index
    %c0_53 = arith.constant 0 : index
    %159 = vector.load %arg11[%c32_52, %c0_53] : memref<64x128xf32, #tpu.memory_space<vmem>>, vector<8x128xf32>
    tpu.vector_store %arg11[%c32_52, %c0_53], %158 {strides = array<i32>} : memref<64x128xf32, #tpu.memory_space<vmem>>, vector<8x128xf32>,
    %cst_54 = arith.constant dense<0.000000e+00> : vector<8x512xf32>
    %160 = tpu.matmul %158, %10, %cst_54 {dimension_numbers = #tpu.dot_dimension_numbers<[1], [0], [0], [1], [0, 0, 1, 1], [], []>} : vector<8x128xf32>, vector<128x512xf32>, vector<8x512xf32> -> vector<8x512xf32>
    %c40 = arith.constant 40 : index
    %c0_55 = arith.constant 0 : index
    %161 = vector.load %arg12[%c40, %c0_55] : memref<64x512xf32, #tpu.memory_space<vmem>>, vector<8x512xf32>
    %162 = arith.addf %160, %161 : vector<8x512xf32>
    %163 = vector.extract_strided_slice %162 {offsets = [0, 0], sizes = [8, 128], strides = [1, 1]} : vector<8x512xf32> to vector<8x128xf32>
    %164 = arith.negf %163 : vector<8x128xf32>
    %165 = math.exp %164 : vector<8x128xf32>
    %cst_56 = arith.constant 1.000000e+00 : f32
    %166 = vector.broadcast %cst_56 : f32 to vector<8x128xf32>
    %167 = arith.addf %166, %165 : vector<8x128xf32>
    %168 = arith.divf %166, %167 : vector<8x128xf32>
    %169 = vector.extract_strided_slice %162 {offsets = [0, 128], sizes = [8, 128], strides = [1, 1]} : vector<8x512xf32> to vector<8x128xf32>
    %170 = arith.negf %169 : vector<8x128xf32>
    %171 = math.exp %170 : vector<8x128xf32>
    %cst_57 = arith.constant 1.000000e+00 : f32
    %172 = vector.broadcast %cst_57 : f32 to vector<8x128xf32>
    %173 = arith.addf %172, %171 : vector<8x128xf32>
    %174 = arith.divf %172, %173 : vector<8x128xf32>
    %175 = vector.extract_strided_slice %162 {offsets = [0, 256], sizes = [8, 128], strides = [1, 1]} : vector<8x512xf32> to vector<8x128xf32>
    %176 = math.tanh %175 : vector<8x128xf32>
    %177 = vector.extract_strided_slice %162 {offsets = [0, 384], sizes = [8, 128], strides = [1, 1]} : vector<8x512xf32> to vector<8x128xf32>
    %178 = arith.negf %177 : vector<8x128xf32>
    %179 = math.exp %178 : vector<8x128xf32>
    %cst_58 = arith.constant 1.000000e+00 : f32
    %180 = vector.broadcast %cst_58 : f32 to vector<8x128xf32>
    %181 = arith.addf %180, %179 : vector<8x128xf32>
    %182 = arith.divf %180, %181 : vector<8x128xf32>
    %183 = arith.mulf %174, %156 : vector<8x128xf32>
    %184 = arith.mulf %168, %176 : vector<8x128xf32>
    %185 = arith.addf %183, %184 : vector<8x128xf32>
    %186 = math.tanh %185 : vector<8x128xf32>
    %187 = arith.mulf %182, %186 : vector<8x128xf32>
    %c40_59 = arith.constant 40 : index
    %c0_60 = arith.constant 0 : index
    %188 = vector.load %arg11[%c40_59, %c0_60] : memref<64x128xf32, #tpu.memory_space<vmem>>, vector<8x128xf32>
    tpu.vector_store %arg11[%c40_59, %c0_60], %187 {strides = array<i32>} : memref<64x128xf32, #tpu.memory_space<vmem>>, vector<8x128xf32>,
    %cst_61 = arith.constant dense<0.000000e+00> : vector<8x512xf32>
    %189 = tpu.matmul %187, %10, %cst_61 {dimension_numbers = #tpu.dot_dimension_numbers<[1], [0], [0], [1], [0, 0, 1, 1], [], []>} : vector<8x128xf32>, vector<128x512xf32>, vector<8x512xf32> -> vector<8x512xf32>
    %c48 = arith.constant 48 : index
    %c0_62 = arith.constant 0 : index
    %190 = vector.load %arg12[%c48, %c0_62] : memref<64x512xf32, #tpu.memory_space<vmem>>, vector<8x512xf32>
    %191 = arith.addf %189, %190 : vector<8x512xf32>
    %192 = vector.extract_strided_slice %191 {offsets = [0, 0], sizes = [8, 128], strides = [1, 1]} : vector<8x512xf32> to vector<8x128xf32>
    %193 = arith.negf %192 : vector<8x128xf32>
    %194 = math.exp %193 : vector<8x128xf32>
    %cst_63 = arith.constant 1.000000e+00 : f32
    %195 = vector.broadcast %cst_63 : f32 to vector<8x128xf32>
    %196 = arith.addf %195, %194 : vector<8x128xf32>
    %197 = arith.divf %195, %196 : vector<8x128xf32>
    %198 = vector.extract_strided_slice %191 {offsets = [0, 128], sizes = [8, 128], strides = [1, 1]} : vector<8x512xf32> to vector<8x128xf32>
    %199 = arith.negf %198 : vector<8x128xf32>
    %200 = math.exp %199 : vector<8x128xf32>
    %cst_64 = arith.constant 1.000000e+00 : f32
    %201 = vector.broadcast %cst_64 : f32 to vector<8x128xf32>
    %202 = arith.addf %201, %200 : vector<8x128xf32>
    %203 = arith.divf %201, %202 : vector<8x128xf32>
    %204 = vector.extract_strided_slice %191 {offsets = [0, 256], sizes = [8, 128], strides = [1, 1]} : vector<8x512xf32> to vector<8x128xf32>
    %205 = math.tanh %204 : vector<8x128xf32>
    %206 = vector.extract_strided_slice %191 {offsets = [0, 384], sizes = [8, 128], strides = [1, 1]} : vector<8x512xf32> to vector<8x128xf32>
    %207 = arith.negf %206 : vector<8x128xf32>
    %208 = math.exp %207 : vector<8x128xf32>
    %cst_65 = arith.constant 1.000000e+00 : f32
    %209 = vector.broadcast %cst_65 : f32 to vector<8x128xf32>
    %210 = arith.addf %209, %208 : vector<8x128xf32>
    %211 = arith.divf %209, %210 : vector<8x128xf32>
    %212 = arith.mulf %203, %185 : vector<8x128xf32>
    %213 = arith.mulf %197, %205 : vector<8x128xf32>
    %214 = arith.addf %212, %213 : vector<8x128xf32>
    %215 = math.tanh %214 : vector<8x128xf32>
    %216 = arith.mulf %211, %215 : vector<8x128xf32>
    %c48_66 = arith.constant 48 : index
    %c0_67 = arith.constant 0 : index
    %217 = vector.load %arg11[%c48_66, %c0_67] : memref<64x128xf32, #tpu.memory_space<vmem>>, vector<8x128xf32>
    tpu.vector_store %arg11[%c48_66, %c0_67], %216 {strides = array<i32>} : memref<64x128xf32, #tpu.memory_space<vmem>>, vector<8x128xf32>,
    %cst_68 = arith.constant dense<0.000000e+00> : vector<8x512xf32>
    %218 = tpu.matmul %216, %10, %cst_68 {dimension_numbers = #tpu.dot_dimension_numbers<[1], [0], [0], [1], [0, 0, 1, 1], [], []>} : vector<8x128xf32>, vector<128x512xf32>, vector<8x512xf32> -> vector<8x512xf32>
    %c56 = arith.constant 56 : index
    %c0_69 = arith.constant 0 : index
    %219 = vector.load %arg12[%c56, %c0_69] : memref<64x512xf32, #tpu.memory_space<vmem>>, vector<8x512xf32>
    %220 = arith.addf %218, %219 : vector<8x512xf32>
    %221 = vector.extract_strided_slice %220 {offsets = [0, 0], sizes = [8, 128], strides = [1, 1]} : vector<8x512xf32> to vector<8x128xf32>
    %222 = arith.negf %221 : vector<8x128xf32>
    %223 = math.exp %222 : vector<8x128xf32>
    %cst_70 = arith.constant 1.000000e+00 : f32
    %224 = vector.broadcast %cst_70 : f32 to vector<8x128xf32>
    %225 = arith.addf %224, %223 : vector<8x128xf32>
    %226 = arith.divf %224, %225 : vector<8x128xf32>
    %227 = vector.extract_strided_slice %220 {offsets = [0, 128], sizes = [8, 128], strides = [1, 1]} : vector<8x512xf32> to vector<8x128xf32>
    %228 = arith.negf %227 : vector<8x128xf32>
    %229 = math.exp %228 : vector<8x128xf32>
    %cst_71 = arith.constant 1.000000e+00 : f32
    %230 = vector.broadcast %cst_71 : f32 to vector<8x128xf32>
    %231 = arith.addf %230, %229 : vector<8x128xf32>
    %232 = arith.divf %230, %231 : vector<8x128xf32>
    %233 = vector.extract_strided_slice %220 {offsets = [0, 256], sizes = [8, 128], strides = [1, 1]} : vector<8x512xf32> to vector<8x128xf32>
    %234 = math.tanh %233 : vector<8x128xf32>
    %235 = vector.extract_strided_slice %220 {offsets = [0, 384], sizes = [8, 128], strides = [1, 1]} : vector<8x512xf32> to vector<8x128xf32>
    %236 = arith.negf %235 : vector<8x128xf32>
    %237 = math.exp %236 : vector<8x128xf32>
    %cst_72 = arith.constant 1.000000e+00 : f32
    %238 = vector.broadcast %cst_72 : f32 to vector<8x128xf32>
    %239 = arith.addf %238, %237 : vector<8x128xf32>
    %240 = arith.divf %238, %239 : vector<8x128xf32>
    %241 = arith.mulf %232, %214 : vector<8x128xf32>
    %242 = arith.mulf %226, %234 : vector<8x128xf32>
    %243 = arith.addf %241, %242 : vector<8x128xf32>
    %244 = math.tanh %243 : vector<8x128xf32>
    %245 = arith.mulf %240, %244 : vector<8x128xf32>
    %c56_73 = arith.constant 56 : index
    %c0_74 = arith.constant 0 : index
    %246 = vector.load %arg11[%c56_73, %c0_74] : memref<64x128xf32, #tpu.memory_space<vmem>>, vector<8x128xf32>
    tpu.vector_store %arg11[%c56_73, %c0_74], %245 {strides = array<i32>} : memref<64x128xf32, #tpu.memory_space<vmem>>, vector<8x128xf32>,
    %c0_75 = arith.constant 0 : index
    %c0_76 = arith.constant 0 : index
    %c0_77 = arith.constant 0 : index
    %247 = vector.load %arg9[%c0_75, %c0_76, %c0_77] : memref<4x8x128xf32, #tpu.memory_space<vmem>>, vector<1x8x128xf32>
    %248 = vector.shape_cast %247 : vector<1x8x128xf32> to vector<8x128xf32>
    %249 = vector.shape_cast %245 : vector<8x128xf32> to vector<1x8x128xf32>
    tpu.vector_store %arg9[%c0_75, %c0_76, %c0_77], %249 {strides = array<i32>} : memref<4x8x128xf32, #tpu.memory_space<vmem>>, vector<1x8x128xf32>,
    %c0_78 = arith.constant 0 : index
    %c0_79 = arith.constant 0 : index
    %c0_80 = arith.constant 0 : index
    %250 = vector.load %arg10[%c0_78, %c0_79, %c0_80] : memref<4x8x128xf32, #tpu.memory_space<vmem>>, vector<1x8x128xf32>
    %251 = vector.shape_cast %250 : vector<1x8x128xf32> to vector<8x128xf32>
    %252 = vector.shape_cast %243 : vector<8x128xf32> to vector<1x8x128xf32>
    tpu.vector_store %arg10[%c0_78, %c0_79, %c0_80], %252 {strides = array<i32>} : memref<4x8x128xf32, #tpu.memory_space<vmem>>, vector<1x8x128xf32>,
    %c0_81 = arith.constant 0 : index
    %c0_82 = arith.constant 0 : index
    %253 = vector.load %arg11[%c0_81, %c0_82] : memref<64x128xf32, #tpu.memory_space<vmem>>, vector<64x128xf32>
    %c1 = arith.constant 1 : index
    %c0_83 = arith.constant 0 : index
    %c0_84 = arith.constant 0 : index
    %254 = vector.load %arg3[%c1, %c0_83, %c0_84] : memref<4x128x512xf32, #tpu.memory_space<vmem>>, vector<1x128x512xf32>
    %255 = vector.shape_cast %254 : vector<1x128x512xf32> to vector<128x512xf32>
    %cst_85 = arith.constant dense<0.000000e+00> : vector<64x512xf32>
    %256 = tpu.matmul %253, %255, %cst_85 {dimension_numbers = #tpu.dot_dimension_numbers<[1], [0], [0], [1], [0, 0, 1, 1], [], []>} : vector<64x128xf32>, vector<128x512xf32>, vector<64x512xf32> -> vector<64x512xf32>
    %c1_86 = arith.constant 1 : index
    %c0_87 = arith.constant 0 : index
    %c0_88 = arith.constant 0 : index
    %257 = vector.load %arg5[%c1_86, %c0_87, %c0_88] : memref<4x1x512xf32, #tpu.memory_space<vmem>>, vector<1x1x512xf32>
    %258 = vector.shape_cast %257 : vector<1x1x512xf32> to vector<1x512xf32>
    %259 = vector.broadcast %258 : vector<1x512xf32> to vector<64x512xf32>
    %260 = arith.addf %256, %259 : vector<64x512xf32>
    %c0_89 = arith.constant 0 : index
    %c0_90 = arith.constant 0 : index
    %261 = vector.load %arg12[%c0_89, %c0_90] : memref<64x512xf32, #tpu.memory_space<vmem>>, vector<64x512xf32>
    tpu.vector_store %arg12[%c0_89, %c0_90], %260 {strides = array<i32>} : memref<64x512xf32, #tpu.memory_space<vmem>>, vector<64x512xf32>,
    %c1_91 = arith.constant 1 : index
    %c0_92 = arith.constant 0 : index
    %c0_93 = arith.constant 0 : index
    %262 = vector.load %arg4[%c1_91, %c0_92, %c0_93] : memref<4x128x512xf32, #tpu.memory_space<vmem>>, vector<1x128x512xf32>
    %263 = vector.shape_cast %262 : vector<1x128x512xf32> to vector<128x512xf32>
    %c1_94 = arith.constant 1 : index
    %c0_95 = arith.constant 0 : index
    %c0_96 = arith.constant 0 : index
    %264 = vector.load %arg1[%c1_94, %c0_95, %c0_96] : memref<4x8x128xf32, #tpu.memory_space<vmem>>, vector<1x8x128xf32>
    %265 = vector.shape_cast %264 : vector<1x8x128xf32> to vector<8x128xf32>
    %c1_97 = arith.constant 1 : index
    %c0_98 = arith.constant 0 : index
    %c0_99 = arith.constant 0 : index
    %266 = vector.load %arg2[%c1_97, %c0_98, %c0_99] : memref<4x8x128xf32, #tpu.memory_space<vmem>>, vector<1x8x128xf32>
    %267 = vector.shape_cast %266 : vector<1x8x128xf32> to vector<8x128xf32>
    %cst_100 = arith.constant dense<0.000000e+00> : vector<8x512xf32>
    %268 = tpu.matmul %265, %263, %cst_100 {dimension_numbers = #tpu.dot_dimension_numbers<[1], [0], [0], [1], [0, 0, 1, 1], [], []>} : vector<8x128xf32>, vector<128x512xf32>, vector<8x512xf32> -> vector<8x512xf32>
    %c0_101 = arith.constant 0 : index
    %c0_102 = arith.constant 0 : index
    %269 = vector.load %arg12[%c0_101, %c0_102] : memref<64x512xf32, #tpu.memory_space<vmem>>, vector<8x512xf32>
    %270 = arith.addf %268, %269 : vector<8x512xf32>
    %271 = vector.extract_strided_slice %270 {offsets = [0, 0], sizes = [8, 128], strides = [1, 1]} : vector<8x512xf32> to vector<8x128xf32>
    %272 = arith.negf %271 : vector<8x128xf32>
    %273 = math.exp %272 : vector<8x128xf32>
    %cst_103 = arith.constant 1.000000e+00 : f32
    %274 = vector.broadcast %cst_103 : f32 to vector<8x128xf32>
    %275 = arith.addf %274, %273 : vector<8x128xf32>
    %276 = arith.divf %274, %275 : vector<8x128xf32>
    %277 = vector.extract_strided_slice %270 {offsets = [0, 128], sizes = [8, 128], strides = [1, 1]} : vector<8x512xf32> to vector<8x128xf32>
    %278 = arith.negf %277 : vector<8x128xf32>
    %279 = math.exp %278 : vector<8x128xf32>
    %cst_104 = arith.constant 1.000000e+00 : f32
    %280 = vector.broadcast %cst_104 : f32 to vector<8x128xf32>
    %281 = arith.addf %280, %279 : vector<8x128xf32>
    %282 = arith.divf %280, %281 : vector<8x128xf32>
    %283 = vector.extract_strided_slice %270 {offsets = [0, 256], sizes = [8, 128], strides = [1, 1]} : vector<8x512xf32> to vector<8x128xf32>
    %284 = math.tanh %283 : vector<8x128xf32>
    %285 = vector.extract_strided_slice %270 {offsets = [0, 384], sizes = [8, 128], strides = [1, 1]} : vector<8x512xf32> to vector<8x128xf32>
    %286 = arith.negf %285 : vector<8x128xf32>
    %287 = math.exp %286 : vector<8x128xf32>
    %cst_105 = arith.constant 1.000000e+00 : f32
    %288 = vector.broadcast %cst_105 : f32 to vector<8x128xf32>
    %289 = arith.addf %288, %287 : vector<8x128xf32>
    %290 = arith.divf %288, %289 : vector<8x128xf32>
    %291 = arith.mulf %282, %267 : vector<8x128xf32>
    %292 = arith.mulf %276, %284 : vector<8x128xf32>
    %293 = arith.addf %291, %292 : vector<8x128xf32>
    %294 = math.tanh %293 : vector<8x128xf32>
    %295 = arith.mulf %290, %294 : vector<8x128xf32>
    %c0_106 = arith.constant 0 : index
    %c0_107 = arith.constant 0 : index
    %296 = vector.load %arg11[%c0_106, %c0_107] : memref<64x128xf32, #tpu.memory_space<vmem>>, vector<8x128xf32>
    tpu.vector_store %arg11[%c0_106, %c0_107], %295 {strides = array<i32>} : memref<64x128xf32, #tpu.memory_space<vmem>>, vector<8x128xf32>,
    %cst_108 = arith.constant dense<0.000000e+00> : vector<8x512xf32>
    %297 = tpu.matmul %295, %263, %cst_108 {dimension_numbers = #tpu.dot_dimension_numbers<[1], [0], [0], [1], [0, 0, 1, 1], [], []>} : vector<8x128xf32>, vector<128x512xf32>, vector<8x512xf32> -> vector<8x512xf32>
    %c8_109 = arith.constant 8 : index
    %c0_110 = arith.constant 0 : index
    %298 = vector.load %arg12[%c8_109, %c0_110] : memref<64x512xf32, #tpu.memory_space<vmem>>, vector<8x512xf32>
    %299 = arith.addf %297, %298 : vector<8x512xf32>
    %300 = vector.extract_strided_slice %299 {offsets = [0, 0], sizes = [8, 128], strides = [1, 1]} : vector<8x512xf32> to vector<8x128xf32>
    %301 = arith.negf %300 : vector<8x128xf32>
    %302 = math.exp %301 : vector<8x128xf32>
    %cst_111 = arith.constant 1.000000e+00 : f32
    %303 = vector.broadcast %cst_111 : f32 to vector<8x128xf32>
    %304 = arith.addf %303, %302 : vector<8x128xf32>
    %305 = arith.divf %303, %304 : vector<8x128xf32>
    %306 = vector.extract_strided_slice %299 {offsets = [0, 128], sizes = [8, 128], strides = [1, 1]} : vector<8x512xf32> to vector<8x128xf32>
    %307 = arith.negf %306 : vector<8x128xf32>
    %308 = math.exp %307 : vector<8x128xf32>
    %cst_112 = arith.constant 1.000000e+00 : f32
    %309 = vector.broadcast %cst_112 : f32 to vector<8x128xf32>
    %310 = arith.addf %309, %308 : vector<8x128xf32>
    %311 = arith.divf %309, %310 : vector<8x128xf32>
    %312 = vector.extract_strided_slice %299 {offsets = [0, 256], sizes = [8, 128], strides = [1, 1]} : vector<8x512xf32> to vector<8x128xf32>
    %313 = math.tanh %312 : vector<8x128xf32>
    %314 = vector.extract_strided_slice %299 {offsets = [0, 384], sizes = [8, 128], strides = [1, 1]} : vector<8x512xf32> to vector<8x128xf32>
    %315 = arith.negf %314 : vector<8x128xf32>
    %316 = math.exp %315 : vector<8x128xf32>
    %cst_113 = arith.constant 1.000000e+00 : f32
    %317 = vector.broadcast %cst_113 : f32 to vector<8x128xf32>
    %318 = arith.addf %317, %316 : vector<8x128xf32>
    %319 = arith.divf %317, %318 : vector<8x128xf32>
    %320 = arith.mulf %311, %293 : vector<8x128xf32>
    %321 = arith.mulf %305, %313 : vector<8x128xf32>
    %322 = arith.addf %320, %321 : vector<8x128xf32>
    %323 = math.tanh %322 : vector<8x128xf32>
    %324 = arith.mulf %319, %323 : vector<8x128xf32>
    %c8_114 = arith.constant 8 : index
    %c0_115 = arith.constant 0 : index
    %325 = vector.load %arg11[%c8_114, %c0_115] : memref<64x128xf32, #tpu.memory_space<vmem>>, vector<8x128xf32>
    tpu.vector_store %arg11[%c8_114, %c0_115], %324 {strides = array<i32>} : memref<64x128xf32, #tpu.memory_space<vmem>>, vector<8x128xf32>,
    %cst_116 = arith.constant dense<0.000000e+00> : vector<8x512xf32>
    %326 = tpu.matmul %324, %263, %cst_116 {dimension_numbers = #tpu.dot_dimension_numbers<[1], [0], [0], [1], [0, 0, 1, 1], [], []>} : vector<8x128xf32>, vector<128x512xf32>, vector<8x512xf32> -> vector<8x512xf32>
    %c16_117 = arith.constant 16 : index
    %c0_118 = arith.constant 0 : index
    %327 = vector.load %arg12[%c16_117, %c0_118] : memref<64x512xf32, #tpu.memory_space<vmem>>, vector<8x512xf32>
    %328 = arith.addf %326, %327 : vector<8x512xf32>
    %329 = vector.extract_strided_slice %328 {offsets = [0, 0], sizes = [8, 128], strides = [1, 1]} : vector<8x512xf32> to vector<8x128xf32>
    %330 = arith.negf %329 : vector<8x128xf32>
    %331 = math.exp %330 : vector<8x128xf32>
    %cst_119 = arith.constant 1.000000e+00 : f32
    %332 = vector.broadcast %cst_119 : f32 to vector<8x128xf32>
    %333 = arith.addf %332, %331 : vector<8x128xf32>
    %334 = arith.divf %332, %333 : vector<8x128xf32>
    %335 = vector.extract_strided_slice %328 {offsets = [0, 128], sizes = [8, 128], strides = [1, 1]} : vector<8x512xf32> to vector<8x128xf32>
    %336 = arith.negf %335 : vector<8x128xf32>
    %337 = math.exp %336 : vector<8x128xf32>
    %cst_120 = arith.constant 1.000000e+00 : f32
    %338 = vector.broadcast %cst_120 : f32 to vector<8x128xf32>
    %339 = arith.addf %338, %337 : vector<8x128xf32>
    %340 = arith.divf %338, %339 : vector<8x128xf32>
    %341 = vector.extract_strided_slice %328 {offsets = [0, 256], sizes = [8, 128], strides = [1, 1]} : vector<8x512xf32> to vector<8x128xf32>
    %342 = math.tanh %341 : vector<8x128xf32>
    %343 = vector.extract_strided_slice %328 {offsets = [0, 384], sizes = [8, 128], strides = [1, 1]} : vector<8x512xf32> to vector<8x128xf32>
    %344 = arith.negf %343 : vector<8x128xf32>
    %345 = math.exp %344 : vector<8x128xf32>
    %cst_121 = arith.constant 1.000000e+00 : f32
    %346 = vector.broadcast %cst_121 : f32 to vector<8x128xf32>
    %347 = arith.addf %346, %345 : vector<8x128xf32>
    %348 = arith.divf %346, %347 : vector<8x128xf32>
    %349 = arith.mulf %340, %322 : vector<8x128xf32>
    %350 = arith.mulf %334, %342 : vector<8x128xf32>
    %351 = arith.addf %349, %350 : vector<8x128xf32>
    %352 = math.tanh %351 : vector<8x128xf32>
    %353 = arith.mulf %348, %352 : vector<8x128xf32>
    %c16_122 = arith.constant 16 : index
    %c0_123 = arith.constant 0 : index
    %354 = vector.load %arg11[%c16_122, %c0_123] : memref<64x128xf32, #tpu.memory_space<vmem>>, vector<8x128xf32>
    tpu.vector_store %arg11[%c16_122, %c0_123], %353 {strides = array<i32>} : memref<64x128xf32, #tpu.memory_space<vmem>>, vector<8x128xf32>,
    %cst_124 = arith.constant dense<0.000000e+00> : vector<8x512xf32>
    %355 = tpu.matmul %353, %263, %cst_124 {dimension_numbers = #tpu.dot_dimension_numbers<[1], [0], [0], [1], [0, 0, 1, 1], [], []>} : vector<8x128xf32>, vector<128x512xf32>, vector<8x512xf32> -> vector<8x512xf32>
    %c24_125 = arith.constant 24 : index
    %c0_126 = arith.constant 0 : index
    %356 = vector.load %arg12[%c24_125, %c0_126] : memref<64x512xf32, #tpu.memory_space<vmem>>, vector<8x512xf32>
    %357 = arith.addf %355, %356 : vector<8x512xf32>
    %358 = vector.extract_strided_slice %357 {offsets = [0, 0], sizes = [8, 128], strides = [1, 1]} : vector<8x512xf32> to vector<8x128xf32>
    %359 = arith.negf %358 : vector<8x128xf32>
    %360 = math.exp %359 : vector<8x128xf32>
    %cst_127 = arith.constant 1.000000e+00 : f32
    %361 = vector.broadcast %cst_127 : f32 to vector<8x128xf32>
    %362 = arith.addf %361, %360 : vector<8x128xf32>
    %363 = arith.divf %361, %362 : vector<8x128xf32>
    %364 = vector.extract_strided_slice %357 {offsets = [0, 128], sizes = [8, 128], strides = [1, 1]} : vector<8x512xf32> to vector<8x128xf32>
    %365 = arith.negf %364 : vector<8x128xf32>
    %366 = math.exp %365 : vector<8x128xf32>
    %cst_128 = arith.constant 1.000000e+00 : f32
    %367 = vector.broadcast %cst_128 : f32 to vector<8x128xf32>
    %368 = arith.addf %367, %366 : vector<8x128xf32>
    %369 = arith.divf %367, %368 : vector<8x128xf32>
    %370 = vector.extract_strided_slice %357 {offsets = [0, 256], sizes = [8, 128], strides = [1, 1]} : vector<8x512xf32> to vector<8x128xf32>
    %371 = math.tanh %370 : vector<8x128xf32>
    %372 = vector.extract_strided_slice %357 {offsets = [0, 384], sizes = [8, 128], strides = [1, 1]} : vector<8x512xf32> to vector<8x128xf32>
    %373 = arith.negf %372 : vector<8x128xf32>
    %374 = math.exp %373 : vector<8x128xf32>
    %cst_129 = arith.constant 1.000000e+00 : f32
    %375 = vector.broadcast %cst_129 : f32 to vector<8x128xf32>
    %376 = arith.addf %375, %374 : vector<8x128xf32>
    %377 = arith.divf %375, %376 : vector<8x128xf32>
    %378 = arith.mulf %369, %351 : vector<8x128xf32>
    %379 = arith.mulf %363, %371 : vector<8x128xf32>
    %380 = arith.addf %378, %379 : vector<8x128xf32>
    %381 = math.tanh %380 : vector<8x128xf32>
    %382 = arith.mulf %377, %381 : vector<8x128xf32>
    %c24_130 = arith.constant 24 : index
    %c0_131 = arith.constant 0 : index
    %383 = vector.load %arg11[%c24_130, %c0_131] : memref<64x128xf32, #tpu.memory_space<vmem>>, vector<8x128xf32>
    tpu.vector_store %arg11[%c24_130, %c0_131], %382 {strides = array<i32>} : memref<64x128xf32, #tpu.memory_space<vmem>>, vector<8x128xf32>,
    %cst_132 = arith.constant dense<0.000000e+00> : vector<8x512xf32>
    %384 = tpu.matmul %382, %263, %cst_132 {dimension_numbers = #tpu.dot_dimension_numbers<[1], [0], [0], [1], [0, 0, 1, 1], [], []>} : vector<8x128xf32>, vector<128x512xf32>, vector<8x512xf32> -> vector<8x512xf32>
    %c32_133 = arith.constant 32 : index
    %c0_134 = arith.constant 0 : index
    %385 = vector.load %arg12[%c32_133, %c0_134] : memref<64x512xf32, #tpu.memory_space<vmem>>, vector<8x512xf32>
    %386 = arith.addf %384, %385 : vector<8x512xf32>
    %387 = vector.extract_strided_slice %386 {offsets = [0, 0], sizes = [8, 128], strides = [1, 1]} : vector<8x512xf32> to vector<8x128xf32>
    %388 = arith.negf %387 : vector<8x128xf32>
    %389 = math.exp %388 : vector<8x128xf32>
    %cst_135 = arith.constant 1.000000e+00 : f32
    %390 = vector.broadcast %cst_135 : f32 to vector<8x128xf32>
    %391 = arith.addf %390, %389 : vector<8x128xf32>
    %392 = arith.divf %390, %391 : vector<8x128xf32>
    %393 = vector.extract_strided_slice %386 {offsets = [0, 128], sizes = [8, 128], strides = [1, 1]} : vector<8x512xf32> to vector<8x128xf32>
    %394 = arith.negf %393 : vector<8x128xf32>
    %395 = math.exp %394 : vector<8x128xf32>
    %cst_136 = arith.constant 1.000000e+00 : f32
    %396 = vector.broadcast %cst_136 : f32 to vector<8x128xf32>
    %397 = arith.addf %396, %395 : vector<8x128xf32>
    %398 = arith.divf %396, %397 : vector<8x128xf32>
    %399 = vector.extract_strided_slice %386 {offsets = [0, 256], sizes = [8, 128], strides = [1, 1]} : vector<8x512xf32> to vector<8x128xf32>
    %400 = math.tanh %399 : vector<8x128xf32>
    %401 = vector.extract_strided_slice %386 {offsets = [0, 384], sizes = [8, 128], strides = [1, 1]} : vector<8x512xf32> to vector<8x128xf32>
    %402 = arith.negf %401 : vector<8x128xf32>
    %403 = math.exp %402 : vector<8x128xf32>
    %cst_137 = arith.constant 1.000000e+00 : f32
    %404 = vector.broadcast %cst_137 : f32 to vector<8x128xf32>
    %405 = arith.addf %404, %403 : vector<8x128xf32>
    %406 = arith.divf %404, %405 : vector<8x128xf32>
    %407 = arith.mulf %398, %380 : vector<8x128xf32>
    %408 = arith.mulf %392, %400 : vector<8x128xf32>
    %409 = arith.addf %407, %408 : vector<8x128xf32>
    %410 = math.tanh %409 : vector<8x128xf32>
    %411 = arith.mulf %406, %410 : vector<8x128xf32>
    %c32_138 = arith.constant 32 : index
    %c0_139 = arith.constant 0 : index
    %412 = vector.load %arg11[%c32_138, %c0_139] : memref<64x128xf32, #tpu.memory_space<vmem>>, vector<8x128xf32>
    tpu.vector_store %arg11[%c32_138, %c0_139], %411 {strides = array<i32>} : memref<64x128xf32, #tpu.memory_space<vmem>>, vector<8x128xf32>,
    %cst_140 = arith.constant dense<0.000000e+00> : vector<8x512xf32>
    %413 = tpu.matmul %411, %263, %cst_140 {dimension_numbers = #tpu.dot_dimension_numbers<[1], [0], [0], [1], [0, 0, 1, 1], [], []>} : vector<8x128xf32>, vector<128x512xf32>, vector<8x512xf32> -> vector<8x512xf32>
    %c40_141 = arith.constant 40 : index
    %c0_142 = arith.constant 0 : index
    %414 = vector.load %arg12[%c40_141, %c0_142] : memref<64x512xf32, #tpu.memory_space<vmem>>, vector<8x512xf32>
    %415 = arith.addf %413, %414 : vector<8x512xf32>
    %416 = vector.extract_strided_slice %415 {offsets = [0, 0], sizes = [8, 128], strides = [1, 1]} : vector<8x512xf32> to vector<8x128xf32>
    %417 = arith.negf %416 : vector<8x128xf32>
    %418 = math.exp %417 : vector<8x128xf32>
    %cst_143 = arith.constant 1.000000e+00 : f32
    %419 = vector.broadcast %cst_143 : f32 to vector<8x128xf32>
    %420 = arith.addf %419, %418 : vector<8x128xf32>
    %421 = arith.divf %419, %420 : vector<8x128xf32>
    %422 = vector.extract_strided_slice %415 {offsets = [0, 128], sizes = [8, 128], strides = [1, 1]} : vector<8x512xf32> to vector<8x128xf32>
    %423 = arith.negf %422 : vector<8x128xf32>
    %424 = math.exp %423 : vector<8x128xf32>
    %cst_144 = arith.constant 1.000000e+00 : f32
    %425 = vector.broadcast %cst_144 : f32 to vector<8x128xf32>
    %426 = arith.addf %425, %424 : vector<8x128xf32>
    %427 = arith.divf %425, %426 : vector<8x128xf32>
    %428 = vector.extract_strided_slice %415 {offsets = [0, 256], sizes = [8, 128], strides = [1, 1]} : vector<8x512xf32> to vector<8x128xf32>
    %429 = math.tanh %428 : vector<8x128xf32>
    %430 = vector.extract_strided_slice %415 {offsets = [0, 384], sizes = [8, 128], strides = [1, 1]} : vector<8x512xf32> to vector<8x128xf32>
    %431 = arith.negf %430 : vector<8x128xf32>
    %432 = math.exp %431 : vector<8x128xf32>
    %cst_145 = arith.constant 1.000000e+00 : f32
    %433 = vector.broadcast %cst_145 : f32 to vector<8x128xf32>
    %434 = arith.addf %433, %432 : vector<8x128xf32>
    %435 = arith.divf %433, %434 : vector<8x128xf32>
    %436 = arith.mulf %427, %409 : vector<8x128xf32>
    %437 = arith.mulf %421, %429 : vector<8x128xf32>
    %438 = arith.addf %436, %437 : vector<8x128xf32>
    %439 = math.tanh %438 : vector<8x128xf32>
    %440 = arith.mulf %435, %439 : vector<8x128xf32>
    %c40_146 = arith.constant 40 : index
    %c0_147 = arith.constant 0 : index
    %441 = vector.load %arg11[%c40_146, %c0_147] : memref<64x128xf32, #tpu.memory_space<vmem>>, vector<8x128xf32>
    tpu.vector_store %arg11[%c40_146, %c0_147], %440 {strides = array<i32>} : memref<64x128xf32, #tpu.memory_space<vmem>>, vector<8x128xf32>,
    %cst_148 = arith.constant dense<0.000000e+00> : vector<8x512xf32>
    %442 = tpu.matmul %440, %263, %cst_148 {dimension_numbers = #tpu.dot_dimension_numbers<[1], [0], [0], [1], [0, 0, 1, 1], [], []>} : vector<8x128xf32>, vector<128x512xf32>, vector<8x512xf32> -> vector<8x512xf32>
    %c48_149 = arith.constant 48 : index
    %c0_150 = arith.constant 0 : index
    %443 = vector.load %arg12[%c48_149, %c0_150] : memref<64x512xf32, #tpu.memory_space<vmem>>, vector<8x512xf32>
    %444 = arith.addf %442, %443 : vector<8x512xf32>
    %445 = vector.extract_strided_slice %444 {offsets = [0, 0], sizes = [8, 128], strides = [1, 1]} : vector<8x512xf32> to vector<8x128xf32>
    %446 = arith.negf %445 : vector<8x128xf32>
    %447 = math.exp %446 : vector<8x128xf32>
    %cst_151 = arith.constant 1.000000e+00 : f32
    %448 = vector.broadcast %cst_151 : f32 to vector<8x128xf32>
    %449 = arith.addf %448, %447 : vector<8x128xf32>
    %450 = arith.divf %448, %449 : vector<8x128xf32>
    %451 = vector.extract_strided_slice %444 {offsets = [0, 128], sizes = [8, 128], strides = [1, 1]} : vector<8x512xf32> to vector<8x128xf32>
    %452 = arith.negf %451 : vector<8x128xf32>
    %453 = math.exp %452 : vector<8x128xf32>
    %cst_152 = arith.constant 1.000000e+00 : f32
    %454 = vector.broadcast %cst_152 : f32 to vector<8x128xf32>
    %455 = arith.addf %454, %453 : vector<8x128xf32>
    %456 = arith.divf %454, %455 : vector<8x128xf32>
    %457 = vector.extract_strided_slice %444 {offsets = [0, 256], sizes = [8, 128], strides = [1, 1]} : vector<8x512xf32> to vector<8x128xf32>
    %458 = math.tanh %457 : vector<8x128xf32>
    %459 = vector.extract_strided_slice %444 {offsets = [0, 384], sizes = [8, 128], strides = [1, 1]} : vector<8x512xf32> to vector<8x128xf32>
    %460 = arith.negf %459 : vector<8x128xf32>
    %461 = math.exp %460 : vector<8x128xf32>
    %cst_153 = arith.constant 1.000000e+00 : f32
    %462 = vector.broadcast %cst_153 : f32 to vector<8x128xf32>
    %463 = arith.addf %462, %461 : vector<8x128xf32>
    %464 = arith.divf %462, %463 : vector<8x128xf32>
    %465 = arith.mulf %456, %438 : vector<8x128xf32>
    %466 = arith.mulf %450, %458 : vector<8x128xf32>
    %467 = arith.addf %465, %466 : vector<8x128xf32>
    %468 = math.tanh %467 : vector<8x128xf32>
    %469 = arith.mulf %464, %468 : vector<8x128xf32>
    %c48_154 = arith.constant 48 : index
    %c0_155 = arith.constant 0 : index
    %470 = vector.load %arg11[%c48_154, %c0_155] : memref<64x128xf32, #tpu.memory_space<vmem>>, vector<8x128xf32>
    tpu.vector_store %arg11[%c48_154, %c0_155], %469 {strides = array<i32>} : memref<64x128xf32, #tpu.memory_space<vmem>>, vector<8x128xf32>,
    %cst_156 = arith.constant dense<0.000000e+00> : vector<8x512xf32>
    %471 = tpu.matmul %469, %263, %cst_156 {dimension_numbers = #tpu.dot_dimension_numbers<[1], [0], [0], [1], [0, 0, 1, 1], [], []>} : vector<8x128xf32>, vector<128x512xf32>, vector<8x512xf32> -> vector<8x512xf32>
    %c56_157 = arith.constant 56 : index
    %c0_158 = arith.constant 0 : index
    %472 = vector.load %arg12[%c56_157, %c0_158] : memref<64x512xf32, #tpu.memory_space<vmem>>, vector<8x512xf32>
    %473 = arith.addf %471, %472 : vector<8x512xf32>
    %474 = vector.extract_strided_slice %473 {offsets = [0, 0], sizes = [8, 128], strides = [1, 1]} : vector<8x512xf32> to vector<8x128xf32>
    %475 = arith.negf %474 : vector<8x128xf32>
    %476 = math.exp %475 : vector<8x128xf32>
    %cst_159 = arith.constant 1.000000e+00 : f32
    %477 = vector.broadcast %cst_159 : f32 to vector<8x128xf32>
    %478 = arith.addf %477, %476 : vector<8x128xf32>
    %479 = arith.divf %477, %478 : vector<8x128xf32>
    %480 = vector.extract_strided_slice %473 {offsets = [0, 128], sizes = [8, 128], strides = [1, 1]} : vector<8x512xf32> to vector<8x128xf32>
    %481 = arith.negf %480 : vector<8x128xf32>
    %482 = math.exp %481 : vector<8x128xf32>
    %cst_160 = arith.constant 1.000000e+00 : f32
    %483 = vector.broadcast %cst_160 : f32 to vector<8x128xf32>
    %484 = arith.addf %483, %482 : vector<8x128xf32>
    %485 = arith.divf %483, %484 : vector<8x128xf32>
    %486 = vector.extract_strided_slice %473 {offsets = [0, 256], sizes = [8, 128], strides = [1, 1]} : vector<8x512xf32> to vector<8x128xf32>
    %487 = math.tanh %486 : vector<8x128xf32>
    %488 = vector.extract_strided_slice %473 {offsets = [0, 384], sizes = [8, 128], strides = [1, 1]} : vector<8x512xf32> to vector<8x128xf32>
    %489 = arith.negf %488 : vector<8x128xf32>
    %490 = math.exp %489 : vector<8x128xf32>
    %cst_161 = arith.constant 1.000000e+00 : f32
    %491 = vector.broadcast %cst_161 : f32 to vector<8x128xf32>
    %492 = arith.addf %491, %490 : vector<8x128xf32>
    %493 = arith.divf %491, %492 : vector<8x128xf32>
    %494 = arith.mulf %485, %467 : vector<8x128xf32>
    %495 = arith.mulf %479, %487 : vector<8x128xf32>
    %496 = arith.addf %494, %495 : vector<8x128xf32>
    %497 = math.tanh %496 : vector<8x128xf32>
    %498 = arith.mulf %493, %497 : vector<8x128xf32>
    %c56_162 = arith.constant 56 : index
    %c0_163 = arith.constant 0 : index
    %499 = vector.load %arg11[%c56_162, %c0_163] : memref<64x128xf32, #tpu.memory_space<vmem>>, vector<8x128xf32>
    tpu.vector_store %arg11[%c56_162, %c0_163], %498 {strides = array<i32>} : memref<64x128xf32, #tpu.memory_space<vmem>>, vector<8x128xf32>,
    %c1_164 = arith.constant 1 : index
    %c0_165 = arith.constant 0 : index
    %c0_166 = arith.constant 0 : index
    %500 = vector.load %arg9[%c1_164, %c0_165, %c0_166] : memref<4x8x128xf32, #tpu.memory_space<vmem>>, vector<1x8x128xf32>
    %501 = vector.shape_cast %500 : vector<1x8x128xf32> to vector<8x128xf32>
    %502 = vector.shape_cast %498 : vector<8x128xf32> to vector<1x8x128xf32>
    tpu.vector_store %arg9[%c1_164, %c0_165, %c0_166], %502 {strides = array<i32>} : memref<4x8x128xf32, #tpu.memory_space<vmem>>, vector<1x8x128xf32>,
    %c1_167 = arith.constant 1 : index
    %c0_168 = arith.constant 0 : index
    %c0_169 = arith.constant 0 : index
    %503 = vector.load %arg10[%c1_167, %c0_168, %c0_169] : memref<4x8x128xf32, #tpu.memory_space<vmem>>, vector<1x8x128xf32>
    %504 = vector.shape_cast %503 : vector<1x8x128xf32> to vector<8x128xf32>
    %505 = vector.shape_cast %496 : vector<8x128xf32> to vector<1x8x128xf32>
    tpu.vector_store %arg10[%c1_167, %c0_168, %c0_169], %505 {strides = array<i32>} : memref<4x8x128xf32, #tpu.memory_space<vmem>>, vector<1x8x128xf32>,
    %c0_170 = arith.constant 0 : index
    %c0_171 = arith.constant 0 : index
    %506 = vector.load %arg11[%c0_170, %c0_171] : memref<64x128xf32, #tpu.memory_space<vmem>>, vector<64x128xf32>
    %c2 = arith.constant 2 : index
    %c0_172 = arith.constant 0 : index
    %c0_173 = arith.constant 0 : index
    %507 = vector.load %arg3[%c2, %c0_172, %c0_173] : memref<4x128x512xf32, #tpu.memory_space<vmem>>, vector<1x128x512xf32>
    %508 = vector.shape_cast %507 : vector<1x128x512xf32> to vector<128x512xf32>
    %cst_174 = arith.constant dense<0.000000e+00> : vector<64x512xf32>
    %509 = tpu.matmul %506, %508, %cst_174 {dimension_numbers = #tpu.dot_dimension_numbers<[1], [0], [0], [1], [0, 0, 1, 1], [], []>} : vector<64x128xf32>, vector<128x512xf32>, vector<64x512xf32> -> vector<64x512xf32>
    %c2_175 = arith.constant 2 : index
    %c0_176 = arith.constant 0 : index
    %c0_177 = arith.constant 0 : index
    %510 = vector.load %arg5[%c2_175, %c0_176, %c0_177] : memref<4x1x512xf32, #tpu.memory_space<vmem>>, vector<1x1x512xf32>
    %511 = vector.shape_cast %510 : vector<1x1x512xf32> to vector<1x512xf32>
    %512 = vector.broadcast %511 : vector<1x512xf32> to vector<64x512xf32>
    %513 = arith.addf %509, %512 : vector<64x512xf32>
    %c0_178 = arith.constant 0 : index
    %c0_179 = arith.constant 0 : index
    %514 = vector.load %arg12[%c0_178, %c0_179] : memref<64x512xf32, #tpu.memory_space<vmem>>, vector<64x512xf32>
    tpu.vector_store %arg12[%c0_178, %c0_179], %513 {strides = array<i32>} : memref<64x512xf32, #tpu.memory_space<vmem>>, vector<64x512xf32>,
    %c2_180 = arith.constant 2 : index
    %c0_181 = arith.constant 0 : index
    %c0_182 = arith.constant 0 : index
    %515 = vector.load %arg4[%c2_180, %c0_181, %c0_182] : memref<4x128x512xf32, #tpu.memory_space<vmem>>, vector<1x128x512xf32>
    %516 = vector.shape_cast %515 : vector<1x128x512xf32> to vector<128x512xf32>
    %c2_183 = arith.constant 2 : index
    %c0_184 = arith.constant 0 : index
    %c0_185 = arith.constant 0 : index
    %517 = vector.load %arg1[%c2_183, %c0_184, %c0_185] : memref<4x8x128xf32, #tpu.memory_space<vmem>>, vector<1x8x128xf32>
    %518 = vector.shape_cast %517 : vector<1x8x128xf32> to vector<8x128xf32>
    %c2_186 = arith.constant 2 : index
    %c0_187 = arith.constant 0 : index
    %c0_188 = arith.constant 0 : index
    %519 = vector.load %arg2[%c2_186, %c0_187, %c0_188] : memref<4x8x128xf32, #tpu.memory_space<vmem>>, vector<1x8x128xf32>
    %520 = vector.shape_cast %519 : vector<1x8x128xf32> to vector<8x128xf32>
    %cst_189 = arith.constant dense<0.000000e+00> : vector<8x512xf32>
    %521 = tpu.matmul %518, %516, %cst_189 {dimension_numbers = #tpu.dot_dimension_numbers<[1], [0], [0], [1], [0, 0, 1, 1], [], []>} : vector<8x128xf32>, vector<128x512xf32>, vector<8x512xf32> -> vector<8x512xf32>
    %c0_190 = arith.constant 0 : index
    %c0_191 = arith.constant 0 : index
    %522 = vector.load %arg12[%c0_190, %c0_191] : memref<64x512xf32, #tpu.memory_space<vmem>>, vector<8x512xf32>
    %523 = arith.addf %521, %522 : vector<8x512xf32>
    %524 = vector.extract_strided_slice %523 {offsets = [0, 0], sizes = [8, 128], strides = [1, 1]} : vector<8x512xf32> to vector<8x128xf32>
    %525 = arith.negf %524 : vector<8x128xf32>
    %526 = math.exp %525 : vector<8x128xf32>
    %cst_192 = arith.constant 1.000000e+00 : f32
    %527 = vector.broadcast %cst_192 : f32 to vector<8x128xf32>
    %528 = arith.addf %527, %526 : vector<8x128xf32>
    %529 = arith.divf %527, %528 : vector<8x128xf32>
    %530 = vector.extract_strided_slice %523 {offsets = [0, 128], sizes = [8, 128], strides = [1, 1]} : vector<8x512xf32> to vector<8x128xf32>
    %531 = arith.negf %530 : vector<8x128xf32>
    %532 = math.exp %531 : vector<8x128xf32>
    %cst_193 = arith.constant 1.000000e+00 : f32
    %533 = vector.broadcast %cst_193 : f32 to vector<8x128xf32>
    %534 = arith.addf %533, %532 : vector<8x128xf32>
    %535 = arith.divf %533, %534 : vector<8x128xf32>
    %536 = vector.extract_strided_slice %523 {offsets = [0, 256], sizes = [8, 128], strides = [1, 1]} : vector<8x512xf32> to vector<8x128xf32>
    %537 = math.tanh %536 : vector<8x128xf32>
    %538 = vector.extract_strided_slice %523 {offsets = [0, 384], sizes = [8, 128], strides = [1, 1]} : vector<8x512xf32> to vector<8x128xf32>
    %539 = arith.negf %538 : vector<8x128xf32>
    %540 = math.exp %539 : vector<8x128xf32>
    %cst_194 = arith.constant 1.000000e+00 : f32
    %541 = vector.broadcast %cst_194 : f32 to vector<8x128xf32>
    %542 = arith.addf %541, %540 : vector<8x128xf32>
    %543 = arith.divf %541, %542 : vector<8x128xf32>
    %544 = arith.mulf %535, %520 : vector<8x128xf32>
    %545 = arith.mulf %529, %537 : vector<8x128xf32>
    %546 = arith.addf %544, %545 : vector<8x128xf32>
    %547 = math.tanh %546 : vector<8x128xf32>
    %548 = arith.mulf %543, %547 : vector<8x128xf32>
    %c0_195 = arith.constant 0 : index
    %c0_196 = arith.constant 0 : index
    %549 = vector.load %arg11[%c0_195, %c0_196] : memref<64x128xf32, #tpu.memory_space<vmem>>, vector<8x128xf32>
    tpu.vector_store %arg11[%c0_195, %c0_196], %548 {strides = array<i32>} : memref<64x128xf32, #tpu.memory_space<vmem>>, vector<8x128xf32>,
    %cst_197 = arith.constant dense<0.000000e+00> : vector<8x512xf32>
    %550 = tpu.matmul %548, %516, %cst_197 {dimension_numbers = #tpu.dot_dimension_numbers<[1], [0], [0], [1], [0, 0, 1, 1], [], []>} : vector<8x128xf32>, vector<128x512xf32>, vector<8x512xf32> -> vector<8x512xf32>
    %c8_198 = arith.constant 8 : index
    %c0_199 = arith.constant 0 : index
    %551 = vector.load %arg12[%c8_198, %c0_199] : memref<64x512xf32, #tpu.memory_space<vmem>>, vector<8x512xf32>
    %552 = arith.addf %550, %551 : vector<8x512xf32>
    %553 = vector.extract_strided_slice %552 {offsets = [0, 0], sizes = [8, 128], strides = [1, 1]} : vector<8x512xf32> to vector<8x128xf32>
    %554 = arith.negf %553 : vector<8x128xf32>
    %555 = math.exp %554 : vector<8x128xf32>
    %cst_200 = arith.constant 1.000000e+00 : f32
    %556 = vector.broadcast %cst_200 : f32 to vector<8x128xf32>
    %557 = arith.addf %556, %555 : vector<8x128xf32>
    %558 = arith.divf %556, %557 : vector<8x128xf32>
    %559 = vector.extract_strided_slice %552 {offsets = [0, 128], sizes = [8, 128], strides = [1, 1]} : vector<8x512xf32> to vector<8x128xf32>
    %560 = arith.negf %559 : vector<8x128xf32>
    %561 = math.exp %560 : vector<8x128xf32>
    %cst_201 = arith.constant 1.000000e+00 : f32
    %562 = vector.broadcast %cst_201 : f32 to vector<8x128xf32>
    %563 = arith.addf %562, %561 : vector<8x128xf32>
    %564 = arith.divf %562, %563 : vector<8x128xf32>
    %565 = vector.extract_strided_slice %552 {offsets = [0, 256], sizes = [8, 128], strides = [1, 1]} : vector<8x512xf32> to vector<8x128xf32>
    %566 = math.tanh %565 : vector<8x128xf32>
    %567 = vector.extract_strided_slice %552 {offsets = [0, 384], sizes = [8, 128], strides = [1, 1]} : vector<8x512xf32> to vector<8x128xf32>
    %568 = arith.negf %567 : vector<8x128xf32>
    %569 = math.exp %568 : vector<8x128xf32>
    %cst_202 = arith.constant 1.000000e+00 : f32
    %570 = vector.broadcast %cst_202 : f32 to vector<8x128xf32>
    %571 = arith.addf %570, %569 : vector<8x128xf32>
    %572 = arith.divf %570, %571 : vector<8x128xf32>
    %573 = arith.mulf %564, %546 : vector<8x128xf32>
    %574 = arith.mulf %558, %566 : vector<8x128xf32>
    %575 = arith.addf %573, %574 : vector<8x128xf32>
    %576 = math.tanh %575 : vector<8x128xf32>
    %577 = arith.mulf %572, %576 : vector<8x128xf32>
    %c8_203 = arith.constant 8 : index
    %c0_204 = arith.constant 0 : index
    %578 = vector.load %arg11[%c8_203, %c0_204] : memref<64x128xf32, #tpu.memory_space<vmem>>, vector<8x128xf32>
    tpu.vector_store %arg11[%c8_203, %c0_204], %577 {strides = array<i32>} : memref<64x128xf32, #tpu.memory_space<vmem>>, vector<8x128xf32>,
    %cst_205 = arith.constant dense<0.000000e+00> : vector<8x512xf32>
    %579 = tpu.matmul %577, %516, %cst_205 {dimension_numbers = #tpu.dot_dimension_numbers<[1], [0], [0], [1], [0, 0, 1, 1], [], []>} : vector<8x128xf32>, vector<128x512xf32>, vector<8x512xf32> -> vector<8x512xf32>
    %c16_206 = arith.constant 16 : index
    %c0_207 = arith.constant 0 : index
    %580 = vector.load %arg12[%c16_206, %c0_207] : memref<64x512xf32, #tpu.memory_space<vmem>>, vector<8x512xf32>
    %581 = arith.addf %579, %580 : vector<8x512xf32>
    %582 = vector.extract_strided_slice %581 {offsets = [0, 0], sizes = [8, 128], strides = [1, 1]} : vector<8x512xf32> to vector<8x128xf32>
    %583 = arith.negf %582 : vector<8x128xf32>
    %584 = math.exp %583 : vector<8x128xf32>
    %cst_208 = arith.constant 1.000000e+00 : f32
    %585 = vector.broadcast %cst_208 : f32 to vector<8x128xf32>
    %586 = arith.addf %585, %584 : vector<8x128xf32>
    %587 = arith.divf %585, %586 : vector<8x128xf32>
    %588 = vector.extract_strided_slice %581 {offsets = [0, 128], sizes = [8, 128], strides = [1, 1]} : vector<8x512xf32> to vector<8x128xf32>
    %589 = arith.negf %588 : vector<8x128xf32>
    %590 = math.exp %589 : vector<8x128xf32>
    %cst_209 = arith.constant 1.000000e+00 : f32
    %591 = vector.broadcast %cst_209 : f32 to vector<8x128xf32>
    %592 = arith.addf %591, %590 : vector<8x128xf32>
    %593 = arith.divf %591, %592 : vector<8x128xf32>
    %594 = vector.extract_strided_slice %581 {offsets = [0, 256], sizes = [8, 128], strides = [1, 1]} : vector<8x512xf32> to vector<8x128xf32>
    %595 = math.tanh %594 : vector<8x128xf32>
    %596 = vector.extract_strided_slice %581 {offsets = [0, 384], sizes = [8, 128], strides = [1, 1]} : vector<8x512xf32> to vector<8x128xf32>
    %597 = arith.negf %596 : vector<8x128xf32>
    %598 = math.exp %597 : vector<8x128xf32>
    %cst_210 = arith.constant 1.000000e+00 : f32
    %599 = vector.broadcast %cst_210 : f32 to vector<8x128xf32>
    %600 = arith.addf %599, %598 : vector<8x128xf32>
    %601 = arith.divf %599, %600 : vector<8x128xf32>
    %602 = arith.mulf %593, %575 : vector<8x128xf32>
    %603 = arith.mulf %587, %595 : vector<8x128xf32>
    %604 = arith.addf %602, %603 : vector<8x128xf32>
    %605 = math.tanh %604 : vector<8x128xf32>
    %606 = arith.mulf %601, %605 : vector<8x128xf32>
    %c16_211 = arith.constant 16 : index
    %c0_212 = arith.constant 0 : index
    %607 = vector.load %arg11[%c16_211, %c0_212] : memref<64x128xf32, #tpu.memory_space<vmem>>, vector<8x128xf32>
    tpu.vector_store %arg11[%c16_211, %c0_212], %606 {strides = array<i32>} : memref<64x128xf32, #tpu.memory_space<vmem>>, vector<8x128xf32>,
    %cst_213 = arith.constant dense<0.000000e+00> : vector<8x512xf32>
    %608 = tpu.matmul %606, %516, %cst_213 {dimension_numbers = #tpu.dot_dimension_numbers<[1], [0], [0], [1], [0, 0, 1, 1], [], []>} : vector<8x128xf32>, vector<128x512xf32>, vector<8x512xf32> -> vector<8x512xf32>
    %c24_214 = arith.constant 24 : index
    %c0_215 = arith.constant 0 : index
    %609 = vector.load %arg12[%c24_214, %c0_215] : memref<64x512xf32, #tpu.memory_space<vmem>>, vector<8x512xf32>
    %610 = arith.addf %608, %609 : vector<8x512xf32>
    %611 = vector.extract_strided_slice %610 {offsets = [0, 0], sizes = [8, 128], strides = [1, 1]} : vector<8x512xf32> to vector<8x128xf32>
    %612 = arith.negf %611 : vector<8x128xf32>
    %613 = math.exp %612 : vector<8x128xf32>
    %cst_216 = arith.constant 1.000000e+00 : f32
    %614 = vector.broadcast %cst_216 : f32 to vector<8x128xf32>
    %615 = arith.addf %614, %613 : vector<8x128xf32>
    %616 = arith.divf %614, %615 : vector<8x128xf32>
    %617 = vector.extract_strided_slice %610 {offsets = [0, 128], sizes = [8, 128], strides = [1, 1]} : vector<8x512xf32> to vector<8x128xf32>
    %618 = arith.negf %617 : vector<8x128xf32>
    %619 = math.exp %618 : vector<8x128xf32>
    %cst_217 = arith.constant 1.000000e+00 : f32
    %620 = vector.broadcast %cst_217 : f32 to vector<8x128xf32>
    %621 = arith.addf %620, %619 : vector<8x128xf32>
    %622 = arith.divf %620, %621 : vector<8x128xf32>
    %623 = vector.extract_strided_slice %610 {offsets = [0, 256], sizes = [8, 128], strides = [1, 1]} : vector<8x512xf32> to vector<8x128xf32>
    %624 = math.tanh %623 : vector<8x128xf32>
    %625 = vector.extract_strided_slice %610 {offsets = [0, 384], sizes = [8, 128], strides = [1, 1]} : vector<8x512xf32> to vector<8x128xf32>
    %626 = arith.negf %625 : vector<8x128xf32>
    %627 = math.exp %626 : vector<8x128xf32>
    %cst_218 = arith.constant 1.000000e+00 : f32
    %628 = vector.broadcast %cst_218 : f32 to vector<8x128xf32>
    %629 = arith.addf %628, %627 : vector<8x128xf32>
    %630 = arith.divf %628, %629 : vector<8x128xf32>
    %631 = arith.mulf %622, %604 : vector<8x128xf32>
    %632 = arith.mulf %616, %624 : vector<8x128xf32>
    %633 = arith.addf %631, %632 : vector<8x128xf32>
    %634 = math.tanh %633 : vector<8x128xf32>
    %635 = arith.mulf %630, %634 : vector<8x128xf32>
    %c24_219 = arith.constant 24 : index
    %c0_220 = arith.constant 0 : index
    %636 = vector.load %arg11[%c24_219, %c0_220] : memref<64x128xf32, #tpu.memory_space<vmem>>, vector<8x128xf32>
    tpu.vector_store %arg11[%c24_219, %c0_220], %635 {strides = array<i32>} : memref<64x128xf32, #tpu.memory_space<vmem>>, vector<8x128xf32>,
    %cst_221 = arith.constant dense<0.000000e+00> : vector<8x512xf32>
    %637 = tpu.matmul %635, %516, %cst_221 {dimension_numbers = #tpu.dot_dimension_numbers<[1], [0], [0], [1], [0, 0, 1, 1], [], []>} : vector<8x128xf32>, vector<128x512xf32>, vector<8x512xf32> -> vector<8x512xf32>
    %c32_222 = arith.constant 32 : index
    %c0_223 = arith.constant 0 : index
    %638 = vector.load %arg12[%c32_222, %c0_223] : memref<64x512xf32, #tpu.memory_space<vmem>>, vector<8x512xf32>
    %639 = arith.addf %637, %638 : vector<8x512xf32>
    %640 = vector.extract_strided_slice %639 {offsets = [0, 0], sizes = [8, 128], strides = [1, 1]} : vector<8x512xf32> to vector<8x128xf32>
    %641 = arith.negf %640 : vector<8x128xf32>
    %642 = math.exp %641 : vector<8x128xf32>
    %cst_224 = arith.constant 1.000000e+00 : f32
    %643 = vector.broadcast %cst_224 : f32 to vector<8x128xf32>
    %644 = arith.addf %643, %642 : vector<8x128xf32>
    %645 = arith.divf %643, %644 : vector<8x128xf32>
    %646 = vector.extract_strided_slice %639 {offsets = [0, 128], sizes = [8, 128], strides = [1, 1]} : vector<8x512xf32> to vector<8x128xf32>
    %647 = arith.negf %646 : vector<8x128xf32>
    %648 = math.exp %647 : vector<8x128xf32>
    %cst_225 = arith.constant 1.000000e+00 : f32
    %649 = vector.broadcast %cst_225 : f32 to vector<8x128xf32>
    %650 = arith.addf %649, %648 : vector<8x128xf32>
    %651 = arith.divf %649, %650 : vector<8x128xf32>
    %652 = vector.extract_strided_slice %639 {offsets = [0, 256], sizes = [8, 128], strides = [1, 1]} : vector<8x512xf32> to vector<8x128xf32>
    %653 = math.tanh %652 : vector<8x128xf32>
    %654 = vector.extract_strided_slice %639 {offsets = [0, 384], sizes = [8, 128], strides = [1, 1]} : vector<8x512xf32> to vector<8x128xf32>
    %655 = arith.negf %654 : vector<8x128xf32>
    %656 = math.exp %655 : vector<8x128xf32>
    %cst_226 = arith.constant 1.000000e+00 : f32
    %657 = vector.broadcast %cst_226 : f32 to vector<8x128xf32>
    %658 = arith.addf %657, %656 : vector<8x128xf32>
    %659 = arith.divf %657, %658 : vector<8x128xf32>
    %660 = arith.mulf %651, %633 : vector<8x128xf32>
    %661 = arith.mulf %645, %653 : vector<8x128xf32>
    %662 = arith.addf %660, %661 : vector<8x128xf32>
    %663 = math.tanh %662 : vector<8x128xf32>
    %664 = arith.mulf %659, %663 : vector<8x128xf32>
    %c32_227 = arith.constant 32 : index
    %c0_228 = arith.constant 0 : index
    %665 = vector.load %arg11[%c32_227, %c0_228] : memref<64x128xf32, #tpu.memory_space<vmem>>, vector<8x128xf32>
    tpu.vector_store %arg11[%c32_227, %c0_228], %664 {strides = array<i32>} : memref<64x128xf32, #tpu.memory_space<vmem>>, vector<8x128xf32>,
    %cst_229 = arith.constant dense<0.000000e+00> : vector<8x512xf32>
    %666 = tpu.matmul %664, %516, %cst_229 {dimension_numbers = #tpu.dot_dimension_numbers<[1], [0], [0], [1], [0, 0, 1, 1], [], []>} : vector<8x128xf32>, vector<128x512xf32>, vector<8x512xf32> -> vector<8x512xf32>
    %c40_230 = arith.constant 40 : index
    %c0_231 = arith.constant 0 : index
    %667 = vector.load %arg12[%c40_230, %c0_231] : memref<64x512xf32, #tpu.memory_space<vmem>>, vector<8x512xf32>
    %668 = arith.addf %666, %667 : vector<8x512xf32>
    %669 = vector.extract_strided_slice %668 {offsets = [0, 0], sizes = [8, 128], strides = [1, 1]} : vector<8x512xf32> to vector<8x128xf32>
    %670 = arith.negf %669 : vector<8x128xf32>
    %671 = math.exp %670 : vector<8x128xf32>
    %cst_232 = arith.constant 1.000000e+00 : f32
    %672 = vector.broadcast %cst_232 : f32 to vector<8x128xf32>
    %673 = arith.addf %672, %671 : vector<8x128xf32>
    %674 = arith.divf %672, %673 : vector<8x128xf32>
    %675 = vector.extract_strided_slice %668 {offsets = [0, 128], sizes = [8, 128], strides = [1, 1]} : vector<8x512xf32> to vector<8x128xf32>
    %676 = arith.negf %675 : vector<8x128xf32>
    %677 = math.exp %676 : vector<8x128xf32>
    %cst_233 = arith.constant 1.000000e+00 : f32
    %678 = vector.broadcast %cst_233 : f32 to vector<8x128xf32>
    %679 = arith.addf %678, %677 : vector<8x128xf32>
    %680 = arith.divf %678, %679 : vector<8x128xf32>
    %681 = vector.extract_strided_slice %668 {offsets = [0, 256], sizes = [8, 128], strides = [1, 1]} : vector<8x512xf32> to vector<8x128xf32>
    %682 = math.tanh %681 : vector<8x128xf32>
    %683 = vector.extract_strided_slice %668 {offsets = [0, 384], sizes = [8, 128], strides = [1, 1]} : vector<8x512xf32> to vector<8x128xf32>
    %684 = arith.negf %683 : vector<8x128xf32>
    %685 = math.exp %684 : vector<8x128xf32>
    %cst_234 = arith.constant 1.000000e+00 : f32
    %686 = vector.broadcast %cst_234 : f32 to vector<8x128xf32>
    %687 = arith.addf %686, %685 : vector<8x128xf32>
    %688 = arith.divf %686, %687 : vector<8x128xf32>
    %689 = arith.mulf %680, %662 : vector<8x128xf32>
    %690 = arith.mulf %674, %682 : vector<8x128xf32>
    %691 = arith.addf %689, %690 : vector<8x128xf32>
    %692 = math.tanh %691 : vector<8x128xf32>
    %693 = arith.mulf %688, %692 : vector<8x128xf32>
    %c40_235 = arith.constant 40 : index
    %c0_236 = arith.constant 0 : index
    %694 = vector.load %arg11[%c40_235, %c0_236] : memref<64x128xf32, #tpu.memory_space<vmem>>, vector<8x128xf32>
    tpu.vector_store %arg11[%c40_235, %c0_236], %693 {strides = array<i32>} : memref<64x128xf32, #tpu.memory_space<vmem>>, vector<8x128xf32>,
    %cst_237 = arith.constant dense<0.000000e+00> : vector<8x512xf32>
    %695 = tpu.matmul %693, %516, %cst_237 {dimension_numbers = #tpu.dot_dimension_numbers<[1], [0], [0], [1], [0, 0, 1, 1], [], []>} : vector<8x128xf32>, vector<128x512xf32>, vector<8x512xf32> -> vector<8x512xf32>
    %c48_238 = arith.constant 48 : index
    %c0_239 = arith.constant 0 : index
    %696 = vector.load %arg12[%c48_238, %c0_239] : memref<64x512xf32, #tpu.memory_space<vmem>>, vector<8x512xf32>
    %697 = arith.addf %695, %696 : vector<8x512xf32>
    %698 = vector.extract_strided_slice %697 {offsets = [0, 0], sizes = [8, 128], strides = [1, 1]} : vector<8x512xf32> to vector<8x128xf32>
    %699 = arith.negf %698 : vector<8x128xf32>
    %700 = math.exp %699 : vector<8x128xf32>
    %cst_240 = arith.constant 1.000000e+00 : f32
    %701 = vector.broadcast %cst_240 : f32 to vector<8x128xf32>
    %702 = arith.addf %701, %700 : vector<8x128xf32>
    %703 = arith.divf %701, %702 : vector<8x128xf32>
    %704 = vector.extract_strided_slice %697 {offsets = [0, 128], sizes = [8, 128], strides = [1, 1]} : vector<8x512xf32> to vector<8x128xf32>
    %705 = arith.negf %704 : vector<8x128xf32>
    %706 = math.exp %705 : vector<8x128xf32>
    %cst_241 = arith.constant 1.000000e+00 : f32
    %707 = vector.broadcast %cst_241 : f32 to vector<8x128xf32>
    %708 = arith.addf %707, %706 : vector<8x128xf32>
    %709 = arith.divf %707, %708 : vector<8x128xf32>
    %710 = vector.extract_strided_slice %697 {offsets = [0, 256], sizes = [8, 128], strides = [1, 1]} : vector<8x512xf32> to vector<8x128xf32>
    %711 = math.tanh %710 : vector<8x128xf32>
    %712 = vector.extract_strided_slice %697 {offsets = [0, 384], sizes = [8, 128], strides = [1, 1]} : vector<8x512xf32> to vector<8x128xf32>
    %713 = arith.negf %712 : vector<8x128xf32>
    %714 = math.exp %713 : vector<8x128xf32>
    %cst_242 = arith.constant 1.000000e+00 : f32
    %715 = vector.broadcast %cst_242 : f32 to vector<8x128xf32>
    %716 = arith.addf %715, %714 : vector<8x128xf32>
    %717 = arith.divf %715, %716 : vector<8x128xf32>
    %718 = arith.mulf %709, %691 : vector<8x128xf32>
    %719 = arith.mulf %703, %711 : vector<8x128xf32>
    %720 = arith.addf %718, %719 : vector<8x128xf32>
    %721 = math.tanh %720 : vector<8x128xf32>
    %722 = arith.mulf %717, %721 : vector<8x128xf32>
    %c48_243 = arith.constant 48 : index
    %c0_244 = arith.constant 0 : index
    %723 = vector.load %arg11[%c48_243, %c0_244] : memref<64x128xf32, #tpu.memory_space<vmem>>, vector<8x128xf32>
    tpu.vector_store %arg11[%c48_243, %c0_244], %722 {strides = array<i32>} : memref<64x128xf32, #tpu.memory_space<vmem>>, vector<8x128xf32>,
    %cst_245 = arith.constant dense<0.000000e+00> : vector<8x512xf32>
    %724 = tpu.matmul %722, %516, %cst_245 {dimension_numbers = #tpu.dot_dimension_numbers<[1], [0], [0], [1], [0, 0, 1, 1], [], []>} : vector<8x128xf32>, vector<128x512xf32>, vector<8x512xf32> -> vector<8x512xf32>
    %c56_246 = arith.constant 56 : index
    %c0_247 = arith.constant 0 : index
    %725 = vector.load %arg12[%c56_246, %c0_247] : memref<64x512xf32, #tpu.memory_space<vmem>>, vector<8x512xf32>
    %726 = arith.addf %724, %725 : vector<8x512xf32>
    %727 = vector.extract_strided_slice %726 {offsets = [0, 0], sizes = [8, 128], strides = [1, 1]} : vector<8x512xf32> to vector<8x128xf32>
    %728 = arith.negf %727 : vector<8x128xf32>
    %729 = math.exp %728 : vector<8x128xf32>
    %cst_248 = arith.constant 1.000000e+00 : f32
    %730 = vector.broadcast %cst_248 : f32 to vector<8x128xf32>
    %731 = arith.addf %730, %729 : vector<8x128xf32>
    %732 = arith.divf %730, %731 : vector<8x128xf32>
    %733 = vector.extract_strided_slice %726 {offsets = [0, 128], sizes = [8, 128], strides = [1, 1]} : vector<8x512xf32> to vector<8x128xf32>
    %734 = arith.negf %733 : vector<8x128xf32>
    %735 = math.exp %734 : vector<8x128xf32>
    %cst_249 = arith.constant 1.000000e+00 : f32
    %736 = vector.broadcast %cst_249 : f32 to vector<8x128xf32>
    %737 = arith.addf %736, %735 : vector<8x128xf32>
    %738 = arith.divf %736, %737 : vector<8x128xf32>
    %739 = vector.extract_strided_slice %726 {offsets = [0, 256], sizes = [8, 128], strides = [1, 1]} : vector<8x512xf32> to vector<8x128xf32>
    %740 = math.tanh %739 : vector<8x128xf32>
    %741 = vector.extract_strided_slice %726 {offsets = [0, 384], sizes = [8, 128], strides = [1, 1]} : vector<8x512xf32> to vector<8x128xf32>
    %742 = arith.negf %741 : vector<8x128xf32>
    %743 = math.exp %742 : vector<8x128xf32>
    %cst_250 = arith.constant 1.000000e+00 : f32
    %744 = vector.broadcast %cst_250 : f32 to vector<8x128xf32>
    %745 = arith.addf %744, %743 : vector<8x128xf32>
    %746 = arith.divf %744, %745 : vector<8x128xf32>
    %747 = arith.mulf %738, %720 : vector<8x128xf32>
    %748 = arith.mulf %732, %740 : vector<8x128xf32>
    %749 = arith.addf %747, %748 : vector<8x128xf32>
    %750 = math.tanh %749 : vector<8x128xf32>
    %751 = arith.mulf %746, %750 : vector<8x128xf32>
    %c56_251 = arith.constant 56 : index
    %c0_252 = arith.constant 0 : index
    %752 = vector.load %arg11[%c56_251, %c0_252] : memref<64x128xf32, #tpu.memory_space<vmem>>, vector<8x128xf32>
    tpu.vector_store %arg11[%c56_251, %c0_252], %751 {strides = array<i32>} : memref<64x128xf32, #tpu.memory_space<vmem>>, vector<8x128xf32>,
    %c2_253 = arith.constant 2 : index
    %c0_254 = arith.constant 0 : index
    %c0_255 = arith.constant 0 : index
    %753 = vector.load %arg9[%c2_253, %c0_254, %c0_255] : memref<4x8x128xf32, #tpu.memory_space<vmem>>, vector<1x8x128xf32>
    %754 = vector.shape_cast %753 : vector<1x8x128xf32> to vector<8x128xf32>
    %755 = vector.shape_cast %751 : vector<8x128xf32> to vector<1x8x128xf32>
    tpu.vector_store %arg9[%c2_253, %c0_254, %c0_255], %755 {strides = array<i32>} : memref<4x8x128xf32, #tpu.memory_space<vmem>>, vector<1x8x128xf32>,
    %c2_256 = arith.constant 2 : index
    %c0_257 = arith.constant 0 : index
    %c0_258 = arith.constant 0 : index
    %756 = vector.load %arg10[%c2_256, %c0_257, %c0_258] : memref<4x8x128xf32, #tpu.memory_space<vmem>>, vector<1x8x128xf32>
    %757 = vector.shape_cast %756 : vector<1x8x128xf32> to vector<8x128xf32>
    %758 = vector.shape_cast %749 : vector<8x128xf32> to vector<1x8x128xf32>
    tpu.vector_store %arg10[%c2_256, %c0_257, %c0_258], %758 {strides = array<i32>} : memref<4x8x128xf32, #tpu.memory_space<vmem>>, vector<1x8x128xf32>,
    %c0_259 = arith.constant 0 : index
    %c0_260 = arith.constant 0 : index
    %759 = vector.load %arg11[%c0_259, %c0_260] : memref<64x128xf32, #tpu.memory_space<vmem>>, vector<64x128xf32>
    %c3 = arith.constant 3 : index
    %c0_261 = arith.constant 0 : index
    %c0_262 = arith.constant 0 : index
    %760 = vector.load %arg3[%c3, %c0_261, %c0_262] : memref<4x128x512xf32, #tpu.memory_space<vmem>>, vector<1x128x512xf32>
    %761 = vector.shape_cast %760 : vector<1x128x512xf32> to vector<128x512xf32>
    %cst_263 = arith.constant dense<0.000000e+00> : vector<64x512xf32>
    %762 = tpu.matmul %759, %761, %cst_263 {dimension_numbers = #tpu.dot_dimension_numbers<[1], [0], [0], [1], [0, 0, 1, 1], [], []>} : vector<64x128xf32>, vector<128x512xf32>, vector<64x512xf32> -> vector<64x512xf32>
    %c3_264 = arith.constant 3 : index
    %c0_265 = arith.constant 0 : index
    %c0_266 = arith.constant 0 : index
    %763 = vector.load %arg5[%c3_264, %c0_265, %c0_266] : memref<4x1x512xf32, #tpu.memory_space<vmem>>, vector<1x1x512xf32>
    %764 = vector.shape_cast %763 : vector<1x1x512xf32> to vector<1x512xf32>
    %765 = vector.broadcast %764 : vector<1x512xf32> to vector<64x512xf32>
    %766 = arith.addf %762, %765 : vector<64x512xf32>
    %c0_267 = arith.constant 0 : index
    %c0_268 = arith.constant 0 : index
    %767 = vector.load %arg12[%c0_267, %c0_268] : memref<64x512xf32, #tpu.memory_space<vmem>>, vector<64x512xf32>
    tpu.vector_store %arg12[%c0_267, %c0_268], %766 {strides = array<i32>} : memref<64x512xf32, #tpu.memory_space<vmem>>, vector<64x512xf32>,
    %c3_269 = arith.constant 3 : index
    %c0_270 = arith.constant 0 : index
    %c0_271 = arith.constant 0 : index
    %768 = vector.load %arg4[%c3_269, %c0_270, %c0_271] : memref<4x128x512xf32, #tpu.memory_space<vmem>>, vector<1x128x512xf32>
    %769 = vector.shape_cast %768 : vector<1x128x512xf32> to vector<128x512xf32>
    %c3_272 = arith.constant 3 : index
    %c0_273 = arith.constant 0 : index
    %c0_274 = arith.constant 0 : index
    %770 = vector.load %arg1[%c3_272, %c0_273, %c0_274] : memref<4x8x128xf32, #tpu.memory_space<vmem>>, vector<1x8x128xf32>
    %771 = vector.shape_cast %770 : vector<1x8x128xf32> to vector<8x128xf32>
    %c3_275 = arith.constant 3 : index
    %c0_276 = arith.constant 0 : index
    %c0_277 = arith.constant 0 : index
    %772 = vector.load %arg2[%c3_275, %c0_276, %c0_277] : memref<4x8x128xf32, #tpu.memory_space<vmem>>, vector<1x8x128xf32>
    %773 = vector.shape_cast %772 : vector<1x8x128xf32> to vector<8x128xf32>
    %cst_278 = arith.constant dense<0.000000e+00> : vector<8x512xf32>
    %774 = tpu.matmul %771, %769, %cst_278 {dimension_numbers = #tpu.dot_dimension_numbers<[1], [0], [0], [1], [0, 0, 1, 1], [], []>} : vector<8x128xf32>, vector<128x512xf32>, vector<8x512xf32> -> vector<8x512xf32>
    %c0_279 = arith.constant 0 : index
    %c0_280 = arith.constant 0 : index
    %775 = vector.load %arg12[%c0_279, %c0_280] : memref<64x512xf32, #tpu.memory_space<vmem>>, vector<8x512xf32>
    %776 = arith.addf %774, %775 : vector<8x512xf32>
    %777 = vector.extract_strided_slice %776 {offsets = [0, 0], sizes = [8, 128], strides = [1, 1]} : vector<8x512xf32> to vector<8x128xf32>
    %778 = arith.negf %777 : vector<8x128xf32>
    %779 = math.exp %778 : vector<8x128xf32>
    %cst_281 = arith.constant 1.000000e+00 : f32
    %780 = vector.broadcast %cst_281 : f32 to vector<8x128xf32>
    %781 = arith.addf %780, %779 : vector<8x128xf32>
    %782 = arith.divf %780, %781 : vector<8x128xf32>
    %783 = vector.extract_strided_slice %776 {offsets = [0, 128], sizes = [8, 128], strides = [1, 1]} : vector<8x512xf32> to vector<8x128xf32>
    %784 = arith.negf %783 : vector<8x128xf32>
    %785 = math.exp %784 : vector<8x128xf32>
    %cst_282 = arith.constant 1.000000e+00 : f32
    %786 = vector.broadcast %cst_282 : f32 to vector<8x128xf32>
    %787 = arith.addf %786, %785 : vector<8x128xf32>
    %788 = arith.divf %786, %787 : vector<8x128xf32>
    %789 = vector.extract_strided_slice %776 {offsets = [0, 256], sizes = [8, 128], strides = [1, 1]} : vector<8x512xf32> to vector<8x128xf32>
    %790 = math.tanh %789 : vector<8x128xf32>
    %791 = vector.extract_strided_slice %776 {offsets = [0, 384], sizes = [8, 128], strides = [1, 1]} : vector<8x512xf32> to vector<8x128xf32>
    %792 = arith.negf %791 : vector<8x128xf32>
    %793 = math.exp %792 : vector<8x128xf32>
    %cst_283 = arith.constant 1.000000e+00 : f32
    %794 = vector.broadcast %cst_283 : f32 to vector<8x128xf32>
    %795 = arith.addf %794, %793 : vector<8x128xf32>
    %796 = arith.divf %794, %795 : vector<8x128xf32>
    %797 = arith.mulf %788, %773 : vector<8x128xf32>
    %798 = arith.mulf %782, %790 : vector<8x128xf32>
    %799 = arith.addf %797, %798 : vector<8x128xf32>
    %800 = math.tanh %799 : vector<8x128xf32>
    %801 = arith.mulf %796, %800 : vector<8x128xf32>
    %cst_284 = arith.constant dense<0.000000e+00> : vector<8x512xf32>
    %802 = tpu.matmul %801, %769, %cst_284 {dimension_numbers = #tpu.dot_dimension_numbers<[1], [0], [0], [1], [0, 0, 1, 1], [], []>} : vector<8x128xf32>, vector<128x512xf32>, vector<8x512xf32> -> vector<8x512xf32>
    %c8_285 = arith.constant 8 : index
    %c0_286 = arith.constant 0 : index
    %803 = vector.load %arg12[%c8_285, %c0_286] : memref<64x512xf32, #tpu.memory_space<vmem>>, vector<8x512xf32>
    %804 = arith.addf %802, %803 : vector<8x512xf32>
    %805 = vector.extract_strided_slice %804 {offsets = [0, 0], sizes = [8, 128], strides = [1, 1]} : vector<8x512xf32> to vector<8x128xf32>
    %806 = arith.negf %805 : vector<8x128xf32>
    %807 = math.exp %806 : vector<8x128xf32>
    %cst_287 = arith.constant 1.000000e+00 : f32
    %808 = vector.broadcast %cst_287 : f32 to vector<8x128xf32>
    %809 = arith.addf %808, %807 : vector<8x128xf32>
    %810 = arith.divf %808, %809 : vector<8x128xf32>
    %811 = vector.extract_strided_slice %804 {offsets = [0, 128], sizes = [8, 128], strides = [1, 1]} : vector<8x512xf32> to vector<8x128xf32>
    %812 = arith.negf %811 : vector<8x128xf32>
    %813 = math.exp %812 : vector<8x128xf32>
    %cst_288 = arith.constant 1.000000e+00 : f32
    %814 = vector.broadcast %cst_288 : f32 to vector<8x128xf32>
    %815 = arith.addf %814, %813 : vector<8x128xf32>
    %816 = arith.divf %814, %815 : vector<8x128xf32>
    %817 = vector.extract_strided_slice %804 {offsets = [0, 256], sizes = [8, 128], strides = [1, 1]} : vector<8x512xf32> to vector<8x128xf32>
    %818 = math.tanh %817 : vector<8x128xf32>
    %819 = vector.extract_strided_slice %804 {offsets = [0, 384], sizes = [8, 128], strides = [1, 1]} : vector<8x512xf32> to vector<8x128xf32>
    %820 = arith.negf %819 : vector<8x128xf32>
    %821 = math.exp %820 : vector<8x128xf32>
    %cst_289 = arith.constant 1.000000e+00 : f32
    %822 = vector.broadcast %cst_289 : f32 to vector<8x128xf32>
    %823 = arith.addf %822, %821 : vector<8x128xf32>
    %824 = arith.divf %822, %823 : vector<8x128xf32>
    %825 = arith.mulf %816, %799 : vector<8x128xf32>
    %826 = arith.mulf %810, %818 : vector<8x128xf32>
    %827 = arith.addf %825, %826 : vector<8x128xf32>
    %828 = math.tanh %827 : vector<8x128xf32>
    %829 = arith.mulf %824, %828 : vector<8x128xf32>
    %cst_290 = arith.constant dense<0.000000e+00> : vector<8x512xf32>
    %830 = tpu.matmul %829, %769, %cst_290 {dimension_numbers = #tpu.dot_dimension_numbers<[1], [0], [0], [1], [0, 0, 1, 1], [], []>} : vector<8x128xf32>, vector<128x512xf32>, vector<8x512xf32> -> vector<8x512xf32>
    %c16_291 = arith.constant 16 : index
    %c0_292 = arith.constant 0 : index
    %831 = vector.load %arg12[%c16_291, %c0_292] : memref<64x512xf32, #tpu.memory_space<vmem>>, vector<8x512xf32>
    %832 = arith.addf %830, %831 : vector<8x512xf32>
    %833 = vector.extract_strided_slice %832 {offsets = [0, 0], sizes = [8, 128], strides = [1, 1]} : vector<8x512xf32> to vector<8x128xf32>
    %834 = arith.negf %833 : vector<8x128xf32>
    %835 = math.exp %834 : vector<8x128xf32>
    %cst_293 = arith.constant 1.000000e+00 : f32
    %836 = vector.broadcast %cst_293 : f32 to vector<8x128xf32>
    %837 = arith.addf %836, %835 : vector<8x128xf32>
    %838 = arith.divf %836, %837 : vector<8x128xf32>
    %839 = vector.extract_strided_slice %832 {offsets = [0, 128], sizes = [8, 128], strides = [1, 1]} : vector<8x512xf32> to vector<8x128xf32>
    %840 = arith.negf %839 : vector<8x128xf32>
    %841 = math.exp %840 : vector<8x128xf32>
    %cst_294 = arith.constant 1.000000e+00 : f32
    %842 = vector.broadcast %cst_294 : f32 to vector<8x128xf32>
    %843 = arith.addf %842, %841 : vector<8x128xf32>
    %844 = arith.divf %842, %843 : vector<8x128xf32>
    %845 = vector.extract_strided_slice %832 {offsets = [0, 256], sizes = [8, 128], strides = [1, 1]} : vector<8x512xf32> to vector<8x128xf32>
    %846 = math.tanh %845 : vector<8x128xf32>
    %847 = vector.extract_strided_slice %832 {offsets = [0, 384], sizes = [8, 128], strides = [1, 1]} : vector<8x512xf32> to vector<8x128xf32>
    %848 = arith.negf %847 : vector<8x128xf32>
    %849 = math.exp %848 : vector<8x128xf32>
    %cst_295 = arith.constant 1.000000e+00 : f32
    %850 = vector.broadcast %cst_295 : f32 to vector<8x128xf32>
    %851 = arith.addf %850, %849 : vector<8x128xf32>
    %852 = arith.divf %850, %851 : vector<8x128xf32>
    %853 = arith.mulf %844, %827 : vector<8x128xf32>
    %854 = arith.mulf %838, %846 : vector<8x128xf32>
    %855 = arith.addf %853, %854 : vector<8x128xf32>
    %856 = math.tanh %855 : vector<8x128xf32>
    %857 = arith.mulf %852, %856 : vector<8x128xf32>
    %cst_296 = arith.constant dense<0.000000e+00> : vector<8x512xf32>
    %858 = tpu.matmul %857, %769, %cst_296 {dimension_numbers = #tpu.dot_dimension_numbers<[1], [0], [0], [1], [0, 0, 1, 1], [], []>} : vector<8x128xf32>, vector<128x512xf32>, vector<8x512xf32> -> vector<8x512xf32>
    %c24_297 = arith.constant 24 : index
    %c0_298 = arith.constant 0 : index
    %859 = vector.load %arg12[%c24_297, %c0_298] : memref<64x512xf32, #tpu.memory_space<vmem>>, vector<8x512xf32>
    %860 = arith.addf %858, %859 : vector<8x512xf32>
    %861 = vector.extract_strided_slice %860 {offsets = [0, 0], sizes = [8, 128], strides = [1, 1]} : vector<8x512xf32> to vector<8x128xf32>
    %862 = arith.negf %861 : vector<8x128xf32>
    %863 = math.exp %862 : vector<8x128xf32>
    %cst_299 = arith.constant 1.000000e+00 : f32
    %864 = vector.broadcast %cst_299 : f32 to vector<8x128xf32>
    %865 = arith.addf %864, %863 : vector<8x128xf32>
    %866 = arith.divf %864, %865 : vector<8x128xf32>
    %867 = vector.extract_strided_slice %860 {offsets = [0, 128], sizes = [8, 128], strides = [1, 1]} : vector<8x512xf32> to vector<8x128xf32>
    %868 = arith.negf %867 : vector<8x128xf32>
    %869 = math.exp %868 : vector<8x128xf32>
    %cst_300 = arith.constant 1.000000e+00 : f32
    %870 = vector.broadcast %cst_300 : f32 to vector<8x128xf32>
    %871 = arith.addf %870, %869 : vector<8x128xf32>
    %872 = arith.divf %870, %871 : vector<8x128xf32>
    %873 = vector.extract_strided_slice %860 {offsets = [0, 256], sizes = [8, 128], strides = [1, 1]} : vector<8x512xf32> to vector<8x128xf32>
    %874 = math.tanh %873 : vector<8x128xf32>
    %875 = vector.extract_strided_slice %860 {offsets = [0, 384], sizes = [8, 128], strides = [1, 1]} : vector<8x512xf32> to vector<8x128xf32>
    %876 = arith.negf %875 : vector<8x128xf32>
    %877 = math.exp %876 : vector<8x128xf32>
    %cst_301 = arith.constant 1.000000e+00 : f32
    %878 = vector.broadcast %cst_301 : f32 to vector<8x128xf32>
    %879 = arith.addf %878, %877 : vector<8x128xf32>
    %880 = arith.divf %878, %879 : vector<8x128xf32>
    %881 = arith.mulf %872, %855 : vector<8x128xf32>
    %882 = arith.mulf %866, %874 : vector<8x128xf32>
    %883 = arith.addf %881, %882 : vector<8x128xf32>
    %884 = math.tanh %883 : vector<8x128xf32>
    %885 = arith.mulf %880, %884 : vector<8x128xf32>
    %cst_302 = arith.constant dense<0.000000e+00> : vector<8x512xf32>
    %886 = tpu.matmul %885, %769, %cst_302 {dimension_numbers = #tpu.dot_dimension_numbers<[1], [0], [0], [1], [0, 0, 1, 1], [], []>} : vector<8x128xf32>, vector<128x512xf32>, vector<8x512xf32> -> vector<8x512xf32>
    %c32_303 = arith.constant 32 : index
    %c0_304 = arith.constant 0 : index
    %887 = vector.load %arg12[%c32_303, %c0_304] : memref<64x512xf32, #tpu.memory_space<vmem>>, vector<8x512xf32>
    %888 = arith.addf %886, %887 : vector<8x512xf32>
    %889 = vector.extract_strided_slice %888 {offsets = [0, 0], sizes = [8, 128], strides = [1, 1]} : vector<8x512xf32> to vector<8x128xf32>
    %890 = arith.negf %889 : vector<8x128xf32>
    %891 = math.exp %890 : vector<8x128xf32>
    %cst_305 = arith.constant 1.000000e+00 : f32
    %892 = vector.broadcast %cst_305 : f32 to vector<8x128xf32>
    %893 = arith.addf %892, %891 : vector<8x128xf32>
    %894 = arith.divf %892, %893 : vector<8x128xf32>
    %895 = vector.extract_strided_slice %888 {offsets = [0, 128], sizes = [8, 128], strides = [1, 1]} : vector<8x512xf32> to vector<8x128xf32>
    %896 = arith.negf %895 : vector<8x128xf32>
    %897 = math.exp %896 : vector<8x128xf32>
    %cst_306 = arith.constant 1.000000e+00 : f32
    %898 = vector.broadcast %cst_306 : f32 to vector<8x128xf32>
    %899 = arith.addf %898, %897 : vector<8x128xf32>
    %900 = arith.divf %898, %899 : vector<8x128xf32>
    %901 = vector.extract_strided_slice %888 {offsets = [0, 256], sizes = [8, 128], strides = [1, 1]} : vector<8x512xf32> to vector<8x128xf32>
    %902 = math.tanh %901 : vector<8x128xf32>
    %903 = vector.extract_strided_slice %888 {offsets = [0, 384], sizes = [8, 128], strides = [1, 1]} : vector<8x512xf32> to vector<8x128xf32>
    %904 = arith.negf %903 : vector<8x128xf32>
    %905 = math.exp %904 : vector<8x128xf32>
    %cst_307 = arith.constant 1.000000e+00 : f32
    %906 = vector.broadcast %cst_307 : f32 to vector<8x128xf32>
    %907 = arith.addf %906, %905 : vector<8x128xf32>
    %908 = arith.divf %906, %907 : vector<8x128xf32>
    %909 = arith.mulf %900, %883 : vector<8x128xf32>
    %910 = arith.mulf %894, %902 : vector<8x128xf32>
    %911 = arith.addf %909, %910 : vector<8x128xf32>
    %912 = math.tanh %911 : vector<8x128xf32>
    %913 = arith.mulf %908, %912 : vector<8x128xf32>
    %cst_308 = arith.constant dense<0.000000e+00> : vector<8x512xf32>
    %914 = tpu.matmul %913, %769, %cst_308 {dimension_numbers = #tpu.dot_dimension_numbers<[1], [0], [0], [1], [0, 0, 1, 1], [], []>} : vector<8x128xf32>, vector<128x512xf32>, vector<8x512xf32> -> vector<8x512xf32>
    %c40_309 = arith.constant 40 : index
    %c0_310 = arith.constant 0 : index
    %915 = vector.load %arg12[%c40_309, %c0_310] : memref<64x512xf32, #tpu.memory_space<vmem>>, vector<8x512xf32>
    %916 = arith.addf %914, %915 : vector<8x512xf32>
    %917 = vector.extract_strided_slice %916 {offsets = [0, 0], sizes = [8, 128], strides = [1, 1]} : vector<8x512xf32> to vector<8x128xf32>
    %918 = arith.negf %917 : vector<8x128xf32>
    %919 = math.exp %918 : vector<8x128xf32>
    %cst_311 = arith.constant 1.000000e+00 : f32
    %920 = vector.broadcast %cst_311 : f32 to vector<8x128xf32>
    %921 = arith.addf %920, %919 : vector<8x128xf32>
    %922 = arith.divf %920, %921 : vector<8x128xf32>
    %923 = vector.extract_strided_slice %916 {offsets = [0, 128], sizes = [8, 128], strides = [1, 1]} : vector<8x512xf32> to vector<8x128xf32>
    %924 = arith.negf %923 : vector<8x128xf32>
    %925 = math.exp %924 : vector<8x128xf32>
    %cst_312 = arith.constant 1.000000e+00 : f32
    %926 = vector.broadcast %cst_312 : f32 to vector<8x128xf32>
    %927 = arith.addf %926, %925 : vector<8x128xf32>
    %928 = arith.divf %926, %927 : vector<8x128xf32>
    %929 = vector.extract_strided_slice %916 {offsets = [0, 256], sizes = [8, 128], strides = [1, 1]} : vector<8x512xf32> to vector<8x128xf32>
    %930 = math.tanh %929 : vector<8x128xf32>
    %931 = vector.extract_strided_slice %916 {offsets = [0, 384], sizes = [8, 128], strides = [1, 1]} : vector<8x512xf32> to vector<8x128xf32>
    %932 = arith.negf %931 : vector<8x128xf32>
    %933 = math.exp %932 : vector<8x128xf32>
    %cst_313 = arith.constant 1.000000e+00 : f32
    %934 = vector.broadcast %cst_313 : f32 to vector<8x128xf32>
    %935 = arith.addf %934, %933 : vector<8x128xf32>
    %936 = arith.divf %934, %935 : vector<8x128xf32>
    %937 = arith.mulf %928, %911 : vector<8x128xf32>
    %938 = arith.mulf %922, %930 : vector<8x128xf32>
    %939 = arith.addf %937, %938 : vector<8x128xf32>
    %940 = math.tanh %939 : vector<8x128xf32>
    %941 = arith.mulf %936, %940 : vector<8x128xf32>
    %cst_314 = arith.constant dense<0.000000e+00> : vector<8x512xf32>
    %942 = tpu.matmul %941, %769, %cst_314 {dimension_numbers = #tpu.dot_dimension_numbers<[1], [0], [0], [1], [0, 0, 1, 1], [], []>} : vector<8x128xf32>, vector<128x512xf32>, vector<8x512xf32> -> vector<8x512xf32>
    %c48_315 = arith.constant 48 : index
    %c0_316 = arith.constant 0 : index
    %943 = vector.load %arg12[%c48_315, %c0_316] : memref<64x512xf32, #tpu.memory_space<vmem>>, vector<8x512xf32>
    %944 = arith.addf %942, %943 : vector<8x512xf32>
    %945 = vector.extract_strided_slice %944 {offsets = [0, 0], sizes = [8, 128], strides = [1, 1]} : vector<8x512xf32> to vector<8x128xf32>
    %946 = arith.negf %945 : vector<8x128xf32>
    %947 = math.exp %946 : vector<8x128xf32>
    %cst_317 = arith.constant 1.000000e+00 : f32
    %948 = vector.broadcast %cst_317 : f32 to vector<8x128xf32>
    %949 = arith.addf %948, %947 : vector<8x128xf32>
    %950 = arith.divf %948, %949 : vector<8x128xf32>
    %951 = vector.extract_strided_slice %944 {offsets = [0, 128], sizes = [8, 128], strides = [1, 1]} : vector<8x512xf32> to vector<8x128xf32>
    %952 = arith.negf %951 : vector<8x128xf32>
    %953 = math.exp %952 : vector<8x128xf32>
    %cst_318 = arith.constant 1.000000e+00 : f32
    %954 = vector.broadcast %cst_318 : f32 to vector<8x128xf32>
    %955 = arith.addf %954, %953 : vector<8x128xf32>
    %956 = arith.divf %954, %955 : vector<8x128xf32>
    %957 = vector.extract_strided_slice %944 {offsets = [0, 256], sizes = [8, 128], strides = [1, 1]} : vector<8x512xf32> to vector<8x128xf32>
    %958 = math.tanh %957 : vector<8x128xf32>
    %959 = vector.extract_strided_slice %944 {offsets = [0, 384], sizes = [8, 128], strides = [1, 1]} : vector<8x512xf32> to vector<8x128xf32>
    %960 = arith.negf %959 : vector<8x128xf32>
    %961 = math.exp %960 : vector<8x128xf32>
    %cst_319 = arith.constant 1.000000e+00 : f32
    %962 = vector.broadcast %cst_319 : f32 to vector<8x128xf32>
    %963 = arith.addf %962, %961 : vector<8x128xf32>
    %964 = arith.divf %962, %963 : vector<8x128xf32>
    %965 = arith.mulf %956, %939 : vector<8x128xf32>
    %966 = arith.mulf %950, %958 : vector<8x128xf32>
    %967 = arith.addf %965, %966 : vector<8x128xf32>
    %968 = math.tanh %967 : vector<8x128xf32>
    %969 = arith.mulf %964, %968 : vector<8x128xf32>
    %cst_320 = arith.constant dense<0.000000e+00> : vector<8x512xf32>
    %970 = tpu.matmul %969, %769, %cst_320 {dimension_numbers = #tpu.dot_dimension_numbers<[1], [0], [0], [1], [0, 0, 1, 1], [], []>} : vector<8x128xf32>, vector<128x512xf32>, vector<8x512xf32> -> vector<8x512xf32>
    %c56_321 = arith.constant 56 : index
    %c0_322 = arith.constant 0 : index
    %971 = vector.load %arg12[%c56_321, %c0_322] : memref<64x512xf32, #tpu.memory_space<vmem>>, vector<8x512xf32>
    %972 = arith.addf %970, %971 : vector<8x512xf32>
    %973 = vector.extract_strided_slice %972 {offsets = [0, 0], sizes = [8, 128], strides = [1, 1]} : vector<8x512xf32> to vector<8x128xf32>
    %974 = arith.negf %973 : vector<8x128xf32>
    %975 = math.exp %974 : vector<8x128xf32>
    %cst_323 = arith.constant 1.000000e+00 : f32
    %976 = vector.broadcast %cst_323 : f32 to vector<8x128xf32>
    %977 = arith.addf %976, %975 : vector<8x128xf32>
    %978 = arith.divf %976, %977 : vector<8x128xf32>
    %979 = vector.extract_strided_slice %972 {offsets = [0, 128], sizes = [8, 128], strides = [1, 1]} : vector<8x512xf32> to vector<8x128xf32>
    %980 = arith.negf %979 : vector<8x128xf32>
    %981 = math.exp %980 : vector<8x128xf32>
    %cst_324 = arith.constant 1.000000e+00 : f32
    %982 = vector.broadcast %cst_324 : f32 to vector<8x128xf32>
    %983 = arith.addf %982, %981 : vector<8x128xf32>
    %984 = arith.divf %982, %983 : vector<8x128xf32>
    %985 = vector.extract_strided_slice %972 {offsets = [0, 256], sizes = [8, 128], strides = [1, 1]} : vector<8x512xf32> to vector<8x128xf32>
    %986 = math.tanh %985 : vector<8x128xf32>
    %987 = vector.extract_strided_slice %972 {offsets = [0, 384], sizes = [8, 128], strides = [1, 1]} : vector<8x512xf32> to vector<8x128xf32>
    %988 = arith.negf %987 : vector<8x128xf32>
    %989 = math.exp %988 : vector<8x128xf32>
    %cst_325 = arith.constant 1.000000e+00 : f32
    %990 = vector.broadcast %cst_325 : f32 to vector<8x128xf32>
    %991 = arith.addf %990, %989 : vector<8x128xf32>
    %992 = arith.divf %990, %991 : vector<8x128xf32>
    %993 = arith.mulf %984, %967 : vector<8x128xf32>
    %994 = arith.mulf %978, %986 : vector<8x128xf32>
    %995 = arith.addf %993, %994 : vector<8x128xf32>
    %996 = math.tanh %995 : vector<8x128xf32>
    %997 = arith.mulf %992, %996 : vector<8x128xf32>
    %c3_326 = arith.constant 3 : index
    %c0_327 = arith.constant 0 : index
    %c0_328 = arith.constant 0 : index
    %998 = vector.load %arg9[%c3_326, %c0_327, %c0_328] : memref<4x8x128xf32, #tpu.memory_space<vmem>>, vector<1x8x128xf32>
    %999 = vector.shape_cast %998 : vector<1x8x128xf32> to vector<8x128xf32>
    %1000 = vector.shape_cast %997 : vector<8x128xf32> to vector<1x8x128xf32>
    tpu.vector_store %arg9[%c3_326, %c0_327, %c0_328], %1000 {strides = array<i32>} : memref<4x8x128xf32, #tpu.memory_space<vmem>>, vector<1x8x128xf32>,
    %c3_329 = arith.constant 3 : index
    %c0_330 = arith.constant 0 : index
    %c0_331 = arith.constant 0 : index
    %1001 = vector.load %arg10[%c3_329, %c0_330, %c0_331] : memref<4x8x128xf32, #tpu.memory_space<vmem>>, vector<1x8x128xf32>
    %1002 = vector.shape_cast %1001 : vector<1x8x128xf32> to vector<8x128xf32>
    %1003 = vector.shape_cast %995 : vector<8x128xf32> to vector<1x8x128xf32>
    tpu.vector_store %arg10[%c3_329, %c0_330, %c0_331], %1003 {strides = array<i32>} : memref<4x8x128xf32, #tpu.memory_space<vmem>>, vector<1x8x128xf32>,
    %c0_332 = arith.constant 0 : index
    %c0_333 = arith.constant 0 : index
    %c0_334 = arith.constant 0 : index
    %1004 = vector.load %arg6[%c0_332, %c0_333, %c0_334] : memref<2x128x128xf32, #tpu.memory_space<vmem>>, vector<1x128x128xf32>
    %1005 = vector.shape_cast %1004 : vector<1x128x128xf32> to vector<128x128xf32>
    %cst_335 = arith.constant dense<0.000000e+00> : vector<8x128xf32>
    %1006 = tpu.matmul %997, %1005, %cst_335 {dimension_numbers = #tpu.dot_dimension_numbers<[1], [0], [0], [1], [0, 0, 1, 1], [], []>} : vector<8x128xf32>, vector<128x128xf32>, vector<8x128xf32> -> vector<8x128xf32>
    %c0_336 = arith.constant 0 : index
    %c0_337 = arith.constant 0 : index
    %c0_338 = arith.constant 0 : index
    %1007 = vector.load %arg7[%c0_336, %c0_337, %c0_338] : memref<2x1x128xf32, #tpu.memory_space<vmem>>, vector<1x1x128xf32>
    %1008 = vector.shape_cast %1007 : vector<1x1x128xf32> to vector<1x128xf32>
    %1009 = vector.broadcast %1008 : vector<1x128xf32> to vector<8x128xf32>
    %1010 = arith.addf %1006, %1009 : vector<8x128xf32>
    %c1_339 = arith.constant 1 : index
    %c0_340 = arith.constant 0 : index
    %c0_341 = arith.constant 0 : index
    %1011 = vector.load %arg6[%c1_339, %c0_340, %c0_341] : memref<2x128x128xf32, #tpu.memory_space<vmem>>, vector<1x128x128xf32>
    %1012 = vector.shape_cast %1011 : vector<1x128x128xf32> to vector<128x128xf32>
    %cst_342 = arith.constant dense<0.000000e+00> : vector<8x128xf32>
    %1013 = tpu.matmul %1010, %1012, %cst_342 {dimension_numbers = #tpu.dot_dimension_numbers<[1], [0], [0], [1], [0, 0, 1, 1], [], []>} : vector<8x128xf32>, vector<128x128xf32>, vector<8x128xf32> -> vector<8x128xf32>
    %c1_343 = arith.constant 1 : index
    %c0_344 = arith.constant 0 : index
    %c0_345 = arith.constant 0 : index
    %1014 = vector.load %arg7[%c1_343, %c0_344, %c0_345] : memref<2x1x128xf32, #tpu.memory_space<vmem>>, vector<1x1x128xf32>
    %1015 = vector.shape_cast %1014 : vector<1x1x128xf32> to vector<1x128xf32>
    %1016 = vector.broadcast %1015 : vector<1x128xf32> to vector<8x128xf32>
    %1017 = arith.addf %1013, %1016 : vector<8x128xf32>
    %1018 = arith.negf %1017 : vector<8x128xf32>
    %1019 = math.exp %1018 : vector<8x128xf32>
    %cst_346 = arith.constant 1.000000e+00 : f32
    %1020 = vector.broadcast %cst_346 : f32 to vector<8x128xf32>
    %1021 = arith.addf %1020, %1019 : vector<8x128xf32>
    %1022 = arith.divf %1020, %1021 : vector<8x128xf32>
    %c0_347 = arith.constant 0 : index
    %c0_348 = arith.constant 0 : index
    %1023 = vector.load %arg8[%c0_347, %c0_348] : memref<8x128xf32, #tpu.memory_space<vmem>>, vector<8x128xf32>
    tpu.vector_store %arg8[%c0_347, %c0_348], %1022 {strides = array<i32>} : memref<8x128xf32, #tpu.memory_space<vmem>>, vector<8x128xf32>,
    return
  }
}

</mosaic_0001>

<llo_original>
// kernel: sentiment_forward.1
$region0: #{sentiment_forward.1}
  #allocation0 [shape = 'u32[]', space=smem, size = 0x4, offset = 0x4, fixed_abs, tag = 'smem constant byte address 0x4 - core index']
  #allocation1 [shape = 'u32[72,128]{1,0:T(1,128)}', space=vmem, size = 0x9000, scoped, tag = 'internal scratch']
  #allocation2 [shape = 'f32[64,128]{1,0:T(8,128)}', space=vmem, size = 0x8000, scoped, tag = 'scratch operand']
  #allocation3 [shape = 'f32[64,512]{1,0:T(8,128)}', space=vmem, size = 0x20000, scoped, tag = 'scratch operand']
  %s0 = inlined_call_operand.vmem [shape: f32[64,128], index: 0, kind: input, shape index: {}]
  %s1 = inlined_call_operand.vmem [shape: f32[4,8,128], index: 1, kind: input, shape index: {}]
  %s2 = inlined_call_operand.vmem [shape: f32[4,8,128], index: 2, kind: input, shape index: {}]
  %s3 = inlined_call_operand.hbm [shape: f32[4,128,512], index: 3, kind: input, shape index: {}]
  %s4 = inlined_call_operand.hbm [shape: f32[4,128,512], index: 4, kind: input, shape index: {}]
  %s5 = inlined_call_operand.vmem [shape: f32[4,1,512], index: 5, kind: input, shape index: {}]
  %s6 = inlined_call_operand.vmem [shape: f32[2,128,128], index: 6, kind: input, shape index: {}]
  %s7 = inlined_call_operand.vmem [shape: f32[2,1,128], index: 7, kind: input, shape index: {}]
  %s8 = inlined_call_operand.vmem [shape: f32[8,128], index: 8, kind: output, shape index: {0}]
  %s9 = inlined_call_operand.vmem [shape: f32[4,8,128], index: 9, kind: output, shape index: {1}]
  %s10 = inlined_call_operand.vmem [shape: f32[4,8,128], index: 10, kind: output, shape index: {2}]
  %11 = xla_tuple %s8, %s9, %s10
  %s12 = sld [smem:[#allocation0]]
  $region66: #{sentiment_forward.1} parent=0
    _
  %s14 = ssub.s32 1, %s12
  %s15 = scalar_select 0, %s14, %s12
  $region1: #{sentiment_forward.1} parent=0
    #allocation4 [shape = 'u8[1048576]{0}', space=vmem, size = 0x100000, scoped, tag = 'input window, operand 3, single buffered']
    #allocation5 [shape = 's32[1]{0}', space=sflag, size = 0x4, scoped, tag = 'scoped memory for sentiment_forward.1']
    #allocation6 [shape = 'u8[1048576]{0}', space=vmem, size = 0x100000, scoped, tag = 'input window, operand 4, single buffered']
    #allocation7 [shape = 's32[1]{0}', space=sflag, size = 0x4, scoped, tag = 'scoped memory for sentiment_forward.1']
    %16 = vsyncpa [#allocation5], 0
    %17 = vsyncpa [#allocation7], 0
    // Predicated region
    $region2: #{sentiment_forward.1} parent=1 // pred_check
      _
    $region3: #{sentiment_forward.1} parent=1 // pred_check_branch
      %19 = sbr.rel (0) target = $region5
    $region4: #{sentiment_forward.1} parent=1 // pred_region
      _
    $region5: #{sentiment_forward.1} parent=1 // pred_fallthru
      _
    // Predicated region
    $region6: #{sentiment_forward.1} parent=1 // pred_check
      _
    $region7: #{sentiment_forward.1} parent=1 // pred_check_branch
      %21 = sbr.rel (0) target = $region9
    $region8: #{sentiment_forward.1} parent=1 // pred_region
      _
    $region9: #{sentiment_forward.1} parent=1 // pred_fallthru
      _
    // Predicated region
    $region10: #{sentiment_forward.1} parent=1 // pred_check
      _
    $region11: #{sentiment_forward.1} parent=1 // pred_check_branch
      %23 = sbr.rel (0) target = $region13
    $region12: #{sentiment_forward.1} parent=1 // pred_region
      _
    $region13: #{sentiment_forward.1} parent=1 // pred_fallthru
      _
    // Predicated region
    $region14: #{sentiment_forward.1} parent=1 // pred_check
      _
    $region15: #{sentiment_forward.1} parent=1 // pred_check_branch
      %25 = sbr.rel (0) target = $region17
    $region16: #{sentiment_forward.1} parent=1 // pred_region
      %27 = vsyncadd [#allocation5], 0
      %s28 = sshll.u32 %s3, 4
      %s29 = int_to_ptr.hbm [resolvable:$true] %s28
      %s30 = sshll.u32 [#allocation4], 4
      %s31 = int_to_ptr.vmem [resolvable:$true] %s30
      %36 = dma.hbm_to_vmem [thread:$0]  %s29, 32768, %s31, [#allocation5], 512, 512, 32
    $region17: #{sentiment_forward.1} parent=1 // pred_fallthru
      _
    // Predicated region
    $region18: #{sentiment_forward.1} parent=1 // pred_check
      _
    $region19: #{sentiment_forward.1} parent=1 // pred_check_branch
      %38 = sbr.rel (0) target = $region21
    $region20: #{sentiment_forward.1} parent=1 // pred_region
      %40 = vsyncadd [#allocation7], 0
      %s41 = sshll.u32 %s4, 4
      %s42 = int_to_ptr.hbm [resolvable:$true] %s41
      %s43 = sshll.u32 [#allocation6], 4
      %s44 = int_to_ptr.vmem [resolvable:$true] %s43
      %49 = dma.hbm_to_vmem [thread:$0]  %s42, 32768, %s44, [#allocation7], 512, 512, 32
    $region21: #{sentiment_forward.1} parent=1 // pred_fallthru
      _
    // Predicated region
    $region22: #{sentiment_forward.1} parent=1 // pred_check
      _
    $region23: #{sentiment_forward.1} parent=1 // pred_check_branch
      %51 = sbr.rel (0) target = $region25
    $region24: #{sentiment_forward.1} parent=1 // pred_region
      _
    $region25: #{sentiment_forward.1} parent=1 // pred_fallthru
      _
    // Predicated region
    $region26: #{sentiment_forward.1} parent=1 // pred_check
      _
    $region27: #{sentiment_forward.1} parent=1 // pred_check_branch
      %53 = sbr.rel (0) target = $region29
    $region28: #{sentiment_forward.1} parent=1 // pred_region
      _
    $region29: #{sentiment_forward.1} parent=1 // pred_fallthru
      _
    // Predicated region
    $region30: #{sentiment_forward.1} parent=1 // pred_check
      _
    $region31: #{sentiment_forward.1} parent=1 // pred_check_branch
      %55 = sbr.rel (0) target = $region33
    $region32: #{sentiment_forward.1} parent=1 // pred_region
      _
    $region33: #{sentiment_forward.1} parent=1 // pred_fallthru
      _
    // Predicated region
    $region34: #{sentiment_forward.1} parent=1 // pred_check
      _
    $region35: #{sentiment_forward.1} parent=1 // pred_check_branch
      %57 = sbr.rel (0) target = $region37
    $region36: #{sentiment_forward.1} parent=1 // pred_region
      %59 = dma.done [#allocation5], 32768
    $region37: #{sentiment_forward.1} parent=1 // pred_fallthru
      _
    // Predicated region
    $region38: #{sentiment_forward.1} parent=1 // pred_check
      _
    $region39: #{sentiment_forward.1} parent=1 // pred_check_branch
      %61 = sbr.rel (0) target = $region41
    $region40: #{sentiment_forward.1} parent=1 // pred_region
      %63 = dma.done [#allocation7], 32768
    $region41: #{sentiment_forward.1} parent=1 // pred_fallthru
      _
    %v64 = vld [vmem:[%s0] sm:$0xff]
    %v65 = vld [vmem:[%s0 + $0x8] sm:$0xff]
    %v66 = vld [vmem:[%s0 + $0x10] sm:$0xff]
    %v67 = vld [vmem:[%s0 + $0x18] sm:$0xff]
    %v68 = vld [vmem:[%s0 + $0x20] sm:$0xff]
    %v69 = vld [vmem:[%s0 + $0x28] sm:$0xff]
    %v70 = vld [vmem:[%s0 + $0x30] sm:$0xff]
    %v71 = vld [vmem:[%s0 + $0x38] sm:$0xff]
    %v72 = vld [vmem:[#allocation4] sm:$0xff]
    %v73 = vld [vmem:[#allocation4 + $0x8] sm:$0xff]
    %v74 = vld [vmem:[#allocation4 + $0x10] sm:$0xff]
    %v75 = vld [vmem:[#allocation4 + $0x18] sm:$0xff]
    %v76 = vld [vmem:[#allocation4 + $0x20] sm:$0xff]
    %v77 = vld [vmem:[#allocation4 + $0x28] sm:$0xff]
    %v78 = vld [vmem:[#allocation4 + $0x30] sm:$0xff]
    %v79 = vld [vmem:[#allocation4 + $0x38] sm:$0xff]
    %v80 = vld [vmem:[#allocation4 + $0x40] sm:$0xff]
    %v81 = vld [vmem:[#allocation4 + $0x48] sm:$0xff]
    %v82 = vld [vmem:[#allocation4 + $0x50] sm:$0xff]
    %v83 = vld [vmem:[#allocation4 + $0x58] sm:$0xff]
    %v84 = vld [vmem:[#allocation4 + $0x60] sm:$0xff]
    %v85 = vld [vmem:[#allocation4 + $0x68] sm:$0xff]
    %v86 = vld [vmem:[#allocation4 + $0x70] sm:$0xff]
    %v87 = vld [vmem:[#allocation4 + $0x78] sm:$0xff]
    %v88 = vld [vmem:[#allocation4 + $0x80] sm:$0xff]
    %v89 = vld [vmem:[#allocation4 + $0x88] sm:$0xff]
    %v90 = vld [vmem:[#allocation4 + $0x90] sm:$0xff]
    %v91 = vld [vmem:[#allocation4 + $0x98] sm:$0xff]
    %v92 = vld [vmem:[#allocation4 + $0xa0] sm:$0xff]
    %v93 = vld [vmem:[#allocation4 + $0xa8] sm:$0xff]
    %v94 = vld [vmem:[#allocation4 + $0xb0] sm:$0xff]
    %v95 = vld [vmem:[#allocation4 + $0xb8] sm:$0xff]
    %v96 = vld [vmem:[#allocation4 + $0xc0] sm:$0xff]
    %v97 = vld [vmem:[#allocation4 + $0xc8] sm:$0xff]
    %v98 = vld [vmem:[#allocation4 + $0xd0] sm:$0xff]
    %v99 = vld [vmem:[#allocation4 + $0xd8] sm:$0xff]
    %v100 = vld [vmem:[#allocation4 + $0xe0] sm:$0xff]
    %v101 = vld [vmem:[#allocation4 + $0xe8] sm:$0xff]
    %v102 = vld [vmem:[#allocation4 + $0xf0] sm:$0xff]
    %v103 = vld [vmem:[#allocation4 + $0xf8] sm:$0xff]
    %v104 = vld [vmem:[#allocation4 + $0x100] sm:$0xff]
    %v105 = vld [vmem:[#allocation4 + $0x108] sm:$0xff]
    %v106 = vld [vmem:[#allocation4 + $0x110] sm:$0xff]
    %v107 = vld [vmem:[#allocation4 + $0x118] sm:$0xff]
    %v108 = vld [vmem:[#allocation4 + $0x120] sm:$0xff]
    %v109 = vld [vmem:[#allocation4 + $0x128] sm:$0xff]
    %v110 = vld [vmem:[#allocation4 + $0x130] sm:$0xff]
    %v111 = vld [vmem:[#allocation4 + $0x138] sm:$0xff]
    %v112 = vld [vmem:[#allocation4 + $0x140] sm:$0xff]
    %v113 = vld [vmem:[#allocation4 + $0x148] sm:$0xff]
    %v114 = vld [vmem:[#allocation4 + $0x150] sm:$0xff]
    %v115 = vld [vmem:[#allocation4 + $0x158] sm:$0xff]
    %v116 = vld [vmem:[#allocation4 + $0x160] sm:$0xff]
    %v117 = vld [vmem:[#allocation4 + $0x168] sm:$0xff]
    %v118 = vld [vmem:[#allocation4 + $0x170] sm:$0xff]
    %v119 = vld [vmem:[#allocation4 + $0x178] sm:$0xff]
    %v120 = vld [vmem:[#allocation4 + $0x180] sm:$0xff]
    %v121 = vld [vmem:[#allocation4 + $0x188] sm:$0xff]
    %v122 = vld [vmem:[#allocation4 + $0x190] sm:$0xff]
    %v123 = vld [vmem:[#allocation4 + $0x198] sm:$0xff]
    %v124 = vld [vmem:[#allocation4 + $0x1a0] sm:$0xff]
    %v125 = vld [vmem:[#allocation4 + $0x1a8] sm:$0xff]
    %v126 = vld [vmem:[#allocation4 + $0x1b0] sm:$0xff]
    %v127 = vld [vmem:[#allocation4 + $0x1b8] sm:$0xff]
    %v128 = vld [vmem:[#allocation4 + $0x1c0] sm:$0xff]
    %v129 = vld [vmem:[#allocation4 + $0x1c8] sm:$0xff]
    %v130 = vld [vmem:[#allocation4 + $0x1d0] sm:$0xff]
    %v131 = vld [vmem:[#allocation4 + $0x1d8] sm:$0xff]
    %v132 = vld [vmem:[#allocation4 + $0x1e0] sm:$0xff]
    %v133 = vld [vmem:[#allocation4 + $0x1e8] sm:$0xff]
    %v134 = vld [vmem:[#allocation4 + $0x1f0] sm:$0xff]
    %v135 = vld [vmem:[#allocation4 + $0x1f8] sm:$0xff]
    %v136 = vld [vmem:[%s5] sm:$0xf]
    %v138 = vperm.slane %v136, 0
    %v139 = vperm.slane %v136, 1
    %v140 = vperm.slane %v136, 2
    %v141 = vperm.slane %v136, 3
    %146 = vmatpush.msra.mxu0 %v132
    %147 = vmatpush.msra.mxu0 %v128
    %148 = vmatpush.msra.mxu0 %v124
    %149 = vmatpush.msra.mxu0 %v120
    %150 = vmatpush.msra.mxu0 %v116
    %151 = vmatpush.msra.mxu0 %v112
    %152 = vmatpush.msra.mxu0 %v108
    %153 = vmatpush.msra.mxu0 %v104
    %154 = vmatpush.msra.mxu0 %v100
    %155 = vmatpush.msra.mxu0 %v96
    %156 = vmatpush.msra.mxu0 %v92
    %157 = vmatpush.msra.mxu0 %v88
    %158 = vmatpush.msra.mxu0 %v84
    %159 = vmatpush.msra.mxu0 %v80
    %160 = vmatpush.msra.mxu0 %v76
    %161 = vmatpush.msra.mxu0 %v72
    %162 = vmatmul.f32.gmra.mxu0 %v64
    %v163 = vpop.f32.mrf.mxu0
    %v164 = vadd.f32 %v138, %v163
    %165 = vmatmul.f32.gmra.mxu0 %v65
    %v166 = vpop.f32.mrf.mxu0
    %v167 = vadd.f32 %v138, %v166
    %168 = vmatmul.f32.gmra.mxu0 %v66
    %v169 = vpop.f32.mrf.mxu0
    %v170 = vadd.f32 %v138, %v169
    %171 = vmatmul.f32.gmra.mxu0 %v67
    %v172 = vpop.f32.mrf.mxu0
    %v173 = vadd.f32 %v138, %v172
    %174 = vmatmul.f32.gmra.mxu0 %v68
    %v175 = vpop.f32.mrf.mxu0
    %v176 = vadd.f32 %v138, %v175
    %177 = vmatmul.f32.gmra.mxu0 %v69
    %v178 = vpop.f32.mrf.mxu0
    %v179 = vadd.f32 %v138, %v178
    %180 = vmatmul.f32.gmra.mxu0 %v70
    %v181 = vpop.f32.mrf.mxu0
    %v182 = vadd.f32 %v138, %v181
    %183 = vmatmul.f32.gmra.mxu0 %v71
    %v184 = vpop.f32.mrf.mxu0
    %v185 = vadd.f32 %v138, %v184
    %186 = vdwg.mxu0
    %187 = vmatpush.msra.mxu0 %v133
    %188 = vmatpush.msra.mxu0 %v129
    %189 = vmatpush.msra.mxu0 %v125
    %190 = vmatpush.msra.mxu0 %v121
    %191 = vmatpush.msra.mxu0 %v117
    %192 = vmatpush.msra.mxu0 %v113
    %193 = vmatpush.msra.mxu0 %v109
    %194 = vmatpush.msra.mxu0 %v105
    %195 = vmatpush.msra.mxu0 %v101
    %196 = vmatpush.msra.mxu0 %v97
    %197 = vmatpush.msra.mxu0 %v93
    %198 = vmatpush.msra.mxu0 %v89
    %199 = vmatpush.msra.mxu0 %v85
    %200 = vmatpush.msra.mxu0 %v81
    %201 = vmatpush.msra.mxu0 %v77
    %202 = vmatpush.msra.mxu0 %v73
    %203 = vmatmul.f32.gmra.mxu0 %v64
    %v204 = vpop.f32.mrf.mxu0
    %v205 = vadd.f32 %v139, %v204
    %206 = vmatmul.f32.gmra.mxu0 %v65
    %v207 = vpop.f32.mrf.mxu0
    %v208 = vadd.f32 %v139, %v207
    %209 = vmatmul.f32.gmra.mxu0 %v66
    %v210 = vpop.f32.mrf.mxu0
    %v211 = vadd.f32 %v139, %v210
    %212 = vmatmul.f32.gmra.mxu0 %v67
    %v213 = vpop.f32.mrf.mxu0
    %v214 = vadd.f32 %v139, %v213
    %215 = vmatmul.f32.gmra.mxu0 %v68
    %v216 = vpop.f32.mrf.mxu0
    %v217 = vadd.f32 %v139, %v216
    %218 = vmatmul.f32.gmra.mxu0 %v69
    %v219 = vpop.f32.mrf.mxu0
    %v220 = vadd.f32 %v139, %v219
    %221 = vmatmul.f32.gmra.mxu0 %v70
    %v222 = vpop.f32.mrf.mxu0
    %v223 = vadd.f32 %v139, %v222
    %224 = vmatmul.f32.gmra.mxu0 %v71
    %v225 = vpop.f32.mrf.mxu0
    %v226 = vadd.f32 %v139, %v225
    %227 = vdwg.mxu0
    %228 = vmatpush.msra.mxu0 %v134
    %229 = vmatpush.msra.mxu0 %v130
    %230 = vmatpush.msra.mxu0 %v126
    %231 = vmatpush.msra.mxu0 %v122
    %232 = vmatpush.msra.mxu0 %v118
    %233 = vmatpush.msra.mxu0 %v114
    %234 = vmatpush.msra.mxu0 %v110
    %235 = vmatpush.msra.mxu0 %v106
    %236 = vmatpush.msra.mxu0 %v102
    %237 = vmatpush.msra.mxu0 %v98
    %238 = vmatpush.msra.mxu0 %v94
    %239 = vmatpush.msra.mxu0 %v90
    %240 = vmatpush.msra.mxu0 %v86
    %241 = vmatpush.msra.mxu0 %v82
    %242 = vmatpush.msra.mxu0 %v78
    %243 = vmatpush.msra.mxu0 %v74
    %244 = vmatmul.f32.gmra.mxu0 %v64
    %v245 = vpop.f32.mrf.mxu0
    %v246 = vadd.f32 %v140, %v245
    %247 = vmatmul.f32.gmra.mxu0 %v65
    %v248 = vpop.f32.mrf.mxu0
    %v249 = vadd.f32 %v140, %v248
    %250 = vmatmul.f32.gmra.mxu0 %v66
    %v251 = vpop.f32.mrf.mxu0
    %v252 = vadd.f32 %v140, %v251
    %253 = vmatmul.f32.gmra.mxu0 %v67
    %v254 = vpop.f32.mrf.mxu0
    %v255 = vadd.f32 %v140, %v254
    %256 = vmatmul.f32.gmra.mxu0 %v68
    %v257 = vpop.f32.mrf.mxu0
    %v258 = vadd.f32 %v140, %v257
    %259 = vmatmul.f32.gmra.mxu0 %v69
    %v260 = vpop.f32.mrf.mxu0
    %v261 = vadd.f32 %v140, %v260
    %262 = vmatmul.f32.gmra.mxu0 %v70
    %v263 = vpop.f32.mrf.mxu0
    %v264 = vadd.f32 %v140, %v263
    %265 = vmatmul.f32.gmra.mxu0 %v71
    %v266 = vpop.f32.mrf.mxu0
    %v267 = vadd.f32 %v140, %v266
    %268 = vdwg.mxu0
    %269 = vmatpush.msra.mxu0 %v135
    %270 = vmatpush.msra.mxu0 %v131
    %271 = vmatpush.msra.mxu0 %v127
    %272 = vmatpush.msra.mxu0 %v123
    %273 = vmatpush.msra.mxu0 %v119
    %274 = vmatpush.msra.mxu0 %v115
    %275 = vmatpush.msra.mxu0 %v111
    %276 = vmatpush.msra.mxu0 %v107
    %277 = vmatpush.msra.mxu0 %v103
    %278 = vmatpush.msra.mxu0 %v99
    %279 = vmatpush.msra.mxu0 %v95
    %280 = vmatpush.msra.mxu0 %v91
    %281 = vmatpush.msra.mxu0 %v87
    %282 = vmatpush.msra.mxu0 %v83
    %283 = vmatpush.msra.mxu0 %v79
    %284 = vmatpush.msra.mxu0 %v75
    %285 = vmatmul.f32.gmra.mxu0 %v64
    %v286 = vpop.f32.mrf.mxu0
    %v287 = vadd.f32 %v141, %v286
    %288 = vmatmul.f32.gmra.mxu0 %v65
    %v289 = vpop.f32.mrf.mxu0
    %v290 = vadd.f32 %v141, %v289
    %291 = vmatmul.f32.gmra.mxu0 %v66
    %v292 = vpop.f32.mrf.mxu0
    %v293 = vadd.f32 %v141, %v292
    %294 = vmatmul.f32.gmra.mxu0 %v67
    %v295 = vpop.f32.mrf.mxu0
    %v296 = vadd.f32 %v141, %v295
    %297 = vmatmul.f32.gmra.mxu0 %v68
    %v298 = vpop.f32.mrf.mxu0
    %v299 = vadd.f32 %v141, %v298
    %300 = vmatmul.f32.gmra.mxu0 %v69
    %v301 = vpop.f32.mrf.mxu0
    %v302 = vadd.f32 %v141, %v301
    %303 = vmatmul.f32.gmra.mxu0 %v70
    %v304 = vpop.f32.mrf.mxu0
    %v305 = vadd.f32 %v141, %v304
    %306 = vmatmul.f32.gmra.mxu0 %v71
    %v307 = vpop.f32.mrf.mxu0
    %v308 = vadd.f32 %v141, %v307
    %309 = vdwg.mxu0
    %310 = vst [vmem:[#allocation3] sm:$0xff] %v164
    %311 = vst [vmem:[#allocation3 + $0x8] sm:$0xff] %v205
    %312 = vst [vmem:[#allocation3 + $0x10] sm:$0xff] %v246
    %313 = vst [vmem:[#allocation3 + $0x18] sm:$0xff] %v287
    %314 = vst [vmem:[#allocation3 + $0x20] sm:$0xff] %v167
    %315 = vst [vmem:[#allocation3 + $0x28] sm:$0xff] %v208
    %316 = vst [vmem:[#allocation3 + $0x30] sm:$0xff] %v249
    %317 = vst [vmem:[#allocation3 + $0x38] sm:$0xff] %v290
    %318 = vst [vmem:[#allocation3 + $0x40] sm:$0xff] %v170
    %319 = vst [vmem:[#allocation3 + $0x48] sm:$0xff] %v211
    %320 = vst [vmem:[#allocation3 + $0x50] sm:$0xff] %v252
    %321 = vst [vmem:[#allocation3 + $0x58] sm:$0xff] %v293
    %322 = vst [vmem:[#allocation3 + $0x60] sm:$0xff] %v173
    %323 = vst [vmem:[#allocation3 + $0x68] sm:$0xff] %v214
    %324 = vst [vmem:[#allocation3 + $0x70] sm:$0xff] %v255
    %325 = vst [vmem:[#allocation3 + $0x78] sm:$0xff] %v296
    %326 = vst [vmem:[#allocation3 + $0x80] sm:$0xff] %v176
    %327 = vst [vmem:[#allocation3 + $0x88] sm:$0xff] %v217
    %328 = vst [vmem:[#allocation3 + $0x90] sm:$0xff] %v258
    %329 = vst [vmem:[#allocation3 + $0x98] sm:$0xff] %v299
    %330 = vst [vmem:[#allocation3 + $0xa0] sm:$0xff] %v179
    %331 = vst [vmem:[#allocation3 + $0xa8] sm:$0xff] %v220
    %332 = vst [vmem:[#allocation3 + $0xb0] sm:$0xff] %v261
    %333 = vst [vmem:[#allocation3 + $0xb8] sm:$0xff] %v302
    %334 = vst [vmem:[#allocation3 + $0xc0] sm:$0xff] %v182
    %335 = vst [vmem:[#allocation3 + $0xc8] sm:$0xff] %v223
    %336 = vst [vmem:[#allocation3 + $0xd0] sm:$0xff] %v264
    %337 = vst [vmem:[#allocation3 + $0xd8] sm:$0xff] %v305
    %338 = vst [vmem:[#allocation3 + $0xe0] sm:$0xff] %v185
    %339 = vst [vmem:[#allocation3 + $0xe8] sm:$0xff] %v226
    %340 = vst [vmem:[#allocation3 + $0xf0] sm:$0xff] %v267
    %341 = vst [vmem:[#allocation3 + $0xf8] sm:$0xff] %v308
    %v342 = vld [vmem:[#allocation6] sm:$0xff]
    %v343 = vld [vmem:[#allocation6 + $0x8] sm:$0xff]
    %v344 = vld [vmem:[#allocation6 + $0x10] sm:$0xff]
    %v345 = vld [vmem:[#allocation6 + $0x18] sm:$0xff]
    %v346 = vld [vmem:[#allocation6 + $0x20] sm:$0xff]
    %v347 = vld [vmem:[#allocation6 + $0x28] sm:$0xff]
    %v348 = vld [vmem:[#allocation6 + $0x30] sm:$0xff]
    %v349 = vld [vmem:[#allocation6 + $0x38] sm:$0xff]
    %v350 = vld [vmem:[#allocation6 + $0x40] sm:$0xff]
    %v351 = vld [vmem:[#allocation6 + $0x48] sm:$0xff]
    %v352 = vld [vmem:[#allocation6 + $0x50] sm:$0xff]
    %v353 = vld [vmem:[#allocation6 + $0x58] sm:$0xff]
    %v354 = vld [vmem:[#allocation6 + $0x60] sm:$0xff]
    %v355 = vld [vmem:[#allocation6 + $0x68] sm:$0xff]
    %v356 = vld [vmem:[#allocation6 + $0x70] sm:$0xff]
    %v357 = vld [vmem:[#allocation6 + $0x78] sm:$0xff]
    %v358 = vld [vmem:[#allocation6 + $0x80] sm:$0xff]
    %v359 = vld [vmem:[#allocation6 + $0x88] sm:$0xff]
    %v360 = vld [vmem:[#allocation6 + $0x90] sm:$0xff]
    %v361 = vld [vmem:[#allocation6 + $0x98] sm:$0xff]
    %v362 = vld [vmem:[#allocation6 + $0xa0] sm:$0xff]
    %v363 = vld [vmem:[#allocation6 + $0xa8] sm:$0xff]
    %v364 = vld [vmem:[#allocation6 + $0xb0] sm:$0xff]
    %v365 = vld [vmem:[#allocation6 + $0xb8] sm:$0xff]
    %v366 = vld [vmem:[#allocation6 + $0xc0] sm:$0xff]
    %v367 = vld [vmem:[#allocation6 + $0xc8] sm:$0xff]
    %v368 = vld [vmem:[#allocation6 + $0xd0] sm:$0xff]
    %v369 = vld [vmem:[#allocation6 + $0xd8] sm:$0xff]
    %v370 = vld [vmem:[#allocation6 + $0xe0] sm:$0xff]
    %v371 = vld [vmem:[#allocation6 + $0xe8] sm:$0xff]
    %v372 = vld [vmem:[#allocation6 + $0xf0] sm:$0xff]
    %v373 = vld [vmem:[#allocation6 + $0xf8] sm:$0xff]
    %v374 = vld [vmem:[#allocation6 + $0x100] sm:$0xff]
    %v375 = vld [vmem:[#allocation6 + $0x108] sm:$0xff]
    %v376 = vld [vmem:[#allocation6 + $0x110] sm:$0xff]
    %v377 = vld [vmem:[#allocation6 + $0x118] sm:$0xff]
    %v378 = vld [vmem:[#allocation6 + $0x120] sm:$0xff]
    %v379 = vld [vmem:[#allocation6 + $0x128] sm:$0xff]
    %v380 = vld [vmem:[#allocation6 + $0x130] sm:$0xff]
    %v381 = vld [vmem:[#allocation6 + $0x138] sm:$0xff]
    %v382 = vld [vmem:[#allocation6 + $0x140] sm:$0xff]
    %v383 = vld [vmem:[#allocation6 + $0x148] sm:$0xff]
    %v384 = vld [vmem:[#allocation6 + $0x150] sm:$0xff]
    %v385 = vld [vmem:[#allocation6 + $0x158] sm:$0xff]
    %v386 = vld [vmem:[#allocation6 + $0x160] sm:$0xff]
    %v387 = vld [vmem:[#allocation6 + $0x168] sm:$0xff]
    %v388 = vld [vmem:[#allocation6 + $0x170] sm:$0xff]
    %v389 = vld [vmem:[#allocation6 + $0x178] sm:$0xff]
    %v390 = vld [vmem:[#allocation6 + $0x180] sm:$0xff]
    %v391 = vld [vmem:[#allocation6 + $0x188] sm:$0xff]
    %v392 = vld [vmem:[#allocation6 + $0x190] sm:$0xff]
    %v393 = vld [vmem:[#allocation6 + $0x198] sm:$0xff]
    %v394 = vld [vmem:[#allocation6 + $0x1a0] sm:$0xff]
    %v395 = vld [vmem:[#allocation6 + $0x1a8] sm:$0xff]
    %v396 = vld [vmem:[#allocation6 + $0x1b0] sm:$0xff]
    %v397 = vld [vmem:[#allocation6 + $0x1b8] sm:$0xff]
    %v398 = vld [vmem:[#allocation6 + $0x1c0] sm:$0xff]
    %v399 = vld [vmem:[#allocation6 + $0x1c8] sm:$0xff]
    %v400 = vld [vmem:[#allocation6 + $0x1d0] sm:$0xff]
    %v401 = vld [vmem:[#allocation6 + $0x1d8] sm:$0xff]
    %v402 = vld [vmem:[#allocation6 + $0x1e0] sm:$0xff]
    %v403 = vld [vmem:[#allocation6 + $0x1e8] sm:$0xff]
    %v404 = vld [vmem:[#allocation6 + $0x1f0] sm:$0xff]
    %v405 = vld [vmem:[#allocation6 + $0x1f8] sm:$0xff]
    %v406 = vld [vmem:[%s1] sm:$0xff]
    %v407 = vld [vmem:[%s2] sm:$0xff]
    %v408 = vld [vmem:[#allocation3] sm:$0xff]
    %v409 = vld [vmem:[#allocation3 + $0x8] sm:$0xff]
    %v410 = vld [vmem:[#allocation3 + $0x10] sm:$0xff]
    %v411 = vld [vmem:[#allocation3 + $0x18] sm:$0xff]
    %412 = vmatpush.msra.mxu0 %v402
    %413 = vmatpush.msra.mxu0 %v398
    %414 = vmatpush.msra.mxu0 %v394
    %415 = vmatpush.msra.mxu0 %v390
    %416 = vmatpush.msra.mxu0 %v386
    %417 = vmatpush.msra.mxu0 %v382
    %418 = vmatpush.msra.mxu0 %v378
    %419 = vmatpush.msra.mxu0 %v374
    %420 = vmatpush.msra.mxu0 %v370
    %421 = vmatpush.msra.mxu0 %v366
    %422 = vmatpush.msra.mxu0 %v362
    %423 = vmatpush.msra.mxu0 %v358
    %424 = vmatpush.msra.mxu0 %v354
    %425 = vmatpush.msra.mxu0 %v350
    %426 = vmatpush.msra.mxu0 %v346
    %427 = vmatpush.msra.mxu0 %v342
    %428 = vmatmul.f32.gmra.mxu0 %v406
    %v429 = vpop.f32.mrf.mxu0
    %v430 = vadd.f32 %v408, %v429
    %431 = vdwg.mxu0
    %432 = vmatpush.msra.mxu0 %v403
    %433 = vmatpush.msra.mxu0 %v399
    %434 = vmatpush.msra.mxu0 %v395
    %435 = vmatpush.msra.mxu0 %v391
    %436 = vmatpush.msra.mxu0 %v387
    %437 = vmatpush.msra.mxu0 %v383
    %438 = vmatpush.msra.mxu0 %v379
    %439 = vmatpush.msra.mxu0 %v375
    %440 = vmatpush.msra.mxu0 %v371
    %441 = vmatpush.msra.mxu0 %v367
    %442 = vmatpush.msra.mxu0 %v363
    %443 = vmatpush.msra.mxu0 %v359
    %444 = vmatpush.msra.mxu0 %v355
    %445 = vmatpush.msra.mxu0 %v351
    %446 = vmatpush.msra.mxu0 %v347
    %447 = vmatpush.msra.mxu0 %v343
    %448 = vmatmul.f32.gmra.mxu0 %v406
    %v449 = vpop.f32.mrf.mxu0
    %v450 = vadd.f32 %v409, %v449
    %451 = vdwg.mxu0
    %452 = vmatpush.msra.mxu0 %v404
    %453 = vmatpush.msra.mxu0 %v400
    %454 = vmatpush.msra.mxu0 %v396
    %455 = vmatpush.msra.mxu0 %v392
    %456 = vmatpush.msra.mxu0 %v388
    %457 = vmatpush.msra.mxu0 %v384
    %458 = vmatpush.msra.mxu0 %v380
    %459 = vmatpush.msra.mxu0 %v376
    %460 = vmatpush.msra.mxu0 %v372
    %461 = vmatpush.msra.mxu0 %v368
    %462 = vmatpush.msra.mxu0 %v364
    %463 = vmatpush.msra.mxu0 %v360
    %464 = vmatpush.msra.mxu0 %v356
    %465 = vmatpush.msra.mxu0 %v352
    %466 = vmatpush.msra.mxu0 %v348
    %467 = vmatpush.msra.mxu0 %v344
    %468 = vmatmul.f32.gmra.mxu0 %v406
    %v469 = vpop.f32.mrf.mxu0
    %v470 = vadd.f32 %v410, %v469
    %471 = vdwg.mxu0
    %472 = vmatpush.msra.mxu0 %v405
    %473 = vmatpush.msra.mxu0 %v401
    %474 = vmatpush.msra.mxu0 %v397
    %475 = vmatpush.msra.mxu0 %v393
    %476 = vmatpush.msra.mxu0 %v389
    %477 = vmatpush.msra.mxu0 %v385
    %478 = vmatpush.msra.mxu0 %v381
    %479 = vmatpush.msra.mxu0 %v377
    %480 = vmatpush.msra.mxu0 %v373
    %481 = vmatpush.msra.mxu0 %v369
    %482 = vmatpush.msra.mxu0 %v365
    %483 = vmatpush.msra.mxu0 %v361
    %484 = vmatpush.msra.mxu0 %v357
    %485 = vmatpush.msra.mxu0 %v353
    %486 = vmatpush.msra.mxu0 %v349
    %487 = vmatpush.msra.mxu0 %v345
    %488 = vmatmul.f32.gmra.mxu0 %v406
    %v489 = vpop.f32.mrf.mxu0
    %v490 = vadd.f32 %v411, %v489
    %491 = vdwg.mxu0
    %v492 = vxor.u32 %v430, 2147483648
    %v493 = vmul.f32 %v492, 1.442695
    %v494 = vpow.pop %v493
    %v495 = vadd.f32 %v494, 1.0
    %v496 = vrcp.pop %v495
    %v497 = vmul.f32 %v495, %v496
    %v498 = vsub.f32 1.0, %v497
    %v499 = vmul.f32 %v496, %v498
    %v500 = vadd.f32 %v496, %v499
    %vm501 = vweird.f32 %v495
    %vm502 = vweird.f32 %v496
    %vm503 = vmor %vm501, %vm502
    %v504 = vsel %vm503, %v496, %v500
    %v505 = vand.u32 2147483647, %v495
    %vm506 = vcmp.eq.f32.partialorder %v505, 8.507059e+37
    %v507 = vand.u32 %v495, 2147483648
    %v508 = vor.u32 1.1754944e-38, %v507
    %v509 = vsel %vm506, %v508, %v504
    %v510 = vmul.f32 1.0, %v509
    %v511 = vxor.u32 %v450, 2147483648
    %v512 = vmul.f32 %v511, 1.442695
    %v513 = vpow.pop %v512
    %v514 = vadd.f32 %v513, 1.0
    %v515 = vrcp.pop %v514
    %v516 = vmul.f32 %v514, %v515
    %v517 = vsub.f32 1.0, %v516
    %v518 = vmul.f32 %v515, %v517
    %v519 = vadd.f32 %v515, %v518
    %vm520 = vweird.f32 %v514
    %vm521 = vweird.f32 %v515
    %vm522 = vmor %vm520, %vm521
    %v523 = vsel %vm522, %v515, %v519
    %v524 = vand.u32 2147483647, %v514
    %vm525 = vcmp.eq.f32.partialorder %v524, 8.507059e+37
    %v526 = vand.u32 %v514, 2147483648
    %v527 = vor.u32 1.1754944e-38, %v526
    %v528 = vsel %vm525, %v527, %v523
    %v529 = vmul.f32 1.0, %v528
    %v530 = vtanh.pop %v470
    %v531 = vxor.u32 %v490, 2147483648
    %v532 = vmul.f32 %v531, 1.442695
    %v533 = vpow.pop %v532
    %v534 = vadd.f32 %v533, 1.0
    %v535 = vrcp.pop %v534
    %v536 = vmul.f32 %v534, %v535
    %v537 = vsub.f32 1.0, %v536
    %v538 = vmul.f32 %v535, %v537
    %v539 = vadd.f32 %v535, %v538
    %vm540 = vweird.f32 %v534
    %vm541 = vweird.f32 %v535
    %vm542 = vmor %vm540, %vm541
    %v543 = vsel %vm542, %v535, %v539
    %v544 = vand.u32 2147483647, %v534
    %vm545 = vcmp.eq.f32.partialorder %v544, 8.507059e+37
    %v546 = vand.u32 %v534, 2147483648
    %v547 = vor.u32 1.1754944e-38, %v546
    %v548 = vsel %vm545, %v547, %v543
    %v549 = vmul.f32 1.0, %v548
    %v550 = vmul.f32 %v529, %v407
    %v551 = vmul.f32 %v510, %v530
    %v552 = vadd.f32 %v550, %v551
    %v553 = vtanh.pop %v552
    %v554 = vmul.f32 %v549, %v553
    %555 = vst [vmem:[#allocation2] sm:$0xff] %v554
    %v556 = vld [vmem:[#allocation3 + $0x20] sm:$0xff]
    %v557 = vld [vmem:[#allocation3 + $0x28] sm:$0xff]
    %v558 = vld [vmem:[#allocation3 + $0x30] sm:$0xff]
    %v559 = vld [vmem:[#allocation3 + $0x38] sm:$0xff]
    %560 = vmatpush.msra.mxu0 %v402
    %561 = vmatpush.msra.mxu0 %v398
    %562 = vmatpush.msra.mxu0 %v394
    %563 = vmatpush.msra.mxu0 %v390
    %564 = vmatpush.msra.mxu0 %v386
    %565 = vmatpush.msra.mxu0 %v382
    %566 = vmatpush.msra.mxu0 %v378
    %567 = vmatpush.msra.mxu0 %v374
    %568 = vmatpush.msra.mxu0 %v370
    %569 = vmatpush.msra.mxu0 %v366
    %570 = vmatpush.msra.mxu0 %v362
    %571 = vmatpush.msra.mxu0 %v358
    %572 = vmatpush.msra.mxu0 %v354
    %573 = vmatpush.msra.mxu0 %v350
    %574 = vmatpush.msra.mxu0 %v346
    %575 = vmatpush.msra.mxu0 %v342
    %576 = vmatmul.f32.gmra.mxu0 %v554
    %v577 = vpop.f32.mrf.mxu0
    %v578 = vadd.f32 %v556, %v577
    %579 = vdwg.mxu0
    %580 = vmatpush.msra.mxu0 %v403
    %581 = vmatpush.msra.mxu0 %v399
    %582 = vmatpush.msra.mxu0 %v395
    %583 = vmatpush.msra.mxu0 %v391
    %584 = vmatpush.msra.mxu0 %v387
    %585 = vmatpush.msra.mxu0 %v383
    %586 = vmatpush.msra.mxu0 %v379
    %587 = vmatpush.msra.mxu0 %v375
    %588 = vmatpush.msra.mxu0 %v371
    %589 = vmatpush.msra.mxu0 %v367
    %590 = vmatpush.msra.mxu0 %v363
    %591 = vmatpush.msra.mxu0 %v359
    %592 = vmatpush.msra.mxu0 %v355
    %593 = vmatpush.msra.mxu0 %v351
    %594 = vmatpush.msra.mxu0 %v347
    %595 = vmatpush.msra.mxu0 %v343
    %596 = vmatmul.f32.gmra.mxu0 %v554
    %v597 = vpop.f32.mrf.mxu0
    %v598 = vadd.f32 %v557, %v597
    %599 = vdwg.mxu0
    %600 = vmatpush.msra.mxu0 %v404
    %601 = vmatpush.msra.mxu0 %v400
    %602 = vmatpush.msra.mxu0 %v396
    %603 = vmatpush.msra.mxu0 %v392
    %604 = vmatpush.msra.mxu0 %v388
    %605 = vmatpush.msra.mxu0 %v384
    %606 = vmatpush.msra.mxu0 %v380
    %607 = vmatpush.msra.mxu0 %v376
    %608 = vmatpush.msra.mxu0 %v372
    %609 = vmatpush.msra.mxu0 %v368
    %610 = vmatpush.msra.mxu0 %v364
    %611 = vmatpush.msra.mxu0 %v360
    %612 = vmatpush.msra.mxu0 %v356
    %613 = vmatpush.msra.mxu0 %v352
    %614 = vmatpush.msra.mxu0 %v348
    %615 = vmatpush.msra.mxu0 %v344
    %616 = vmatmul.f32.gmra.mxu0 %v554
    %v617 = vpop.f32.mrf.mxu0
    %v618 = vadd.f32 %v558, %v617
    %619 = vdwg.mxu0
    %620 = vmatpush.msra.mxu0 %v405
    %621 = vmatpush.msra.mxu0 %v401
    %622 = vmatpush.msra.mxu0 %v397
    %623 = vmatpush.msra.mxu0 %v393
    %624 = vmatpush.msra.mxu0 %v389
    %625 = vmatpush.msra.mxu0 %v385
    %626 = vmatpush.msra.mxu0 %v381
    %627 = vmatpush.msra.mxu0 %v377
    %628 = vmatpush.msra.mxu0 %v373
    %629 = vmatpush.msra.mxu0 %v369
    %630 = vmatpush.msra.mxu0 %v365
    %631 = vmatpush.msra.mxu0 %v361
    %632 = vmatpush.msra.mxu0 %v357
    %633 = vmatpush.msra.mxu0 %v353
    %634 = vmatpush.msra.mxu0 %v349
    %635 = vmatpush.msra.mxu0 %v345
    %636 = vmatmul.f32.gmra.mxu0 %v554
    %v637 = vpop.f32.mrf.mxu0
    %v638 = vadd.f32 %v559, %v637
    %639 = vdwg.mxu0
    %v640 = vxor.u32 %v578, 2147483648
    %v641 = vmul.f32 %v640, 1.442695
    %v642 = vpow.pop %v641
    %v643 = vadd.f32 %v642, 1.0
    %v644 = vrcp.pop %v643
    %v645 = vmul.f32 %v643, %v644
    %v646 = vsub.f32 1.0, %v645
    %v647 = vmul.f32 %v644, %v646
    %v648 = vadd.f32 %v644, %v647
    %vm649 = vweird.f32 %v643
    %vm650 = vweird.f32 %v644
    %vm651 = vmor %vm649, %vm650
    %v652 = vsel %vm651, %v644, %v648
    %v653 = vand.u32 2147483647, %v643
    %vm654 = vcmp.eq.f32.partialorder %v653, 8.507059e+37
    %v655 = vand.u32 %v643, 2147483648
    %v656 = vor.u32 1.1754944e-38, %v655
    %v657 = vsel %vm654, %v656, %v652
    %v658 = vmul.f32 1.0, %v657
    %v659 = vxor.u32 %v598, 2147483648
    %v660 = vmul.f32 %v659, 1.442695
    %v661 = vpow.pop %v660
    %v662 = vadd.f32 %v661, 1.0
    %v663 = vrcp.pop %v662
    %v664 = vmul.f32 %v662, %v663
    %v665 = vsub.f32 1.0, %v664
    %v666 = vmul.f32 %v663, %v665
    %v667 = vadd.f32 %v663, %v666
    %vm668 = vweird.f32 %v662
    %vm669 = vweird.f32 %v663
    %vm670 = vmor %vm668, %vm669
    %v671 = vsel %vm670, %v663, %v667
    %v672 = vand.u32 2147483647, %v662
    %vm673 = vcmp.eq.f32.partialorder %v672, 8.507059e+37
    %v674 = vand.u32 %v662, 2147483648
    %v675 = vor.u32 1.1754944e-38, %v674
    %v676 = vsel %vm673, %v675, %v671
    %v677 = vmul.f32 1.0, %v676
    %v678 = vtanh.pop %v618
    %v679 = vxor.u32 %v638, 2147483648
    %v680 = vmul.f32 %v679, 1.442695
    %v681 = vpow.pop %v680
    %v682 = vadd.f32 %v681, 1.0
    %v683 = vrcp.pop %v682
    %v684 = vmul.f32 %v682, %v683
    %v685 = vsub.f32 1.0, %v684
    %v686 = vmul.f32 %v683, %v685
    %v687 = vadd.f32 %v683, %v686
    %vm688 = vweird.f32 %v682
    %vm689 = vweird.f32 %v683
    %vm690 = vmor %vm688, %vm689
    %v691 = vsel %vm690, %v683, %v687
    %v692 = vand.u32 2147483647, %v682
    %vm693 = vcmp.eq.f32.partialorder %v692, 8.507059e+37
    %v694 = vand.u32 %v682, 2147483648
    %v695 = vor.u32 1.1754944e-38, %v694
    %v696 = vsel %vm693, %v695, %v691
    %v697 = vmul.f32 1.0, %v696
    %v698 = vmul.f32 %v677, %v552
    %v699 = vmul.f32 %v658, %v678
    %v700 = vadd.f32 %v698, %v699
    %v701 = vtanh.pop %v700
    %v702 = vmul.f32 %v697, %v701
    %703 = vst [vmem:[#allocation2 + $0x8] sm:$0xff] %v702
    %v704 = vld [vmem:[#allocation3 + $0x40] sm:$0xff]
    %v705 = vld [vmem:[#allocation3 + $0x48] sm:$0xff]
    %v706 = vld [vmem:[#allocation3 + $0x50] sm:$0xff]
    %v707 = vld [vmem:[#allocation3 + $0x58] sm:$0xff]
    %708 = vmatpush.msra.mxu0 %v402
    %709 = vmatpush.msra.mxu0 %v398
    %710 = vmatpush.msra.mxu0 %v394
    %711 = vmatpush.msra.mxu0 %v390
    %712 = vmatpush.msra.mxu0 %v386
    %713 = vmatpush.msra.mxu0 %v382
    %714 = vmatpush.msra.mxu0 %v378
    %715 = vmatpush.msra.mxu0 %v374
    %716 = vmatpush.msra.mxu0 %v370
    %717 = vmatpush.msra.mxu0 %v366
    %718 = vmatpush.msra.mxu0 %v362
    %719 = vmatpush.msra.mxu0 %v358
    %720 = vmatpush.msra.mxu0 %v354
    %721 = vmatpush.msra.mxu0 %v350
    %722 = vmatpush.msra.mxu0 %v346
    %723 = vmatpush.msra.mxu0 %v342
    %724 = vmatmul.f32.gmra.mxu0 %v702
    %v725 = vpop.f32.mrf.mxu0
    %v726 = vadd.f32 %v704, %v725
    %727 = vdwg.mxu0
    %728 = vmatpush.msra.mxu0 %v403
    %729 = vmatpush.msra.mxu0 %v399
    %730 = vmatpush.msra.mxu0 %v395
    %731 = vmatpush.msra.mxu0 %v391
    %732 = vmatpush.msra.mxu0 %v387
    %733 = vmatpush.msra.mxu0 %v383
    %734 = vmatpush.msra.mxu0 %v379
    %735 = vmatpush.msra.mxu0 %v375
    %736 = vmatpush.msra.mxu0 %v371
    %737 = vmatpush.msra.mxu0 %v367
    %738 = vmatpush.msra.mxu0 %v363
    %739 = vmatpush.msra.mxu0 %v359
    %740 = vmatpush.msra.mxu0 %v355
    %741 = vmatpush.msra.mxu0 %v351
    %742 = vmatpush.msra.mxu0 %v347
    %743 = vmatpush.msra.mxu0 %v343
    %744 = vmatmul.f32.gmra.mxu0 %v702
    %v745 = vpop.f32.mrf.mxu0
    %v746 = vadd.f32 %v705, %v745
    %747 = vdwg.mxu0
    %748 = vmatpush.msra.mxu0 %v404
    %749 = vmatpush.msra.mxu0 %v400
    %750 = vmatpush.msra.mxu0 %v396
    %751 = vmatpush.msra.mxu0 %v392
    %752 = vmatpush.msra.mxu0 %v388
    %753 = vmatpush.msra.mxu0 %v384
    %754 = vmatpush.msra.mxu0 %v380
    %755 = vmatpush.msra.mxu0 %v376
    %756 = vmatpush.msra.mxu0 %v372
    %757 = vmatpush.msra.mxu0 %v368
    %758 = vmatpush.msra.mxu0 %v364
    %759 = vmatpush.msra.mxu0 %v360
    %760 = vmatpush.msra.mxu0 %v356
    %761 = vmatpush.msra.mxu0 %v352
    %762 = vmatpush.msra.mxu0 %v348
    %763 = vmatpush.msra.mxu0 %v344
    %764 = vmatmul.f32.gmra.mxu0 %v702
    %v765 = vpop.f32.mrf.mxu0
    %v766 = vadd.f32 %v706, %v765
    %767 = vdwg.mxu0
    %768 = vmatpush.msra.mxu0 %v405
    %769 = vmatpush.msra.mxu0 %v401
    %770 = vmatpush.msra.mxu0 %v397
    %771 = vmatpush.msra.mxu0 %v393
    %772 = vmatpush.msra.mxu0 %v389
    %773 = vmatpush.msra.mxu0 %v385
    %774 = vmatpush.msra.mxu0 %v381
    %775 = vmatpush.msra.mxu0 %v377
    %776 = vmatpush.msra.mxu0 %v373
    %777 = vmatpush.msra.mxu0 %v369
    %778 = vmatpush.msra.mxu0 %v365
    %779 = vmatpush.msra.mxu0 %v361
    %780 = vmatpush.msra.mxu0 %v357
    %781 = vmatpush.msra.mxu0 %v353
    %782 = vmatpush.msra.mxu0 %v349
    %783 = vmatpush.msra.mxu0 %v345
    %784 = vmatmul.f32.gmra.mxu0 %v702
    %v785 = vpop.f32.mrf.mxu0
    %v786 = vadd.f32 %v707, %v785
    %787 = vdwg.mxu0
    %v788 = vxor.u32 %v726, 2147483648
    %v789 = vmul.f32 %v788, 1.442695
    %v790 = vpow.pop %v789
    %v791 = vadd.f32 %v790, 1.0
    %v792 = vrcp.pop %v791
    %v793 = vmul.f32 %v791, %v792
    %v794 = vsub.f32 1.0, %v793
    %v795 = vmul.f32 %v792, %v794
    %v796 = vadd.f32 %v792, %v795
    %vm797 = vweird.f32 %v791
    %vm798 = vweird.f32 %v792
    %vm799 = vmor %vm797, %vm798
    %v800 = vsel %vm799, %v792, %v796
    %v801 = vand.u32 2147483647, %v791
    %vm802 = vcmp.eq.f32.partialorder %v801, 8.507059e+37
    %v803 = vand.u32 %v791, 2147483648
    %v804 = vor.u32 1.1754944e-38, %v803
    %v805 = vsel %vm802, %v804, %v800
    %v806 = vmul.f32 1.0, %v805
    %v807 = vxor.u32 %v746, 2147483648
    %v808 = vmul.f32 %v807, 1.442695
    %v809 = vpow.pop %v808
    %v810 = vadd.f32 %v809, 1.0
    %v811 = vrcp.pop %v810
    %v812 = vmul.f32 %v810, %v811
    %v813 = vsub.f32 1.0, %v812
    %v814 = vmul.f32 %v811, %v813
    %v815 = vadd.f32 %v811, %v814
    %vm816 = vweird.f32 %v810
    %vm817 = vweird.f32 %v811
    %vm818 = vmor %vm816, %vm817
    %v819 = vsel %vm818, %v811, %v815
    %v820 = vand.u32 2147483647, %v810
    %vm821 = vcmp.eq.f32.partialorder %v820, 8.507059e+37
    %v822 = vand.u32 %v810, 2147483648
    %v823 = vor.u32 1.1754944e-38, %v822
    %v824 = vsel %vm821, %v823, %v819
    %v825 = vmul.f32 1.0, %v824
    %v826 = vtanh.pop %v766
    %v827 = vxor.u32 %v786, 2147483648
    %v828 = vmul.f32 %v827, 1.442695
    %v829 = vpow.pop %v828
    %v830 = vadd.f32 %v829, 1.0
    %v831 = vrcp.pop %v830
    %v832 = vmul.f32 %v830, %v831
    %v833 = vsub.f32 1.0, %v832
    %v834 = vmul.f32 %v831, %v833
    %v835 = vadd.f32 %v831, %v834
    %vm836 = vweird.f32 %v830
    %vm837 = vweird.f32 %v831
    %vm838 = vmor %vm836, %vm837
    %v839 = vsel %vm838, %v831, %v835
    %v840 = vand.u32 2147483647, %v830
    %vm841 = vcmp.eq.f32.partialorder %v840, 8.507059e+37
    %v842 = vand.u32 %v830, 2147483648
    %v843 = vor.u32 1.1754944e-38, %v842
    %v844 = vsel %vm841, %v843, %v839
    %v845 = vmul.f32 1.0, %v844
    %v846 = vmul.f32 %v825, %v700
    %v847 = vmul.f32 %v806, %v826
    %v848 = vadd.f32 %v846, %v847
    %v849 = vtanh.pop %v848
    %v850 = vmul.f32 %v845, %v849
    %851 = vst [vmem:[#allocation2 + $0x10] sm:$0xff] %v850
    %v852 = vld [vmem:[#allocation3 + $0x60] sm:$0xff]
    %v853 = vld [vmem:[#allocation3 + $0x68] sm:$0xff]
    %v854 = vld [vmem:[#allocation3 + $0x70] sm:$0xff]
    %v855 = vld [vmem:[#allocation3 + $0x78] sm:$0xff]
    %856 = vmatpush.msra.mxu0 %v402
    %857 = vmatpush.msra.mxu0 %v398
    %858 = vmatpush.msra.mxu0 %v394
    %859 = vmatpush.msra.mxu0 %v390
    %860 = vmatpush.msra.mxu0 %v386
    %861 = vmatpush.msra.mxu0 %v382
    %862 = vmatpush.msra.mxu0 %v378
    %863 = vmatpush.msra.mxu0 %v374
    %864 = vmatpush.msra.mxu0 %v370
    %865 = vmatpush.msra.mxu0 %v366
    %866 = vmatpush.msra.mxu0 %v362
    %867 = vmatpush.msra.mxu0 %v358
    %868 = vmatpush.msra.mxu0 %v354
    %869 = vmatpush.msra.mxu0 %v350
    %870 = vmatpush.msra.mxu0 %v346
    %871 = vmatpush.msra.mxu0 %v342
    %872 = vmatmul.f32.gmra.mxu0 %v850
    %v873 = vpop.f32.mrf.mxu0
    %v874 = vadd.f32 %v852, %v873
    %875 = vdwg.mxu0
    %876 = vmatpush.msra.mxu0 %v403
    %877 = vmatpush.msra.mxu0 %v399
    %878 = vmatpush.msra.mxu0 %v395
    %879 = vmatpush.msra.mxu0 %v391
    %880 = vmatpush.msra.mxu0 %v387
    %881 = vmatpush.msra.mxu0 %v383
    %882 = vmatpush.msra.mxu0 %v379
    %883 = vmatpush.msra.mxu0 %v375
    %884 = vmatpush.msra.mxu0 %v371
    %885 = vmatpush.msra.mxu0 %v367
    %886 = vmatpush.msra.mxu0 %v363
    %887 = vmatpush.msra.mxu0 %v359
    %888 = vmatpush.msra.mxu0 %v355
    %889 = vmatpush.msra.mxu0 %v351
    %890 = vmatpush.msra.mxu0 %v347
    %891 = vmatpush.msra.mxu0 %v343
    %892 = vmatmul.f32.gmra.mxu0 %v850
    %v893 = vpop.f32.mrf.mxu0
    %v894 = vadd.f32 %v853, %v893
    %895 = vdwg.mxu0
    %896 = vmatpush.msra.mxu0 %v404
    %897 = vmatpush.msra.mxu0 %v400
    %898 = vmatpush.msra.mxu0 %v396
    %899 = vmatpush.msra.mxu0 %v392
    %900 = vmatpush.msra.mxu0 %v388
    %901 = vmatpush.msra.mxu0 %v384
    %902 = vmatpush.msra.mxu0 %v380
    %903 = vmatpush.msra.mxu0 %v376
    %904 = vmatpush.msra.mxu0 %v372
    %905 = vmatpush.msra.mxu0 %v368
    %906 = vmatpush.msra.mxu0 %v364
    %907 = vmatpush.msra.mxu0 %v360
    %908 = vmatpush.msra.mxu0 %v356
    %909 = vmatpush.msra.mxu0 %v352
    %910 = vmatpush.msra.mxu0 %v348
    %911 = vmatpush.msra.mxu0 %v344
    %912 = vmatmul.f32.gmra.mxu0 %v850
    %v913 = vpop.f32.mrf.mxu0
    %v914 = vadd.f32 %v854, %v913
    %915 = vdwg.mxu0
    %916 = vmatpush.msra.mxu0 %v405
    %917 = vmatpush.msra.mxu0 %v401
    %918 = vmatpush.msra.mxu0 %v397
    %919 = vmatpush.msra.mxu0 %v393
    %920 = vmatpush.msra.mxu0 %v389
    %921 = vmatpush.msra.mxu0 %v385
    %922 = vmatpush.msra.mxu0 %v381
    %923 = vmatpush.msra.mxu0 %v377
    %924 = vmatpush.msra.mxu0 %v373
    %925 = vmatpush.msra.mxu0 %v369
    %926 = vmatpush.msra.mxu0 %v365
    %927 = vmatpush.msra.mxu0 %v361
    %928 = vmatpush.msra.mxu0 %v357
    %929 = vmatpush.msra.mxu0 %v353
    %930 = vmatpush.msra.mxu0 %v349
    %931 = vmatpush.msra.mxu0 %v345
    %932 = vmatmul.f32.gmra.mxu0 %v850
    %v933 = vpop.f32.mrf.mxu0
    %v934 = vadd.f32 %v855, %v933
    %935 = vdwg.mxu0
    %v936 = vxor.u32 %v874, 2147483648
    %v937 = vmul.f32 %v936, 1.442695
    %v938 = vpow.pop %v937
    %v939 = vadd.f32 %v938, 1.0
    %v940 = vrcp.pop %v939
    %v941 = vmul.f32 %v939, %v940
    %v942 = vsub.f32 1.0, %v941
    %v943 = vmul.f32 %v940, %v942
    %v944 = vadd.f32 %v940, %v943
    %vm945 = vweird.f32 %v939
    %vm946 = vweird.f32 %v940
    %vm947 = vmor %vm945, %vm946
    %v948 = vsel %vm947, %v940, %v944
    %v949 = vand.u32 2147483647, %v939
    %vm950 = vcmp.eq.f32.partialorder %v949, 8.507059e+37
    %v951 = vand.u32 %v939, 2147483648
    %v952 = vor.u32 1.1754944e-38, %v951
    %v953 = vsel %vm950, %v952, %v948
    %v954 = vmul.f32 1.0, %v953
    %v955 = vxor.u32 %v894, 2147483648
    %v956 = vmul.f32 %v955, 1.442695
    %v957 = vpow.pop %v956
    %v958 = vadd.f32 %v957, 1.0
    %v959 = vrcp.pop %v958
    %v960 = vmul.f32 %v958, %v959
    %v961 = vsub.f32 1.0, %v960
    %v962 = vmul.f32 %v959, %v961
    %v963 = vadd.f32 %v959, %v962
    %vm964 = vweird.f32 %v958
    %vm965 = vweird.f32 %v959
    %vm966 = vmor %vm964, %vm965
    %v967 = vsel %vm966, %v959, %v963
    %v968 = vand.u32 2147483647, %v958
    %vm969 = vcmp.eq.f32.partialorder %v968, 8.507059e+37
    %v970 = vand.u32 %v958, 2147483648
    %v971 = vor.u32 1.1754944e-38, %v970
    %v972 = vsel %vm969, %v971, %v967
    %v973 = vmul.f32 1.0, %v972
    %v974 = vtanh.pop %v914
    %v975 = vxor.u32 %v934, 2147483648
    %v976 = vmul.f32 %v975, 1.442695
    %v977 = vpow.pop %v976
    %v978 = vadd.f32 %v977, 1.0
    %v979 = vrcp.pop %v978
    %v980 = vmul.f32 %v978, %v979
    %v981 = vsub.f32 1.0, %v980
    %v982 = vmul.f32 %v979, %v981
    %v983 = vadd.f32 %v979, %v982
    %vm984 = vweird.f32 %v978
    %vm985 = vweird.f32 %v979
    %vm986 = vmor %vm984, %vm985
    %v987 = vsel %vm986, %v979, %v983
    %v988 = vand.u32 2147483647, %v978
    %vm989 = vcmp.eq.f32.partialorder %v988, 8.507059e+37
    %v990 = vand.u32 %v978, 2147483648
    %v991 = vor.u32 1.1754944e-38, %v990
    %v992 = vsel %vm989, %v991, %v987
    %v993 = vmul.f32 1.0, %v992
    %v994 = vmul.f32 %v973, %v848
    %v995 = vmul.f32 %v954, %v974
    %v996 = vadd.f32 %v994, %v995
    %v997 = vtanh.pop %v996
    %v998 = vmul.f32 %v993, %v997
    %999 = vst [vmem:[#allocation2 + $0x18] sm:$0xff] %v998
    %v1000 = vld [vmem:[#allocation3 + $0x80] sm:$0xff]
    %v1001 = vld [vmem:[#allocation3 + $0x88] sm:$0xff]
    %v1002 = vld [vmem:[#allocation3 + $0x90] sm:$0xff]
    %v1003 = vld [vmem:[#allocation3 + $0x98] sm:$0xff]
    %1004 = vmatpush.msra.mxu0 %v402
    %1005 = vmatpush.msra.mxu0 %v398
    %1006 = vmatpush.msra.mxu0 %v394
    %1007 = vmatpush.msra.mxu0 %v390
    %1008 = vmatpush.msra.mxu0 %v386
    %1009 = vmatpush.msra.mxu0 %v382
    %1010 = vmatpush.msra.mxu0 %v378
    %1011 = vmatpush.msra.mxu0 %v374
    %1012 = vmatpush.msra.mxu0 %v370
    %1013 = vmatpush.msra.mxu0 %v366
    %1014 = vmatpush.msra.mxu0 %v362
    %1015 = vmatpush.msra.mxu0 %v358
    %1016 = vmatpush.msra.mxu0 %v354
    %1017 = vmatpush.msra.mxu0 %v350
    %1018 = vmatpush.msra.mxu0 %v346
    %1019 = vmatpush.msra.mxu0 %v342
    %1020 = vmatmul.f32.gmra.mxu0 %v998
    %v1021 = vpop.f32.mrf.mxu0
    %v1022 = vadd.f32 %v1000, %v1021
    %1023 = vdwg.mxu0
    %1024 = vmatpush.msra.mxu0 %v403
    %1025 = vmatpush.msra.mxu0 %v399
    %1026 = vmatpush.msra.mxu0 %v395
    %1027 = vmatpush.msra.mxu0 %v391
    %1028 = vmatpush.msra.mxu0 %v387
    %1029 = vmatpush.msra.mxu0 %v383
    %1030 = vmatpush.msra.mxu0 %v379
    %1031 = vmatpush.msra.mxu0 %v375
    %1032 = vmatpush.msra.mxu0 %v371
    %1033 = vmatpush.msra.mxu0 %v367
    %1034 = vmatpush.msra.mxu0 %v363
    %1035 = vmatpush.msra.mxu0 %v359
    %1036 = vmatpush.msra.mxu0 %v355
    %1037 = vmatpush.msra.mxu0 %v351
    %1038 = vmatpush.msra.mxu0 %v347
    %1039 = vmatpush.msra.mxu0 %v343
    %1040 = vmatmul.f32.gmra.mxu0 %v998
    %v1041 = vpop.f32.mrf.mxu0
    %v1042 = vadd.f32 %v1001, %v1041
    %1043 = vdwg.mxu0
    %1044 = vmatpush.msra.mxu0 %v404
    %1045 = vmatpush.msra.mxu0 %v400
    %1046 = vmatpush.msra.mxu0 %v396
    %1047 = vmatpush.msra.mxu0 %v392
    %1048 = vmatpush.msra.mxu0 %v388
    %1049 = vmatpush.msra.mxu0 %v384
    %1050 = vmatpush.msra.mxu0 %v380
    %1051 = vmatpush.msra.mxu0 %v376
    %1052 = vmatpush.msra.mxu0 %v372
    %1053 = vmatpush.msra.mxu0 %v368
    %1054 = vmatpush.msra.mxu0 %v364
    %1055 = vmatpush.msra.mxu0 %v360
    %1056 = vmatpush.msra.mxu0 %v356
    %1057 = vmatpush.msra.mxu0 %v352
    %1058 = vmatpush.msra.mxu0 %v348
    %1059 = vmatpush.msra.mxu0 %v344
    %1060 = vmatmul.f32.gmra.mxu0 %v998
    %v1061 = vpop.f32.mrf.mxu0
    %v1062 = vadd.f32 %v1002, %v1061
    %1063 = vdwg.mxu0
    %1064 = vmatpush.msra.mxu0 %v405
    %1065 = vmatpush.msra.mxu0 %v401
    %1066 = vmatpush.msra.mxu0 %v397
    %1067 = vmatpush.msra.mxu0 %v393
    %1068 = vmatpush.msra.mxu0 %v389
    %1069 = vmatpush.msra.mxu0 %v385
    %1070 = vmatpush.msra.mxu0 %v381
    %1071 = vmatpush.msra.mxu0 %v377
    %1072 = vmatpush.msra.mxu0 %v373
    %1073 = vmatpush.msra.mxu0 %v369
    %1074 = vmatpush.msra.mxu0 %v365
    %1075 = vmatpush.msra.mxu0 %v361
    %1076 = vmatpush.msra.mxu0 %v357
    %1077 = vmatpush.msra.mxu0 %v353
    %1078 = vmatpush.msra.mxu0 %v349
    %1079 = vmatpush.msra.mxu0 %v345
    %1080 = vmatmul.f32.gmra.mxu0 %v998
    %v1081 = vpop.f32.mrf.mxu0
    %v1082 = vadd.f32 %v1003, %v1081
    %1083 = vdwg.mxu0
    %v1084 = vxor.u32 %v1022, 2147483648
    %v1085 = vmul.f32 %v1084, 1.442695
    %v1086 = vpow.pop %v1085
    %v1087 = vadd.f32 %v1086, 1.0
    %v1088 = vrcp.pop %v1087
    %v1089 = vmul.f32 %v1087, %v1088
    %v1090 = vsub.f32 1.0, %v1089
    %v1091 = vmul.f32 %v1088, %v1090
    %v1092 = vadd.f32 %v1088, %v1091
    %vm1093 = vweird.f32 %v1087
    %vm1094 = vweird.f32 %v1088
    %vm1095 = vmor %vm1093, %vm1094
    %v1096 = vsel %vm1095, %v1088, %v1092
    %v1097 = vand.u32 2147483647, %v1087
    %vm1098 = vcmp.eq.f32.partialorder %v1097, 8.507059e+37
    %v1099 = vand.u32 %v1087, 2147483648
    %v1100 = vor.u32 1.1754944e-38, %v1099
    %v1101 = vsel %vm1098, %v1100, %v1096
    %v1102 = vmul.f32 1.0, %v1101
    %v1103 = vxor.u32 %v1042, 2147483648
    %v1104 = vmul.f32 %v1103, 1.442695
    %v1105 = vpow.pop %v1104
    %v1106 = vadd.f32 %v1105, 1.0
    %v1107 = vrcp.pop %v1106
    %v1108 = vmul.f32 %v1106, %v1107
    %v1109 = vsub.f32 1.0, %v1108
    %v1110 = vmul.f32 %v1107, %v1109
    %v1111 = vadd.f32 %v1107, %v1110
    %vm1112 = vweird.f32 %v1106
    %vm1113 = vweird.f32 %v1107
    %vm1114 = vmor %vm1112, %vm1113
    %v1115 = vsel %vm1114, %v1107, %v1111
    %v1116 = vand.u32 2147483647, %v1106
    %vm1117 = vcmp.eq.f32.partialorder %v1116, 8.507059e+37
    %v1118 = vand.u32 %v1106, 2147483648
    %v1119 = vor.u32 1.1754944e-38, %v1118
    %v1120 = vsel %vm1117, %v1119, %v1115
    %v1121 = vmul.f32 1.0, %v1120
    %v1122 = vtanh.pop %v1062
    %v1123 = vxor.u32 %v1082, 2147483648
    %v1124 = vmul.f32 %v1123, 1.442695
    %v1125 = vpow.pop %v1124
    %v1126 = vadd.f32 %v1125, 1.0
    %v1127 = vrcp.pop %v1126
    %v1128 = vmul.f32 %v1126, %v1127
    %v1129 = vsub.f32 1.0, %v1128
    %v1130 = vmul.f32 %v1127, %v1129
    %v1131 = vadd.f32 %v1127, %v1130
    %vm1132 = vweird.f32 %v1126
    %vm1133 = vweird.f32 %v1127
    %vm1134 = vmor %vm1132, %vm1133
    %v1135 = vsel %vm1134, %v1127, %v1131
    %v1136 = vand.u32 2147483647, %v1126
    %vm1137 = vcmp.eq.f32.partialorder %v1136, 8.507059e+37
    %v1138 = vand.u32 %v1126, 2147483648
    %v1139 = vor.u32 1.1754944e-38, %v1138
    %v1140 = vsel %vm1137, %v1139, %v1135
    %v1141 = vmul.f32 1.0, %v1140
    %v1142 = vmul.f32 %v1121, %v996
    %v1143 = vmul.f32 %v1102, %v1122
    %v1144 = vadd.f32 %v1142, %v1143
    %v1145 = vtanh.pop %v1144
    %v1146 = vmul.f32 %v1141, %v1145
    %1147 = vst [vmem:[#allocation2 + $0x20] sm:$0xff] %v1146
    %v1148 = vld [vmem:[#allocation3 + $0xa0] sm:$0xff]
    %v1149 = vld [vmem:[#allocation3 + $0xa8] sm:$0xff]
    %v1150 = vld [vmem:[#allocation3 + $0xb0] sm:$0xff]
    %v1151 = vld [vmem:[#allocation3 + $0xb8] sm:$0xff]
    %1152 = vmatpush.msra.mxu0 %v402
    %1153 = vmatpush.msra.mxu0 %v398
    %1154 = vmatpush.msra.mxu0 %v394
    %1155 = vmatpush.msra.mxu0 %v390
    %1156 = vmatpush.msra.mxu0 %v386
    %1157 = vmatpush.msra.mxu0 %v382
    %1158 = vmatpush.msra.mxu0 %v378
    %1159 = vmatpush.msra.mxu0 %v374
    %1160 = vmatpush.msra.mxu0 %v370
    %1161 = vmatpush.msra.mxu0 %v366
    %1162 = vmatpush.msra.mxu0 %v362
    %1163 = vmatpush.msra.mxu0 %v358
    %1164 = vmatpush.msra.mxu0 %v354
    %1165 = vmatpush.msra.mxu0 %v350
    %1166 = vmatpush.msra.mxu0 %v346
    %1167 = vmatpush.msra.mxu0 %v342
    %1168 = vmatmul.f32.gmra.mxu0 %v1146
    %v1169 = vpop.f32.mrf.mxu0
    %v1170 = vadd.f32 %v1148, %v1169
    %1171 = vdwg.mxu0
    %1172 = vmatpush.msra.mxu0 %v403
    %1173 = vmatpush.msra.mxu0 %v399
    %1174 = vmatpush.msra.mxu0 %v395
    %1175 = vmatpush.msra.mxu0 %v391
    %1176 = vmatpush.msra.mxu0 %v387
    %1177 = vmatpush.msra.mxu0 %v383
    %1178 = vmatpush.msra.mxu0 %v379
    %1179 = vmatpush.msra.mxu0 %v375
    %1180 = vmatpush.msra.mxu0 %v371
    %1181 = vmatpush.msra.mxu0 %v367
    %1182 = vmatpush.msra.mxu0 %v363
    %1183 = vmatpush.msra.mxu0 %v359
    %1184 = vmatpush.msra.mxu0 %v355
    %1185 = vmatpush.msra.mxu0 %v351
    %1186 = vmatpush.msra.mxu0 %v347
    %1187 = vmatpush.msra.mxu0 %v343
    %1188 = vmatmul.f32.gmra.mxu0 %v1146
    %v1189 = vpop.f32.mrf.mxu0
    %v1190 = vadd.f32 %v1149, %v1189
    %1191 = vdwg.mxu0
    %1192 = vmatpush.msra.mxu0 %v404
    %1193 = vmatpush.msra.mxu0 %v400
    %1194 = vmatpush.msra.mxu0 %v396
    %1195 = vmatpush.msra.mxu0 %v392
    %1196 = vmatpush.msra.mxu0 %v388
    %1197 = vmatpush.msra.mxu0 %v384
    %1198 = vmatpush.msra.mxu0 %v380
    %1199 = vmatpush.msra.mxu0 %v376
    %1200 = vmatpush.msra.mxu0 %v372
    %1201 = vmatpush.msra.mxu0 %v368
    %1202 = vmatpush.msra.mxu0 %v364
    %1203 = vmatpush.msra.mxu0 %v360
    %1204 = vmatpush.msra.mxu0 %v356
    %1205 = vmatpush.msra.mxu0 %v352
    %1206 = vmatpush.msra.mxu0 %v348
    %1207 = vmatpush.msra.mxu0 %v344
    %1208 = vmatmul.f32.gmra.mxu0 %v1146
    %v1209 = vpop.f32.mrf.mxu0
    %v1210 = vadd.f32 %v1150, %v1209
    %1211 = vdwg.mxu0
    %1212 = vmatpush.msra.mxu0 %v405
    %1213 = vmatpush.msra.mxu0 %v401
    %1214 = vmatpush.msra.mxu0 %v397
    %1215 = vmatpush.msra.mxu0 %v393
    %1216 = vmatpush.msra.mxu0 %v389
    %1217 = vmatpush.msra.mxu0 %v385
    %1218 = vmatpush.msra.mxu0 %v381
    %1219 = vmatpush.msra.mxu0 %v377
    %1220 = vmatpush.msra.mxu0 %v373
    %1221 = vmatpush.msra.mxu0 %v369
    %1222 = vmatpush.msra.mxu0 %v365
    %1223 = vmatpush.msra.mxu0 %v361
    %1224 = vmatpush.msra.mxu0 %v357
    %1225 = vmatpush.msra.mxu0 %v353
    %1226 = vmatpush.msra.mxu0 %v349
    %1227 = vmatpush.msra.mxu0 %v345
    %1228 = vmatmul.f32.gmra.mxu0 %v1146
    %v1229 = vpop.f32.mrf.mxu0
    %v1230 = vadd.f32 %v1151, %v1229
    %1231 = vdwg.mxu0
    %v1232 = vxor.u32 %v1170, 2147483648
    %v1233 = vmul.f32 %v1232, 1.442695
    %v1234 = vpow.pop %v1233
    %v1235 = vadd.f32 %v1234, 1.0
    %v1236 = vrcp.pop %v1235
    %v1237 = vmul.f32 %v1235, %v1236
    %v1238 = vsub.f32 1.0, %v1237
    %v1239 = vmul.f32 %v1236, %v1238
    %v1240 = vadd.f32 %v1236, %v1239
    %vm1241 = vweird.f32 %v1235
    %vm1242 = vweird.f32 %v1236
    %vm1243 = vmor %vm1241, %vm1242
    %v1244 = vsel %vm1243, %v1236, %v1240
    %v1245 = vand.u32 2147483647, %v1235
    %vm1246 = vcmp.eq.f32.partialorder %v1245, 8.507059e+37
    %v1247 = vand.u32 %v1235, 2147483648
    %v1248 = vor.u32 1.1754944e-38, %v1247
    %v1249 = vsel %vm1246, %v1248, %v1244
    %v1250 = vmul.f32 1.0, %v1249
    %v1251 = vxor.u32 %v1190, 2147483648
    %v1252 = vmul.f32 %v1251, 1.442695
    %v1253 = vpow.pop %v1252
    %v1254 = vadd.f32 %v1253, 1.0
    %v1255 = vrcp.pop %v1254
    %v1256 = vmul.f32 %v1254, %v1255
    %v1257 = vsub.f32 1.0, %v1256
    %v1258 = vmul.f32 %v1255, %v1257
    %v1259 = vadd.f32 %v1255, %v1258
    %vm1260 = vweird.f32 %v1254
    %vm1261 = vweird.f32 %v1255
    %vm1262 = vmor %vm1260, %vm1261
    %v1263 = vsel %vm1262, %v1255, %v1259
    %v1264 = vand.u32 2147483647, %v1254
    %vm1265 = vcmp.eq.f32.partialorder %v1264, 8.507059e+37
    %v1266 = vand.u32 %v1254, 2147483648
    %v1267 = vor.u32 1.1754944e-38, %v1266
    %v1268 = vsel %vm1265, %v1267, %v1263
    %v1269 = vmul.f32 1.0, %v1268
    %v1270 = vtanh.pop %v1210
    %v1271 = vxor.u32 %v1230, 2147483648
    %v1272 = vmul.f32 %v1271, 1.442695
    %v1273 = vpow.pop %v1272
    %v1274 = vadd.f32 %v1273, 1.0
    %v1275 = vrcp.pop %v1274
    %v1276 = vmul.f32 %v1274, %v1275
    %v1277 = vsub.f32 1.0, %v1276
    %v1278 = vmul.f32 %v1275, %v1277
    %v1279 = vadd.f32 %v1275, %v1278
    %vm1280 = vweird.f32 %v1274
    %vm1281 = vweird.f32 %v1275
    %vm1282 = vmor %vm1280, %vm1281
    %v1283 = vsel %vm1282, %v1275, %v1279
    %v1284 = vand.u32 2147483647, %v1274
    %vm1285 = vcmp.eq.f32.partialorder %v1284, 8.507059e+37
    %v1286 = vand.u32 %v1274, 2147483648
    %v1287 = vor.u32 1.1754944e-38, %v1286
    %v1288 = vsel %vm1285, %v1287, %v1283
    %v1289 = vmul.f32 1.0, %v1288
    %v1290 = vmul.f32 %v1269, %v1144
    %v1291 = vmul.f32 %v1250, %v1270
    %v1292 = vadd.f32 %v1290, %v1291
    %v1293 = vtanh.pop %v1292
    %v1294 = vmul.f32 %v1289, %v1293
    %1295 = vst [vmem:[#allocation2 + $0x28] sm:$0xff] %v1294
    %v1296 = vld [vmem:[#allocation3 + $0xc0] sm:$0xff]
    %v1297 = vld [vmem:[#allocation3 + $0xc8] sm:$0xff]
    %v1298 = vld [vmem:[#allocation3 + $0xd0] sm:$0xff]
    %v1299 = vld [vmem:[#allocation3 + $0xd8] sm:$0xff]
    %1300 = vmatpush.msra.mxu0 %v402
    %1301 = vmatpush.msra.mxu0 %v398
    %1302 = vmatpush.msra.mxu0 %v394
    %1303 = vmatpush.msra.mxu0 %v390
    %1304 = vmatpush.msra.mxu0 %v386
    %1305 = vmatpush.msra.mxu0 %v382
    %1306 = vmatpush.msra.mxu0 %v378
    %1307 = vmatpush.msra.mxu0 %v374
    %1308 = vmatpush.msra.mxu0 %v370
    %1309 = vmatpush.msra.mxu0 %v366
    %1310 = vmatpush.msra.mxu0 %v362
    %1311 = vmatpush.msra.mxu0 %v358
    %1312 = vmatpush.msra.mxu0 %v354
    %1313 = vmatpush.msra.mxu0 %v350
    %1314 = vmatpush.msra.mxu0 %v346
    %1315 = vmatpush.msra.mxu0 %v342
    %1316 = vmatmul.f32.gmra.mxu0 %v1294
    %v1317 = vpop.f32.mrf.mxu0
    %v1318 = vadd.f32 %v1296, %v1317
    %1319 = vdwg.mxu0
    %1320 = vmatpush.msra.mxu0 %v403
    %1321 = vmatpush.msra.mxu0 %v399
    %1322 = vmatpush.msra.mxu0 %v395
    %1323 = vmatpush.msra.mxu0 %v391
    %1324 = vmatpush.msra.mxu0 %v387
    %1325 = vmatpush.msra.mxu0 %v383
    %1326 = vmatpush.msra.mxu0 %v379
    %1327 = vmatpush.msra.mxu0 %v375
    %1328 = vmatpush.msra.mxu0 %v371
    %1329 = vmatpush.msra.mxu0 %v367
    %1330 = vmatpush.msra.mxu0 %v363
    %1331 = vmatpush.msra.mxu0 %v359
    %1332 = vmatpush.msra.mxu0 %v355
    %1333 = vmatpush.msra.mxu0 %v351
    %1334 = vmatpush.msra.mxu0 %v347
    %1335 = vmatpush.msra.mxu0 %v343
    %1336 = vmatmul.f32.gmra.mxu0 %v1294
    %v1337 = vpop.f32.mrf.mxu0
    %v1338 = vadd.f32 %v1297, %v1337
    %1339 = vdwg.mxu0
    %1340 = vmatpush.msra.mxu0 %v404
    %1341 = vmatpush.msra.mxu0 %v400
    %1342 = vmatpush.msra.mxu0 %v396
    %1343 = vmatpush.msra.mxu0 %v392
    %1344 = vmatpush.msra.mxu0 %v388
    %1345 = vmatpush.msra.mxu0 %v384
    %1346 = vmatpush.msra.mxu0 %v380
    %1347 = vmatpush.msra.mxu0 %v376
    %1348 = vmatpush.msra.mxu0 %v372
    %1349 = vmatpush.msra.mxu0 %v368
    %1350 = vmatpush.msra.mxu0 %v364
    %1351 = vmatpush.msra.mxu0 %v360
    %1352 = vmatpush.msra.mxu0 %v356
    %1353 = vmatpush.msra.mxu0 %v352
    %1354 = vmatpush.msra.mxu0 %v348
    %1355 = vmatpush.msra.mxu0 %v344
    %1356 = vmatmul.f32.gmra.mxu0 %v1294
    %v1357 = vpop.f32.mrf.mxu0
    %v1358 = vadd.f32 %v1298, %v1357
    %1359 = vdwg.mxu0
    %1360 = vmatpush.msra.mxu0 %v405
    %1361 = vmatpush.msra.mxu0 %v401
    %1362 = vmatpush.msra.mxu0 %v397
    %1363 = vmatpush.msra.mxu0 %v393
    %1364 = vmatpush.msra.mxu0 %v389
    %1365 = vmatpush.msra.mxu0 %v385
    %1366 = vmatpush.msra.mxu0 %v381
    %1367 = vmatpush.msra.mxu0 %v377
    %1368 = vmatpush.msra.mxu0 %v373
    %1369 = vmatpush.msra.mxu0 %v369
    %1370 = vmatpush.msra.mxu0 %v365
    %1371 = vmatpush.msra.mxu0 %v361
    %1372 = vmatpush.msra.mxu0 %v357
    %1373 = vmatpush.msra.mxu0 %v353
    %1374 = vmatpush.msra.mxu0 %v349
    %1375 = vmatpush.msra.mxu0 %v345
    %1376 = vmatmul.f32.gmra.mxu0 %v1294
    %v1377 = vpop.f32.mrf.mxu0
    %v1378 = vadd.f32 %v1299, %v1377
    %1379 = vdwg.mxu0
    %v1380 = vxor.u32 %v1318, 2147483648
    %v1381 = vmul.f32 %v1380, 1.442695
    %v1382 = vpow.pop %v1381
    %v1383 = vadd.f32 %v1382, 1.0
    %v1384 = vrcp.pop %v1383
    %v1385 = vmul.f32 %v1383, %v1384
    %v1386 = vsub.f32 1.0, %v1385
    %v1387 = vmul.f32 %v1384, %v1386
    %v1388 = vadd.f32 %v1384, %v1387
    %vm1389 = vweird.f32 %v1383
    %vm1390 = vweird.f32 %v1384
    %vm1391 = vmor %vm1389, %vm1390
    %v1392 = vsel %vm1391, %v1384, %v1388
    %v1393 = vand.u32 2147483647, %v1383
    %vm1394 = vcmp.eq.f32.partialorder %v1393, 8.507059e+37
    %v1395 = vand.u32 %v1383, 2147483648
    %v1396 = vor.u32 1.1754944e-38, %v1395
    %v1397 = vsel %vm1394, %v1396, %v1392
    %v1398 = vmul.f32 1.0, %v1397
    %v1399 = vxor.u32 %v1338, 2147483648
    %v1400 = vmul.f32 %v1399, 1.442695
    %v1401 = vpow.pop %v1400
    %v1402 = vadd.f32 %v1401, 1.0
    %v1403 = vrcp.pop %v1402
    %v1404 = vmul.f32 %v1402, %v1403
    %v1405 = vsub.f32 1.0, %v1404
    %v1406 = vmul.f32 %v1403, %v1405
    %v1407 = vadd.f32 %v1403, %v1406
    %vm1408 = vweird.f32 %v1402
    %vm1409 = vweird.f32 %v1403
    %vm1410 = vmor %vm1408, %vm1409
    %v1411 = vsel %vm1410, %v1403, %v1407
    %v1412 = vand.u32 2147483647, %v1402
    %vm1413 = vcmp.eq.f32.partialorder %v1412, 8.507059e+37
    %v1414 = vand.u32 %v1402, 2147483648
    %v1415 = vor.u32 1.1754944e-38, %v1414
    %v1416 = vsel %vm1413, %v1415, %v1411
    %v1417 = vmul.f32 1.0, %v1416
    %v1418 = vtanh.pop %v1358
    %v1419 = vxor.u32 %v1378, 2147483648
    %v1420 = vmul.f32 %v1419, 1.442695
    %v1421 = vpow.pop %v1420
    %v1422 = vadd.f32 %v1421, 1.0
    %v1423 = vrcp.pop %v1422
    %v1424 = vmul.f32 %v1422, %v1423
    %v1425 = vsub.f32 1.0, %v1424
    %v1426 = vmul.f32 %v1423, %v1425
    %v1427 = vadd.f32 %v1423, %v1426
    %vm1428 = vweird.f32 %v1422
    %vm1429 = vweird.f32 %v1423
    %vm1430 = vmor %vm1428, %vm1429
    %v1431 = vsel %vm1430, %v1423, %v1427
    %v1432 = vand.u32 2147483647, %v1422
    %vm1433 = vcmp.eq.f32.partialorder %v1432, 8.507059e+37
    %v1434 = vand.u32 %v1422, 2147483648
    %v1435 = vor.u32 1.1754944e-38, %v1434
    %v1436 = vsel %vm1433, %v1435, %v1431
    %v1437 = vmul.f32 1.0, %v1436
    %v1438 = vmul.f32 %v1417, %v1292
    %v1439 = vmul.f32 %v1398, %v1418
    %v1440 = vadd.f32 %v1438, %v1439
    %v1441 = vtanh.pop %v1440
    %v1442 = vmul.f32 %v1437, %v1441
    %1443 = vst [vmem:[#allocation2 + $0x30] sm:$0xff] %v1442
    %v1444 = vld [vmem:[#allocation3 + $0xe0] sm:$0xff]
    %v1445 = vld [vmem:[#allocation3 + $0xe8] sm:$0xff]
    %v1446 = vld [vmem:[#allocation3 + $0xf0] sm:$0xff]
    %v1447 = vld [vmem:[#allocation3 + $0xf8] sm:$0xff]
    %1448 = vmatpush.msra.mxu0 %v402
    %1449 = vmatpush.msra.mxu0 %v398
    %1450 = vmatpush.msra.mxu0 %v394
    %1451 = vmatpush.msra.mxu0 %v390
    %1452 = vmatpush.msra.mxu0 %v386
    %1453 = vmatpush.msra.mxu0 %v382
    %1454 = vmatpush.msra.mxu0 %v378
    %1455 = vmatpush.msra.mxu0 %v374
    %1456 = vmatpush.msra.mxu0 %v370
    %1457 = vmatpush.msra.mxu0 %v366
    %1458 = vmatpush.msra.mxu0 %v362
    %1459 = vmatpush.msra.mxu0 %v358
    %1460 = vmatpush.msra.mxu0 %v354
    %1461 = vmatpush.msra.mxu0 %v350
    %1462 = vmatpush.msra.mxu0 %v346
    %1463 = vmatpush.msra.mxu0 %v342
    %1464 = vmatmul.f32.gmra.mxu0 %v1442
    %v1465 = vpop.f32.mrf.mxu0
    %v1466 = vadd.f32 %v1444, %v1465
    %1467 = vdwg.mxu0
    %1468 = vmatpush.msra.mxu0 %v403
    %1469 = vmatpush.msra.mxu0 %v399
    %1470 = vmatpush.msra.mxu0 %v395
    %1471 = vmatpush.msra.mxu0 %v391
    %1472 = vmatpush.msra.mxu0 %v387
    %1473 = vmatpush.msra.mxu0 %v383
    %1474 = vmatpush.msra.mxu0 %v379
    %1475 = vmatpush.msra.mxu0 %v375
    %1476 = vmatpush.msra.mxu0 %v371
    %1477 = vmatpush.msra.mxu0 %v367
    %1478 = vmatpush.msra.mxu0 %v363
    %1479 = vmatpush.msra.mxu0 %v359
    %1480 = vmatpush.msra.mxu0 %v355
    %1481 = vmatpush.msra.mxu0 %v351
    %1482 = vmatpush.msra.mxu0 %v347
    %1483 = vmatpush.msra.mxu0 %v343
    %1484 = vmatmul.f32.gmra.mxu0 %v1442
    %v1485 = vpop.f32.mrf.mxu0
    %v1486 = vadd.f32 %v1445, %v1485
    %1487 = vdwg.mxu0
    %1488 = vmatpush.msra.mxu0 %v404
    %1489 = vmatpush.msra.mxu0 %v400
    %1490 = vmatpush.msra.mxu0 %v396
    %1491 = vmatpush.msra.mxu0 %v392
    %1492 = vmatpush.msra.mxu0 %v388
    %1493 = vmatpush.msra.mxu0 %v384
    %1494 = vmatpush.msra.mxu0 %v380
    %1495 = vmatpush.msra.mxu0 %v376
    %1496 = vmatpush.msra.mxu0 %v372
    %1497 = vmatpush.msra.mxu0 %v368
    %1498 = vmatpush.msra.mxu0 %v364
    %1499 = vmatpush.msra.mxu0 %v360
    %1500 = vmatpush.msra.mxu0 %v356
    %1501 = vmatpush.msra.mxu0 %v352
    %1502 = vmatpush.msra.mxu0 %v348
    %1503 = vmatpush.msra.mxu0 %v344
    %1504 = vmatmul.f32.gmra.mxu0 %v1442
    %v1505 = vpop.f32.mrf.mxu0
    %v1506 = vadd.f32 %v1446, %v1505
    %1507 = vdwg.mxu0
    %1508 = vmatpush.msra.mxu0 %v405
    %1509 = vmatpush.msra.mxu0 %v401
    %1510 = vmatpush.msra.mxu0 %v397
    %1511 = vmatpush.msra.mxu0 %v393
    %1512 = vmatpush.msra.mxu0 %v389
    %1513 = vmatpush.msra.mxu0 %v385
    %1514 = vmatpush.msra.mxu0 %v381
    %1515 = vmatpush.msra.mxu0 %v377
    %1516 = vmatpush.msra.mxu0 %v373
    %1517 = vmatpush.msra.mxu0 %v369
    %1518 = vmatpush.msra.mxu0 %v365
    %1519 = vmatpush.msra.mxu0 %v361
    %1520 = vmatpush.msra.mxu0 %v357
    %1521 = vmatpush.msra.mxu0 %v353
    %1522 = vmatpush.msra.mxu0 %v349
    %1523 = vmatpush.msra.mxu0 %v345
    %1524 = vmatmul.f32.gmra.mxu0 %v1442
    %v1525 = vpop.f32.mrf.mxu0
    %v1526 = vadd.f32 %v1447, %v1525
    %1527 = vdwg.mxu0
    %v1528 = vxor.u32 %v1466, 2147483648
    %v1529 = vmul.f32 %v1528, 1.442695
    %v1530 = vpow.pop %v1529
    %v1531 = vadd.f32 %v1530, 1.0
    %v1532 = vrcp.pop %v1531
    %v1533 = vmul.f32 %v1531, %v1532
    %v1534 = vsub.f32 1.0, %v1533
    %v1535 = vmul.f32 %v1532, %v1534
    %v1536 = vadd.f32 %v1532, %v1535
    %vm1537 = vweird.f32 %v1531
    %vm1538 = vweird.f32 %v1532
    %vm1539 = vmor %vm1537, %vm1538
    %v1540 = vsel %vm1539, %v1532, %v1536
    %v1541 = vand.u32 2147483647, %v1531
    %vm1542 = vcmp.eq.f32.partialorder %v1541, 8.507059e+37
    %v1543 = vand.u32 %v1531, 2147483648
    %v1544 = vor.u32 1.1754944e-38, %v1543
    %v1545 = vsel %vm1542, %v1544, %v1540
    %v1546 = vmul.f32 1.0, %v1545
    %v1547 = vxor.u32 %v1486, 2147483648
    %v1548 = vmul.f32 %v1547, 1.442695
    %v1549 = vpow.pop %v1548
    %v1550 = vadd.f32 %v1549, 1.0
    %v1551 = vrcp.pop %v1550
    %v1552 = vmul.f32 %v1550, %v1551
    %v1553 = vsub.f32 1.0, %v1552
    %v1554 = vmul.f32 %v1551, %v1553
    %v1555 = vadd.f32 %v1551, %v1554
    %vm1556 = vweird.f32 %v1550
    %vm1557 = vweird.f32 %v1551
    %vm1558 = vmor %vm1556, %vm1557
    %v1559 = vsel %vm1558, %v1551, %v1555
    %v1560 = vand.u32 2147483647, %v1550
    %vm1561 = vcmp.eq.f32.partialorder %v1560, 8.507059e+37
    %v1562 = vand.u32 %v1550, 2147483648
    %v1563 = vor.u32 1.1754944e-38, %v1562
    %v1564 = vsel %vm1561, %v1563, %v1559
    %v1565 = vmul.f32 1.0, %v1564
    %v1566 = vtanh.pop %v1506
    %v1567 = vxor.u32 %v1526, 2147483648
    %v1568 = vmul.f32 %v1567, 1.442695
    %v1569 = vpow.pop %v1568
    %v1570 = vadd.f32 %v1569, 1.0
    %v1571 = vrcp.pop %v1570
    %v1572 = vmul.f32 %v1570, %v1571
    %v1573 = vsub.f32 1.0, %v1572
    %v1574 = vmul.f32 %v1571, %v1573
    %v1575 = vadd.f32 %v1571, %v1574
    %vm1576 = vweird.f32 %v1570
    %vm1577 = vweird.f32 %v1571
    %vm1578 = vmor %vm1576, %vm1577
    %v1579 = vsel %vm1578, %v1571, %v1575
    %v1580 = vand.u32 2147483647, %v1570
    %vm1581 = vcmp.eq.f32.partialorder %v1580, 8.507059e+37
    %v1582 = vand.u32 %v1570, 2147483648
    %v1583 = vor.u32 1.1754944e-38, %v1582
    %v1584 = vsel %vm1581, %v1583, %v1579
    %v1585 = vmul.f32 1.0, %v1584
    %v1586 = vmul.f32 %v1565, %v1440
    %v1587 = vmul.f32 %v1546, %v1566
    %v1588 = vadd.f32 %v1586, %v1587
    %v1589 = vtanh.pop %v1588
    %v1590 = vmul.f32 %v1585, %v1589
    %1591 = vst [vmem:[#allocation2 + $0x38] sm:$0xff] %v1590
    %1592 = vst [vmem:[%s9] sm:$0xff] %v1590
    %1593 = vst [vmem:[%s10] sm:$0xff] %v1588
    %v1594 = vld [vmem:[#allocation2] sm:$0xff]
    %v1595 = vld [vmem:[#allocation2 + $0x8] sm:$0xff]
    %v1596 = vld [vmem:[#allocation2 + $0x10] sm:$0xff]
    %v1597 = vld [vmem:[#allocation2 + $0x18] sm:$0xff]
    %v1598 = vld [vmem:[#allocation2 + $0x20] sm:$0xff]
    %v1599 = vld [vmem:[#allocation2 + $0x28] sm:$0xff]
    %v1600 = vld [vmem:[#allocation2 + $0x30] sm:$0xff]
    %v1601 = vld [vmem:[#allocation2 + $0x38] sm:$0xff]
    %s1602 = scalar_lea.vmem [#allocation4], 512
    %v1603 = vld [vmem:[%s1602] sm:$0xff]
    %v1604 = vld [vmem:[%s1602 + $0x8] sm:$0xff]
    %v1605 = vld [vmem:[%s1602 + $0x10] sm:$0xff]
    %v1606 = vld [vmem:[%s1602 + $0x18] sm:$0xff]
    %v1607 = vld [vmem:[%s1602 + $0x20] sm:$0xff]
    %v1608 = vld [vmem:[%s1602 + $0x28] sm:$0xff]
    %v1609 = vld [vmem:[%s1602 + $0x30] sm:$0xff]
    %v1610 = vld [vmem:[%s1602 + $0x38] sm:$0xff]
    %v1611 = vld [vmem:[%s1602 + $0x40] sm:$0xff]
    %v1612 = vld [vmem:[%s1602 + $0x48] sm:$0xff]
    %v1613 = vld [vmem:[%s1602 + $0x50] sm:$0xff]
    %v1614 = vld [vmem:[%s1602 + $0x58] sm:$0xff]
    %v1615 = vld [vmem:[%s1602 + $0x60] sm:$0xff]
    %v1616 = vld [vmem:[%s1602 + $0x68] sm:$0xff]
    %v1617 = vld [vmem:[%s1602 + $0x70] sm:$0xff]
    %v1618 = vld [vmem:[%s1602 + $0x78] sm:$0xff]
    %v1619 = vld [vmem:[%s1602 + $0x80] sm:$0xff]
    %v1620 = vld [vmem:[%s1602 + $0x88] sm:$0xff]
    %v1621 = vld [vmem:[%s1602 + $0x90] sm:$0xff]
    %v1622 = vld [vmem:[%s1602 + $0x98] sm:$0xff]
    %v1623 = vld [vmem:[%s1602 + $0xa0] sm:$0xff]
    %v1624 = vld [vmem:[%s1602 + $0xa8] sm:$0xff]
    %v1625 = vld [vmem:[%s1602 + $0xb0] sm:$0xff]
    %v1626 = vld [vmem:[%s1602 + $0xb8] sm:$0xff]
    %v1627 = vld [vmem:[%s1602 + $0xc0] sm:$0xff]
    %v1628 = vld [vmem:[%s1602 + $0xc8] sm:$0xff]
    %v1629 = vld [vmem:[%s1602 + $0xd0] sm:$0xff]
    %v1630 = vld [vmem:[%s1602 + $0xd8] sm:$0xff]
    %v1631 = vld [vmem:[%s1602 + $0xe0] sm:$0xff]
    %v1632 = vld [vmem:[%s1602 + $0xe8] sm:$0xff]
    %v1633 = vld [vmem:[%s1602 + $0xf0] sm:$0xff]
    %v1634 = vld [vmem:[%s1602 + $0xf8] sm:$0xff]
    %v1635 = vld [vmem:[%s1602 + $0x100] sm:$0xff]
    %v1636 = vld [vmem:[%s1602 + $0x108] sm:$0xff]
    %v1637 = vld [vmem:[%s1602 + $0x110] sm:$0xff]
    %v1638 = vld [vmem:[%s1602 + $0x118] sm:$0xff]
    %v1639 = vld [vmem:[%s1602 + $0x120] sm:$0xff]
    %v1640 = vld [vmem:[%s1602 + $0x128] sm:$0xff]
    %v1641 = vld [vmem:[%s1602 + $0x130] sm:$0xff]
    %v1642 = vld [vmem:[%s1602 + $0x138] sm:$0xff]
    %v1643 = vld [vmem:[%s1602 + $0x140] sm:$0xff]
    %v1644 = vld [vmem:[%s1602 + $0x148] sm:$0xff]
    %v1645 = vld [vmem:[%s1602 + $0x150] sm:$0xff]
    %v1646 = vld [vmem:[%s1602 + $0x158] sm:$0xff]
    %v1647 = vld [vmem:[%s1602 + $0x160] sm:$0xff]
    %v1648 = vld [vmem:[%s1602 + $0x168] sm:$0xff]
    %v1649 = vld [vmem:[%s1602 + $0x170] sm:$0xff]
    %v1650 = vld [vmem:[%s1602 + $0x178] sm:$0xff]
    %v1651 = vld [vmem:[%s1602 + $0x180] sm:$0xff]
    %v1652 = vld [vmem:[%s1602 + $0x188] sm:$0xff]
    %v1653 = vld [vmem:[%s1602 + $0x190] sm:$0xff]
    %v1654 = vld [vmem:[%s1602 + $0x198] sm:$0xff]
    %v1655 = vld [vmem:[%s1602 + $0x1a0] sm:$0xff]
    %v1656 = vld [vmem:[%s1602 + $0x1a8] sm:$0xff]
    %v1657 = vld [vmem:[%s1602 + $0x1b0] sm:$0xff]
    %v1658 = vld [vmem:[%s1602 + $0x1b8] sm:$0xff]
    %v1659 = vld [vmem:[%s1602 + $0x1c0] sm:$0xff]
    %v1660 = vld [vmem:[%s1602 + $0x1c8] sm:$0xff]
    %v1661 = vld [vmem:[%s1602 + $0x1d0] sm:$0xff]
    %v1662 = vld [vmem:[%s1602 + $0x1d8] sm:$0xff]
    %v1663 = vld [vmem:[%s1602 + $0x1e0] sm:$0xff]
    %v1664 = vld [vmem:[%s1602 + $0x1e8] sm:$0xff]
    %v1665 = vld [vmem:[%s1602 + $0x1f0] sm:$0xff]
    %v1666 = vld [vmem:[%s1602 + $0x1f8] sm:$0xff]
    %s1667 = scalar_lea.vmem %s5, 4
    %v1668 = vld [vmem:[%s1667] sm:$0xf]
    %v1670 = vperm.slane %v1668, 0
    %v1671 = vperm.slane %v1668, 1
    %v1672 = vperm.slane %v1668, 2
    %v1673 = vperm.slane %v1668, 3
    %1678 = vmatpush.msra.mxu0 %v1663
    %1679 = vmatpush.msra.mxu0 %v1659
    %1680 = vmatpush.msra.mxu0 %v1655
    %1681 = vmatpush.msra.mxu0 %v1651
    %1682 = vmatpush.msra.mxu0 %v1647
    %1683 = vmatpush.msra.mxu0 %v1643
    %1684 = vmatpush.msra.mxu0 %v1639
    %1685 = vmatpush.msra.mxu0 %v1635
    %1686 = vmatpush.msra.mxu0 %v1631
    %1687 = vmatpush.msra.mxu0 %v1627
    %1688 = vmatpush.msra.mxu0 %v1623
    %1689 = vmatpush.msra.mxu0 %v1619
    %1690 = vmatpush.msra.mxu0 %v1615
    %1691 = vmatpush.msra.mxu0 %v1611
    %1692 = vmatpush.msra.mxu0 %v1607
    %1693 = vmatpush.msra.mxu0 %v1603
    %1694 = vmatmul.f32.gmra.mxu0 %v1594
    %v1695 = vpop.f32.mrf.mxu0
    %v1696 = vadd.f32 %v1670, %v1695
    %1697 = vmatmul.f32.gmra.mxu0 %v1595
    %v1698 = vpop.f32.mrf.mxu0
    %v1699 = vadd.f32 %v1670, %v1698
    %1700 = vmatmul.f32.gmra.mxu0 %v1596
    %v1701 = vpop.f32.mrf.mxu0
    %v1702 = vadd.f32 %v1670, %v1701
    %1703 = vmatmul.f32.gmra.mxu0 %v1597
    %v1704 = vpop.f32.mrf.mxu0
    %v1705 = vadd.f32 %v1670, %v1704
    %1706 = vmatmul.f32.gmra.mxu0 %v1598
    %v1707 = vpop.f32.mrf.mxu0
    %v1708 = vadd.f32 %v1670, %v1707
    %1709 = vmatmul.f32.gmra.mxu0 %v1599
    %v1710 = vpop.f32.mrf.mxu0
    %v1711 = vadd.f32 %v1670, %v1710
    %1712 = vmatmul.f32.gmra.mxu0 %v1600
    %v1713 = vpop.f32.mrf.mxu0
    %v1714 = vadd.f32 %v1670, %v1713
    %1715 = vmatmul.f32.gmra.mxu0 %v1601
    %v1716 = vpop.f32.mrf.mxu0
    %v1717 = vadd.f32 %v1670, %v1716
    %1718 = vdwg.mxu0
    %1719 = vmatpush.msra.mxu0 %v1664
    %1720 = vmatpush.msra.mxu0 %v1660
    %1721 = vmatpush.msra.mxu0 %v1656
    %1722 = vmatpush.msra.mxu0 %v1652
    %1723 = vmatpush.msra.mxu0 %v1648
    %1724 = vmatpush.msra.mxu0 %v1644
    %1725 = vmatpush.msra.mxu0 %v1640
    %1726 = vmatpush.msra.mxu0 %v1636
    %1727 = vmatpush.msra.mxu0 %v1632
    %1728 = vmatpush.msra.mxu0 %v1628
    %1729 = vmatpush.msra.mxu0 %v1624
    %1730 = vmatpush.msra.mxu0 %v1620
    %1731 = vmatpush.msra.mxu0 %v1616
    %1732 = vmatpush.msra.mxu0 %v1612
    %1733 = vmatpush.msra.mxu0 %v1608
    %1734 = vmatpush.msra.mxu0 %v1604
    %1735 = vmatmul.f32.gmra.mxu0 %v1594
    %v1736 = vpop.f32.mrf.mxu0
    %v1737 = vadd.f32 %v1671, %v1736
    %1738 = vmatmul.f32.gmra.mxu0 %v1595
    %v1739 = vpop.f32.mrf.mxu0
    %v1740 = vadd.f32 %v1671, %v1739
    %1741 = vmatmul.f32.gmra.mxu0 %v1596
    %v1742 = vpop.f32.mrf.mxu0
    %v1743 = vadd.f32 %v1671, %v1742
    %1744 = vmatmul.f32.gmra.mxu0 %v1597
    %v1745 = vpop.f32.mrf.mxu0
    %v1746 = vadd.f32 %v1671, %v1745
    %1747 = vmatmul.f32.gmra.mxu0 %v1598
    %v1748 = vpop.f32.mrf.mxu0
    %v1749 = vadd.f32 %v1671, %v1748
    %1750 = vmatmul.f32.gmra.mxu0 %v1599
    %v1751 = vpop.f32.mrf.mxu0
    %v1752 = vadd.f32 %v1671, %v1751
    %1753 = vmatmul.f32.gmra.mxu0 %v1600
    %v1754 = vpop.f32.mrf.mxu0
    %v1755 = vadd.f32 %v1671, %v1754
    %1756 = vmatmul.f32.gmra.mxu0 %v1601
    %v1757 = vpop.f32.mrf.mxu0
    %v1758 = vadd.f32 %v1671, %v1757
    %1759 = vdwg.mxu0
    %1760 = vmatpush.msra.mxu0 %v1665
    %1761 = vmatpush.msra.mxu0 %v1661
    %1762 = vmatpush.msra.mxu0 %v1657
    %1763 = vmatpush.msra.mxu0 %v1653
    %1764 = vmatpush.msra.mxu0 %v1649
    %1765 = vmatpush.msra.mxu0 %v1645
    %1766 = vmatpush.msra.mxu0 %v1641
    %1767 = vmatpush.msra.mxu0 %v1637
    %1768 = vmatpush.msra.mxu0 %v1633
    %1769 = vmatpush.msra.mxu0 %v1629
    %1770 = vmatpush.msra.mxu0 %v1625
    %1771 = vmatpush.msra.mxu0 %v1621
    %1772 = vmatpush.msra.mxu0 %v1617
    %1773 = vmatpush.msra.mxu0 %v1613
    %1774 = vmatpush.msra.mxu0 %v1609
    %1775 = vmatpush.msra.mxu0 %v1605
    %1776 = vmatmul.f32.gmra.mxu0 %v1594
    %v1777 = vpop.f32.mrf.mxu0
    %v1778 = vadd.f32 %v1672, %v1777
    %1779 = vmatmul.f32.gmra.mxu0 %v1595
    %v1780 = vpop.f32.mrf.mxu0
    %v1781 = vadd.f32 %v1672, %v1780
    %1782 = vmatmul.f32.gmra.mxu0 %v1596
    %v1783 = vpop.f32.mrf.mxu0
    %v1784 = vadd.f32 %v1672, %v1783
    %1785 = vmatmul.f32.gmra.mxu0 %v1597
    %v1786 = vpop.f32.mrf.mxu0
    %v1787 = vadd.f32 %v1672, %v1786
    %1788 = vmatmul.f32.gmra.mxu0 %v1598
    %v1789 = vpop.f32.mrf.mxu0
    %v1790 = vadd.f32 %v1672, %v1789
    %1791 = vmatmul.f32.gmra.mxu0 %v1599
    %v1792 = vpop.f32.mrf.mxu0
    %v1793 = vadd.f32 %v1672, %v1792
    %1794 = vmatmul.f32.gmra.mxu0 %v1600
    %v1795 = vpop.f32.mrf.mxu0
    %v1796 = vadd.f32 %v1672, %v1795
    %1797 = vmatmul.f32.gmra.mxu0 %v1601
    %v1798 = vpop.f32.mrf.mxu0
    %v1799 = vadd.f32 %v1672, %v1798
    %1800 = vdwg.mxu0
    %1801 = vmatpush.msra.mxu0 %v1666
    %1802 = vmatpush.msra.mxu0 %v1662
    %1803 = vmatpush.msra.mxu0 %v1658
    %1804 = vmatpush.msra.mxu0 %v1654
    %1805 = vmatpush.msra.mxu0 %v1650
    %1806 = vmatpush.msra.mxu0 %v1646
    %1807 = vmatpush.msra.mxu0 %v1642
    %1808 = vmatpush.msra.mxu0 %v1638
    %1809 = vmatpush.msra.mxu0 %v1634
    %1810 = vmatpush.msra.mxu0 %v1630
    %1811 = vmatpush.msra.mxu0 %v1626
    %1812 = vmatpush.msra.mxu0 %v1622
    %1813 = vmatpush.msra.mxu0 %v1618
    %1814 = vmatpush.msra.mxu0 %v1614
    %1815 = vmatpush.msra.mxu0 %v1610
    %1816 = vmatpush.msra.mxu0 %v1606
    %1817 = vmatmul.f32.gmra.mxu0 %v1594
    %v1818 = vpop.f32.mrf.mxu0
    %v1819 = vadd.f32 %v1673, %v1818
    %1820 = vmatmul.f32.gmra.mxu0 %v1595
    %v1821 = vpop.f32.mrf.mxu0
    %v1822 = vadd.f32 %v1673, %v1821
    %1823 = vmatmul.f32.gmra.mxu0 %v1596
    %v1824 = vpop.f32.mrf.mxu0
    %v1825 = vadd.f32 %v1673, %v1824
    %1826 = vmatmul.f32.gmra.mxu0 %v1597
    %v1827 = vpop.f32.mrf.mxu0
    %v1828 = vadd.f32 %v1673, %v1827
    %1829 = vmatmul.f32.gmra.mxu0 %v1598
    %v1830 = vpop.f32.mrf.mxu0
    %v1831 = vadd.f32 %v1673, %v1830
    %1832 = vmatmul.f32.gmra.mxu0 %v1599
    %v1833 = vpop.f32.mrf.mxu0
    %v1834 = vadd.f32 %v1673, %v1833
    %1835 = vmatmul.f32.gmra.mxu0 %v1600
    %v1836 = vpop.f32.mrf.mxu0
    %v1837 = vadd.f32 %v1673, %v1836
    %1838 = vmatmul.f32.gmra.mxu0 %v1601
    %v1839 = vpop.f32.mrf.mxu0
    %v1840 = vadd.f32 %v1673, %v1839
    %1841 = vdwg.mxu0
    %1842 = vst [vmem:[#allocation3] sm:$0xff] %v1696
    %1843 = vst [vmem:[#allocation3 + $0x8] sm:$0xff] %v1737
    %1844 = vst [vmem:[#allocation3 + $0x10] sm:$0xff] %v1778
    %1845 = vst [vmem:[#allocation3 + $0x18] sm:$0xff] %v1819
    %1846 = vst [vmem:[#allocation3 + $0x20] sm:$0xff] %v1699
    %1847 = vst [vmem:[#allocation3 + $0x28] sm:$0xff] %v1740
    %1848 = vst [vmem:[#allocation3 + $0x30] sm:$0xff] %v1781
    %1849 = vst [vmem:[#allocation3 + $0x38] sm:$0xff] %v1822
    %1850 = vst [vmem:[#allocation3 + $0x40] sm:$0xff] %v1702
    %1851 = vst [vmem:[#allocation3 + $0x48] sm:$0xff] %v1743
    %1852 = vst [vmem:[#allocation3 + $0x50] sm:$0xff] %v1784
    %1853 = vst [vmem:[#allocation3 + $0x58] sm:$0xff] %v1825
    %1854 = vst [vmem:[#allocation3 + $0x60] sm:$0xff] %v1705
    %1855 = vst [vmem:[#allocation3 + $0x68] sm:$0xff] %v1746
    %1856 = vst [vmem:[#allocation3 + $0x70] sm:$0xff] %v1787
    %1857 = vst [vmem:[#allocation3 + $0x78] sm:$0xff] %v1828
    %1858 = vst [vmem:[#allocation3 + $0x80] sm:$0xff] %v1708
    %1859 = vst [vmem:[#allocation3 + $0x88] sm:$0xff] %v1749
    %1860 = vst [vmem:[#allocation3 + $0x90] sm:$0xff] %v1790
    %1861 = vst [vmem:[#allocation3 + $0x98] sm:$0xff] %v1831
    %1862 = vst [vmem:[#allocation3 + $0xa0] sm:$0xff] %v1711
    %1863 = vst [vmem:[#allocation3 + $0xa8] sm:$0xff] %v1752
    %1864 = vst [vmem:[#allocation3 + $0xb0] sm:$0xff] %v1793
    %1865 = vst [vmem:[#allocation3 + $0xb8] sm:$0xff] %v1834
    %1866 = vst [vmem:[#allocation3 + $0xc0] sm:$0xff] %v1714
    %1867 = vst [vmem:[#allocation3 + $0xc8] sm:$0xff] %v1755
    %1868 = vst [vmem:[#allocation3 + $0xd0] sm:$0xff] %v1796
    %1869 = vst [vmem:[#allocation3 + $0xd8] sm:$0xff] %v1837
    %1870 = vst [vmem:[#allocation3 + $0xe0] sm:$0xff] %v1717
    %1871 = vst [vmem:[#allocation3 + $0xe8] sm:$0xff] %v1758
    %1872 = vst [vmem:[#allocation3 + $0xf0] sm:$0xff] %v1799
    %1873 = vst [vmem:[#allocation3 + $0xf8] sm:$0xff] %v1840
    %s1874 = scalar_lea.vmem [#allocation6], 512
    %v1875 = vld [vmem:[%s1874] sm:$0xff]
    %v1876 = vld [vmem:[%s1874 + $0x8] sm:$0xff]
    %v1877 = vld [vmem:[%s1874 + $0x10] sm:$0xff]
    %v1878 = vld [vmem:[%s1874 + $0x18] sm:$0xff]
    %v1879 = vld [vmem:[%s1874 + $0x20] sm:$0xff]
    %v1880 = vld [vmem:[%s1874 + $0x28] sm:$0xff]
    %v1881 = vld [vmem:[%s1874 + $0x30] sm:$0xff]
    %v1882 = vld [vmem:[%s1874 + $0x38] sm:$0xff]
    %v1883 = vld [vmem:[%s1874 + $0x40] sm:$0xff]
    %v1884 = vld [vmem:[%s1874 + $0x48] sm:$0xff]
    %v1885 = vld [vmem:[%s1874 + $0x50] sm:$0xff]
    %v1886 = vld [vmem:[%s1874 + $0x58] sm:$0xff]
    %v1887 = vld [vmem:[%s1874 + $0x60] sm:$0xff]
    %v1888 = vld [vmem:[%s1874 + $0x68] sm:$0xff]
    %v1889 = vld [vmem:[%s1874 + $0x70] sm:$0xff]
    %v1890 = vld [vmem:[%s1874 + $0x78] sm:$0xff]
    %v1891 = vld [vmem:[%s1874 + $0x80] sm:$0xff]
    %v1892 = vld [vmem:[%s1874 + $0x88] sm:$0xff]
    %v1893 = vld [vmem:[%s1874 + $0x90] sm:$0xff]
    %v1894 = vld [vmem:[%s1874 + $0x98] sm:$0xff]
    %v1895 = vld [vmem:[%s1874 + $0xa0] sm:$0xff]
    %v1896 = vld [vmem:[%s1874 + $0xa8] sm:$0xff]
    %v1897 = vld [vmem:[%s1874 + $0xb0] sm:$0xff]
    %v1898 = vld [vmem:[%s1874 + $0xb8] sm:$0xff]
    %v1899 = vld [vmem:[%s1874 + $0xc0] sm:$0xff]
    %v1900 = vld [vmem:[%s1874 + $0xc8] sm:$0xff]
    %v1901 = vld [vmem:[%s1874 + $0xd0] sm:$0xff]
    %v1902 = vld [vmem:[%s1874 + $0xd8] sm:$0xff]
    %v1903 = vld [vmem:[%s1874 + $0xe0] sm:$0xff]
    %v1904 = vld [vmem:[%s1874 + $0xe8] sm:$0xff]
    %v1905 = vld [vmem:[%s1874 + $0xf0] sm:$0xff]
    %v1906 = vld [vmem:[%s1874 + $0xf8] sm:$0xff]
    %v1907 = vld [vmem:[%s1874 + $0x100] sm:$0xff]
    %v1908 = vld [vmem:[%s1874 + $0x108] sm:$0xff]
    %v1909 = vld [vmem:[%s1874 + $0x110] sm:$0xff]
    %v1910 = vld [vmem:[%s1874 + $0x118] sm:$0xff]
    %v1911 = vld [vmem:[%s1874 + $0x120] sm:$0xff]
    %v1912 = vld [vmem:[%s1874 + $0x128] sm:$0xff]
    %v1913 = vld [vmem:[%s1874 + $0x130] sm:$0xff]
    %v1914 = vld [vmem:[%s1874 + $0x138] sm:$0xff]
    %v1915 = vld [vmem:[%s1874 + $0x140] sm:$0xff]
    %v1916 = vld [vmem:[%s1874 + $0x148] sm:$0xff]
    %v1917 = vld [vmem:[%s1874 + $0x150] sm:$0xff]
    %v1918 = vld [vmem:[%s1874 + $0x158] sm:$0xff]
    %v1919 = vld [vmem:[%s1874 + $0x160] sm:$0xff]
    %v1920 = vld [vmem:[%s1874 + $0x168] sm:$0xff]
    %v1921 = vld [vmem:[%s1874 + $0x170] sm:$0xff]
    %v1922 = vld [vmem:[%s1874 + $0x178] sm:$0xff]
    %v1923 = vld [vmem:[%s1874 + $0x180] sm:$0xff]
    %v1924 = vld [vmem:[%s1874 + $0x188] sm:$0xff]
    %v1925 = vld [vmem:[%s1874 + $0x190] sm:$0xff]
    %v1926 = vld [vmem:[%s1874 + $0x198] sm:$0xff]
    %v1927 = vld [vmem:[%s1874 + $0x1a0] sm:$0xff]
    %v1928 = vld [vmem:[%s1874 + $0x1a8] sm:$0xff]
    %v1929 = vld [vmem:[%s1874 + $0x1b0] sm:$0xff]
    %v1930 = vld [vmem:[%s1874 + $0x1b8] sm:$0xff]
    %v1931 = vld [vmem:[%s1874 + $0x1c0] sm:$0xff]
    %v1932 = vld [vmem:[%s1874 + $0x1c8] sm:$0xff]
    %v1933 = vld [vmem:[%s1874 + $0x1d0] sm:$0xff]
    %v1934 = vld [vmem:[%s1874 + $0x1d8] sm:$0xff]
    %v1935 = vld [vmem:[%s1874 + $0x1e0] sm:$0xff]
    %v1936 = vld [vmem:[%s1874 + $0x1e8] sm:$0xff]
    %v1937 = vld [vmem:[%s1874 + $0x1f0] sm:$0xff]
    %v1938 = vld [vmem:[%s1874 + $0x1f8] sm:$0xff]
    %s1939 = scalar_lea.vmem %s1, 8
    %v1940 = vld [vmem:[%s1939] sm:$0xff]
    %s1941 = scalar_lea.vmem %s2, 8
    %v1942 = vld [vmem:[%s1941] sm:$0xff]
    %v1943 = vld [vmem:[#allocation3] sm:$0xff]
    %v1944 = vld [vmem:[#allocation3 + $0x8] sm:$0xff]
    %v1945 = vld [vmem:[#allocation3 + $0x10] sm:$0xff]
    %v1946 = vld [vmem:[#allocation3 + $0x18] sm:$0xff]
    %1947 = vmatpush.msra.mxu0 %v1935
    %1948 = vmatpush.msra.mxu0 %v1931
    %1949 = vmatpush.msra.mxu0 %v1927
    %1950 = vmatpush.msra.mxu0 %v1923
    %1951 = vmatpush.msra.mxu0 %v1919
    %1952 = vmatpush.msra.mxu0 %v1915
    %1953 = vmatpush.msra.mxu0 %v1911
    %1954 = vmatpush.msra.mxu0 %v1907
    %1955 = vmatpush.msra.mxu0 %v1903
    %1956 = vmatpush.msra.mxu0 %v1899
    %1957 = vmatpush.msra.mxu0 %v1895
    %1958 = vmatpush.msra.mxu0 %v1891
    %1959 = vmatpush.msra.mxu0 %v1887
    %1960 = vmatpush.msra.mxu0 %v1883
    %1961 = vmatpush.msra.mxu0 %v1879
    %1962 = vmatpush.msra.mxu0 %v1875
    %1963 = vmatmul.f32.gmra.mxu0 %v1940
    %v1964 = vpop.f32.mrf.mxu0
    %v1965 = vadd.f32 %v1943, %v1964
    %1966 = vdwg.mxu0
    %1967 = vmatpush.msra.mxu0 %v1936
    %1968 = vmatpush.msra.mxu0 %v1932
    %1969 = vmatpush.msra.mxu0 %v1928
    %1970 = vmatpush.msra.mxu0 %v1924
    %1971 = vmatpush.msra.mxu0 %v1920
    %1972 = vmatpush.msra.mxu0 %v1916
    %1973 = vmatpush.msra.mxu0 %v1912
    %1974 = vmatpush.msra.mxu0 %v1908
    %1975 = vmatpush.msra.mxu0 %v1904
    %1976 = vmatpush.msra.mxu0 %v1900
    %1977 = vmatpush.msra.mxu0 %v1896
    %1978 = vmatpush.msra.mxu0 %v1892
    %1979 = vmatpush.msra.mxu0 %v1888
    %1980 = vmatpush.msra.mxu0 %v1884
    %1981 = vmatpush.msra.mxu0 %v1880
    %1982 = vmatpush.msra.mxu0 %v1876
    %1983 = vmatmul.f32.gmra.mxu0 %v1940
    %v1984 = vpop.f32.mrf.mxu0
    %v1985 = vadd.f32 %v1944, %v1984
    %1986 = vdwg.mxu0
    %1987 = vmatpush.msra.mxu0 %v1937
    %1988 = vmatpush.msra.mxu0 %v1933
    %1989 = vmatpush.msra.mxu0 %v1929
    %1990 = vmatpush.msra.mxu0 %v1925
    %1991 = vmatpush.msra.mxu0 %v1921
    %1992 = vmatpush.msra.mxu0 %v1917
    %1993 = vmatpush.msra.mxu0 %v1913
    %1994 = vmatpush.msra.mxu0 %v1909
    %1995 = vmatpush.msra.mxu0 %v1905
    %1996 = vmatpush.msra.mxu0 %v1901
    %1997 = vmatpush.msra.mxu0 %v1897
    %1998 = vmatpush.msra.mxu0 %v1893
    %1999 = vmatpush.msra.mxu0 %v1889
    %2000 = vmatpush.msra.mxu0 %v1885
    %2001 = vmatpush.msra.mxu0 %v1881
    %2002 = vmatpush.msra.mxu0 %v1877
    %2003 = vmatmul.f32.gmra.mxu0 %v1940
    %v2004 = vpop.f32.mrf.mxu0
    %v2005 = vadd.f32 %v1945, %v2004
    %2006 = vdwg.mxu0
    %2007 = vmatpush.msra.mxu0 %v1938
    %2008 = vmatpush.msra.mxu0 %v1934
    %2009 = vmatpush.msra.mxu0 %v1930
    %2010 = vmatpush.msra.mxu0 %v1926
    %2011 = vmatpush.msra.mxu0 %v1922
    %2012 = vmatpush.msra.mxu0 %v1918
    %2013 = vmatpush.msra.mxu0 %v1914
    %2014 = vmatpush.msra.mxu0 %v1910
    %2015 = vmatpush.msra.mxu0 %v1906
    %2016 = vmatpush.msra.mxu0 %v1902
    %2017 = vmatpush.msra.mxu0 %v1898
    %2018 = vmatpush.msra.mxu0 %v1894
    %2019 = vmatpush.msra.mxu0 %v1890
    %2020 = vmatpush.msra.mxu0 %v1886
    %2021 = vmatpush.msra.mxu0 %v1882
    %2022 = vmatpush.msra.mxu0 %v1878
    %2023 = vmatmul.f32.gmra.mxu0 %v1940
    %v2024 = vpop.f32.mrf.mxu0
    %v2025 = vadd.f32 %v1946, %v2024
    %2026 = vdwg.mxu0
    %v2027 = vxor.u32 %v1965, 2147483648
    %v2028 = vmul.f32 %v2027, 1.442695
    %v2029 = vpow.pop %v2028
    %v2030 = vadd.f32 %v2029, 1.0
    %v2031 = vrcp.pop %v2030
    %v2032 = vmul.f32 %v2030, %v2031
    %v2033 = vsub.f32 1.0, %v2032
    %v2034 = vmul.f32 %v2031, %v2033
    %v2035 = vadd.f32 %v2031, %v2034
    %vm2036 = vweird.f32 %v2030
    %vm2037 = vweird.f32 %v2031
    %vm2038 = vmor %vm2036, %vm2037
    %v2039 = vsel %vm2038, %v2031, %v2035
    %v2040 = vand.u32 2147483647, %v2030
    %vm2041 = vcmp.eq.f32.partialorder %v2040, 8.507059e+37
    %v2042 = vand.u32 %v2030, 2147483648
    %v2043 = vor.u32 1.1754944e-38, %v2042
    %v2044 = vsel %vm2041, %v2043, %v2039
    %v2045 = vmul.f32 1.0, %v2044
    %v2046 = vxor.u32 %v1985, 2147483648
    %v2047 = vmul.f32 %v2046, 1.442695
    %v2048 = vpow.pop %v2047
    %v2049 = vadd.f32 %v2048, 1.0
    %v2050 = vrcp.pop %v2049
    %v2051 = vmul.f32 %v2049, %v2050
    %v2052 = vsub.f32 1.0, %v2051
    %v2053 = vmul.f32 %v2050, %v2052
    %v2054 = vadd.f32 %v2050, %v2053
    %vm2055 = vweird.f32 %v2049
    %vm2056 = vweird.f32 %v2050
    %vm2057 = vmor %vm2055, %vm2056
    %v2058 = vsel %vm2057, %v2050, %v2054
    %v2059 = vand.u32 2147483647, %v2049
    %vm2060 = vcmp.eq.f32.partialorder %v2059, 8.507059e+37
    %v2061 = vand.u32 %v2049, 2147483648
    %v2062 = vor.u32 1.1754944e-38, %v2061
    %v2063 = vsel %vm2060, %v2062, %v2058
    %v2064 = vmul.f32 1.0, %v2063
    %v2065 = vtanh.pop %v2005
    %v2066 = vxor.u32 %v2025, 2147483648
    %v2067 = vmul.f32 %v2066, 1.442695
    %v2068 = vpow.pop %v2067
    %v2069 = vadd.f32 %v2068, 1.0
    %v2070 = vrcp.pop %v2069
    %v2071 = vmul.f32 %v2069, %v2070
    %v2072 = vsub.f32 1.0, %v2071
    %v2073 = vmul.f32 %v2070, %v2072
    %v2074 = vadd.f32 %v2070, %v2073
    %vm2075 = vweird.f32 %v2069
    %vm2076 = vweird.f32 %v2070
    %vm2077 = vmor %vm2075, %vm2076
    %v2078 = vsel %vm2077, %v2070, %v2074
    %v2079 = vand.u32 2147483647, %v2069
    %vm2080 = vcmp.eq.f32.partialorder %v2079, 8.507059e+37
    %v2081 = vand.u32 %v2069, 2147483648
    %v2082 = vor.u32 1.1754944e-38, %v2081
    %v2083 = vsel %vm2080, %v2082, %v2078
    %v2084 = vmul.f32 1.0, %v2083
    %v2085 = vmul.f32 %v2064, %v1942
    %v2086 = vmul.f32 %v2045, %v2065
    %v2087 = vadd.f32 %v2085, %v2086
    %v2088 = vtanh.pop %v2087
    %v2089 = vmul.f32 %v2084, %v2088
    %2090 = vst [vmem:[#allocation2] sm:$0xff] %v2089
    %v2091 = vld [vmem:[#allocation3 + $0x20] sm:$0xff]
    %v2092 = vld [vmem:[#allocation3 + $0x28] sm:$0xff]
    %v2093 = vld [vmem:[#allocation3 + $0x30] sm:$0xff]
    %v2094 = vld [vmem:[#allocation3 + $0x38] sm:$0xff]
    %2095 = vmatpush.msra.mxu0 %v1935
    %2096 = vmatpush.msra.mxu0 %v1931
    %2097 = vmatpush.msra.mxu0 %v1927
    %2098 = vmatpush.msra.mxu0 %v1923
    %2099 = vmatpush.msra.mxu0 %v1919
    %2100 = vmatpush.msra.mxu0 %v1915
    %2101 = vmatpush.msra.mxu0 %v1911
    %2102 = vmatpush.msra.mxu0 %v1907
    %2103 = vmatpush.msra.mxu0 %v1903
    %2104 = vmatpush.msra.mxu0 %v1899
    %2105 = vmatpush.msra.mxu0 %v1895
    %2106 = vmatpush.msra.mxu0 %v1891
    %2107 = vmatpush.msra.mxu0 %v1887
    %2108 = vmatpush.msra.mxu0 %v1883
    %2109 = vmatpush.msra.mxu0 %v1879
    %2110 = vmatpush.msra.mxu0 %v1875
    %2111 = vmatmul.f32.gmra.mxu0 %v2089
    %v2112 = vpop.f32.mrf.mxu0
    %v2113 = vadd.f32 %v2091, %v2112
    %2114 = vdwg.mxu0
    %2115 = vmatpush.msra.mxu0 %v1936
    %2116 = vmatpush.msra.mxu0 %v1932
    %2117 = vmatpush.msra.mxu0 %v1928
    %2118 = vmatpush.msra.mxu0 %v1924
    %2119 = vmatpush.msra.mxu0 %v1920
    %2120 = vmatpush.msra.mxu0 %v1916
    %2121 = vmatpush.msra.mxu0 %v1912
    %2122 = vmatpush.msra.mxu0 %v1908
    %2123 = vmatpush.msra.mxu0 %v1904
    %2124 = vmatpush.msra.mxu0 %v1900
    %2125 = vmatpush.msra.mxu0 %v1896
    %2126 = vmatpush.msra.mxu0 %v1892
    %2127 = vmatpush.msra.mxu0 %v1888
    %2128 = vmatpush.msra.mxu0 %v1884
    %2129 = vmatpush.msra.mxu0 %v1880
    %2130 = vmatpush.msra.mxu0 %v1876
    %2131 = vmatmul.f32.gmra.mxu0 %v2089
    %v2132 = vpop.f32.mrf.mxu0
    %v2133 = vadd.f32 %v2092, %v2132
    %2134 = vdwg.mxu0
    %2135 = vmatpush.msra.mxu0 %v1937
    %2136 = vmatpush.msra.mxu0 %v1933
    %2137 = vmatpush.msra.mxu0 %v1929
    %2138 = vmatpush.msra.mxu0 %v1925
    %2139 = vmatpush.msra.mxu0 %v1921
    %2140 = vmatpush.msra.mxu0 %v1917
    %2141 = vmatpush.msra.mxu0 %v1913
    %2142 = vmatpush.msra.mxu0 %v1909
    %2143 = vmatpush.msra.mxu0 %v1905
    %2144 = vmatpush.msra.mxu0 %v1901
    %2145 = vmatpush.msra.mxu0 %v1897
    %2146 = vmatpush.msra.mxu0 %v1893
    %2147 = vmatpush.msra.mxu0 %v1889
    %2148 = vmatpush.msra.mxu0 %v1885
    %2149 = vmatpush.msra.mxu0 %v1881
    %2150 = vmatpush.msra.mxu0 %v1877
    %2151 = vmatmul.f32.gmra.mxu0 %v2089
    %v2152 = vpop.f32.mrf.mxu0
    %v2153 = vadd.f32 %v2093, %v2152
    %2154 = vdwg.mxu0
    %2155 = vmatpush.msra.mxu0 %v1938
    %2156 = vmatpush.msra.mxu0 %v1934
    %2157 = vmatpush.msra.mxu0 %v1930
    %2158 = vmatpush.msra.mxu0 %v1926
    %2159 = vmatpush.msra.mxu0 %v1922
    %2160 = vmatpush.msra.mxu0 %v1918
    %2161 = vmatpush.msra.mxu0 %v1914
    %2162 = vmatpush.msra.mxu0 %v1910
    %2163 = vmatpush.msra.mxu0 %v1906
    %2164 = vmatpush.msra.mxu0 %v1902
    %2165 = vmatpush.msra.mxu0 %v1898
    %2166 = vmatpush.msra.mxu0 %v1894
    %2167 = vmatpush.msra.mxu0 %v1890
    %2168 = vmatpush.msra.mxu0 %v1886
    %2169 = vmatpush.msra.mxu0 %v1882
    %2170 = vmatpush.msra.mxu0 %v1878
    %2171 = vmatmul.f32.gmra.mxu0 %v2089
    %v2172 = vpop.f32.mrf.mxu0
    %v2173 = vadd.f32 %v2094, %v2172
    %2174 = vdwg.mxu0
    %v2175 = vxor.u32 %v2113, 2147483648
    %v2176 = vmul.f32 %v2175, 1.442695
    %v2177 = vpow.pop %v2176
    %v2178 = vadd.f32 %v2177, 1.0
    %v2179 = vrcp.pop %v2178
    %v2180 = vmul.f32 %v2178, %v2179
    %v2181 = vsub.f32 1.0, %v2180
    %v2182 = vmul.f32 %v2179, %v2181
    %v2183 = vadd.f32 %v2179, %v2182
    %vm2184 = vweird.f32 %v2178
    %vm2185 = vweird.f32 %v2179
    %vm2186 = vmor %vm2184, %vm2185
    %v2187 = vsel %vm2186, %v2179, %v2183
    %v2188 = vand.u32 2147483647, %v2178
    %vm2189 = vcmp.eq.f32.partialorder %v2188, 8.507059e+37
    %v2190 = vand.u32 %v2178, 2147483648
    %v2191 = vor.u32 1.1754944e-38, %v2190
    %v2192 = vsel %vm2189, %v2191, %v2187
    %v2193 = vmul.f32 1.0, %v2192
    %v2194 = vxor.u32 %v2133, 2147483648
    %v2195 = vmul.f32 %v2194, 1.442695
    %v2196 = vpow.pop %v2195
    %v2197 = vadd.f32 %v2196, 1.0
    %v2198 = vrcp.pop %v2197
    %v2199 = vmul.f32 %v2197, %v2198
    %v2200 = vsub.f32 1.0, %v2199
    %v2201 = vmul.f32 %v2198, %v2200
    %v2202 = vadd.f32 %v2198, %v2201
    %vm2203 = vweird.f32 %v2197
    %vm2204 = vweird.f32 %v2198
    %vm2205 = vmor %vm2203, %vm2204
    %v2206 = vsel %vm2205, %v2198, %v2202
    %v2207 = vand.u32 2147483647, %v2197
    %vm2208 = vcmp.eq.f32.partialorder %v2207, 8.507059e+37
    %v2209 = vand.u32 %v2197, 2147483648
    %v2210 = vor.u32 1.1754944e-38, %v2209
    %v2211 = vsel %vm2208, %v2210, %v2206
    %v2212 = vmul.f32 1.0, %v2211
    %v2213 = vtanh.pop %v2153
    %v2214 = vxor.u32 %v2173, 2147483648
    %v2215 = vmul.f32 %v2214, 1.442695
    %v2216 = vpow.pop %v2215
    %v2217 = vadd.f32 %v2216, 1.0
    %v2218 = vrcp.pop %v2217
    %v2219 = vmul.f32 %v2217, %v2218
    %v2220 = vsub.f32 1.0, %v2219
    %v2221 = vmul.f32 %v2218, %v2220
    %v2222 = vadd.f32 %v2218, %v2221
    %vm2223 = vweird.f32 %v2217
    %vm2224 = vweird.f32 %v2218
    %vm2225 = vmor %vm2223, %vm2224
    %v2226 = vsel %vm2225, %v2218, %v2222
    %v2227 = vand.u32 2147483647, %v2217
    %vm2228 = vcmp.eq.f32.partialorder %v2227, 8.507059e+37
    %v2229 = vand.u32 %v2217, 2147483648
    %v2230 = vor.u32 1.1754944e-38, %v2229
    %v2231 = vsel %vm2228, %v2230, %v2226
    %v2232 = vmul.f32 1.0, %v2231
    %v2233 = vmul.f32 %v2212, %v2087
    %v2234 = vmul.f32 %v2193, %v2213
    %v2235 = vadd.f32 %v2233, %v2234
    %v2236 = vtanh.pop %v2235
    %v2237 = vmul.f32 %v2232, %v2236
    %2238 = vst [vmem:[#allocation2 + $0x8] sm:$0xff] %v2237
    %v2239 = vld [vmem:[#allocation3 + $0x40] sm:$0xff]
    %v2240 = vld [vmem:[#allocation3 + $0x48] sm:$0xff]
    %v2241 = vld [vmem:[#allocation3 + $0x50] sm:$0xff]
    %v2242 = vld [vmem:[#allocation3 + $0x58] sm:$0xff]
    %2243 = vmatpush.msra.mxu0 %v1935
    %2244 = vmatpush.msra.mxu0 %v1931
    %2245 = vmatpush.msra.mxu0 %v1927
    %2246 = vmatpush.msra.mxu0 %v1923
    %2247 = vmatpush.msra.mxu0 %v1919
    %2248 = vmatpush.msra.mxu0 %v1915
    %2249 = vmatpush.msra.mxu0 %v1911
    %2250 = vmatpush.msra.mxu0 %v1907
    %2251 = vmatpush.msra.mxu0 %v1903
    %2252 = vmatpush.msra.mxu0 %v1899
    %2253 = vmatpush.msra.mxu0 %v1895
    %2254 = vmatpush.msra.mxu0 %v1891
    %2255 = vmatpush.msra.mxu0 %v1887
    %2256 = vmatpush.msra.mxu0 %v1883
    %2257 = vmatpush.msra.mxu0 %v1879
    %2258 = vmatpush.msra.mxu0 %v1875
    %2259 = vmatmul.f32.gmra.mxu0 %v2237
    %v2260 = vpop.f32.mrf.mxu0
    %v2261 = vadd.f32 %v2239, %v2260
    %2262 = vdwg.mxu0
    %2263 = vmatpush.msra.mxu0 %v1936
    %2264 = vmatpush.msra.mxu0 %v1932
    %2265 = vmatpush.msra.mxu0 %v1928
    %2266 = vmatpush.msra.mxu0 %v1924
    %2267 = vmatpush.msra.mxu0 %v1920
    %2268 = vmatpush.msra.mxu0 %v1916
    %2269 = vmatpush.msra.mxu0 %v1912
    %2270 = vmatpush.msra.mxu0 %v1908
    %2271 = vmatpush.msra.mxu0 %v1904
    %2272 = vmatpush.msra.mxu0 %v1900
    %2273 = vmatpush.msra.mxu0 %v1896
    %2274 = vmatpush.msra.mxu0 %v1892
    %2275 = vmatpush.msra.mxu0 %v1888
    %2276 = vmatpush.msra.mxu0 %v1884
    %2277 = vmatpush.msra.mxu0 %v1880
    %2278 = vmatpush.msra.mxu0 %v1876
    %2279 = vmatmul.f32.gmra.mxu0 %v2237
    %v2280 = vpop.f32.mrf.mxu0
    %v2281 = vadd.f32 %v2240, %v2280
    %2282 = vdwg.mxu0
    %2283 = vmatpush.msra.mxu0 %v1937
    %2284 = vmatpush.msra.mxu0 %v1933
    %2285 = vmatpush.msra.mxu0 %v1929
    %2286 = vmatpush.msra.mxu0 %v1925
    %2287 = vmatpush.msra.mxu0 %v1921
    %2288 = vmatpush.msra.mxu0 %v1917
    %2289 = vmatpush.msra.mxu0 %v1913
    %2290 = vmatpush.msra.mxu0 %v1909
    %2291 = vmatpush.msra.mxu0 %v1905
    %2292 = vmatpush.msra.mxu0 %v1901
    %2293 = vmatpush.msra.mxu0 %v1897
    %2294 = vmatpush.msra.mxu0 %v1893
    %2295 = vmatpush.msra.mxu0 %v1889
    %2296 = vmatpush.msra.mxu0 %v1885
    %2297 = vmatpush.msra.mxu0 %v1881
    %2298 = vmatpush.msra.mxu0 %v1877
    %2299 = vmatmul.f32.gmra.mxu0 %v2237
    %v2300 = vpop.f32.mrf.mxu0
    %v2301 = vadd.f32 %v2241, %v2300
    %2302 = vdwg.mxu0
    %2303 = vmatpush.msra.mxu0 %v1938
    %2304 = vmatpush.msra.mxu0 %v1934
    %2305 = vmatpush.msra.mxu0 %v1930
    %2306 = vmatpush.msra.mxu0 %v1926
    %2307 = vmatpush.msra.mxu0 %v1922
    %2308 = vmatpush.msra.mxu0 %v1918
    %2309 = vmatpush.msra.mxu0 %v1914
    %2310 = vmatpush.msra.mxu0 %v1910
    %2311 = vmatpush.msra.mxu0 %v1906
    %2312 = vmatpush.msra.mxu0 %v1902
    %2313 = vmatpush.msra.mxu0 %v1898
    %2314 = vmatpush.msra.mxu0 %v1894
    %2315 = vmatpush.msra.mxu0 %v1890
    %2316 = vmatpush.msra.mxu0 %v1886
    %2317 = vmatpush.msra.mxu0 %v1882
    %2318 = vmatpush.msra.mxu0 %v1878
    %2319 = vmatmul.f32.gmra.mxu0 %v2237
    %v2320 = vpop.f32.mrf.mxu0
    %v2321 = vadd.f32 %v2242, %v2320
    %2322 = vdwg.mxu0
    %v2323 = vxor.u32 %v2261, 2147483648
    %v2324 = vmul.f32 %v2323, 1.442695
    %v2325 = vpow.pop %v2324
    %v2326 = vadd.f32 %v2325, 1.0
    %v2327 = vrcp.pop %v2326
    %v2328 = vmul.f32 %v2326, %v2327
    %v2329 = vsub.f32 1.0, %v2328
    %v2330 = vmul.f32 %v2327, %v2329
    %v2331 = vadd.f32 %v2327, %v2330
    %vm2332 = vweird.f32 %v2326
    %vm2333 = vweird.f32 %v2327
    %vm2334 = vmor %vm2332, %vm2333
    %v2335 = vsel %vm2334, %v2327, %v2331
    %v2336 = vand.u32 2147483647, %v2326
    %vm2337 = vcmp.eq.f32.partialorder %v2336, 8.507059e+37
    %v2338 = vand.u32 %v2326, 2147483648
    %v2339 = vor.u32 1.1754944e-38, %v2338
    %v2340 = vsel %vm2337, %v2339, %v2335
    %v2341 = vmul.f32 1.0, %v2340
    %v2342 = vxor.u32 %v2281, 2147483648
    %v2343 = vmul.f32 %v2342, 1.442695
    %v2344 = vpow.pop %v2343
    %v2345 = vadd.f32 %v2344, 1.0
    %v2346 = vrcp.pop %v2345
    %v2347 = vmul.f32 %v2345, %v2346
    %v2348 = vsub.f32 1.0, %v2347
    %v2349 = vmul.f32 %v2346, %v2348
    %v2350 = vadd.f32 %v2346, %v2349
    %vm2351 = vweird.f32 %v2345
    %vm2352 = vweird.f32 %v2346
    %vm2353 = vmor %vm2351, %vm2352
    %v2354 = vsel %vm2353, %v2346, %v2350
    %v2355 = vand.u32 2147483647, %v2345
    %vm2356 = vcmp.eq.f32.partialorder %v2355, 8.507059e+37
    %v2357 = vand.u32 %v2345, 2147483648
    %v2358 = vor.u32 1.1754944e-38, %v2357
    %v2359 = vsel %vm2356, %v2358, %v2354
    %v2360 = vmul.f32 1.0, %v2359
    %v2361 = vtanh.pop %v2301
    %v2362 = vxor.u32 %v2321, 2147483648
    %v2363 = vmul.f32 %v2362, 1.442695
    %v2364 = vpow.pop %v2363
    %v2365 = vadd.f32 %v2364, 1.0
    %v2366 = vrcp.pop %v2365
    %v2367 = vmul.f32 %v2365, %v2366
    %v2368 = vsub.f32 1.0, %v2367
    %v2369 = vmul.f32 %v2366, %v2368
    %v2370 = vadd.f32 %v2366, %v2369
    %vm2371 = vweird.f32 %v2365
    %vm2372 = vweird.f32 %v2366
    %vm2373 = vmor %vm2371, %vm2372
    %v2374 = vsel %vm2373, %v2366, %v2370
    %v2375 = vand.u32 2147483647, %v2365
    %vm2376 = vcmp.eq.f32.partialorder %v2375, 8.507059e+37
    %v2377 = vand.u32 %v2365, 2147483648
    %v2378 = vor.u32 1.1754944e-38, %v2377
    %v2379 = vsel %vm2376, %v2378, %v2374
    %v2380 = vmul.f32 1.0, %v2379
    %v2381 = vmul.f32 %v2360, %v2235
    %v2382 = vmul.f32 %v2341, %v2361
    %v2383 = vadd.f32 %v2381, %v2382
    %v2384 = vtanh.pop %v2383
    %v2385 = vmul.f32 %v2380, %v2384
    %2386 = vst [vmem:[#allocation2 + $0x10] sm:$0xff] %v2385
    %v2387 = vld [vmem:[#allocation3 + $0x60] sm:$0xff]
    %v2388 = vld [vmem:[#allocation3 + $0x68] sm:$0xff]
    %v2389 = vld [vmem:[#allocation3 + $0x70] sm:$0xff]
    %v2390 = vld [vmem:[#allocation3 + $0x78] sm:$0xff]
    %2391 = vmatpush.msra.mxu0 %v1935
    %2392 = vmatpush.msra.mxu0 %v1931
    %2393 = vmatpush.msra.mxu0 %v1927
    %2394 = vmatpush.msra.mxu0 %v1923
    %2395 = vmatpush.msra.mxu0 %v1919
    %2396 = vmatpush.msra.mxu0 %v1915
    %2397 = vmatpush.msra.mxu0 %v1911
    %2398 = vmatpush.msra.mxu0 %v1907
    %2399 = vmatpush.msra.mxu0 %v1903
    %2400 = vmatpush.msra.mxu0 %v1899
    %2401 = vmatpush.msra.mxu0 %v1895
    %2402 = vmatpush.msra.mxu0 %v1891
    %2403 = vmatpush.msra.mxu0 %v1887
    %2404 = vmatpush.msra.mxu0 %v1883
    %2405 = vmatpush.msra.mxu0 %v1879
    %2406 = vmatpush.msra.mxu0 %v1875
    %2407 = vmatmul.f32.gmra.mxu0 %v2385
    %v2408 = vpop.f32.mrf.mxu0
    %v2409 = vadd.f32 %v2387, %v2408
    %2410 = vdwg.mxu0
    %2411 = vmatpush.msra.mxu0 %v1936
    %2412 = vmatpush.msra.mxu0 %v1932
    %2413 = vmatpush.msra.mxu0 %v1928
    %2414 = vmatpush.msra.mxu0 %v1924
    %2415 = vmatpush.msra.mxu0 %v1920
    %2416 = vmatpush.msra.mxu0 %v1916
    %2417 = vmatpush.msra.mxu0 %v1912
    %2418 = vmatpush.msra.mxu0 %v1908
    %2419 = vmatpush.msra.mxu0 %v1904
    %2420 = vmatpush.msra.mxu0 %v1900
    %2421 = vmatpush.msra.mxu0 %v1896
    %2422 = vmatpush.msra.mxu0 %v1892
    %2423 = vmatpush.msra.mxu0 %v1888
    %2424 = vmatpush.msra.mxu0 %v1884
    %2425 = vmatpush.msra.mxu0 %v1880
    %2426 = vmatpush.msra.mxu0 %v1876
    %2427 = vmatmul.f32.gmra.mxu0 %v2385
    %v2428 = vpop.f32.mrf.mxu0
    %v2429 = vadd.f32 %v2388, %v2428
    %2430 = vdwg.mxu0
    %2431 = vmatpush.msra.mxu0 %v1937
    %2432 = vmatpush.msra.mxu0 %v1933
    %2433 = vmatpush.msra.mxu0 %v1929
    %2434 = vmatpush.msra.mxu0 %v1925
    %2435 = vmatpush.msra.mxu0 %v1921
    %2436 = vmatpush.msra.mxu0 %v1917
    %2437 = vmatpush.msra.mxu0 %v1913
    %2438 = vmatpush.msra.mxu0 %v1909
    %2439 = vmatpush.msra.mxu0 %v1905
    %2440 = vmatpush.msra.mxu0 %v1901
    %2441 = vmatpush.msra.mxu0 %v1897
    %2442 = vmatpush.msra.mxu0 %v1893
    %2443 = vmatpush.msra.mxu0 %v1889
    %2444 = vmatpush.msra.mxu0 %v1885
    %2445 = vmatpush.msra.mxu0 %v1881
    %2446 = vmatpush.msra.mxu0 %v1877
    %2447 = vmatmul.f32.gmra.mxu0 %v2385
    %v2448 = vpop.f32.mrf.mxu0
    %v2449 = vadd.f32 %v2389, %v2448
    %2450 = vdwg.mxu0
    %2451 = vmatpush.msra.mxu0 %v1938
    %2452 = vmatpush.msra.mxu0 %v1934
    %2453 = vmatpush.msra.mxu0 %v1930
    %2454 = vmatpush.msra.mxu0 %v1926
    %2455 = vmatpush.msra.mxu0 %v1922
    %2456 = vmatpush.msra.mxu0 %v1918
    %2457 = vmatpush.msra.mxu0 %v1914
    %2458 = vmatpush.msra.mxu0 %v1910
    %2459 = vmatpush.msra.mxu0 %v1906
    %2460 = vmatpush.msra.mxu0 %v1902
    %2461 = vmatpush.msra.mxu0 %v1898
    %2462 = vmatpush.msra.mxu0 %v1894
    %2463 = vmatpush.msra.mxu0 %v1890
    %2464 = vmatpush.msra.mxu0 %v1886
    %2465 = vmatpush.msra.mxu0 %v1882
    %2466 = vmatpush.msra.mxu0 %v1878
    %2467 = vmatmul.f32.gmra.mxu0 %v2385
    %v2468 = vpop.f32.mrf.mxu0
    %v2469 = vadd.f32 %v2390, %v2468
    %2470 = vdwg.mxu0
    %v2471 = vxor.u32 %v2409, 2147483648
    %v2472 = vmul.f32 %v2471, 1.442695
    %v2473 = vpow.pop %v2472
    %v2474 = vadd.f32 %v2473, 1.0
    %v2475 = vrcp.pop %v2474
    %v2476 = vmul.f32 %v2474, %v2475
    %v2477 = vsub.f32 1.0, %v2476
    %v2478 = vmul.f32 %v2475, %v2477
    %v2479 = vadd.f32 %v2475, %v2478
    %vm2480 = vweird.f32 %v2474
    %vm2481 = vweird.f32 %v2475
    %vm2482 = vmor %vm2480, %vm2481
    %v2483 = vsel %vm2482, %v2475, %v2479
    %v2484 = vand.u32 2147483647, %v2474
    %vm2485 = vcmp.eq.f32.partialorder %v2484, 8.507059e+37
    %v2486 = vand.u32 %v2474, 2147483648
    %v2487 = vor.u32 1.1754944e-38, %v2486
    %v2488 = vsel %vm2485, %v2487, %v2483
    %v2489 = vmul.f32 1.0, %v2488
    %v2490 = vxor.u32 %v2429, 2147483648
    %v2491 = vmul.f32 %v2490, 1.442695
    %v2492 = vpow.pop %v2491
    %v2493 = vadd.f32 %v2492, 1.0
    %v2494 = vrcp.pop %v2493
    %v2495 = vmul.f32 %v2493, %v2494
    %v2496 = vsub.f32 1.0, %v2495
    %v2497 = vmul.f32 %v2494, %v2496
    %v2498 = vadd.f32 %v2494, %v2497
    %vm2499 = vweird.f32 %v2493
    %vm2500 = vweird.f32 %v2494
    %vm2501 = vmor %vm2499, %vm2500
    %v2502 = vsel %vm2501, %v2494, %v2498
    %v2503 = vand.u32 2147483647, %v2493
    %vm2504 = vcmp.eq.f32.partialorder %v2503, 8.507059e+37
    %v2505 = vand.u32 %v2493, 2147483648
    %v2506 = vor.u32 1.1754944e-38, %v2505
    %v2507 = vsel %vm2504, %v2506, %v2502
    %v2508 = vmul.f32 1.0, %v2507
    %v2509 = vtanh.pop %v2449
    %v2510 = vxor.u32 %v2469, 2147483648
    %v2511 = vmul.f32 %v2510, 1.442695
    %v2512 = vpow.pop %v2511
    %v2513 = vadd.f32 %v2512, 1.0
    %v2514 = vrcp.pop %v2513
    %v2515 = vmul.f32 %v2513, %v2514
    %v2516 = vsub.f32 1.0, %v2515
    %v2517 = vmul.f32 %v2514, %v2516
    %v2518 = vadd.f32 %v2514, %v2517
    %vm2519 = vweird.f32 %v2513
    %vm2520 = vweird.f32 %v2514
    %vm2521 = vmor %vm2519, %vm2520
    %v2522 = vsel %vm2521, %v2514, %v2518
    %v2523 = vand.u32 2147483647, %v2513
    %vm2524 = vcmp.eq.f32.partialorder %v2523, 8.507059e+37
    %v2525 = vand.u32 %v2513, 2147483648
    %v2526 = vor.u32 1.1754944e-38, %v2525
    %v2527 = vsel %vm2524, %v2526, %v2522
    %v2528 = vmul.f32 1.0, %v2527
    %v2529 = vmul.f32 %v2508, %v2383
    %v2530 = vmul.f32 %v2489, %v2509
    %v2531 = vadd.f32 %v2529, %v2530
    %v2532 = vtanh.pop %v2531
    %v2533 = vmul.f32 %v2528, %v2532
    %2534 = vst [vmem:[#allocation2 + $0x18] sm:$0xff] %v2533
    %v2535 = vld [vmem:[#allocation3 + $0x80] sm:$0xff]
    %v2536 = vld [vmem:[#allocation3 + $0x88] sm:$0xff]
    %v2537 = vld [vmem:[#allocation3 + $0x90] sm:$0xff]
    %v2538 = vld [vmem:[#allocation3 + $0x98] sm:$0xff]
    %2539 = vmatpush.msra.mxu0 %v1935
    %2540 = vmatpush.msra.mxu0 %v1931
    %2541 = vmatpush.msra.mxu0 %v1927
    %2542 = vmatpush.msra.mxu0 %v1923
    %2543 = vmatpush.msra.mxu0 %v1919
    %2544 = vmatpush.msra.mxu0 %v1915
    %2545 = vmatpush.msra.mxu0 %v1911
    %2546 = vmatpush.msra.mxu0 %v1907
    %2547 = vmatpush.msra.mxu0 %v1903
    %2548 = vmatpush.msra.mxu0 %v1899
    %2549 = vmatpush.msra.mxu0 %v1895
    %2550 = vmatpush.msra.mxu0 %v1891
    %2551 = vmatpush.msra.mxu0 %v1887
    %2552 = vmatpush.msra.mxu0 %v1883
    %2553 = vmatpush.msra.mxu0 %v1879
    %2554 = vmatpush.msra.mxu0 %v1875
    %2555 = vmatmul.f32.gmra.mxu0 %v2533
    %v2556 = vpop.f32.mrf.mxu0
    %v2557 = vadd.f32 %v2535, %v2556
    %2558 = vdwg.mxu0
    %2559 = vmatpush.msra.mxu0 %v1936
    %2560 = vmatpush.msra.mxu0 %v1932
    %2561 = vmatpush.msra.mxu0 %v1928
    %2562 = vmatpush.msra.mxu0 %v1924
    %2563 = vmatpush.msra.mxu0 %v1920
    %2564 = vmatpush.msra.mxu0 %v1916
    %2565 = vmatpush.msra.mxu0 %v1912
    %2566 = vmatpush.msra.mxu0 %v1908
    %2567 = vmatpush.msra.mxu0 %v1904
    %2568 = vmatpush.msra.mxu0 %v1900
    %2569 = vmatpush.msra.mxu0 %v1896
    %2570 = vmatpush.msra.mxu0 %v1892
    %2571 = vmatpush.msra.mxu0 %v1888
    %2572 = vmatpush.msra.mxu0 %v1884
    %2573 = vmatpush.msra.mxu0 %v1880
    %2574 = vmatpush.msra.mxu0 %v1876
    %2575 = vmatmul.f32.gmra.mxu0 %v2533
    %v2576 = vpop.f32.mrf.mxu0
    %v2577 = vadd.f32 %v2536, %v2576
    %2578 = vdwg.mxu0
    %2579 = vmatpush.msra.mxu0 %v1937
    %2580 = vmatpush.msra.mxu0 %v1933
    %2581 = vmatpush.msra.mxu0 %v1929
    %2582 = vmatpush.msra.mxu0 %v1925
    %2583 = vmatpush.msra.mxu0 %v1921
    %2584 = vmatpush.msra.mxu0 %v1917
    %2585 = vmatpush.msra.mxu0 %v1913
    %2586 = vmatpush.msra.mxu0 %v1909
    %2587 = vmatpush.msra.mxu0 %v1905
    %2588 = vmatpush.msra.mxu0 %v1901
    %2589 = vmatpush.msra.mxu0 %v1897
    %2590 = vmatpush.msra.mxu0 %v1893
    %2591 = vmatpush.msra.mxu0 %v1889
    %2592 = vmatpush.msra.mxu0 %v1885
    %2593 = vmatpush.msra.mxu0 %v1881
    %2594 = vmatpush.msra.mxu0 %v1877
    %2595 = vmatmul.f32.gmra.mxu0 %v2533
    %v2596 = vpop.f32.mrf.mxu0
    %v2597 = vadd.f32 %v2537, %v2596
    %2598 = vdwg.mxu0
    %2599 = vmatpush.msra.mxu0 %v1938
    %2600 = vmatpush.msra.mxu0 %v1934
    %2601 = vmatpush.msra.mxu0 %v1930
    %2602 = vmatpush.msra.mxu0 %v1926
    %2603 = vmatpush.msra.mxu0 %v1922
    %2604 = vmatpush.msra.mxu0 %v1918
    %2605 = vmatpush.msra.mxu0 %v1914
    %2606 = vmatpush.msra.mxu0 %v1910
    %2607 = vmatpush.msra.mxu0 %v1906
    %2608 = vmatpush.msra.mxu0 %v1902
    %2609 = vmatpush.msra.mxu0 %v1898
    %2610 = vmatpush.msra.mxu0 %v1894
    %2611 = vmatpush.msra.mxu0 %v1890
    %2612 = vmatpush.msra.mxu0 %v1886
    %2613 = vmatpush.msra.mxu0 %v1882
    %2614 = vmatpush.msra.mxu0 %v1878
    %2615 = vmatmul.f32.gmra.mxu0 %v2533
    %v2616 = vpop.f32.mrf.mxu0
    %v2617 = vadd.f32 %v2538, %v2616
    %2618 = vdwg.mxu0
    %v2619 = vxor.u32 %v2557, 2147483648
    %v2620 = vmul.f32 %v2619, 1.442695
    %v2621 = vpow.pop %v2620
    %v2622 = vadd.f32 %v2621, 1.0
    %v2623 = vrcp.pop %v2622
    %v2624 = vmul.f32 %v2622, %v2623
    %v2625 = vsub.f32 1.0, %v2624
    %v2626 = vmul.f32 %v2623, %v2625
    %v2627 = vadd.f32 %v2623, %v2626
    %vm2628 = vweird.f32 %v2622
    %vm2629 = vweird.f32 %v2623
    %vm2630 = vmor %vm2628, %vm2629
    %v2631 = vsel %vm2630, %v2623, %v2627
    %v2632 = vand.u32 2147483647, %v2622
    %vm2633 = vcmp.eq.f32.partialorder %v2632, 8.507059e+37
    %v2634 = vand.u32 %v2622, 2147483648
    %v2635 = vor.u32 1.1754944e-38, %v2634
    %v2636 = vsel %vm2633, %v2635, %v2631
    %v2637 = vmul.f32 1.0, %v2636
    %v2638 = vxor.u32 %v2577, 2147483648
    %v2639 = vmul.f32 %v2638, 1.442695
    %v2640 = vpow.pop %v2639
    %v2641 = vadd.f32 %v2640, 1.0
    %v2642 = vrcp.pop %v2641
    %v2643 = vmul.f32 %v2641, %v2642
    %v2644 = vsub.f32 1.0, %v2643
    %v2645 = vmul.f32 %v2642, %v2644
    %v2646 = vadd.f32 %v2642, %v2645
    %vm2647 = vweird.f32 %v2641
    %vm2648 = vweird.f32 %v2642
    %vm2649 = vmor %vm2647, %vm2648
    %v2650 = vsel %vm2649, %v2642, %v2646
    %v2651 = vand.u32 2147483647, %v2641
    %vm2652 = vcmp.eq.f32.partialorder %v2651, 8.507059e+37
    %v2653 = vand.u32 %v2641, 2147483648
    %v2654 = vor.u32 1.1754944e-38, %v2653
    %v2655 = vsel %vm2652, %v2654, %v2650
    %v2656 = vmul.f32 1.0, %v2655
    %v2657 = vtanh.pop %v2597
    %v2658 = vxor.u32 %v2617, 2147483648
    %v2659 = vmul.f32 %v2658, 1.442695
    %v2660 = vpow.pop %v2659
    %v2661 = vadd.f32 %v2660, 1.0
    %v2662 = vrcp.pop %v2661
    %v2663 = vmul.f32 %v2661, %v2662
    %v2664 = vsub.f32 1.0, %v2663
    %v2665 = vmul.f32 %v2662, %v2664
    %v2666 = vadd.f32 %v2662, %v2665
    %vm2667 = vweird.f32 %v2661
    %vm2668 = vweird.f32 %v2662
    %vm2669 = vmor %vm2667, %vm2668
    %v2670 = vsel %vm2669, %v2662, %v2666
    %v2671 = vand.u32 2147483647, %v2661
    %vm2672 = vcmp.eq.f32.partialorder %v2671, 8.507059e+37
    %v2673 = vand.u32 %v2661, 2147483648
    %v2674 = vor.u32 1.1754944e-38, %v2673
    %v2675 = vsel %vm2672, %v2674, %v2670
    %v2676 = vmul.f32 1.0, %v2675
    %v2677 = vmul.f32 %v2656, %v2531
    %v2678 = vmul.f32 %v2637, %v2657
    %v2679 = vadd.f32 %v2677, %v2678
    %v2680 = vtanh.pop %v2679
    %v2681 = vmul.f32 %v2676, %v2680
    %2682 = vst [vmem:[#allocation2 + $0x20] sm:$0xff] %v2681
    %v2683 = vld [vmem:[#allocation3 + $0xa0] sm:$0xff]
    %v2684 = vld [vmem:[#allocation3 + $0xa8] sm:$0xff]
    %v2685 = vld [vmem:[#allocation3 + $0xb0] sm:$0xff]
    %v2686 = vld [vmem:[#allocation3 + $0xb8] sm:$0xff]
    %2687 = vmatpush.msra.mxu0 %v1935
    %2688 = vmatpush.msra.mxu0 %v1931
    %2689 = vmatpush.msra.mxu0 %v1927
    %2690 = vmatpush.msra.mxu0 %v1923
    %2691 = vmatpush.msra.mxu0 %v1919
    %2692 = vmatpush.msra.mxu0 %v1915
    %2693 = vmatpush.msra.mxu0 %v1911
    %2694 = vmatpush.msra.mxu0 %v1907
    %2695 = vmatpush.msra.mxu0 %v1903
    %2696 = vmatpush.msra.mxu0 %v1899
    %2697 = vmatpush.msra.mxu0 %v1895
    %2698 = vmatpush.msra.mxu0 %v1891
    %2699 = vmatpush.msra.mxu0 %v1887
    %2700 = vmatpush.msra.mxu0 %v1883
    %2701 = vmatpush.msra.mxu0 %v1879
    %2702 = vmatpush.msra.mxu0 %v1875
    %2703 = vmatmul.f32.gmra.mxu0 %v2681
    %v2704 = vpop.f32.mrf.mxu0
    %v2705 = vadd.f32 %v2683, %v2704
    %2706 = vdwg.mxu0
    %2707 = vmatpush.msra.mxu0 %v1936
    %2708 = vmatpush.msra.mxu0 %v1932
    %2709 = vmatpush.msra.mxu0 %v1928
    %2710 = vmatpush.msra.mxu0 %v1924
    %2711 = vmatpush.msra.mxu0 %v1920
    %2712 = vmatpush.msra.mxu0 %v1916
    %2713 = vmatpush.msra.mxu0 %v1912
    %2714 = vmatpush.msra.mxu0 %v1908
    %2715 = vmatpush.msra.mxu0 %v1904
    %2716 = vmatpush.msra.mxu0 %v1900
    %2717 = vmatpush.msra.mxu0 %v1896
    %2718 = vmatpush.msra.mxu0 %v1892
    %2719 = vmatpush.msra.mxu0 %v1888
    %2720 = vmatpush.msra.mxu0 %v1884
    %2721 = vmatpush.msra.mxu0 %v1880
    %2722 = vmatpush.msra.mxu0 %v1876
    %2723 = vmatmul.f32.gmra.mxu0 %v2681
    %v2724 = vpop.f32.mrf.mxu0
    %v2725 = vadd.f32 %v2684, %v2724
    %2726 = vdwg.mxu0
    %2727 = vmatpush.msra.mxu0 %v1937
    %2728 = vmatpush.msra.mxu0 %v1933
    %2729 = vmatpush.msra.mxu0 %v1929
    %2730 = vmatpush.msra.mxu0 %v1925
    %2731 = vmatpush.msra.mxu0 %v1921
    %2732 = vmatpush.msra.mxu0 %v1917
    %2733 = vmatpush.msra.mxu0 %v1913
    %2734 = vmatpush.msra.mxu0 %v1909
    %2735 = vmatpush.msra.mxu0 %v1905
    %2736 = vmatpush.msra.mxu0 %v1901
    %2737 = vmatpush.msra.mxu0 %v1897
    %2738 = vmatpush.msra.mxu0 %v1893
    %2739 = vmatpush.msra.mxu0 %v1889
    %2740 = vmatpush.msra.mxu0 %v1885
    %2741 = vmatpush.msra.mxu0 %v1881
    %2742 = vmatpush.msra.mxu0 %v1877
    %2743 = vmatmul.f32.gmra.mxu0 %v2681
    %v2744 = vpop.f32.mrf.mxu0
    %v2745 = vadd.f32 %v2685, %v2744
    %2746 = vdwg.mxu0
    %2747 = vmatpush.msra.mxu0 %v1938
    %2748 = vmatpush.msra.mxu0 %v1934
    %2749 = vmatpush.msra.mxu0 %v1930
    %2750 = vmatpush.msra.mxu0 %v1926
    %2751 = vmatpush.msra.mxu0 %v1922
    %2752 = vmatpush.msra.mxu0 %v1918
    %2753 = vmatpush.msra.mxu0 %v1914
    %2754 = vmatpush.msra.mxu0 %v1910
    %2755 = vmatpush.msra.mxu0 %v1906
    %2756 = vmatpush.msra.mxu0 %v1902
    %2757 = vmatpush.msra.mxu0 %v1898
    %2758 = vmatpush.msra.mxu0 %v1894
    %2759 = vmatpush.msra.mxu0 %v1890
    %2760 = vmatpush.msra.mxu0 %v1886
    %2761 = vmatpush.msra.mxu0 %v1882
    %2762 = vmatpush.msra.mxu0 %v1878
    %2763 = vmatmul.f32.gmra.mxu0 %v2681
    %v2764 = vpop.f32.mrf.mxu0
    %v2765 = vadd.f32 %v2686, %v2764
    %2766 = vdwg.mxu0
    %v2767 = vxor.u32 %v2705, 2147483648
    %v2768 = vmul.f32 %v2767, 1.442695
    %v2769 = vpow.pop %v2768
    %v2770 = vadd.f32 %v2769, 1.0
    %v2771 = vrcp.pop %v2770
    %v2772 = vmul.f32 %v2770, %v2771
    %v2773 = vsub.f32 1.0, %v2772
    %v2774 = vmul.f32 %v2771, %v2773
    %v2775 = vadd.f32 %v2771, %v2774
    %vm2776 = vweird.f32 %v2770
    %vm2777 = vweird.f32 %v2771
    %vm2778 = vmor %vm2776, %vm2777
    %v2779 = vsel %vm2778, %v2771, %v2775
    %v2780 = vand.u32 2147483647, %v2770
    %vm2781 = vcmp.eq.f32.partialorder %v2780, 8.507059e+37
    %v2782 = vand.u32 %v2770, 2147483648
    %v2783 = vor.u32 1.1754944e-38, %v2782
    %v2784 = vsel %vm2781, %v2783, %v2779
    %v2785 = vmul.f32 1.0, %v2784
    %v2786 = vxor.u32 %v2725, 2147483648
    %v2787 = vmul.f32 %v2786, 1.442695
    %v2788 = vpow.pop %v2787
    %v2789 = vadd.f32 %v2788, 1.0
    %v2790 = vrcp.pop %v2789
    %v2791 = vmul.f32 %v2789, %v2790
    %v2792 = vsub.f32 1.0, %v2791
    %v2793 = vmul.f32 %v2790, %v2792
    %v2794 = vadd.f32 %v2790, %v2793
    %vm2795 = vweird.f32 %v2789
    %vm2796 = vweird.f32 %v2790
    %vm2797 = vmor %vm2795, %vm2796
    %v2798 = vsel %vm2797, %v2790, %v2794
    %v2799 = vand.u32 2147483647, %v2789
    %vm2800 = vcmp.eq.f32.partialorder %v2799, 8.507059e+37
    %v2801 = vand.u32 %v2789, 2147483648
    %v2802 = vor.u32 1.1754944e-38, %v2801
    %v2803 = vsel %vm2800, %v2802, %v2798
    %v2804 = vmul.f32 1.0, %v2803
    %v2805 = vtanh.pop %v2745
    %v2806 = vxor.u32 %v2765, 2147483648
    %v2807 = vmul.f32 %v2806, 1.442695
    %v2808 = vpow.pop %v2807
    %v2809 = vadd.f32 %v2808, 1.0
    %v2810 = vrcp.pop %v2809
    %v2811 = vmul.f32 %v2809, %v2810
    %v2812 = vsub.f32 1.0, %v2811
    %v2813 = vmul.f32 %v2810, %v2812
    %v2814 = vadd.f32 %v2810, %v2813
    %vm2815 = vweird.f32 %v2809
    %vm2816 = vweird.f32 %v2810
    %vm2817 = vmor %vm2815, %vm2816
    %v2818 = vsel %vm2817, %v2810, %v2814
    %v2819 = vand.u32 2147483647, %v2809
    %vm2820 = vcmp.eq.f32.partialorder %v2819, 8.507059e+37
    %v2821 = vand.u32 %v2809, 2147483648
    %v2822 = vor.u32 1.1754944e-38, %v2821
    %v2823 = vsel %vm2820, %v2822, %v2818
    %v2824 = vmul.f32 1.0, %v2823
    %v2825 = vmul.f32 %v2804, %v2679
    %v2826 = vmul.f32 %v2785, %v2805
    %v2827 = vadd.f32 %v2825, %v2826
    %v2828 = vtanh.pop %v2827
    %v2829 = vmul.f32 %v2824, %v2828
    %2830 = vst [vmem:[#allocation2 + $0x28] sm:$0xff] %v2829
    %v2831 = vld [vmem:[#allocation3 + $0xc0] sm:$0xff]
    %v2832 = vld [vmem:[#allocation3 + $0xc8] sm:$0xff]
    %v2833 = vld [vmem:[#allocation3 + $0xd0] sm:$0xff]
    %v2834 = vld [vmem:[#allocation3 + $0xd8] sm:$0xff]
    %2835 = vmatpush.msra.mxu0 %v1935
    %2836 = vmatpush.msra.mxu0 %v1931
    %2837 = vmatpush.msra.mxu0 %v1927
    %2838 = vmatpush.msra.mxu0 %v1923
    %2839 = vmatpush.msra.mxu0 %v1919
    %2840 = vmatpush.msra.mxu0 %v1915
    %2841 = vmatpush.msra.mxu0 %v1911
    %2842 = vmatpush.msra.mxu0 %v1907
    %2843 = vmatpush.msra.mxu0 %v1903
    %2844 = vmatpush.msra.mxu0 %v1899
    %2845 = vmatpush.msra.mxu0 %v1895
    %2846 = vmatpush.msra.mxu0 %v1891
    %2847 = vmatpush.msra.mxu0 %v1887
    %2848 = vmatpush.msra.mxu0 %v1883
    %2849 = vmatpush.msra.mxu0 %v1879
    %2850 = vmatpush.msra.mxu0 %v1875
    %2851 = vmatmul.f32.gmra.mxu0 %v2829
    %v2852 = vpop.f32.mrf.mxu0
    %v2853 = vadd.f32 %v2831, %v2852
    %2854 = vdwg.mxu0
    %2855 = vmatpush.msra.mxu0 %v1936
    %2856 = vmatpush.msra.mxu0 %v1932
    %2857 = vmatpush.msra.mxu0 %v1928
    %2858 = vmatpush.msra.mxu0 %v1924
    %2859 = vmatpush.msra.mxu0 %v1920
    %2860 = vmatpush.msra.mxu0 %v1916
    %2861 = vmatpush.msra.mxu0 %v1912
    %2862 = vmatpush.msra.mxu0 %v1908
    %2863 = vmatpush.msra.mxu0 %v1904
    %2864 = vmatpush.msra.mxu0 %v1900
    %2865 = vmatpush.msra.mxu0 %v1896
    %2866 = vmatpush.msra.mxu0 %v1892
    %2867 = vmatpush.msra.mxu0 %v1888
    %2868 = vmatpush.msra.mxu0 %v1884
    %2869 = vmatpush.msra.mxu0 %v1880
    %2870 = vmatpush.msra.mxu0 %v1876
    %2871 = vmatmul.f32.gmra.mxu0 %v2829
    %v2872 = vpop.f32.mrf.mxu0
    %v2873 = vadd.f32 %v2832, %v2872
    %2874 = vdwg.mxu0
    %2875 = vmatpush.msra.mxu0 %v1937
    %2876 = vmatpush.msra.mxu0 %v1933
    %2877 = vmatpush.msra.mxu0 %v1929
    %2878 = vmatpush.msra.mxu0 %v1925
    %2879 = vmatpush.msra.mxu0 %v1921
    %2880 = vmatpush.msra.mxu0 %v1917
    %2881 = vmatpush.msra.mxu0 %v1913
    %2882 = vmatpush.msra.mxu0 %v1909
    %2883 = vmatpush.msra.mxu0 %v1905
    %2884 = vmatpush.msra.mxu0 %v1901
    %2885 = vmatpush.msra.mxu0 %v1897
    %2886 = vmatpush.msra.mxu0 %v1893
    %2887 = vmatpush.msra.mxu0 %v1889
    %2888 = vmatpush.msra.mxu0 %v1885
    %2889 = vmatpush.msra.mxu0 %v1881
    %2890 = vmatpush.msra.mxu0 %v1877
    %2891 = vmatmul.f32.gmra.mxu0 %v2829
    %v2892 = vpop.f32.mrf.mxu0
    %v2893 = vadd.f32 %v2833, %v2892
    %2894 = vdwg.mxu0
    %2895 = vmatpush.msra.mxu0 %v1938
    %2896 = vmatpush.msra.mxu0 %v1934
    %2897 = vmatpush.msra.mxu0 %v1930
    %2898 = vmatpush.msra.mxu0 %v1926
    %2899 = vmatpush.msra.mxu0 %v1922
    %2900 = vmatpush.msra.mxu0 %v1918
    %2901 = vmatpush.msra.mxu0 %v1914
    %2902 = vmatpush.msra.mxu0 %v1910
    %2903 = vmatpush.msra.mxu0 %v1906
    %2904 = vmatpush.msra.mxu0 %v1902
    %2905 = vmatpush.msra.mxu0 %v1898
    %2906 = vmatpush.msra.mxu0 %v1894
    %2907 = vmatpush.msra.mxu0 %v1890
    %2908 = vmatpush.msra.mxu0 %v1886
    %2909 = vmatpush.msra.mxu0 %v1882
    %2910 = vmatpush.msra.mxu0 %v1878
    %2911 = vmatmul.f32.gmra.mxu0 %v2829
    %v2912 = vpop.f32.mrf.mxu0
    %v2913 = vadd.f32 %v2834, %v2912
    %2914 = vdwg.mxu0
    %v2915 = vxor.u32 %v2853, 2147483648
    %v2916 = vmul.f32 %v2915, 1.442695
    %v2917 = vpow.pop %v2916
    %v2918 = vadd.f32 %v2917, 1.0
    %v2919 = vrcp.pop %v2918
    %v2920 = vmul.f32 %v2918, %v2919
    %v2921 = vsub.f32 1.0, %v2920
    %v2922 = vmul.f32 %v2919, %v2921
    %v2923 = vadd.f32 %v2919, %v2922
    %vm2924 = vweird.f32 %v2918
    %vm2925 = vweird.f32 %v2919
    %vm2926 = vmor %vm2924, %vm2925
    %v2927 = vsel %vm2926, %v2919, %v2923
    %v2928 = vand.u32 2147483647, %v2918
    %vm2929 = vcmp.eq.f32.partialorder %v2928, 8.507059e+37
    %v2930 = vand.u32 %v2918, 2147483648
    %v2931 = vor.u32 1.1754944e-38, %v2930
    %v2932 = vsel %vm2929, %v2931, %v2927
    %v2933 = vmul.f32 1.0, %v2932
    %v2934 = vxor.u32 %v2873, 2147483648
    %v2935 = vmul.f32 %v2934, 1.442695
    %v2936 = vpow.pop %v2935
    %v2937 = vadd.f32 %v2936, 1.0
    %v2938 = vrcp.pop %v2937
    %v2939 = vmul.f32 %v2937, %v2938
    %v2940 = vsub.f32 1.0, %v2939
    %v2941 = vmul.f32 %v2938, %v2940
    %v2942 = vadd.f32 %v2938, %v2941
    %vm2943 = vweird.f32 %v2937
    %vm2944 = vweird.f32 %v2938
    %vm2945 = vmor %vm2943, %vm2944
    %v2946 = vsel %vm2945, %v2938, %v2942
    %v2947 = vand.u32 2147483647, %v2937
    %vm2948 = vcmp.eq.f32.partialorder %v2947, 8.507059e+37
    %v2949 = vand.u32 %v2937, 2147483648
    %v2950 = vor.u32 1.1754944e-38, %v2949
    %v2951 = vsel %vm2948, %v2950, %v2946
    %v2952 = vmul.f32 1.0, %v2951
    %v2953 = vtanh.pop %v2893
    %v2954 = vxor.u32 %v2913, 2147483648
    %v2955 = vmul.f32 %v2954, 1.442695
    %v2956 = vpow.pop %v2955
    %v2957 = vadd.f32 %v2956, 1.0
    %v2958 = vrcp.pop %v2957
    %v2959 = vmul.f32 %v2957, %v2958
    %v2960 = vsub.f32 1.0, %v2959
    %v2961 = vmul.f32 %v2958, %v2960
    %v2962 = vadd.f32 %v2958, %v2961
    %vm2963 = vweird.f32 %v2957
    %vm2964 = vweird.f32 %v2958
    %vm2965 = vmor %vm2963, %vm2964
    %v2966 = vsel %vm2965, %v2958, %v2962
    %v2967 = vand.u32 2147483647, %v2957
    %vm2968 = vcmp.eq.f32.partialorder %v2967, 8.507059e+37
    %v2969 = vand.u32 %v2957, 2147483648
    %v2970 = vor.u32 1.1754944e-38, %v2969
    %v2971 = vsel %vm2968, %v2970, %v2966
    %v2972 = vmul.f32 1.0, %v2971
    %v2973 = vmul.f32 %v2952, %v2827
    %v2974 = vmul.f32 %v2933, %v2953
    %v2975 = vadd.f32 %v2973, %v2974
    %v2976 = vtanh.pop %v2975
    %v2977 = vmul.f32 %v2972, %v2976
    %2978 = vst [vmem:[#allocation2 + $0x30] sm:$0xff] %v2977
    %v2979 = vld [vmem:[#allocation3 + $0xe0] sm:$0xff]
    %v2980 = vld [vmem:[#allocation3 + $0xe8] sm:$0xff]
    %v2981 = vld [vmem:[#allocation3 + $0xf0] sm:$0xff]
    %v2982 = vld [vmem:[#allocation3 + $0xf8] sm:$0xff]
    %2983 = vmatpush.msra.mxu0 %v1935
    %2984 = vmatpush.msra.mxu0 %v1931
    %2985 = vmatpush.msra.mxu0 %v1927
    %2986 = vmatpush.msra.mxu0 %v1923
    %2987 = vmatpush.msra.mxu0 %v1919
    %2988 = vmatpush.msra.mxu0 %v1915
    %2989 = vmatpush.msra.mxu0 %v1911
    %2990 = vmatpush.msra.mxu0 %v1907
    %2991 = vmatpush.msra.mxu0 %v1903
    %2992 = vmatpush.msra.mxu0 %v1899
    %2993 = vmatpush.msra.mxu0 %v1895
    %2994 = vmatpush.msra.mxu0 %v1891
    %2995 = vmatpush.msra.mxu0 %v1887
    %2996 = vmatpush.msra.mxu0 %v1883
    %2997 = vmatpush.msra.mxu0 %v1879
    %2998 = vmatpush.msra.mxu0 %v1875
    %2999 = vmatmul.f32.gmra.mxu0 %v2977
    %v3000 = vpop.f32.mrf.mxu0
    %v3001 = vadd.f32 %v2979, %v3000
    %3002 = vdwg.mxu0
    %3003 = vmatpush.msra.mxu0 %v1936
    %3004 = vmatpush.msra.mxu0 %v1932
    %3005 = vmatpush.msra.mxu0 %v1928
    %3006 = vmatpush.msra.mxu0 %v1924
    %3007 = vmatpush.msra.mxu0 %v1920
    %3008 = vmatpush.msra.mxu0 %v1916
    %3009 = vmatpush.msra.mxu0 %v1912
    %3010 = vmatpush.msra.mxu0 %v1908
    %3011 = vmatpush.msra.mxu0 %v1904
    %3012 = vmatpush.msra.mxu0 %v1900
    %3013 = vmatpush.msra.mxu0 %v1896
    %3014 = vmatpush.msra.mxu0 %v1892
    %3015 = vmatpush.msra.mxu0 %v1888
    %3016 = vmatpush.msra.mxu0 %v1884
    %3017 = vmatpush.msra.mxu0 %v1880
    %3018 = vmatpush.msra.mxu0 %v1876
    %3019 = vmatmul.f32.gmra.mxu0 %v2977
    %v3020 = vpop.f32.mrf.mxu0
    %v3021 = vadd.f32 %v2980, %v3020
    %3022 = vdwg.mxu0
    %3023 = vmatpush.msra.mxu0 %v1937
    %3024 = vmatpush.msra.mxu0 %v1933
    %3025 = vmatpush.msra.mxu0 %v1929
    %3026 = vmatpush.msra.mxu0 %v1925
    %3027 = vmatpush.msra.mxu0 %v1921
    %3028 = vmatpush.msra.mxu0 %v1917
    %3029 = vmatpush.msra.mxu0 %v1913
    %3030 = vmatpush.msra.mxu0 %v1909
    %3031 = vmatpush.msra.mxu0 %v1905
    %3032 = vmatpush.msra.mxu0 %v1901
    %3033 = vmatpush.msra.mxu0 %v1897
    %3034 = vmatpush.msra.mxu0 %v1893
    %3035 = vmatpush.msra.mxu0 %v1889
    %3036 = vmatpush.msra.mxu0 %v1885
    %3037 = vmatpush.msra.mxu0 %v1881
    %3038 = vmatpush.msra.mxu0 %v1877
    %3039 = vmatmul.f32.gmra.mxu0 %v2977
    %v3040 = vpop.f32.mrf.mxu0
    %v3041 = vadd.f32 %v2981, %v3040
    %3042 = vdwg.mxu0
    %3043 = vmatpush.msra.mxu0 %v1938
    %3044 = vmatpush.msra.mxu0 %v1934
    %3045 = vmatpush.msra.mxu0 %v1930
    %3046 = vmatpush.msra.mxu0 %v1926
    %3047 = vmatpush.msra.mxu0 %v1922
    %3048 = vmatpush.msra.mxu0 %v1918
    %3049 = vmatpush.msra.mxu0 %v1914
    %3050 = vmatpush.msra.mxu0 %v1910
    %3051 = vmatpush.msra.mxu0 %v1906
    %3052 = vmatpush.msra.mxu0 %v1902
    %3053 = vmatpush.msra.mxu0 %v1898
    %3054 = vmatpush.msra.mxu0 %v1894
    %3055 = vmatpush.msra.mxu0 %v1890
    %3056 = vmatpush.msra.mxu0 %v1886
    %3057 = vmatpush.msra.mxu0 %v1882
    %3058 = vmatpush.msra.mxu0 %v1878
    %3059 = vmatmul.f32.gmra.mxu0 %v2977
    %v3060 = vpop.f32.mrf.mxu0
    %v3061 = vadd.f32 %v2982, %v3060
    %3062 = vdwg.mxu0
    %v3063 = vxor.u32 %v3001, 2147483648
    %v3064 = vmul.f32 %v3063, 1.442695
    %v3065 = vpow.pop %v3064
    %v3066 = vadd.f32 %v3065, 1.0
    %v3067 = vrcp.pop %v3066
    %v3068 = vmul.f32 %v3066, %v3067
    %v3069 = vsub.f32 1.0, %v3068
    %v3070 = vmul.f32 %v3067, %v3069
    %v3071 = vadd.f32 %v3067, %v3070
    %vm3072 = vweird.f32 %v3066
    %vm3073 = vweird.f32 %v3067
    %vm3074 = vmor %vm3072, %vm3073
    %v3075 = vsel %vm3074, %v3067, %v3071
    %v3076 = vand.u32 2147483647, %v3066
    %vm3077 = vcmp.eq.f32.partialorder %v3076, 8.507059e+37
    %v3078 = vand.u32 %v3066, 2147483648
    %v3079 = vor.u32 1.1754944e-38, %v3078
    %v3080 = vsel %vm3077, %v3079, %v3075
    %v3081 = vmul.f32 1.0, %v3080
    %v3082 = vxor.u32 %v3021, 2147483648
    %v3083 = vmul.f32 %v3082, 1.442695
    %v3084 = vpow.pop %v3083
    %v3085 = vadd.f32 %v3084, 1.0
    %v3086 = vrcp.pop %v3085
    %v3087 = vmul.f32 %v3085, %v3086
    %v3088 = vsub.f32 1.0, %v3087
    %v3089 = vmul.f32 %v3086, %v3088
    %v3090 = vadd.f32 %v3086, %v3089
    %vm3091 = vweird.f32 %v3085
    %vm3092 = vweird.f32 %v3086
    %vm3093 = vmor %vm3091, %vm3092
    %v3094 = vsel %vm3093, %v3086, %v3090
    %v3095 = vand.u32 2147483647, %v3085
    %vm3096 = vcmp.eq.f32.partialorder %v3095, 8.507059e+37
    %v3097 = vand.u32 %v3085, 2147483648
    %v3098 = vor.u32 1.1754944e-38, %v3097
    %v3099 = vsel %vm3096, %v3098, %v3094
    %v3100 = vmul.f32 1.0, %v3099
    %v3101 = vtanh.pop %v3041
    %v3102 = vxor.u32 %v3061, 2147483648
    %v3103 = vmul.f32 %v3102, 1.442695
    %v3104 = vpow.pop %v3103
    %v3105 = vadd.f32 %v3104, 1.0
    %v3106 = vrcp.pop %v3105
    %v3107 = vmul.f32 %v3105, %v3106
    %v3108 = vsub.f32 1.0, %v3107
    %v3109 = vmul.f32 %v3106, %v3108
    %v3110 = vadd.f32 %v3106, %v3109
    %vm3111 = vweird.f32 %v3105
    %vm3112 = vweird.f32 %v3106
    %vm3113 = vmor %vm3111, %vm3112
    %v3114 = vsel %vm3113, %v3106, %v3110
    %v3115 = vand.u32 2147483647, %v3105
    %vm3116 = vcmp.eq.f32.partialorder %v3115, 8.507059e+37
    %v3117 = vand.u32 %v3105, 2147483648
    %v3118 = vor.u32 1.1754944e-38, %v3117
    %v3119 = vsel %vm3116, %v3118, %v3114
    %v3120 = vmul.f32 1.0, %v3119
    %v3121 = vmul.f32 %v3100, %v2975
    %v3122 = vmul.f32 %v3081, %v3101
    %v3123 = vadd.f32 %v3121, %v3122
    %v3124 = vtanh.pop %v3123
    %v3125 = vmul.f32 %v3120, %v3124
    %3126 = vst [vmem:[#allocation2 + $0x38] sm:$0xff] %v3125
    %s3127 = scalar_lea.vmem %s9, 8
    %3128 = vst [vmem:[%s3127] sm:$0xff] %v3125
    %s3129 = scalar_lea.vmem %s10, 8
    %3130 = vst [vmem:[%s3129] sm:$0xff] %v3123
    %v3131 = vld [vmem:[#allocation2] sm:$0xff]
    %v3132 = vld [vmem:[#allocation2 + $0x8] sm:$0xff]
    %v3133 = vld [vmem:[#allocation2 + $0x10] sm:$0xff]
    %v3134 = vld [vmem:[#allocation2 + $0x18] sm:$0xff]
    %v3135 = vld [vmem:[#allocation2 + $0x20] sm:$0xff]
    %v3136 = vld [vmem:[#allocation2 + $0x28] sm:$0xff]
    %v3137 = vld [vmem:[#allocation2 + $0x30] sm:$0xff]
    %v3138 = vld [vmem:[#allocation2 + $0x38] sm:$0xff]
    %s3139 = scalar_lea.vmem [#allocation4], 1024
    %v3140 = vld [vmem:[%s3139] sm:$0xff]
    %v3141 = vld [vmem:[%s3139 + $0x8] sm:$0xff]
    %v3142 = vld [vmem:[%s3139 + $0x10] sm:$0xff]
    %v3143 = vld [vmem:[%s3139 + $0x18] sm:$0xff]
    %v3144 = vld [vmem:[%s3139 + $0x20] sm:$0xff]
    %v3145 = vld [vmem:[%s3139 + $0x28] sm:$0xff]
    %v3146 = vld [vmem:[%s3139 + $0x30] sm:$0xff]
    %v3147 = vld [vmem:[%s3139 + $0x38] sm:$0xff]
    %v3148 = vld [vmem:[%s3139 + $0x40] sm:$0xff]
    %v3149 = vld [vmem:[%s3139 + $0x48] sm:$0xff]
    %v3150 = vld [vmem:[%s3139 + $0x50] sm:$0xff]
    %v3151 = vld [vmem:[%s3139 + $0x58] sm:$0xff]
    %v3152 = vld [vmem:[%s3139 + $0x60] sm:$0xff]
    %v3153 = vld [vmem:[%s3139 + $0x68] sm:$0xff]
    %v3154 = vld [vmem:[%s3139 + $0x70] sm:$0xff]
    %v3155 = vld [vmem:[%s3139 + $0x78] sm:$0xff]
    %v3156 = vld [vmem:[%s3139 + $0x80] sm:$0xff]
    %v3157 = vld [vmem:[%s3139 + $0x88] sm:$0xff]
    %v3158 = vld [vmem:[%s3139 + $0x90] sm:$0xff]
    %v3159 = vld [vmem:[%s3139 + $0x98] sm:$0xff]
    %v3160 = vld [vmem:[%s3139 + $0xa0] sm:$0xff]
    %v3161 = vld [vmem:[%s3139 + $0xa8] sm:$0xff]
    %v3162 = vld [vmem:[%s3139 + $0xb0] sm:$0xff]
    %v3163 = vld [vmem:[%s3139 + $0xb8] sm:$0xff]
    %v3164 = vld [vmem:[%s3139 + $0xc0] sm:$0xff]
    %v3165 = vld [vmem:[%s3139 + $0xc8] sm:$0xff]
    %v3166 = vld [vmem:[%s3139 + $0xd0] sm:$0xff]
    %v3167 = vld [vmem:[%s3139 + $0xd8] sm:$0xff]
    %v3168 = vld [vmem:[%s3139 + $0xe0] sm:$0xff]
    %v3169 = vld [vmem:[%s3139 + $0xe8] sm:$0xff]
    %v3170 = vld [vmem:[%s3139 + $0xf0] sm:$0xff]
    %v3171 = vld [vmem:[%s3139 + $0xf8] sm:$0xff]
    %v3172 = vld [vmem:[%s3139 + $0x100] sm:$0xff]
    %v3173 = vld [vmem:[%s3139 + $0x108] sm:$0xff]
    %v3174 = vld [vmem:[%s3139 + $0x110] sm:$0xff]
    %v3175 = vld [vmem:[%s3139 + $0x118] sm:$0xff]
    %v3176 = vld [vmem:[%s3139 + $0x120] sm:$0xff]
    %v3177 = vld [vmem:[%s3139 + $0x128] sm:$0xff]
    %v3178 = vld [vmem:[%s3139 + $0x130] sm:$0xff]
    %v3179 = vld [vmem:[%s3139 + $0x138] sm:$0xff]
    %v3180 = vld [vmem:[%s3139 + $0x140] sm:$0xff]
    %v3181 = vld [vmem:[%s3139 + $0x148] sm:$0xff]
    %v3182 = vld [vmem:[%s3139 + $0x150] sm:$0xff]
    %v3183 = vld [vmem:[%s3139 + $0x158] sm:$0xff]
    %v3184 = vld [vmem:[%s3139 + $0x160] sm:$0xff]
    %v3185 = vld [vmem:[%s3139 + $0x168] sm:$0xff]
    %v3186 = vld [vmem:[%s3139 + $0x170] sm:$0xff]
    %v3187 = vld [vmem:[%s3139 + $0x178] sm:$0xff]
    %v3188 = vld [vmem:[%s3139 + $0x180] sm:$0xff]
    %v3189 = vld [vmem:[%s3139 + $0x188] sm:$0xff]
    %v3190 = vld [vmem:[%s3139 + $0x190] sm:$0xff]
    %v3191 = vld [vmem:[%s3139 + $0x198] sm:$0xff]
    %v3192 = vld [vmem:[%s3139 + $0x1a0] sm:$0xff]
    %v3193 = vld [vmem:[%s3139 + $0x1a8] sm:$0xff]
    %v3194 = vld [vmem:[%s3139 + $0x1b0] sm:$0xff]
    %v3195 = vld [vmem:[%s3139 + $0x1b8] sm:$0xff]
    %v3196 = vld [vmem:[%s3139 + $0x1c0] sm:$0xff]
    %v3197 = vld [vmem:[%s3139 + $0x1c8] sm:$0xff]
    %v3198 = vld [vmem:[%s3139 + $0x1d0] sm:$0xff]
    %v3199 = vld [vmem:[%s3139 + $0x1d8] sm:$0xff]
    %v3200 = vld [vmem:[%s3139 + $0x1e0] sm:$0xff]
    %v3201 = vld [vmem:[%s3139 + $0x1e8] sm:$0xff]
    %v3202 = vld [vmem:[%s3139 + $0x1f0] sm:$0xff]
    %v3203 = vld [vmem:[%s3139 + $0x1f8] sm:$0xff]
    %s3204 = scalar_lea.vmem %s5, 8
    %v3205 = vld [vmem:[%s3204] sm:$0xf]
    %v3207 = vperm.slane %v3205, 0
    %v3208 = vperm.slane %v3205, 1
    %v3209 = vperm.slane %v3205, 2
    %v3210 = vperm.slane %v3205, 3
    %3215 = vmatpush.msra.mxu0 %v3200
    %3216 = vmatpush.msra.mxu0 %v3196
    %3217 = vmatpush.msra.mxu0 %v3192
    %3218 = vmatpush.msra.mxu0 %v3188
    %3219 = vmatpush.msra.mxu0 %v3184
    %3220 = vmatpush.msra.mxu0 %v3180
    %3221 = vmatpush.msra.mxu0 %v3176
    %3222 = vmatpush.msra.mxu0 %v3172
    %3223 = vmatpush.msra.mxu0 %v3168
    %3224 = vmatpush.msra.mxu0 %v3164
    %3225 = vmatpush.msra.mxu0 %v3160
    %3226 = vmatpush.msra.mxu0 %v3156
    %3227 = vmatpush.msra.mxu0 %v3152
    %3228 = vmatpush.msra.mxu0 %v3148
    %3229 = vmatpush.msra.mxu0 %v3144
    %3230 = vmatpush.msra.mxu0 %v3140
    %3231 = vmatmul.f32.gmra.mxu0 %v3131
    %v3232 = vpop.f32.mrf.mxu0
    %v3233 = vadd.f32 %v3207, %v3232
    %3234 = vmatmul.f32.gmra.mxu0 %v3132
    %v3235 = vpop.f32.mrf.mxu0
    %v3236 = vadd.f32 %v3207, %v3235
    %3237 = vmatmul.f32.gmra.mxu0 %v3133
    %v3238 = vpop.f32.mrf.mxu0
    %v3239 = vadd.f32 %v3207, %v3238
    %3240 = vmatmul.f32.gmra.mxu0 %v3134
    %v3241 = vpop.f32.mrf.mxu0
    %v3242 = vadd.f32 %v3207, %v3241
    %3243 = vmatmul.f32.gmra.mxu0 %v3135
    %v3244 = vpop.f32.mrf.mxu0
    %v3245 = vadd.f32 %v3207, %v3244
    %3246 = vmatmul.f32.gmra.mxu0 %v3136
    %v3247 = vpop.f32.mrf.mxu0
    %v3248 = vadd.f32 %v3207, %v3247
    %3249 = vmatmul.f32.gmra.mxu0 %v3137
    %v3250 = vpop.f32.mrf.mxu0
    %v3251 = vadd.f32 %v3207, %v3250
    %3252 = vmatmul.f32.gmra.mxu0 %v3138
    %v3253 = vpop.f32.mrf.mxu0
    %v3254 = vadd.f32 %v3207, %v3253
    %3255 = vdwg.mxu0
    %3256 = vmatpush.msra.mxu0 %v3201
    %3257 = vmatpush.msra.mxu0 %v3197
    %3258 = vmatpush.msra.mxu0 %v3193
    %3259 = vmatpush.msra.mxu0 %v3189
    %3260 = vmatpush.msra.mxu0 %v3185
    %3261 = vmatpush.msra.mxu0 %v3181
    %3262 = vmatpush.msra.mxu0 %v3177
    %3263 = vmatpush.msra.mxu0 %v3173
    %3264 = vmatpush.msra.mxu0 %v3169
    %3265 = vmatpush.msra.mxu0 %v3165
    %3266 = vmatpush.msra.mxu0 %v3161
    %3267 = vmatpush.msra.mxu0 %v3157
    %3268 = vmatpush.msra.mxu0 %v3153
    %3269 = vmatpush.msra.mxu0 %v3149
    %3270 = vmatpush.msra.mxu0 %v3145
    %3271 = vmatpush.msra.mxu0 %v3141
    %3272 = vmatmul.f32.gmra.mxu0 %v3131
    %v3273 = vpop.f32.mrf.mxu0
    %v3274 = vadd.f32 %v3208, %v3273
    %3275 = vmatmul.f32.gmra.mxu0 %v3132
    %v3276 = vpop.f32.mrf.mxu0
    %v3277 = vadd.f32 %v3208, %v3276
    %3278 = vmatmul.f32.gmra.mxu0 %v3133
    %v3279 = vpop.f32.mrf.mxu0
    %v3280 = vadd.f32 %v3208, %v3279
    %3281 = vmatmul.f32.gmra.mxu0 %v3134
    %v3282 = vpop.f32.mrf.mxu0
    %v3283 = vadd.f32 %v3208, %v3282
    %3284 = vmatmul.f32.gmra.mxu0 %v3135
    %v3285 = vpop.f32.mrf.mxu0
    %v3286 = vadd.f32 %v3208, %v3285
    %3287 = vmatmul.f32.gmra.mxu0 %v3136
    %v3288 = vpop.f32.mrf.mxu0
    %v3289 = vadd.f32 %v3208, %v3288
    %3290 = vmatmul.f32.gmra.mxu0 %v3137
    %v3291 = vpop.f32.mrf.mxu0
    %v3292 = vadd.f32 %v3208, %v3291
    %3293 = vmatmul.f32.gmra.mxu0 %v3138
    %v3294 = vpop.f32.mrf.mxu0
    %v3295 = vadd.f32 %v3208, %v3294
    %3296 = vdwg.mxu0
    %3297 = vmatpush.msra.mxu0 %v3202
    %3298 = vmatpush.msra.mxu0 %v3198
    %3299 = vmatpush.msra.mxu0 %v3194
    %3300 = vmatpush.msra.mxu0 %v3190
    %3301 = vmatpush.msra.mxu0 %v3186
    %3302 = vmatpush.msra.mxu0 %v3182
    %3303 = vmatpush.msra.mxu0 %v3178
    %3304 = vmatpush.msra.mxu0 %v3174
    %3305 = vmatpush.msra.mxu0 %v3170
    %3306 = vmatpush.msra.mxu0 %v3166
    %3307 = vmatpush.msra.mxu0 %v3162
    %3308 = vmatpush.msra.mxu0 %v3158
    %3309 = vmatpush.msra.mxu0 %v3154
    %3310 = vmatpush.msra.mxu0 %v3150
    %3311 = vmatpush.msra.mxu0 %v3146
    %3312 = vmatpush.msra.mxu0 %v3142
    %3313 = vmatmul.f32.gmra.mxu0 %v3131
    %v3314 = vpop.f32.mrf.mxu0
    %v3315 = vadd.f32 %v3209, %v3314
    %3316 = vmatmul.f32.gmra.mxu0 %v3132
    %v3317 = vpop.f32.mrf.mxu0
    %v3318 = vadd.f32 %v3209, %v3317
    %3319 = vmatmul.f32.gmra.mxu0 %v3133
    %v3320 = vpop.f32.mrf.mxu0
    %v3321 = vadd.f32 %v3209, %v3320
    %3322 = vmatmul.f32.gmra.mxu0 %v3134
    %v3323 = vpop.f32.mrf.mxu0
    %v3324 = vadd.f32 %v3209, %v3323
    %3325 = vmatmul.f32.gmra.mxu0 %v3135
    %v3326 = vpop.f32.mrf.mxu0
    %v3327 = vadd.f32 %v3209, %v3326
    %3328 = vmatmul.f32.gmra.mxu0 %v3136
    %v3329 = vpop.f32.mrf.mxu0
    %v3330 = vadd.f32 %v3209, %v3329
    %3331 = vmatmul.f32.gmra.mxu0 %v3137
    %v3332 = vpop.f32.mrf.mxu0
    %v3333 = vadd.f32 %v3209, %v3332
    %3334 = vmatmul.f32.gmra.mxu0 %v3138
    %v3335 = vpop.f32.mrf.mxu0
    %v3336 = vadd.f32 %v3209, %v3335
    %3337 = vdwg.mxu0
    %3338 = vmatpush.msra.mxu0 %v3203
    %3339 = vmatpush.msra.mxu0 %v3199
    %3340 = vmatpush.msra.mxu0 %v3195
    %3341 = vmatpush.msra.mxu0 %v3191
    %3342 = vmatpush.msra.mxu0 %v3187
    %3343 = vmatpush.msra.mxu0 %v3183
    %3344 = vmatpush.msra.mxu0 %v3179
    %3345 = vmatpush.msra.mxu0 %v3175
    %3346 = vmatpush.msra.mxu0 %v3171
    %3347 = vmatpush.msra.mxu0 %v3167
    %3348 = vmatpush.msra.mxu0 %v3163
    %3349 = vmatpush.msra.mxu0 %v3159
    %3350 = vmatpush.msra.mxu0 %v3155
    %3351 = vmatpush.msra.mxu0 %v3151
    %3352 = vmatpush.msra.mxu0 %v3147
    %3353 = vmatpush.msra.mxu0 %v3143
    %3354 = vmatmul.f32.gmra.mxu0 %v3131
    %v3355 = vpop.f32.mrf.mxu0
    %v3356 = vadd.f32 %v3210, %v3355
    %3357 = vmatmul.f32.gmra.mxu0 %v3132
    %v3358 = vpop.f32.mrf.mxu0
    %v3359 = vadd.f32 %v3210, %v3358
    %3360 = vmatmul.f32.gmra.mxu0 %v3133
    %v3361 = vpop.f32.mrf.mxu0
    %v3362 = vadd.f32 %v3210, %v3361
    %3363 = vmatmul.f32.gmra.mxu0 %v3134
    %v3364 = vpop.f32.mrf.mxu0
    %v3365 = vadd.f32 %v3210, %v3364
    %3366 = vmatmul.f32.gmra.mxu0 %v3135
    %v3367 = vpop.f32.mrf.mxu0
    %v3368 = vadd.f32 %v3210, %v3367
    %3369 = vmatmul.f32.gmra.mxu0 %v3136
    %v3370 = vpop.f32.mrf.mxu0
    %v3371 = vadd.f32 %v3210, %v3370
    %3372 = vmatmul.f32.gmra.mxu0 %v3137
    %v3373 = vpop.f32.mrf.mxu0
    %v3374 = vadd.f32 %v3210, %v3373
    %3375 = vmatmul.f32.gmra.mxu0 %v3138
    %v3376 = vpop.f32.mrf.mxu0
    %v3377 = vadd.f32 %v3210, %v3376
    %3378 = vdwg.mxu0
    %3379 = vst [vmem:[#allocation3] sm:$0xff] %v3233
    %3380 = vst [vmem:[#allocation3 + $0x8] sm:$0xff] %v3274
    %3381 = vst [vmem:[#allocation3 + $0x10] sm:$0xff] %v3315
    %3382 = vst [vmem:[#allocation3 + $0x18] sm:$0xff] %v3356
    %3383 = vst [vmem:[#allocation3 + $0x20] sm:$0xff] %v3236
    %3384 = vst [vmem:[#allocation3 + $0x28] sm:$0xff] %v3277
    %3385 = vst [vmem:[#allocation3 + $0x30] sm:$0xff] %v3318
    %3386 = vst [vmem:[#allocation3 + $0x38] sm:$0xff] %v3359
    %3387 = vst [vmem:[#allocation3 + $0x40] sm:$0xff] %v3239
    %3388 = vst [vmem:[#allocation3 + $0x48] sm:$0xff] %v3280
    %3389 = vst [vmem:[#allocation3 + $0x50] sm:$0xff] %v3321
    %3390 = vst [vmem:[#allocation3 + $0x58] sm:$0xff] %v3362
    %3391 = vst [vmem:[#allocation3 + $0x60] sm:$0xff] %v3242
    %3392 = vst [vmem:[#allocation3 + $0x68] sm:$0xff] %v3283
    %3393 = vst [vmem:[#allocation3 + $0x70] sm:$0xff] %v3324
    %3394 = vst [vmem:[#allocation3 + $0x78] sm:$0xff] %v3365
    %3395 = vst [vmem:[#allocation3 + $0x80] sm:$0xff] %v3245
    %3396 = vst [vmem:[#allocation3 + $0x88] sm:$0xff] %v3286
    %3397 = vst [vmem:[#allocation3 + $0x90] sm:$0xff] %v3327
    %3398 = vst [vmem:[#allocation3 + $0x98] sm:$0xff] %v3368
    %3399 = vst [vmem:[#allocation3 + $0xa0] sm:$0xff] %v3248
    %3400 = vst [vmem:[#allocation3 + $0xa8] sm:$0xff] %v3289
    %3401 = vst [vmem:[#allocation3 + $0xb0] sm:$0xff] %v3330
    %3402 = vst [vmem:[#allocation3 + $0xb8] sm:$0xff] %v3371
    %3403 = vst [vmem:[#allocation3 + $0xc0] sm:$0xff] %v3251
    %3404 = vst [vmem:[#allocation3 + $0xc8] sm:$0xff] %v3292
    %3405 = vst [vmem:[#allocation3 + $0xd0] sm:$0xff] %v3333
    %3406 = vst [vmem:[#allocation3 + $0xd8] sm:$0xff] %v3374
    %3407 = vst [vmem:[#allocation3 + $0xe0] sm:$0xff] %v3254
    %3408 = vst [vmem:[#allocation3 + $0xe8] sm:$0xff] %v3295
    %3409 = vst [vmem:[#allocation3 + $0xf0] sm:$0xff] %v3336
    %3410 = vst [vmem:[#allocation3 + $0xf8] sm:$0xff] %v3377
    %s3411 = scalar_lea.vmem [#allocation6], 1024
    %v3412 = vld [vmem:[%s3411] sm:$0xff]
    %v3413 = vld [vmem:[%s3411 + $0x8] sm:$0xff]
    %v3414 = vld [vmem:[%s3411 + $0x10] sm:$0xff]
    %v3415 = vld [vmem:[%s3411 + $0x18] sm:$0xff]
    %v3416 = vld [vmem:[%s3411 + $0x20] sm:$0xff]
    %v3417 = vld [vmem:[%s3411 + $0x28] sm:$0xff]
    %v3418 = vld [vmem:[%s3411 + $0x30] sm:$0xff]
    %v3419 = vld [vmem:[%s3411 + $0x38] sm:$0xff]
    %v3420 = vld [vmem:[%s3411 + $0x40] sm:$0xff]
    %v3421 = vld [vmem:[%s3411 + $0x48] sm:$0xff]
    %v3422 = vld [vmem:[%s3411 + $0x50] sm:$0xff]
    %v3423 = vld [vmem:[%s3411 + $0x58] sm:$0xff]
    %v3424 = vld [vmem:[%s3411 + $0x60] sm:$0xff]
    %v3425 = vld [vmem:[%s3411 + $0x68] sm:$0xff]
    %v3426 = vld [vmem:[%s3411 + $0x70] sm:$0xff]
    %v3427 = vld [vmem:[%s3411 + $0x78] sm:$0xff]
    %v3428 = vld [vmem:[%s3411 + $0x80] sm:$0xff]
    %v3429 = vld [vmem:[%s3411 + $0x88] sm:$0xff]
    %v3430 = vld [vmem:[%s3411 + $0x90] sm:$0xff]
    %v3431 = vld [vmem:[%s3411 + $0x98] sm:$0xff]
    %v3432 = vld [vmem:[%s3411 + $0xa0] sm:$0xff]
    %v3433 = vld [vmem:[%s3411 + $0xa8] sm:$0xff]
    %v3434 = vld [vmem:[%s3411 + $0xb0] sm:$0xff]
    %v3435 = vld [vmem:[%s3411 + $0xb8] sm:$0xff]
    %v3436 = vld [vmem:[%s3411 + $0xc0] sm:$0xff]
    %v3437 = vld [vmem:[%s3411 + $0xc8] sm:$0xff]
    %v3438 = vld [vmem:[%s3411 + $0xd0] sm:$0xff]
    %v3439 = vld [vmem:[%s3411 + $0xd8] sm:$0xff]
    %v3440 = vld [vmem:[%s3411 + $0xe0] sm:$0xff]
    %v3441 = vld [vmem:[%s3411 + $0xe8] sm:$0xff]
    %v3442 = vld [vmem:[%s3411 + $0xf0] sm:$0xff]
    %v3443 = vld [vmem:[%s3411 + $0xf8] sm:$0xff]
    %v3444 = vld [vmem:[%s3411 + $0x100] sm:$0xff]
    %v3445 = vld [vmem:[%s3411 + $0x108] sm:$0xff]
    %v3446 = vld [vmem:[%s3411 + $0x110] sm:$0xff]
    %v3447 = vld [vmem:[%s3411 + $0x118] sm:$0xff]
    %v3448 = vld [vmem:[%s3411 + $0x120] sm:$0xff]
    %v3449 = vld [vmem:[%s3411 + $0x128] sm:$0xff]
    %v3450 = vld [vmem:[%s3411 + $0x130] sm:$0xff]
    %v3451 = vld [vmem:[%s3411 + $0x138] sm:$0xff]
    %v3452 = vld [vmem:[%s3411 + $0x140] sm:$0xff]
    %v3453 = vld [vmem:[%s3411 + $0x148] sm:$0xff]
    %v3454 = vld [vmem:[%s3411 + $0x150] sm:$0xff]
    %v3455 = vld [vmem:[%s3411 + $0x158] sm:$0xff]
    %v3456 = vld [vmem:[%s3411 + $0x160] sm:$0xff]
    %v3457 = vld [vmem:[%s3411 + $0x168] sm:$0xff]
    %v3458 = vld [vmem:[%s3411 + $0x170] sm:$0xff]
    %v3459 = vld [vmem:[%s3411 + $0x178] sm:$0xff]
    %v3460 = vld [vmem:[%s3411 + $0x180] sm:$0xff]
    %v3461 = vld [vmem:[%s3411 + $0x188] sm:$0xff]
    %v3462 = vld [vmem:[%s3411 + $0x190] sm:$0xff]
    %v3463 = vld [vmem:[%s3411 + $0x198] sm:$0xff]
    %v3464 = vld [vmem:[%s3411 + $0x1a0] sm:$0xff]
    %v3465 = vld [vmem:[%s3411 + $0x1a8] sm:$0xff]
    %v3466 = vld [vmem:[%s3411 + $0x1b0] sm:$0xff]
    %v3467 = vld [vmem:[%s3411 + $0x1b8] sm:$0xff]
    %v3468 = vld [vmem:[%s3411 + $0x1c0] sm:$0xff]
    %v3469 = vld [vmem:[%s3411 + $0x1c8] sm:$0xff]
    %v3470 = vld [vmem:[%s3411 + $0x1d0] sm:$0xff]
    %v3471 = vld [vmem:[%s3411 + $0x1d8] sm:$0xff]
    %v3472 = vld [vmem:[%s3411 + $0x1e0] sm:$0xff]
    %v3473 = vld [vmem:[%s3411 + $0x1e8] sm:$0xff]
    %v3474 = vld [vmem:[%s3411 + $0x1f0] sm:$0xff]
    %v3475 = vld [vmem:[%s3411 + $0x1f8] sm:$0xff]
    %s3476 = scalar_lea.vmem %s1, 16
    %v3477 = vld [vmem:[%s3476] sm:$0xff]
    %s3478 = scalar_lea.vmem %s2, 16
    %v3479 = vld [vmem:[%s3478] sm:$0xff]
    %v3480 = vld [vmem:[#allocation3] sm:$0xff]
    %v3481 = vld [vmem:[#allocation3 + $0x8] sm:$0xff]
    %v3482 = vld [vmem:[#allocation3 + $0x10] sm:$0xff]
    %v3483 = vld [vmem:[#allocation3 + $0x18] sm:$0xff]
    %3484 = vmatpush.msra.mxu0 %v3472
    %3485 = vmatpush.msra.mxu0 %v3468
    %3486 = vmatpush.msra.mxu0 %v3464
    %3487 = vmatpush.msra.mxu0 %v3460
    %3488 = vmatpush.msra.mxu0 %v3456
    %3489 = vmatpush.msra.mxu0 %v3452
    %3490 = vmatpush.msra.mxu0 %v3448
    %3491 = vmatpush.msra.mxu0 %v3444
    %3492 = vmatpush.msra.mxu0 %v3440
    %3493 = vmatpush.msra.mxu0 %v3436
    %3494 = vmatpush.msra.mxu0 %v3432
    %3495 = vmatpush.msra.mxu0 %v3428
    %3496 = vmatpush.msra.mxu0 %v3424
    %3497 = vmatpush.msra.mxu0 %v3420
    %3498 = vmatpush.msra.mxu0 %v3416
    %3499 = vmatpush.msra.mxu0 %v3412
    %3500 = vmatmul.f32.gmra.mxu0 %v3477
    %v3501 = vpop.f32.mrf.mxu0
    %v3502 = vadd.f32 %v3480, %v3501
    %3503 = vdwg.mxu0
    %3504 = vmatpush.msra.mxu0 %v3473
    %3505 = vmatpush.msra.mxu0 %v3469
    %3506 = vmatpush.msra.mxu0 %v3465
    %3507 = vmatpush.msra.mxu0 %v3461
    %3508 = vmatpush.msra.mxu0 %v3457
    %3509 = vmatpush.msra.mxu0 %v3453
    %3510 = vmatpush.msra.mxu0 %v3449
    %3511 = vmatpush.msra.mxu0 %v3445
    %3512 = vmatpush.msra.mxu0 %v3441
    %3513 = vmatpush.msra.mxu0 %v3437
    %3514 = vmatpush.msra.mxu0 %v3433
    %3515 = vmatpush.msra.mxu0 %v3429
    %3516 = vmatpush.msra.mxu0 %v3425
    %3517 = vmatpush.msra.mxu0 %v3421
    %3518 = vmatpush.msra.mxu0 %v3417
    %3519 = vmatpush.msra.mxu0 %v3413
    %3520 = vmatmul.f32.gmra.mxu0 %v3477
    %v3521 = vpop.f32.mrf.mxu0
    %v3522 = vadd.f32 %v3481, %v3521
    %3523 = vdwg.mxu0
    %3524 = vmatpush.msra.mxu0 %v3474
    %3525 = vmatpush.msra.mxu0 %v3470
    %3526 = vmatpush.msra.mxu0 %v3466
    %3527 = vmatpush.msra.mxu0 %v3462
    %3528 = vmatpush.msra.mxu0 %v3458
    %3529 = vmatpush.msra.mxu0 %v3454
    %3530 = vmatpush.msra.mxu0 %v3450
    %3531 = vmatpush.msra.mxu0 %v3446
    %3532 = vmatpush.msra.mxu0 %v3442
    %3533 = vmatpush.msra.mxu0 %v3438
    %3534 = vmatpush.msra.mxu0 %v3434
    %3535 = vmatpush.msra.mxu0 %v3430
    %3536 = vmatpush.msra.mxu0 %v3426
    %3537 = vmatpush.msra.mxu0 %v3422
    %3538 = vmatpush.msra.mxu0 %v3418
    %3539 = vmatpush.msra.mxu0 %v3414
    %3540 = vmatmul.f32.gmra.mxu0 %v3477
    %v3541 = vpop.f32.mrf.mxu0
    %v3542 = vadd.f32 %v3482, %v3541
    %3543 = vdwg.mxu0
    %3544 = vmatpush.msra.mxu0 %v3475
    %3545 = vmatpush.msra.mxu0 %v3471
    %3546 = vmatpush.msra.mxu0 %v3467
    %3547 = vmatpush.msra.mxu0 %v3463
    %3548 = vmatpush.msra.mxu0 %v3459
    %3549 = vmatpush.msra.mxu0 %v3455
    %3550 = vmatpush.msra.mxu0 %v3451
    %3551 = vmatpush.msra.mxu0 %v3447
    %3552 = vmatpush.msra.mxu0 %v3443
    %3553 = vmatpush.msra.mxu0 %v3439
    %3554 = vmatpush.msra.mxu0 %v3435
    %3555 = vmatpush.msra.mxu0 %v3431
    %3556 = vmatpush.msra.mxu0 %v3427
    %3557 = vmatpush.msra.mxu0 %v3423
    %3558 = vmatpush.msra.mxu0 %v3419
    %3559 = vmatpush.msra.mxu0 %v3415
    %3560 = vmatmul.f32.gmra.mxu0 %v3477
    %v3561 = vpop.f32.mrf.mxu0
    %v3562 = vadd.f32 %v3483, %v3561
    %3563 = vdwg.mxu0
    %v3564 = vxor.u32 %v3502, 2147483648
    %v3565 = vmul.f32 %v3564, 1.442695
    %v3566 = vpow.pop %v3565
    %v3567 = vadd.f32 %v3566, 1.0
    %v3568 = vrcp.pop %v3567
    %v3569 = vmul.f32 %v3567, %v3568
    %v3570 = vsub.f32 1.0, %v3569
    %v3571 = vmul.f32 %v3568, %v3570
    %v3572 = vadd.f32 %v3568, %v3571
    %vm3573 = vweird.f32 %v3567
    %vm3574 = vweird.f32 %v3568
    %vm3575 = vmor %vm3573, %vm3574
    %v3576 = vsel %vm3575, %v3568, %v3572
    %v3577 = vand.u32 2147483647, %v3567
    %vm3578 = vcmp.eq.f32.partialorder %v3577, 8.507059e+37
    %v3579 = vand.u32 %v3567, 2147483648
    %v3580 = vor.u32 1.1754944e-38, %v3579
    %v3581 = vsel %vm3578, %v3580, %v3576
    %v3582 = vmul.f32 1.0, %v3581
    %v3583 = vxor.u32 %v3522, 2147483648
    %v3584 = vmul.f32 %v3583, 1.442695
    %v3585 = vpow.pop %v3584
    %v3586 = vadd.f32 %v3585, 1.0
    %v3587 = vrcp.pop %v3586
    %v3588 = vmul.f32 %v3586, %v3587
    %v3589 = vsub.f32 1.0, %v3588
    %v3590 = vmul.f32 %v3587, %v3589
    %v3591 = vadd.f32 %v3587, %v3590
    %vm3592 = vweird.f32 %v3586
    %vm3593 = vweird.f32 %v3587
    %vm3594 = vmor %vm3592, %vm3593
    %v3595 = vsel %vm3594, %v3587, %v3591
    %v3596 = vand.u32 2147483647, %v3586
    %vm3597 = vcmp.eq.f32.partialorder %v3596, 8.507059e+37
    %v3598 = vand.u32 %v3586, 2147483648
    %v3599 = vor.u32 1.1754944e-38, %v3598
    %v3600 = vsel %vm3597, %v3599, %v3595
    %v3601 = vmul.f32 1.0, %v3600
    %v3602 = vtanh.pop %v3542
    %v3603 = vxor.u32 %v3562, 2147483648
    %v3604 = vmul.f32 %v3603, 1.442695
    %v3605 = vpow.pop %v3604
    %v3606 = vadd.f32 %v3605, 1.0
    %v3607 = vrcp.pop %v3606
    %v3608 = vmul.f32 %v3606, %v3607
    %v3609 = vsub.f32 1.0, %v3608
    %v3610 = vmul.f32 %v3607, %v3609
    %v3611 = vadd.f32 %v3607, %v3610
    %vm3612 = vweird.f32 %v3606
    %vm3613 = vweird.f32 %v3607
    %vm3614 = vmor %vm3612, %vm3613
    %v3615 = vsel %vm3614, %v3607, %v3611
    %v3616 = vand.u32 2147483647, %v3606
    %vm3617 = vcmp.eq.f32.partialorder %v3616, 8.507059e+37
    %v3618 = vand.u32 %v3606, 2147483648
    %v3619 = vor.u32 1.1754944e-38, %v3618
    %v3620 = vsel %vm3617, %v3619, %v3615
    %v3621 = vmul.f32 1.0, %v3620
    %v3622 = vmul.f32 %v3601, %v3479
    %v3623 = vmul.f32 %v3582, %v3602
    %v3624 = vadd.f32 %v3622, %v3623
    %v3625 = vtanh.pop %v3624
    %v3626 = vmul.f32 %v3621, %v3625
    %3627 = vst [vmem:[#allocation2] sm:$0xff] %v3626
    %v3628 = vld [vmem:[#allocation3 + $0x20] sm:$0xff]
    %v3629 = vld [vmem:[#allocation3 + $0x28] sm:$0xff]
    %v3630 = vld [vmem:[#allocation3 + $0x30] sm:$0xff]
    %v3631 = vld [vmem:[#allocation3 + $0x38] sm:$0xff]
    %3632 = vmatpush.msra.mxu0 %v3472
    %3633 = vmatpush.msra.mxu0 %v3468
    %3634 = vmatpush.msra.mxu0 %v3464
    %3635 = vmatpush.msra.mxu0 %v3460
    %3636 = vmatpush.msra.mxu0 %v3456
    %3637 = vmatpush.msra.mxu0 %v3452
    %3638 = vmatpush.msra.mxu0 %v3448
    %3639 = vmatpush.msra.mxu0 %v3444
    %3640 = vmatpush.msra.mxu0 %v3440
    %3641 = vmatpush.msra.mxu0 %v3436
    %3642 = vmatpush.msra.mxu0 %v3432
    %3643 = vmatpush.msra.mxu0 %v3428
    %3644 = vmatpush.msra.mxu0 %v3424
    %3645 = vmatpush.msra.mxu0 %v3420
    %3646 = vmatpush.msra.mxu0 %v3416
    %3647 = vmatpush.msra.mxu0 %v3412
    %3648 = vmatmul.f32.gmra.mxu0 %v3626
    %v3649 = vpop.f32.mrf.mxu0
    %v3650 = vadd.f32 %v3628, %v3649
    %3651 = vdwg.mxu0
    %3652 = vmatpush.msra.mxu0 %v3473
    %3653 = vmatpush.msra.mxu0 %v3469
    %3654 = vmatpush.msra.mxu0 %v3465
    %3655 = vmatpush.msra.mxu0 %v3461
    %3656 = vmatpush.msra.mxu0 %v3457
    %3657 = vmatpush.msra.mxu0 %v3453
    %3658 = vmatpush.msra.mxu0 %v3449
    %3659 = vmatpush.msra.mxu0 %v3445
    %3660 = vmatpush.msra.mxu0 %v3441
    %3661 = vmatpush.msra.mxu0 %v3437
    %3662 = vmatpush.msra.mxu0 %v3433
    %3663 = vmatpush.msra.mxu0 %v3429
    %3664 = vmatpush.msra.mxu0 %v3425
    %3665 = vmatpush.msra.mxu0 %v3421
    %3666 = vmatpush.msra.mxu0 %v3417
    %3667 = vmatpush.msra.mxu0 %v3413
    %3668 = vmatmul.f32.gmra.mxu0 %v3626
    %v3669 = vpop.f32.mrf.mxu0
    %v3670 = vadd.f32 %v3629, %v3669
    %3671 = vdwg.mxu0
    %3672 = vmatpush.msra.mxu0 %v3474
    %3673 = vmatpush.msra.mxu0 %v3470
    %3674 = vmatpush.msra.mxu0 %v3466
    %3675 = vmatpush.msra.mxu0 %v3462
    %3676 = vmatpush.msra.mxu0 %v3458
    %3677 = vmatpush.msra.mxu0 %v3454
    %3678 = vmatpush.msra.mxu0 %v3450
    %3679 = vmatpush.msra.mxu0 %v3446
    %3680 = vmatpush.msra.mxu0 %v3442
    %3681 = vmatpush.msra.mxu0 %v3438
    %3682 = vmatpush.msra.mxu0 %v3434
    %3683 = vmatpush.msra.mxu0 %v3430
    %3684 = vmatpush.msra.mxu0 %v3426
    %3685 = vmatpush.msra.mxu0 %v3422
    %3686 = vmatpush.msra.mxu0 %v3418
    %3687 = vmatpush.msra.mxu0 %v3414
    %3688 = vmatmul.f32.gmra.mxu0 %v3626
    %v3689 = vpop.f32.mrf.mxu0
    %v3690 = vadd.f32 %v3630, %v3689
    %3691 = vdwg.mxu0
    %3692 = vmatpush.msra.mxu0 %v3475
    %3693 = vmatpush.msra.mxu0 %v3471
    %3694 = vmatpush.msra.mxu0 %v3467
    %3695 = vmatpush.msra.mxu0 %v3463
    %3696 = vmatpush.msra.mxu0 %v3459
    %3697 = vmatpush.msra.mxu0 %v3455
    %3698 = vmatpush.msra.mxu0 %v3451
    %3699 = vmatpush.msra.mxu0 %v3447
    %3700 = vmatpush.msra.mxu0 %v3443
    %3701 = vmatpush.msra.mxu0 %v3439
    %3702 = vmatpush.msra.mxu0 %v3435
    %3703 = vmatpush.msra.mxu0 %v3431
    %3704 = vmatpush.msra.mxu0 %v3427
    %3705 = vmatpush.msra.mxu0 %v3423
    %3706 = vmatpush.msra.mxu0 %v3419
    %3707 = vmatpush.msra.mxu0 %v3415
    %3708 = vmatmul.f32.gmra.mxu0 %v3626
    %v3709 = vpop.f32.mrf.mxu0
    %v3710 = vadd.f32 %v3631, %v3709
    %3711 = vdwg.mxu0
    %v3712 = vxor.u32 %v3650, 2147483648
    %v3713 = vmul.f32 %v3712, 1.442695
    %v3714 = vpow.pop %v3713
    %v3715 = vadd.f32 %v3714, 1.0
    %v3716 = vrcp.pop %v3715
    %v3717 = vmul.f32 %v3715, %v3716
    %v3718 = vsub.f32 1.0, %v3717
    %v3719 = vmul.f32 %v3716, %v3718
    %v3720 = vadd.f32 %v3716, %v3719
    %vm3721 = vweird.f32 %v3715
    %vm3722 = vweird.f32 %v3716
    %vm3723 = vmor %vm3721, %vm3722
    %v3724 = vsel %vm3723, %v3716, %v3720
    %v3725 = vand.u32 2147483647, %v3715
    %vm3726 = vcmp.eq.f32.partialorder %v3725, 8.507059e+37
    %v3727 = vand.u32 %v3715, 2147483648
    %v3728 = vor.u32 1.1754944e-38, %v3727
    %v3729 = vsel %vm3726, %v3728, %v3724
    %v3730 = vmul.f32 1.0, %v3729
    %v3731 = vxor.u32 %v3670, 2147483648
    %v3732 = vmul.f32 %v3731, 1.442695
    %v3733 = vpow.pop %v3732
    %v3734 = vadd.f32 %v3733, 1.0
    %v3735 = vrcp.pop %v3734
    %v3736 = vmul.f32 %v3734, %v3735
    %v3737 = vsub.f32 1.0, %v3736
    %v3738 = vmul.f32 %v3735, %v3737
    %v3739 = vadd.f32 %v3735, %v3738
    %vm3740 = vweird.f32 %v3734
    %vm3741 = vweird.f32 %v3735
    %vm3742 = vmor %vm3740, %vm3741
    %v3743 = vsel %vm3742, %v3735, %v3739
    %v3744 = vand.u32 2147483647, %v3734
    %vm3745 = vcmp.eq.f32.partialorder %v3744, 8.507059e+37
    %v3746 = vand.u32 %v3734, 2147483648
    %v3747 = vor.u32 1.1754944e-38, %v3746
    %v3748 = vsel %vm3745, %v3747, %v3743
    %v3749 = vmul.f32 1.0, %v3748
    %v3750 = vtanh.pop %v3690
    %v3751 = vxor.u32 %v3710, 2147483648
    %v3752 = vmul.f32 %v3751, 1.442695
    %v3753 = vpow.pop %v3752
    %v3754 = vadd.f32 %v3753, 1.0
    %v3755 = vrcp.pop %v3754
    %v3756 = vmul.f32 %v3754, %v3755
    %v3757 = vsub.f32 1.0, %v3756
    %v3758 = vmul.f32 %v3755, %v3757
    %v3759 = vadd.f32 %v3755, %v3758
    %vm3760 = vweird.f32 %v3754
    %vm3761 = vweird.f32 %v3755
    %vm3762 = vmor %vm3760, %vm3761
    %v3763 = vsel %vm3762, %v3755, %v3759
    %v3764 = vand.u32 2147483647, %v3754
    %vm3765 = vcmp.eq.f32.partialorder %v3764, 8.507059e+37
    %v3766 = vand.u32 %v3754, 2147483648
    %v3767 = vor.u32 1.1754944e-38, %v3766
    %v3768 = vsel %vm3765, %v3767, %v3763
    %v3769 = vmul.f32 1.0, %v3768
    %v3770 = vmul.f32 %v3749, %v3624
    %v3771 = vmul.f32 %v3730, %v3750
    %v3772 = vadd.f32 %v3770, %v3771
    %v3773 = vtanh.pop %v3772
    %v3774 = vmul.f32 %v3769, %v3773
    %3775 = vst [vmem:[#allocation2 + $0x8] sm:$0xff] %v3774
    %v3776 = vld [vmem:[#allocation3 + $0x40] sm:$0xff]
    %v3777 = vld [vmem:[#allocation3 + $0x48] sm:$0xff]
    %v3778 = vld [vmem:[#allocation3 + $0x50] sm:$0xff]
    %v3779 = vld [vmem:[#allocation3 + $0x58] sm:$0xff]
    %3780 = vmatpush.msra.mxu0 %v3472
    %3781 = vmatpush.msra.mxu0 %v3468
    %3782 = vmatpush.msra.mxu0 %v3464
    %3783 = vmatpush.msra.mxu0 %v3460
    %3784 = vmatpush.msra.mxu0 %v3456
    %3785 = vmatpush.msra.mxu0 %v3452
    %3786 = vmatpush.msra.mxu0 %v3448
    %3787 = vmatpush.msra.mxu0 %v3444
    %3788 = vmatpush.msra.mxu0 %v3440
    %3789 = vmatpush.msra.mxu0 %v3436
    %3790 = vmatpush.msra.mxu0 %v3432
    %3791 = vmatpush.msra.mxu0 %v3428
    %3792 = vmatpush.msra.mxu0 %v3424
    %3793 = vmatpush.msra.mxu0 %v3420
    %3794 = vmatpush.msra.mxu0 %v3416
    %3795 = vmatpush.msra.mxu0 %v3412
    %3796 = vmatmul.f32.gmra.mxu0 %v3774
    %v3797 = vpop.f32.mrf.mxu0
    %v3798 = vadd.f32 %v3776, %v3797
    %3799 = vdwg.mxu0
    %3800 = vmatpush.msra.mxu0 %v3473
    %3801 = vmatpush.msra.mxu0 %v3469
    %3802 = vmatpush.msra.mxu0 %v3465
    %3803 = vmatpush.msra.mxu0 %v3461
    %3804 = vmatpush.msra.mxu0 %v3457
    %3805 = vmatpush.msra.mxu0 %v3453
    %3806 = vmatpush.msra.mxu0 %v3449
    %3807 = vmatpush.msra.mxu0 %v3445
    %3808 = vmatpush.msra.mxu0 %v3441
    %3809 = vmatpush.msra.mxu0 %v3437
    %3810 = vmatpush.msra.mxu0 %v3433
    %3811 = vmatpush.msra.mxu0 %v3429
    %3812 = vmatpush.msra.mxu0 %v3425
    %3813 = vmatpush.msra.mxu0 %v3421
    %3814 = vmatpush.msra.mxu0 %v3417
    %3815 = vmatpush.msra.mxu0 %v3413
    %3816 = vmatmul.f32.gmra.mxu0 %v3774
    %v3817 = vpop.f32.mrf.mxu0
    %v3818 = vadd.f32 %v3777, %v3817
    %3819 = vdwg.mxu0
    %3820 = vmatpush.msra.mxu0 %v3474
    %3821 = vmatpush.msra.mxu0 %v3470
    %3822 = vmatpush.msra.mxu0 %v3466
    %3823 = vmatpush.msra.mxu0 %v3462
    %3824 = vmatpush.msra.mxu0 %v3458
    %3825 = vmatpush.msra.mxu0 %v3454
    %3826 = vmatpush.msra.mxu0 %v3450
    %3827 = vmatpush.msra.mxu0 %v3446
    %3828 = vmatpush.msra.mxu0 %v3442
    %3829 = vmatpush.msra.mxu0 %v3438
    %3830 = vmatpush.msra.mxu0 %v3434
    %3831 = vmatpush.msra.mxu0 %v3430
    %3832 = vmatpush.msra.mxu0 %v3426
    %3833 = vmatpush.msra.mxu0 %v3422
    %3834 = vmatpush.msra.mxu0 %v3418
    %3835 = vmatpush.msra.mxu0 %v3414
    %3836 = vmatmul.f32.gmra.mxu0 %v3774
    %v3837 = vpop.f32.mrf.mxu0
    %v3838 = vadd.f32 %v3778, %v3837
    %3839 = vdwg.mxu0
    %3840 = vmatpush.msra.mxu0 %v3475
    %3841 = vmatpush.msra.mxu0 %v3471
    %3842 = vmatpush.msra.mxu0 %v3467
    %3843 = vmatpush.msra.mxu0 %v3463
    %3844 = vmatpush.msra.mxu0 %v3459
    %3845 = vmatpush.msra.mxu0 %v3455
    %3846 = vmatpush.msra.mxu0 %v3451
    %3847 = vmatpush.msra.mxu0 %v3447
    %3848 = vmatpush.msra.mxu0 %v3443
    %3849 = vmatpush.msra.mxu0 %v3439
    %3850 = vmatpush.msra.mxu0 %v3435
    %3851 = vmatpush.msra.mxu0 %v3431
    %3852 = vmatpush.msra.mxu0 %v3427
    %3853 = vmatpush.msra.mxu0 %v3423
    %3854 = vmatpush.msra.mxu0 %v3419
    %3855 = vmatpush.msra.mxu0 %v3415
    %3856 = vmatmul.f32.gmra.mxu0 %v3774
    %v3857 = vpop.f32.mrf.mxu0
    %v3858 = vadd.f32 %v3779, %v3857
    %3859 = vdwg.mxu0
    %v3860 = vxor.u32 %v3798, 2147483648
    %v3861 = vmul.f32 %v3860, 1.442695
    %v3862 = vpow.pop %v3861
    %v3863 = vadd.f32 %v3862, 1.0
    %v3864 = vrcp.pop %v3863
    %v3865 = vmul.f32 %v3863, %v3864
    %v3866 = vsub.f32 1.0, %v3865
    %v3867 = vmul.f32 %v3864, %v3866
    %v3868 = vadd.f32 %v3864, %v3867
    %vm3869 = vweird.f32 %v3863
    %vm3870 = vweird.f32 %v3864
    %vm3871 = vmor %vm3869, %vm3870
    %v3872 = vsel %vm3871, %v3864, %v3868
    %v3873 = vand.u32 2147483647, %v3863
    %vm3874 = vcmp.eq.f32.partialorder %v3873, 8.507059e+37
    %v3875 = vand.u32 %v3863, 2147483648
    %v3876 = vor.u32 1.1754944e-38, %v3875
    %v3877 = vsel %vm3874, %v3876, %v3872
    %v3878 = vmul.f32 1.0, %v3877
    %v3879 = vxor.u32 %v3818, 2147483648
    %v3880 = vmul.f32 %v3879, 1.442695
    %v3881 = vpow.pop %v3880
    %v3882 = vadd.f32 %v3881, 1.0
    %v3883 = vrcp.pop %v3882
    %v3884 = vmul.f32 %v3882, %v3883
    %v3885 = vsub.f32 1.0, %v3884
    %v3886 = vmul.f32 %v3883, %v3885
    %v3887 = vadd.f32 %v3883, %v3886
    %vm3888 = vweird.f32 %v3882
    %vm3889 = vweird.f32 %v3883
    %vm3890 = vmor %vm3888, %vm3889
    %v3891 = vsel %vm3890, %v3883, %v3887
    %v3892 = vand.u32 2147483647, %v3882
    %vm3893 = vcmp.eq.f32.partialorder %v3892, 8.507059e+37
    %v3894 = vand.u32 %v3882, 2147483648
    %v3895 = vor.u32 1.1754944e-38, %v3894
    %v3896 = vsel %vm3893, %v3895, %v3891
    %v3897 = vmul.f32 1.0, %v3896
    %v3898 = vtanh.pop %v3838
    %v3899 = vxor.u32 %v3858, 2147483648
    %v3900 = vmul.f32 %v3899, 1.442695
    %v3901 = vpow.pop %v3900
    %v3902 = vadd.f32 %v3901, 1.0
    %v3903 = vrcp.pop %v3902
    %v3904 = vmul.f32 %v3902, %v3903
    %v3905 = vsub.f32 1.0, %v3904
    %v3906 = vmul.f32 %v3903, %v3905
    %v3907 = vadd.f32 %v3903, %v3906
    %vm3908 = vweird.f32 %v3902
    %vm3909 = vweird.f32 %v3903
    %vm3910 = vmor %vm3908, %vm3909
    %v3911 = vsel %vm3910, %v3903, %v3907
    %v3912 = vand.u32 2147483647, %v3902
    %vm3913 = vcmp.eq.f32.partialorder %v3912, 8.507059e+37
    %v3914 = vand.u32 %v3902, 2147483648
    %v3915 = vor.u32 1.1754944e-38, %v3914
    %v3916 = vsel %vm3913, %v3915, %v3911
    %v3917 = vmul.f32 1.0, %v3916
    %v3918 = vmul.f32 %v3897, %v3772
    %v3919 = vmul.f32 %v3878, %v3898
    %v3920 = vadd.f32 %v3918, %v3919
    %v3921 = vtanh.pop %v3920
    %v3922 = vmul.f32 %v3917, %v3921
    %3923 = vst [vmem:[#allocation2 + $0x10] sm:$0xff] %v3922
    %v3924 = vld [vmem:[#allocation3 + $0x60] sm:$0xff]
    %v3925 = vld [vmem:[#allocation3 + $0x68] sm:$0xff]
    %v3926 = vld [vmem:[#allocation3 + $0x70] sm:$0xff]
    %v3927 = vld [vmem:[#allocation3 + $0x78] sm:$0xff]
    %3928 = vmatpush.msra.mxu0 %v3472
    %3929 = vmatpush.msra.mxu0 %v3468
    %3930 = vmatpush.msra.mxu0 %v3464
    %3931 = vmatpush.msra.mxu0 %v3460
    %3932 = vmatpush.msra.mxu0 %v3456
    %3933 = vmatpush.msra.mxu0 %v3452
    %3934 = vmatpush.msra.mxu0 %v3448
    %3935 = vmatpush.msra.mxu0 %v3444
    %3936 = vmatpush.msra.mxu0 %v3440
    %3937 = vmatpush.msra.mxu0 %v3436
    %3938 = vmatpush.msra.mxu0 %v3432
    %3939 = vmatpush.msra.mxu0 %v3428
    %3940 = vmatpush.msra.mxu0 %v3424
    %3941 = vmatpush.msra.mxu0 %v3420
    %3942 = vmatpush.msra.mxu0 %v3416
    %3943 = vmatpush.msra.mxu0 %v3412
    %3944 = vmatmul.f32.gmra.mxu0 %v3922
    %v3945 = vpop.f32.mrf.mxu0
    %v3946 = vadd.f32 %v3924, %v3945
    %3947 = vdwg.mxu0
    %3948 = vmatpush.msra.mxu0 %v3473
    %3949 = vmatpush.msra.mxu0 %v3469
    %3950 = vmatpush.msra.mxu0 %v3465
    %3951 = vmatpush.msra.mxu0 %v3461
    %3952 = vmatpush.msra.mxu0 %v3457
    %3953 = vmatpush.msra.mxu0 %v3453
    %3954 = vmatpush.msra.mxu0 %v3449
    %3955 = vmatpush.msra.mxu0 %v3445
    %3956 = vmatpush.msra.mxu0 %v3441
    %3957 = vmatpush.msra.mxu0 %v3437
    %3958 = vmatpush.msra.mxu0 %v3433
    %3959 = vmatpush.msra.mxu0 %v3429
    %3960 = vmatpush.msra.mxu0 %v3425
    %3961 = vmatpush.msra.mxu0 %v3421
    %3962 = vmatpush.msra.mxu0 %v3417
    %3963 = vmatpush.msra.mxu0 %v3413
    %3964 = vmatmul.f32.gmra.mxu0 %v3922
    %v3965 = vpop.f32.mrf.mxu0
    %v3966 = vadd.f32 %v3925, %v3965
    %3967 = vdwg.mxu0
    %3968 = vmatpush.msra.mxu0 %v3474
    %3969 = vmatpush.msra.mxu0 %v3470
    %3970 = vmatpush.msra.mxu0 %v3466
    %3971 = vmatpush.msra.mxu0 %v3462
    %3972 = vmatpush.msra.mxu0 %v3458
    %3973 = vmatpush.msra.mxu0 %v3454
    %3974 = vmatpush.msra.mxu0 %v3450
    %3975 = vmatpush.msra.mxu0 %v3446
    %3976 = vmatpush.msra.mxu0 %v3442
    %3977 = vmatpush.msra.mxu0 %v3438
    %3978 = vmatpush.msra.mxu0 %v3434
    %3979 = vmatpush.msra.mxu0 %v3430
    %3980 = vmatpush.msra.mxu0 %v3426
    %3981 = vmatpush.msra.mxu0 %v3422
    %3982 = vmatpush.msra.mxu0 %v3418
    %3983 = vmatpush.msra.mxu0 %v3414
    %3984 = vmatmul.f32.gmra.mxu0 %v3922
    %v3985 = vpop.f32.mrf.mxu0
    %v3986 = vadd.f32 %v3926, %v3985
    %3987 = vdwg.mxu0
    %3988 = vmatpush.msra.mxu0 %v3475
    %3989 = vmatpush.msra.mxu0 %v3471
    %3990 = vmatpush.msra.mxu0 %v3467
    %3991 = vmatpush.msra.mxu0 %v3463
    %3992 = vmatpush.msra.mxu0 %v3459
    %3993 = vmatpush.msra.mxu0 %v3455
    %3994 = vmatpush.msra.mxu0 %v3451
    %3995 = vmatpush.msra.mxu0 %v3447
    %3996 = vmatpush.msra.mxu0 %v3443
    %3997 = vmatpush.msra.mxu0 %v3439
    %3998 = vmatpush.msra.mxu0 %v3435
    %3999 = vmatpush.msra.mxu0 %v3431
    %4000 = vmatpush.msra.mxu0 %v3427
    %4001 = vmatpush.msra.mxu0 %v3423
    %4002 = vmatpush.msra.mxu0 %v3419
    %4003 = vmatpush.msra.mxu0 %v3415
    %4004 = vmatmul.f32.gmra.mxu0 %v3922
    %v4005 = vpop.f32.mrf.mxu0
    %v4006 = vadd.f32 %v3927, %v4005
    %4007 = vdwg.mxu0
    %v4008 = vxor.u32 %v3946, 2147483648
    %v4009 = vmul.f32 %v4008, 1.442695
    %v4010 = vpow.pop %v4009
    %v4011 = vadd.f32 %v4010, 1.0
    %v4012 = vrcp.pop %v4011
    %v4013 = vmul.f32 %v4011, %v4012
    %v4014 = vsub.f32 1.0, %v4013
    %v4015 = vmul.f32 %v4012, %v4014
    %v4016 = vadd.f32 %v4012, %v4015
    %vm4017 = vweird.f32 %v4011
    %vm4018 = vweird.f32 %v4012
    %vm4019 = vmor %vm4017, %vm4018
    %v4020 = vsel %vm4019, %v4012, %v4016
    %v4021 = vand.u32 2147483647, %v4011
    %vm4022 = vcmp.eq.f32.partialorder %v4021, 8.507059e+37
    %v4023 = vand.u32 %v4011, 2147483648
    %v4024 = vor.u32 1.1754944e-38, %v4023
    %v4025 = vsel %vm4022, %v4024, %v4020
    %v4026 = vmul.f32 1.0, %v4025
    %v4027 = vxor.u32 %v3966, 2147483648
    %v4028 = vmul.f32 %v4027, 1.442695
    %v4029 = vpow.pop %v4028
    %v4030 = vadd.f32 %v4029, 1.0
    %v4031 = vrcp.pop %v4030
    %v4032 = vmul.f32 %v4030, %v4031
    %v4033 = vsub.f32 1.0, %v4032
    %v4034 = vmul.f32 %v4031, %v4033
    %v4035 = vadd.f32 %v4031, %v4034
    %vm4036 = vweird.f32 %v4030
    %vm4037 = vweird.f32 %v4031
    %vm4038 = vmor %vm4036, %vm4037
    %v4039 = vsel %vm4038, %v4031, %v4035
    %v4040 = vand.u32 2147483647, %v4030
    %vm4041 = vcmp.eq.f32.partialorder %v4040, 8.507059e+37
    %v4042 = vand.u32 %v4030, 2147483648
    %v4043 = vor.u32 1.1754944e-38, %v4042
    %v4044 = vsel %vm4041, %v4043, %v4039
    %v4045 = vmul.f32 1.0, %v4044
    %v4046 = vtanh.pop %v3986
    %v4047 = vxor.u32 %v4006, 2147483648
    %v4048 = vmul.f32 %v4047, 1.442695
    %v4049 = vpow.pop %v4048
    %v4050 = vadd.f32 %v4049, 1.0
    %v4051 = vrcp.pop %v4050
    %v4052 = vmul.f32 %v4050, %v4051
    %v4053 = vsub.f32 1.0, %v4052
    %v4054 = vmul.f32 %v4051, %v4053
    %v4055 = vadd.f32 %v4051, %v4054
    %vm4056 = vweird.f32 %v4050
    %vm4057 = vweird.f32 %v4051
    %vm4058 = vmor %vm4056, %vm4057
    %v4059 = vsel %vm4058, %v4051, %v4055
    %v4060 = vand.u32 2147483647, %v4050
    %vm4061 = vcmp.eq.f32.partialorder %v4060, 8.507059e+37
    %v4062 = vand.u32 %v4050, 2147483648
    %v4063 = vor.u32 1.1754944e-38, %v4062
    %v4064 = vsel %vm4061, %v4063, %v4059
    %v4065 = vmul.f32 1.0, %v4064
    %v4066 = vmul.f32 %v4045, %v3920
    %v4067 = vmul.f32 %v4026, %v4046
    %v4068 = vadd.f32 %v4066, %v4067
    %v4069 = vtanh.pop %v4068
    %v4070 = vmul.f32 %v4065, %v4069
    %4071 = vst [vmem:[#allocation2 + $0x18] sm:$0xff] %v4070
    %v4072 = vld [vmem:[#allocation3 + $0x80] sm:$0xff]
    %v4073 = vld [vmem:[#allocation3 + $0x88] sm:$0xff]
    %v4074 = vld [vmem:[#allocation3 + $0x90] sm:$0xff]
    %v4075 = vld [vmem:[#allocation3 + $0x98] sm:$0xff]
    %4076 = vmatpush.msra.mxu0 %v3472
    %4077 = vmatpush.msra.mxu0 %v3468
    %4078 = vmatpush.msra.mxu0 %v3464
    %4079 = vmatpush.msra.mxu0 %v3460
    %4080 = vmatpush.msra.mxu0 %v3456
    %4081 = vmatpush.msra.mxu0 %v3452
    %4082 = vmatpush.msra.mxu0 %v3448
    %4083 = vmatpush.msra.mxu0 %v3444
    %4084 = vmatpush.msra.mxu0 %v3440
    %4085 = vmatpush.msra.mxu0 %v3436
    %4086 = vmatpush.msra.mxu0 %v3432
    %4087 = vmatpush.msra.mxu0 %v3428
    %4088 = vmatpush.msra.mxu0 %v3424
    %4089 = vmatpush.msra.mxu0 %v3420
    %4090 = vmatpush.msra.mxu0 %v3416
    %4091 = vmatpush.msra.mxu0 %v3412
    %4092 = vmatmul.f32.gmra.mxu0 %v4070
    %v4093 = vpop.f32.mrf.mxu0
    %v4094 = vadd.f32 %v4072, %v4093
    %4095 = vdwg.mxu0
    %4096 = vmatpush.msra.mxu0 %v3473
    %4097 = vmatpush.msra.mxu0 %v3469
    %4098 = vmatpush.msra.mxu0 %v3465
    %4099 = vmatpush.msra.mxu0 %v3461
    %4100 = vmatpush.msra.mxu0 %v3457
    %4101 = vmatpush.msra.mxu0 %v3453
    %4102 = vmatpush.msra.mxu0 %v3449
    %4103 = vmatpush.msra.mxu0 %v3445
    %4104 = vmatpush.msra.mxu0 %v3441
    %4105 = vmatpush.msra.mxu0 %v3437
    %4106 = vmatpush.msra.mxu0 %v3433
    %4107 = vmatpush.msra.mxu0 %v3429
    %4108 = vmatpush.msra.mxu0 %v3425
    %4109 = vmatpush.msra.mxu0 %v3421
    %4110 = vmatpush.msra.mxu0 %v3417
    %4111 = vmatpush.msra.mxu0 %v3413
    %4112 = vmatmul.f32.gmra.mxu0 %v4070
    %v4113 = vpop.f32.mrf.mxu0
    %v4114 = vadd.f32 %v4073, %v4113
    %4115 = vdwg.mxu0
    %4116 = vmatpush.msra.mxu0 %v3474
    %4117 = vmatpush.msra.mxu0 %v3470
    %4118 = vmatpush.msra.mxu0 %v3466
    %4119 = vmatpush.msra.mxu0 %v3462
    %4120 = vmatpush.msra.mxu0 %v3458
    %4121 = vmatpush.msra.mxu0 %v3454
    %4122 = vmatpush.msra.mxu0 %v3450
    %4123 = vmatpush.msra.mxu0 %v3446
    %4124 = vmatpush.msra.mxu0 %v3442
    %4125 = vmatpush.msra.mxu0 %v3438
    %4126 = vmatpush.msra.mxu0 %v3434
    %4127 = vmatpush.msra.mxu0 %v3430
    %4128 = vmatpush.msra.mxu0 %v3426
    %4129 = vmatpush.msra.mxu0 %v3422
    %4130 = vmatpush.msra.mxu0 %v3418
    %4131 = vmatpush.msra.mxu0 %v3414
    %4132 = vmatmul.f32.gmra.mxu0 %v4070
    %v4133 = vpop.f32.mrf.mxu0
    %v4134 = vadd.f32 %v4074, %v4133
    %4135 = vdwg.mxu0
    %4136 = vmatpush.msra.mxu0 %v3475
    %4137 = vmatpush.msra.mxu0 %v3471
    %4138 = vmatpush.msra.mxu0 %v3467
    %4139 = vmatpush.msra.mxu0 %v3463
    %4140 = vmatpush.msra.mxu0 %v3459
    %4141 = vmatpush.msra.mxu0 %v3455
    %4142 = vmatpush.msra.mxu0 %v3451
    %4143 = vmatpush.msra.mxu0 %v3447
    %4144 = vmatpush.msra.mxu0 %v3443
    %4145 = vmatpush.msra.mxu0 %v3439
    %4146 = vmatpush.msra.mxu0 %v3435
    %4147 = vmatpush.msra.mxu0 %v3431
    %4148 = vmatpush.msra.mxu0 %v3427
    %4149 = vmatpush.msra.mxu0 %v3423
    %4150 = vmatpush.msra.mxu0 %v3419
    %4151 = vmatpush.msra.mxu0 %v3415
    %4152 = vmatmul.f32.gmra.mxu0 %v4070
    %v4153 = vpop.f32.mrf.mxu0
    %v4154 = vadd.f32 %v4075, %v4153
    %4155 = vdwg.mxu0
    %v4156 = vxor.u32 %v4094, 2147483648
    %v4157 = vmul.f32 %v4156, 1.442695
    %v4158 = vpow.pop %v4157
    %v4159 = vadd.f32 %v4158, 1.0
    %v4160 = vrcp.pop %v4159
    %v4161 = vmul.f32 %v4159, %v4160
    %v4162 = vsub.f32 1.0, %v4161
    %v4163 = vmul.f32 %v4160, %v4162
    %v4164 = vadd.f32 %v4160, %v4163
    %vm4165 = vweird.f32 %v4159
    %vm4166 = vweird.f32 %v4160
    %vm4167 = vmor %vm4165, %vm4166
    %v4168 = vsel %vm4167, %v4160, %v4164
    %v4169 = vand.u32 2147483647, %v4159
    %vm4170 = vcmp.eq.f32.partialorder %v4169, 8.507059e+37
    %v4171 = vand.u32 %v4159, 2147483648
    %v4172 = vor.u32 1.1754944e-38, %v4171
    %v4173 = vsel %vm4170, %v4172, %v4168
    %v4174 = vmul.f32 1.0, %v4173
    %v4175 = vxor.u32 %v4114, 2147483648
    %v4176 = vmul.f32 %v4175, 1.442695
    %v4177 = vpow.pop %v4176
    %v4178 = vadd.f32 %v4177, 1.0
    %v4179 = vrcp.pop %v4178
    %v4180 = vmul.f32 %v4178, %v4179
    %v4181 = vsub.f32 1.0, %v4180
    %v4182 = vmul.f32 %v4179, %v4181
    %v4183 = vadd.f32 %v4179, %v4182
    %vm4184 = vweird.f32 %v4178
    %vm4185 = vweird.f32 %v4179
    %vm4186 = vmor %vm4184, %vm4185
    %v4187 = vsel %vm4186, %v4179, %v4183
    %v4188 = vand.u32 2147483647, %v4178
    %vm4189 = vcmp.eq.f32.partialorder %v4188, 8.507059e+37
    %v4190 = vand.u32 %v4178, 2147483648
    %v4191 = vor.u32 1.1754944e-38, %v4190
    %v4192 = vsel %vm4189, %v4191, %v4187
    %v4193 = vmul.f32 1.0, %v4192
    %v4194 = vtanh.pop %v4134
    %v4195 = vxor.u32 %v4154, 2147483648
    %v4196 = vmul.f32 %v4195, 1.442695
    %v4197 = vpow.pop %v4196
    %v4198 = vadd.f32 %v4197, 1.0
    %v4199 = vrcp.pop %v4198
    %v4200 = vmul.f32 %v4198, %v4199
    %v4201 = vsub.f32 1.0, %v4200
    %v4202 = vmul.f32 %v4199, %v4201
    %v4203 = vadd.f32 %v4199, %v4202
    %vm4204 = vweird.f32 %v4198
    %vm4205 = vweird.f32 %v4199
    %vm4206 = vmor %vm4204, %vm4205
    %v4207 = vsel %vm4206, %v4199, %v4203
    %v4208 = vand.u32 2147483647, %v4198
    %vm4209 = vcmp.eq.f32.partialorder %v4208, 8.507059e+37
    %v4210 = vand.u32 %v4198, 2147483648
    %v4211 = vor.u32 1.1754944e-38, %v4210
    %v4212 = vsel %vm4209, %v4211, %v4207
    %v4213 = vmul.f32 1.0, %v4212
    %v4214 = vmul.f32 %v4193, %v4068
    %v4215 = vmul.f32 %v4174, %v4194
    %v4216 = vadd.f32 %v4214, %v4215
    %v4217 = vtanh.pop %v4216
    %v4218 = vmul.f32 %v4213, %v4217
    %4219 = vst [vmem:[#allocation2 + $0x20] sm:$0xff] %v4218
    %v4220 = vld [vmem:[#allocation3 + $0xa0] sm:$0xff]
    %v4221 = vld [vmem:[#allocation3 + $0xa8] sm:$0xff]
    %v4222 = vld [vmem:[#allocation3 + $0xb0] sm:$0xff]
    %v4223 = vld [vmem:[#allocation3 + $0xb8] sm:$0xff]
    %4224 = vmatpush.msra.mxu0 %v3472
    %4225 = vmatpush.msra.mxu0 %v3468
    %4226 = vmatpush.msra.mxu0 %v3464
    %4227 = vmatpush.msra.mxu0 %v3460
    %4228 = vmatpush.msra.mxu0 %v3456
    %4229 = vmatpush.msra.mxu0 %v3452
    %4230 = vmatpush.msra.mxu0 %v3448
    %4231 = vmatpush.msra.mxu0 %v3444
    %4232 = vmatpush.msra.mxu0 %v3440
    %4233 = vmatpush.msra.mxu0 %v3436
    %4234 = vmatpush.msra.mxu0 %v3432
    %4235 = vmatpush.msra.mxu0 %v3428
    %4236 = vmatpush.msra.mxu0 %v3424
    %4237 = vmatpush.msra.mxu0 %v3420
    %4238 = vmatpush.msra.mxu0 %v3416
    %4239 = vmatpush.msra.mxu0 %v3412
    %4240 = vmatmul.f32.gmra.mxu0 %v4218
    %v4241 = vpop.f32.mrf.mxu0
    %v4242 = vadd.f32 %v4220, %v4241
    %4243 = vdwg.mxu0
    %4244 = vmatpush.msra.mxu0 %v3473
    %4245 = vmatpush.msra.mxu0 %v3469
    %4246 = vmatpush.msra.mxu0 %v3465
    %4247 = vmatpush.msra.mxu0 %v3461
    %4248 = vmatpush.msra.mxu0 %v3457
    %4249 = vmatpush.msra.mxu0 %v3453
    %4250 = vmatpush.msra.mxu0 %v3449
    %4251 = vmatpush.msra.mxu0 %v3445
    %4252 = vmatpush.msra.mxu0 %v3441
    %4253 = vmatpush.msra.mxu0 %v3437
    %4254 = vmatpush.msra.mxu0 %v3433
    %4255 = vmatpush.msra.mxu0 %v3429
    %4256 = vmatpush.msra.mxu0 %v3425
    %4257 = vmatpush.msra.mxu0 %v3421
    %4258 = vmatpush.msra.mxu0 %v3417
    %4259 = vmatpush.msra.mxu0 %v3413
    %4260 = vmatmul.f32.gmra.mxu0 %v4218
    %v4261 = vpop.f32.mrf.mxu0
    %v4262 = vadd.f32 %v4221, %v4261
    %4263 = vdwg.mxu0
    %4264 = vmatpush.msra.mxu0 %v3474
    %4265 = vmatpush.msra.mxu0 %v3470
    %4266 = vmatpush.msra.mxu0 %v3466
    %4267 = vmatpush.msra.mxu0 %v3462
    %4268 = vmatpush.msra.mxu0 %v3458
    %4269 = vmatpush.msra.mxu0 %v3454
    %4270 = vmatpush.msra.mxu0 %v3450
    %4271 = vmatpush.msra.mxu0 %v3446
    %4272 = vmatpush.msra.mxu0 %v3442
    %4273 = vmatpush.msra.mxu0 %v3438
    %4274 = vmatpush.msra.mxu0 %v3434
    %4275 = vmatpush.msra.mxu0 %v3430
    %4276 = vmatpush.msra.mxu0 %v3426
    %4277 = vmatpush.msra.mxu0 %v3422
    %4278 = vmatpush.msra.mxu0 %v3418
    %4279 = vmatpush.msra.mxu0 %v3414
    %4280 = vmatmul.f32.gmra.mxu0 %v4218
    %v4281 = vpop.f32.mrf.mxu0
    %v4282 = vadd.f32 %v4222, %v4281
    %4283 = vdwg.mxu0
    %4284 = vmatpush.msra.mxu0 %v3475
    %4285 = vmatpush.msra.mxu0 %v3471
    %4286 = vmatpush.msra.mxu0 %v3467
    %4287 = vmatpush.msra.mxu0 %v3463
    %4288 = vmatpush.msra.mxu0 %v3459
    %4289 = vmatpush.msra.mxu0 %v3455
    %4290 = vmatpush.msra.mxu0 %v3451
    %4291 = vmatpush.msra.mxu0 %v3447
    %4292 = vmatpush.msra.mxu0 %v3443
    %4293 = vmatpush.msra.mxu0 %v3439
    %4294 = vmatpush.msra.mxu0 %v3435
    %4295 = vmatpush.msra.mxu0 %v3431
    %4296 = vmatpush.msra.mxu0 %v3427
    %4297 = vmatpush.msra.mxu0 %v3423
    %4298 = vmatpush.msra.mxu0 %v3419
    %4299 = vmatpush.msra.mxu0 %v3415
    %4300 = vmatmul.f32.gmra.mxu0 %v4218
    %v4301 = vpop.f32.mrf.mxu0
    %v4302 = vadd.f32 %v4223, %v4301
    %4303 = vdwg.mxu0
    %v4304 = vxor.u32 %v4242, 2147483648
    %v4305 = vmul.f32 %v4304, 1.442695
    %v4306 = vpow.pop %v4305
    %v4307 = vadd.f32 %v4306, 1.0
    %v4308 = vrcp.pop %v4307
    %v4309 = vmul.f32 %v4307, %v4308
    %v4310 = vsub.f32 1.0, %v4309
    %v4311 = vmul.f32 %v4308, %v4310
    %v4312 = vadd.f32 %v4308, %v4311
    %vm4313 = vweird.f32 %v4307
    %vm4314 = vweird.f32 %v4308
    %vm4315 = vmor %vm4313, %vm4314
    %v4316 = vsel %vm4315, %v4308, %v4312
    %v4317 = vand.u32 2147483647, %v4307
    %vm4318 = vcmp.eq.f32.partialorder %v4317, 8.507059e+37
    %v4319 = vand.u32 %v4307, 2147483648
    %v4320 = vor.u32 1.1754944e-38, %v4319
    %v4321 = vsel %vm4318, %v4320, %v4316
    %v4322 = vmul.f32 1.0, %v4321
    %v4323 = vxor.u32 %v4262, 2147483648
    %v4324 = vmul.f32 %v4323, 1.442695
    %v4325 = vpow.pop %v4324
    %v4326 = vadd.f32 %v4325, 1.0
    %v4327 = vrcp.pop %v4326
    %v4328 = vmul.f32 %v4326, %v4327
    %v4329 = vsub.f32 1.0, %v4328
    %v4330 = vmul.f32 %v4327, %v4329
    %v4331 = vadd.f32 %v4327, %v4330
    %vm4332 = vweird.f32 %v4326
    %vm4333 = vweird.f32 %v4327
    %vm4334 = vmor %vm4332, %vm4333
    %v4335 = vsel %vm4334, %v4327, %v4331
    %v4336 = vand.u32 2147483647, %v4326
    %vm4337 = vcmp.eq.f32.partialorder %v4336, 8.507059e+37
    %v4338 = vand.u32 %v4326, 2147483648
    %v4339 = vor.u32 1.1754944e-38, %v4338
    %v4340 = vsel %vm4337, %v4339, %v4335
    %v4341 = vmul.f32 1.0, %v4340
    %v4342 = vtanh.pop %v4282
    %v4343 = vxor.u32 %v4302, 2147483648
    %v4344 = vmul.f32 %v4343, 1.442695
    %v4345 = vpow.pop %v4344
    %v4346 = vadd.f32 %v4345, 1.0
    %v4347 = vrcp.pop %v4346
    %v4348 = vmul.f32 %v4346, %v4347
    %v4349 = vsub.f32 1.0, %v4348
    %v4350 = vmul.f32 %v4347, %v4349
    %v4351 = vadd.f32 %v4347, %v4350
    %vm4352 = vweird.f32 %v4346
    %vm4353 = vweird.f32 %v4347
    %vm4354 = vmor %vm4352, %vm4353
    %v4355 = vsel %vm4354, %v4347, %v4351
    %v4356 = vand.u32 2147483647, %v4346
    %vm4357 = vcmp.eq.f32.partialorder %v4356, 8.507059e+37
    %v4358 = vand.u32 %v4346, 2147483648
    %v4359 = vor.u32 1.1754944e-38, %v4358
    %v4360 = vsel %vm4357, %v4359, %v4355
    %v4361 = vmul.f32 1.0, %v4360
    %v4362 = vmul.f32 %v4341, %v4216
    %v4363 = vmul.f32 %v4322, %v4342
    %v4364 = vadd.f32 %v4362, %v4363
    %v4365 = vtanh.pop %v4364
    %v4366 = vmul.f32 %v4361, %v4365
    %4367 = vst [vmem:[#allocation2 + $0x28] sm:$0xff] %v4366
    %v4368 = vld [vmem:[#allocation3 + $0xc0] sm:$0xff]
    %v4369 = vld [vmem:[#allocation3 + $0xc8] sm:$0xff]
    %v4370 = vld [vmem:[#allocation3 + $0xd0] sm:$0xff]
    %v4371 = vld [vmem:[#allocation3 + $0xd8] sm:$0xff]
    %4372 = vmatpush.msra.mxu0 %v3472
    %4373 = vmatpush.msra.mxu0 %v3468
    %4374 = vmatpush.msra.mxu0 %v3464
    %4375 = vmatpush.msra.mxu0 %v3460
    %4376 = vmatpush.msra.mxu0 %v3456
    %4377 = vmatpush.msra.mxu0 %v3452
    %4378 = vmatpush.msra.mxu0 %v3448
    %4379 = vmatpush.msra.mxu0 %v3444
    %4380 = vmatpush.msra.mxu0 %v3440
    %4381 = vmatpush.msra.mxu0 %v3436
    %4382 = vmatpush.msra.mxu0 %v3432
    %4383 = vmatpush.msra.mxu0 %v3428
    %4384 = vmatpush.msra.mxu0 %v3424
    %4385 = vmatpush.msra.mxu0 %v3420
    %4386 = vmatpush.msra.mxu0 %v3416
    %4387 = vmatpush.msra.mxu0 %v3412
    %4388 = vmatmul.f32.gmra.mxu0 %v4366
    %v4389 = vpop.f32.mrf.mxu0
    %v4390 = vadd.f32 %v4368, %v4389
    %4391 = vdwg.mxu0
    %4392 = vmatpush.msra.mxu0 %v3473
    %4393 = vmatpush.msra.mxu0 %v3469
    %4394 = vmatpush.msra.mxu0 %v3465
    %4395 = vmatpush.msra.mxu0 %v3461
    %4396 = vmatpush.msra.mxu0 %v3457
    %4397 = vmatpush.msra.mxu0 %v3453
    %4398 = vmatpush.msra.mxu0 %v3449
    %4399 = vmatpush.msra.mxu0 %v3445
    %4400 = vmatpush.msra.mxu0 %v3441
    %4401 = vmatpush.msra.mxu0 %v3437
    %4402 = vmatpush.msra.mxu0 %v3433
    %4403 = vmatpush.msra.mxu0 %v3429
    %4404 = vmatpush.msra.mxu0 %v3425
    %4405 = vmatpush.msra.mxu0 %v3421
    %4406 = vmatpush.msra.mxu0 %v3417
    %4407 = vmatpush.msra.mxu0 %v3413
    %4408 = vmatmul.f32.gmra.mxu0 %v4366
    %v4409 = vpop.f32.mrf.mxu0
    %v4410 = vadd.f32 %v4369, %v4409
    %4411 = vdwg.mxu0
    %4412 = vmatpush.msra.mxu0 %v3474
    %4413 = vmatpush.msra.mxu0 %v3470
    %4414 = vmatpush.msra.mxu0 %v3466
    %4415 = vmatpush.msra.mxu0 %v3462
    %4416 = vmatpush.msra.mxu0 %v3458
    %4417 = vmatpush.msra.mxu0 %v3454
    %4418 = vmatpush.msra.mxu0 %v3450
    %4419 = vmatpush.msra.mxu0 %v3446
    %4420 = vmatpush.msra.mxu0 %v3442
    %4421 = vmatpush.msra.mxu0 %v3438
    %4422 = vmatpush.msra.mxu0 %v3434
    %4423 = vmatpush.msra.mxu0 %v3430
    %4424 = vmatpush.msra.mxu0 %v3426
    %4425 = vmatpush.msra.mxu0 %v3422
    %4426 = vmatpush.msra.mxu0 %v3418
    %4427 = vmatpush.msra.mxu0 %v3414
    %4428 = vmatmul.f32.gmra.mxu0 %v4366
    %v4429 = vpop.f32.mrf.mxu0
    %v4430 = vadd.f32 %v4370, %v4429
    %4431 = vdwg.mxu0
    %4432 = vmatpush.msra.mxu0 %v3475
    %4433 = vmatpush.msra.mxu0 %v3471
    %4434 = vmatpush.msra.mxu0 %v3467
    %4435 = vmatpush.msra.mxu0 %v3463
    %4436 = vmatpush.msra.mxu0 %v3459
    %4437 = vmatpush.msra.mxu0 %v3455
    %4438 = vmatpush.msra.mxu0 %v3451
    %4439 = vmatpush.msra.mxu0 %v3447
    %4440 = vmatpush.msra.mxu0 %v3443
    %4441 = vmatpush.msra.mxu0 %v3439
    %4442 = vmatpush.msra.mxu0 %v3435
    %4443 = vmatpush.msra.mxu0 %v3431
    %4444 = vmatpush.msra.mxu0 %v3427
    %4445 = vmatpush.msra.mxu0 %v3423
    %4446 = vmatpush.msra.mxu0 %v3419
    %4447 = vmatpush.msra.mxu0 %v3415
    %4448 = vmatmul.f32.gmra.mxu0 %v4366
    %v4449 = vpop.f32.mrf.mxu0
    %v4450 = vadd.f32 %v4371, %v4449
    %4451 = vdwg.mxu0
    %v4452 = vxor.u32 %v4390, 2147483648
    %v4453 = vmul.f32 %v4452, 1.442695
    %v4454 = vpow.pop %v4453
    %v4455 = vadd.f32 %v4454, 1.0
    %v4456 = vrcp.pop %v4455
    %v4457 = vmul.f32 %v4455, %v4456
    %v4458 = vsub.f32 1.0, %v4457
    %v4459 = vmul.f32 %v4456, %v4458
    %v4460 = vadd.f32 %v4456, %v4459
    %vm4461 = vweird.f32 %v4455
    %vm4462 = vweird.f32 %v4456
    %vm4463 = vmor %vm4461, %vm4462
    %v4464 = vsel %vm4463, %v4456, %v4460
    %v4465 = vand.u32 2147483647, %v4455
    %vm4466 = vcmp.eq.f32.partialorder %v4465, 8.507059e+37
    %v4467 = vand.u32 %v4455, 2147483648
    %v4468 = vor.u32 1.1754944e-38, %v4467
    %v4469 = vsel %vm4466, %v4468, %v4464
    %v4470 = vmul.f32 1.0, %v4469
    %v4471 = vxor.u32 %v4410, 2147483648
    %v4472 = vmul.f32 %v4471, 1.442695
    %v4473 = vpow.pop %v4472
    %v4474 = vadd.f32 %v4473, 1.0
    %v4475 = vrcp.pop %v4474
    %v4476 = vmul.f32 %v4474, %v4475
    %v4477 = vsub.f32 1.0, %v4476
    %v4478 = vmul.f32 %v4475, %v4477
    %v4479 = vadd.f32 %v4475, %v4478
    %vm4480 = vweird.f32 %v4474
    %vm4481 = vweird.f32 %v4475
    %vm4482 = vmor %vm4480, %vm4481
    %v4483 = vsel %vm4482, %v4475, %v4479
    %v4484 = vand.u32 2147483647, %v4474
    %vm4485 = vcmp.eq.f32.partialorder %v4484, 8.507059e+37
    %v4486 = vand.u32 %v4474, 2147483648
    %v4487 = vor.u32 1.1754944e-38, %v4486
    %v4488 = vsel %vm4485, %v4487, %v4483
    %v4489 = vmul.f32 1.0, %v4488
    %v4490 = vtanh.pop %v4430
    %v4491 = vxor.u32 %v4450, 2147483648
    %v4492 = vmul.f32 %v4491, 1.442695
    %v4493 = vpow.pop %v4492
    %v4494 = vadd.f32 %v4493, 1.0
    %v4495 = vrcp.pop %v4494
    %v4496 = vmul.f32 %v4494, %v4495
    %v4497 = vsub.f32 1.0, %v4496
    %v4498 = vmul.f32 %v4495, %v4497
    %v4499 = vadd.f32 %v4495, %v4498
    %vm4500 = vweird.f32 %v4494
    %vm4501 = vweird.f32 %v4495
    %vm4502 = vmor %vm4500, %vm4501
    %v4503 = vsel %vm4502, %v4495, %v4499
    %v4504 = vand.u32 2147483647, %v4494
    %vm4505 = vcmp.eq.f32.partialorder %v4504, 8.507059e+37
    %v4506 = vand.u32 %v4494, 2147483648
    %v4507 = vor.u32 1.1754944e-38, %v4506
    %v4508 = vsel %vm4505, %v4507, %v4503
    %v4509 = vmul.f32 1.0, %v4508
    %v4510 = vmul.f32 %v4489, %v4364
    %v4511 = vmul.f32 %v4470, %v4490
    %v4512 = vadd.f32 %v4510, %v4511
    %v4513 = vtanh.pop %v4512
    %v4514 = vmul.f32 %v4509, %v4513
    %4515 = vst [vmem:[#allocation2 + $0x30] sm:$0xff] %v4514
    %v4516 = vld [vmem:[#allocation3 + $0xe0] sm:$0xff]
    %v4517 = vld [vmem:[#allocation3 + $0xe8] sm:$0xff]
    %v4518 = vld [vmem:[#allocation3 + $0xf0] sm:$0xff]
    %v4519 = vld [vmem:[#allocation3 + $0xf8] sm:$0xff]
    %4520 = vmatpush.msra.mxu0 %v3472
    %4521 = vmatpush.msra.mxu0 %v3468
    %4522 = vmatpush.msra.mxu0 %v3464
    %4523 = vmatpush.msra.mxu0 %v3460
    %4524 = vmatpush.msra.mxu0 %v3456
    %4525 = vmatpush.msra.mxu0 %v3452
    %4526 = vmatpush.msra.mxu0 %v3448
    %4527 = vmatpush.msra.mxu0 %v3444
    %4528 = vmatpush.msra.mxu0 %v3440
    %4529 = vmatpush.msra.mxu0 %v3436
    %4530 = vmatpush.msra.mxu0 %v3432
    %4531 = vmatpush.msra.mxu0 %v3428
    %4532 = vmatpush.msra.mxu0 %v3424
    %4533 = vmatpush.msra.mxu0 %v3420
    %4534 = vmatpush.msra.mxu0 %v3416
    %4535 = vmatpush.msra.mxu0 %v3412
    %4536 = vmatmul.f32.gmra.mxu0 %v4514
    %v4537 = vpop.f32.mrf.mxu0
    %v4538 = vadd.f32 %v4516, %v4537
    %4539 = vdwg.mxu0
    %4540 = vmatpush.msra.mxu0 %v3473
    %4541 = vmatpush.msra.mxu0 %v3469
    %4542 = vmatpush.msra.mxu0 %v3465
    %4543 = vmatpush.msra.mxu0 %v3461
    %4544 = vmatpush.msra.mxu0 %v3457
    %4545 = vmatpush.msra.mxu0 %v3453
    %4546 = vmatpush.msra.mxu0 %v3449
    %4547 = vmatpush.msra.mxu0 %v3445
    %4548 = vmatpush.msra.mxu0 %v3441
    %4549 = vmatpush.msra.mxu0 %v3437
    %4550 = vmatpush.msra.mxu0 %v3433
    %4551 = vmatpush.msra.mxu0 %v3429
    %4552 = vmatpush.msra.mxu0 %v3425
    %4553 = vmatpush.msra.mxu0 %v3421
    %4554 = vmatpush.msra.mxu0 %v3417
    %4555 = vmatpush.msra.mxu0 %v3413
    %4556 = vmatmul.f32.gmra.mxu0 %v4514
    %v4557 = vpop.f32.mrf.mxu0
    %v4558 = vadd.f32 %v4517, %v4557
    %4559 = vdwg.mxu0
    %4560 = vmatpush.msra.mxu0 %v3474
    %4561 = vmatpush.msra.mxu0 %v3470
    %4562 = vmatpush.msra.mxu0 %v3466
    %4563 = vmatpush.msra.mxu0 %v3462
    %4564 = vmatpush.msra.mxu0 %v3458
    %4565 = vmatpush.msra.mxu0 %v3454
    %4566 = vmatpush.msra.mxu0 %v3450
    %4567 = vmatpush.msra.mxu0 %v3446
    %4568 = vmatpush.msra.mxu0 %v3442
    %4569 = vmatpush.msra.mxu0 %v3438
    %4570 = vmatpush.msra.mxu0 %v3434
    %4571 = vmatpush.msra.mxu0 %v3430
    %4572 = vmatpush.msra.mxu0 %v3426
    %4573 = vmatpush.msra.mxu0 %v3422
    %4574 = vmatpush.msra.mxu0 %v3418
    %4575 = vmatpush.msra.mxu0 %v3414
    %4576 = vmatmul.f32.gmra.mxu0 %v4514
    %v4577 = vpop.f32.mrf.mxu0
    %v4578 = vadd.f32 %v4518, %v4577
    %4579 = vdwg.mxu0
    %4580 = vmatpush.msra.mxu0 %v3475
    %4581 = vmatpush.msra.mxu0 %v3471
    %4582 = vmatpush.msra.mxu0 %v3467
    %4583 = vmatpush.msra.mxu0 %v3463
    %4584 = vmatpush.msra.mxu0 %v3459
    %4585 = vmatpush.msra.mxu0 %v3455
    %4586 = vmatpush.msra.mxu0 %v3451
    %4587 = vmatpush.msra.mxu0 %v3447
    %4588 = vmatpush.msra.mxu0 %v3443
    %4589 = vmatpush.msra.mxu0 %v3439
    %4590 = vmatpush.msra.mxu0 %v3435
    %4591 = vmatpush.msra.mxu0 %v3431
    %4592 = vmatpush.msra.mxu0 %v3427
    %4593 = vmatpush.msra.mxu0 %v3423
    %4594 = vmatpush.msra.mxu0 %v3419
    %4595 = vmatpush.msra.mxu0 %v3415
    %4596 = vmatmul.f32.gmra.mxu0 %v4514
    %v4597 = vpop.f32.mrf.mxu0
    %v4598 = vadd.f32 %v4519, %v4597
    %4599 = vdwg.mxu0
    %v4600 = vxor.u32 %v4538, 2147483648
    %v4601 = vmul.f32 %v4600, 1.442695
    %v4602 = vpow.pop %v4601
    %v4603 = vadd.f32 %v4602, 1.0
    %v4604 = vrcp.pop %v4603
    %v4605 = vmul.f32 %v4603, %v4604
    %v4606 = vsub.f32 1.0, %v4605
    %v4607 = vmul.f32 %v4604, %v4606
    %v4608 = vadd.f32 %v4604, %v4607
    %vm4609 = vweird.f32 %v4603
    %vm4610 = vweird.f32 %v4604
    %vm4611 = vmor %vm4609, %vm4610
    %v4612 = vsel %vm4611, %v4604, %v4608
    %v4613 = vand.u32 2147483647, %v4603
    %vm4614 = vcmp.eq.f32.partialorder %v4613, 8.507059e+37
    %v4615 = vand.u32 %v4603, 2147483648
    %v4616 = vor.u32 1.1754944e-38, %v4615
    %v4617 = vsel %vm4614, %v4616, %v4612
    %v4618 = vmul.f32 1.0, %v4617
    %v4619 = vxor.u32 %v4558, 2147483648
    %v4620 = vmul.f32 %v4619, 1.442695
    %v4621 = vpow.pop %v4620
    %v4622 = vadd.f32 %v4621, 1.0
    %v4623 = vrcp.pop %v4622
    %v4624 = vmul.f32 %v4622, %v4623
    %v4625 = vsub.f32 1.0, %v4624
    %v4626 = vmul.f32 %v4623, %v4625
    %v4627 = vadd.f32 %v4623, %v4626
    %vm4628 = vweird.f32 %v4622
    %vm4629 = vweird.f32 %v4623
    %vm4630 = vmor %vm4628, %vm4629
    %v4631 = vsel %vm4630, %v4623, %v4627
    %v4632 = vand.u32 2147483647, %v4622
    %vm4633 = vcmp.eq.f32.partialorder %v4632, 8.507059e+37
    %v4634 = vand.u32 %v4622, 2147483648
    %v4635 = vor.u32 1.1754944e-38, %v4634
    %v4636 = vsel %vm4633, %v4635, %v4631
    %v4637 = vmul.f32 1.0, %v4636
    %v4638 = vtanh.pop %v4578
    %v4639 = vxor.u32 %v4598, 2147483648
    %v4640 = vmul.f32 %v4639, 1.442695
    %v4641 = vpow.pop %v4640
    %v4642 = vadd.f32 %v4641, 1.0
    %v4643 = vrcp.pop %v4642
    %v4644 = vmul.f32 %v4642, %v4643
    %v4645 = vsub.f32 1.0, %v4644
    %v4646 = vmul.f32 %v4643, %v4645
    %v4647 = vadd.f32 %v4643, %v4646
    %vm4648 = vweird.f32 %v4642
    %vm4649 = vweird.f32 %v4643
    %vm4650 = vmor %vm4648, %vm4649
    %v4651 = vsel %vm4650, %v4643, %v4647
    %v4652 = vand.u32 2147483647, %v4642
    %vm4653 = vcmp.eq.f32.partialorder %v4652, 8.507059e+37
    %v4654 = vand.u32 %v4642, 2147483648
    %v4655 = vor.u32 1.1754944e-38, %v4654
    %v4656 = vsel %vm4653, %v4655, %v4651
    %v4657 = vmul.f32 1.0, %v4656
    %v4658 = vmul.f32 %v4637, %v4512
    %v4659 = vmul.f32 %v4618, %v4638
    %v4660 = vadd.f32 %v4658, %v4659
    %v4661 = vtanh.pop %v4660
    %v4662 = vmul.f32 %v4657, %v4661
    %4663 = vst [vmem:[#allocation2 + $0x38] sm:$0xff] %v4662
    %s4664 = scalar_lea.vmem %s9, 16
    %4665 = vst [vmem:[%s4664] sm:$0xff] %v4662
    %s4666 = scalar_lea.vmem %s10, 16
    %4667 = vst [vmem:[%s4666] sm:$0xff] %v4660
    %v4668 = vld [vmem:[#allocation2] sm:$0xff]
    %v4669 = vld [vmem:[#allocation2 + $0x8] sm:$0xff]
    %v4670 = vld [vmem:[#allocation2 + $0x10] sm:$0xff]
    %v4671 = vld [vmem:[#allocation2 + $0x18] sm:$0xff]
    %v4672 = vld [vmem:[#allocation2 + $0x20] sm:$0xff]
    %v4673 = vld [vmem:[#allocation2 + $0x28] sm:$0xff]
    %v4674 = vld [vmem:[#allocation2 + $0x30] sm:$0xff]
    %v4675 = vld [vmem:[#allocation2 + $0x38] sm:$0xff]
    %s4676 = scalar_lea.vmem [#allocation4], 1536
    %v4677 = vld [vmem:[%s4676] sm:$0xff]
    %v4678 = vld [vmem:[%s4676 + $0x8] sm:$0xff]
    %v4679 = vld [vmem:[%s4676 + $0x10] sm:$0xff]
    %v4680 = vld [vmem:[%s4676 + $0x18] sm:$0xff]
    %v4681 = vld [vmem:[%s4676 + $0x20] sm:$0xff]
    %v4682 = vld [vmem:[%s4676 + $0x28] sm:$0xff]
    %v4683 = vld [vmem:[%s4676 + $0x30] sm:$0xff]
    %v4684 = vld [vmem:[%s4676 + $0x38] sm:$0xff]
    %v4685 = vld [vmem:[%s4676 + $0x40] sm:$0xff]
    %v4686 = vld [vmem:[%s4676 + $0x48] sm:$0xff]
    %v4687 = vld [vmem:[%s4676 + $0x50] sm:$0xff]
    %v4688 = vld [vmem:[%s4676 + $0x58] sm:$0xff]
    %v4689 = vld [vmem:[%s4676 + $0x60] sm:$0xff]
    %v4690 = vld [vmem:[%s4676 + $0x68] sm:$0xff]
    %v4691 = vld [vmem:[%s4676 + $0x70] sm:$0xff]
    %v4692 = vld [vmem:[%s4676 + $0x78] sm:$0xff]
    %v4693 = vld [vmem:[%s4676 + $0x80] sm:$0xff]
    %v4694 = vld [vmem:[%s4676 + $0x88] sm:$0xff]
    %v4695 = vld [vmem:[%s4676 + $0x90] sm:$0xff]
    %v4696 = vld [vmem:[%s4676 + $0x98] sm:$0xff]
    %v4697 = vld [vmem:[%s4676 + $0xa0] sm:$0xff]
    %v4698 = vld [vmem:[%s4676 + $0xa8] sm:$0xff]
    %v4699 = vld [vmem:[%s4676 + $0xb0] sm:$0xff]
    %v4700 = vld [vmem:[%s4676 + $0xb8] sm:$0xff]
    %v4701 = vld [vmem:[%s4676 + $0xc0] sm:$0xff]
    %v4702 = vld [vmem:[%s4676 + $0xc8] sm:$0xff]
    %v4703 = vld [vmem:[%s4676 + $0xd0] sm:$0xff]
    %v4704 = vld [vmem:[%s4676 + $0xd8] sm:$0xff]
    %v4705 = vld [vmem:[%s4676 + $0xe0] sm:$0xff]
    %v4706 = vld [vmem:[%s4676 + $0xe8] sm:$0xff]
    %v4707 = vld [vmem:[%s4676 + $0xf0] sm:$0xff]
    %v4708 = vld [vmem:[%s4676 + $0xf8] sm:$0xff]
    %v4709 = vld [vmem:[%s4676 + $0x100] sm:$0xff]
    %v4710 = vld [vmem:[%s4676 + $0x108] sm:$0xff]
    %v4711 = vld [vmem:[%s4676 + $0x110] sm:$0xff]
    %v4712 = vld [vmem:[%s4676 + $0x118] sm:$0xff]
    %v4713 = vld [vmem:[%s4676 + $0x120] sm:$0xff]
    %v4714 = vld [vmem:[%s4676 + $0x128] sm:$0xff]
    %v4715 = vld [vmem:[%s4676 + $0x130] sm:$0xff]
    %v4716 = vld [vmem:[%s4676 + $0x138] sm:$0xff]
    %v4717 = vld [vmem:[%s4676 + $0x140] sm:$0xff]
    %v4718 = vld [vmem:[%s4676 + $0x148] sm:$0xff]
    %v4719 = vld [vmem:[%s4676 + $0x150] sm:$0xff]
    %v4720 = vld [vmem:[%s4676 + $0x158] sm:$0xff]
    %v4721 = vld [vmem:[%s4676 + $0x160] sm:$0xff]
    %v4722 = vld [vmem:[%s4676 + $0x168] sm:$0xff]
    %v4723 = vld [vmem:[%s4676 + $0x170] sm:$0xff]
    %v4724 = vld [vmem:[%s4676 + $0x178] sm:$0xff]
    %v4725 = vld [vmem:[%s4676 + $0x180] sm:$0xff]
    %v4726 = vld [vmem:[%s4676 + $0x188] sm:$0xff]
    %v4727 = vld [vmem:[%s4676 + $0x190] sm:$0xff]
    %v4728 = vld [vmem:[%s4676 + $0x198] sm:$0xff]
    %v4729 = vld [vmem:[%s4676 + $0x1a0] sm:$0xff]
    %v4730 = vld [vmem:[%s4676 + $0x1a8] sm:$0xff]
    %v4731 = vld [vmem:[%s4676 + $0x1b0] sm:$0xff]
    %v4732 = vld [vmem:[%s4676 + $0x1b8] sm:$0xff]
    %v4733 = vld [vmem:[%s4676 + $0x1c0] sm:$0xff]
    %v4734 = vld [vmem:[%s4676 + $0x1c8] sm:$0xff]
    %v4735 = vld [vmem:[%s4676 + $0x1d0] sm:$0xff]
    %v4736 = vld [vmem:[%s4676 + $0x1d8] sm:$0xff]
    %v4737 = vld [vmem:[%s4676 + $0x1e0] sm:$0xff]
    %v4738 = vld [vmem:[%s4676 + $0x1e8] sm:$0xff]
    %v4739 = vld [vmem:[%s4676 + $0x1f0] sm:$0xff]
    %v4740 = vld [vmem:[%s4676 + $0x1f8] sm:$0xff]
    %s4741 = scalar_lea.vmem %s5, 12
    %v4742 = vld [vmem:[%s4741] sm:$0xf]
    %v4744 = vperm.slane %v4742, 0
    %v4745 = vperm.slane %v4742, 1
    %v4746 = vperm.slane %v4742, 2
    %v4747 = vperm.slane %v4742, 3
    %4752 = vmatpush.msra.mxu0 %v4737
    %4753 = vmatpush.msra.mxu0 %v4733
    %4754 = vmatpush.msra.mxu0 %v4729
    %4755 = vmatpush.msra.mxu0 %v4725
    %4756 = vmatpush.msra.mxu0 %v4721
    %4757 = vmatpush.msra.mxu0 %v4717
    %4758 = vmatpush.msra.mxu0 %v4713
    %4759 = vmatpush.msra.mxu0 %v4709
    %4760 = vmatpush.msra.mxu0 %v4705
    %4761 = vmatpush.msra.mxu0 %v4701
    %4762 = vmatpush.msra.mxu0 %v4697
    %4763 = vmatpush.msra.mxu0 %v4693
    %4764 = vmatpush.msra.mxu0 %v4689
    %4765 = vmatpush.msra.mxu0 %v4685
    %4766 = vmatpush.msra.mxu0 %v4681
    %4767 = vmatpush.msra.mxu0 %v4677
    %4768 = vmatmul.f32.gmra.mxu0 %v4668
    %v4769 = vpop.f32.mrf.mxu0
    %v4770 = vadd.f32 %v4744, %v4769
    %4771 = vmatmul.f32.gmra.mxu0 %v4669
    %v4772 = vpop.f32.mrf.mxu0
    %v4773 = vadd.f32 %v4744, %v4772
    %4774 = vmatmul.f32.gmra.mxu0 %v4670
    %v4775 = vpop.f32.mrf.mxu0
    %v4776 = vadd.f32 %v4744, %v4775
    %4777 = vmatmul.f32.gmra.mxu0 %v4671
    %v4778 = vpop.f32.mrf.mxu0
    %v4779 = vadd.f32 %v4744, %v4778
    %4780 = vmatmul.f32.gmra.mxu0 %v4672
    %v4781 = vpop.f32.mrf.mxu0
    %v4782 = vadd.f32 %v4744, %v4781
    %4783 = vmatmul.f32.gmra.mxu0 %v4673
    %v4784 = vpop.f32.mrf.mxu0
    %v4785 = vadd.f32 %v4744, %v4784
    %4786 = vmatmul.f32.gmra.mxu0 %v4674
    %v4787 = vpop.f32.mrf.mxu0
    %v4788 = vadd.f32 %v4744, %v4787
    %4789 = vmatmul.f32.gmra.mxu0 %v4675
    %v4790 = vpop.f32.mrf.mxu0
    %v4791 = vadd.f32 %v4744, %v4790
    %4792 = vdwg.mxu0
    %4793 = vmatpush.msra.mxu0 %v4738
    %4794 = vmatpush.msra.mxu0 %v4734
    %4795 = vmatpush.msra.mxu0 %v4730
    %4796 = vmatpush.msra.mxu0 %v4726
    %4797 = vmatpush.msra.mxu0 %v4722
    %4798 = vmatpush.msra.mxu0 %v4718
    %4799 = vmatpush.msra.mxu0 %v4714
    %4800 = vmatpush.msra.mxu0 %v4710
    %4801 = vmatpush.msra.mxu0 %v4706
    %4802 = vmatpush.msra.mxu0 %v4702
    %4803 = vmatpush.msra.mxu0 %v4698
    %4804 = vmatpush.msra.mxu0 %v4694
    %4805 = vmatpush.msra.mxu0 %v4690
    %4806 = vmatpush.msra.mxu0 %v4686
    %4807 = vmatpush.msra.mxu0 %v4682
    %4808 = vmatpush.msra.mxu0 %v4678
    %4809 = vmatmul.f32.gmra.mxu0 %v4668
    %v4810 = vpop.f32.mrf.mxu0
    %v4811 = vadd.f32 %v4745, %v4810
    %4812 = vmatmul.f32.gmra.mxu0 %v4669
    %v4813 = vpop.f32.mrf.mxu0
    %v4814 = vadd.f32 %v4745, %v4813
    %4815 = vmatmul.f32.gmra.mxu0 %v4670
    %v4816 = vpop.f32.mrf.mxu0
    %v4817 = vadd.f32 %v4745, %v4816
    %4818 = vmatmul.f32.gmra.mxu0 %v4671
    %v4819 = vpop.f32.mrf.mxu0
    %v4820 = vadd.f32 %v4745, %v4819
    %4821 = vmatmul.f32.gmra.mxu0 %v4672
    %v4822 = vpop.f32.mrf.mxu0
    %v4823 = vadd.f32 %v4745, %v4822
    %4824 = vmatmul.f32.gmra.mxu0 %v4673
    %v4825 = vpop.f32.mrf.mxu0
    %v4826 = vadd.f32 %v4745, %v4825
    %4827 = vmatmul.f32.gmra.mxu0 %v4674
    %v4828 = vpop.f32.mrf.mxu0
    %v4829 = vadd.f32 %v4745, %v4828
    %4830 = vmatmul.f32.gmra.mxu0 %v4675
    %v4831 = vpop.f32.mrf.mxu0
    %v4832 = vadd.f32 %v4745, %v4831
    %4833 = vdwg.mxu0
    %4834 = vmatpush.msra.mxu0 %v4739
    %4835 = vmatpush.msra.mxu0 %v4735
    %4836 = vmatpush.msra.mxu0 %v4731
    %4837 = vmatpush.msra.mxu0 %v4727
    %4838 = vmatpush.msra.mxu0 %v4723
    %4839 = vmatpush.msra.mxu0 %v4719
    %4840 = vmatpush.msra.mxu0 %v4715
    %4841 = vmatpush.msra.mxu0 %v4711
    %4842 = vmatpush.msra.mxu0 %v4707
    %4843 = vmatpush.msra.mxu0 %v4703
    %4844 = vmatpush.msra.mxu0 %v4699
    %4845 = vmatpush.msra.mxu0 %v4695
    %4846 = vmatpush.msra.mxu0 %v4691
    %4847 = vmatpush.msra.mxu0 %v4687
    %4848 = vmatpush.msra.mxu0 %v4683
    %4849 = vmatpush.msra.mxu0 %v4679
    %4850 = vmatmul.f32.gmra.mxu0 %v4668
    %v4851 = vpop.f32.mrf.mxu0
    %v4852 = vadd.f32 %v4746, %v4851
    %4853 = vmatmul.f32.gmra.mxu0 %v4669
    %v4854 = vpop.f32.mrf.mxu0
    %v4855 = vadd.f32 %v4746, %v4854
    %4856 = vmatmul.f32.gmra.mxu0 %v4670
    %v4857 = vpop.f32.mrf.mxu0
    %v4858 = vadd.f32 %v4746, %v4857
    %4859 = vmatmul.f32.gmra.mxu0 %v4671
    %v4860 = vpop.f32.mrf.mxu0
    %v4861 = vadd.f32 %v4746, %v4860
    %4862 = vmatmul.f32.gmra.mxu0 %v4672
    %v4863 = vpop.f32.mrf.mxu0
    %v4864 = vadd.f32 %v4746, %v4863
    %4865 = vmatmul.f32.gmra.mxu0 %v4673
    %v4866 = vpop.f32.mrf.mxu0
    %v4867 = vadd.f32 %v4746, %v4866
    %4868 = vmatmul.f32.gmra.mxu0 %v4674
    %v4869 = vpop.f32.mrf.mxu0
    %v4870 = vadd.f32 %v4746, %v4869
    %4871 = vmatmul.f32.gmra.mxu0 %v4675
    %v4872 = vpop.f32.mrf.mxu0
    %v4873 = vadd.f32 %v4746, %v4872
    %4874 = vdwg.mxu0
    %4875 = vmatpush.msra.mxu0 %v4740
    %4876 = vmatpush.msra.mxu0 %v4736
    %4877 = vmatpush.msra.mxu0 %v4732
    %4878 = vmatpush.msra.mxu0 %v4728
    %4879 = vmatpush.msra.mxu0 %v4724
    %4880 = vmatpush.msra.mxu0 %v4720
    %4881 = vmatpush.msra.mxu0 %v4716
    %4882 = vmatpush.msra.mxu0 %v4712
    %4883 = vmatpush.msra.mxu0 %v4708
    %4884 = vmatpush.msra.mxu0 %v4704
    %4885 = vmatpush.msra.mxu0 %v4700
    %4886 = vmatpush.msra.mxu0 %v4696
    %4887 = vmatpush.msra.mxu0 %v4692
    %4888 = vmatpush.msra.mxu0 %v4688
    %4889 = vmatpush.msra.mxu0 %v4684
    %4890 = vmatpush.msra.mxu0 %v4680
    %4891 = vmatmul.f32.gmra.mxu0 %v4668
    %v4892 = vpop.f32.mrf.mxu0
    %v4893 = vadd.f32 %v4747, %v4892
    %4894 = vmatmul.f32.gmra.mxu0 %v4669
    %v4895 = vpop.f32.mrf.mxu0
    %v4896 = vadd.f32 %v4747, %v4895
    %4897 = vmatmul.f32.gmra.mxu0 %v4670
    %v4898 = vpop.f32.mrf.mxu0
    %v4899 = vadd.f32 %v4747, %v4898
    %4900 = vmatmul.f32.gmra.mxu0 %v4671
    %v4901 = vpop.f32.mrf.mxu0
    %v4902 = vadd.f32 %v4747, %v4901
    %4903 = vmatmul.f32.gmra.mxu0 %v4672
    %v4904 = vpop.f32.mrf.mxu0
    %v4905 = vadd.f32 %v4747, %v4904
    %4906 = vmatmul.f32.gmra.mxu0 %v4673
    %v4907 = vpop.f32.mrf.mxu0
    %v4908 = vadd.f32 %v4747, %v4907
    %4909 = vmatmul.f32.gmra.mxu0 %v4674
    %v4910 = vpop.f32.mrf.mxu0
    %v4911 = vadd.f32 %v4747, %v4910
    %4912 = vmatmul.f32.gmra.mxu0 %v4675
    %v4913 = vpop.f32.mrf.mxu0
    %v4914 = vadd.f32 %v4747, %v4913
    %4915 = vdwg.mxu0
    %4916 = vst [vmem:[#allocation3] sm:$0xff] %v4770
    %4917 = vst [vmem:[#allocation3 + $0x8] sm:$0xff] %v4811
    %4918 = vst [vmem:[#allocation3 + $0x10] sm:$0xff] %v4852
    %4919 = vst [vmem:[#allocation3 + $0x18] sm:$0xff] %v4893
    %4920 = vst [vmem:[#allocation3 + $0x20] sm:$0xff] %v4773
    %4921 = vst [vmem:[#allocation3 + $0x28] sm:$0xff] %v4814
    %4922 = vst [vmem:[#allocation3 + $0x30] sm:$0xff] %v4855
    %4923 = vst [vmem:[#allocation3 + $0x38] sm:$0xff] %v4896
    %4924 = vst [vmem:[#allocation3 + $0x40] sm:$0xff] %v4776
    %4925 = vst [vmem:[#allocation3 + $0x48] sm:$0xff] %v4817
    %4926 = vst [vmem:[#allocation3 + $0x50] sm:$0xff] %v4858
    %4927 = vst [vmem:[#allocation3 + $0x58] sm:$0xff] %v4899
    %4928 = vst [vmem:[#allocation3 + $0x60] sm:$0xff] %v4779
    %4929 = vst [vmem:[#allocation3 + $0x68] sm:$0xff] %v4820
    %4930 = vst [vmem:[#allocation3 + $0x70] sm:$0xff] %v4861
    %4931 = vst [vmem:[#allocation3 + $0x78] sm:$0xff] %v4902
    %4932 = vst [vmem:[#allocation3 + $0x80] sm:$0xff] %v4782
    %4933 = vst [vmem:[#allocation3 + $0x88] sm:$0xff] %v4823
    %4934 = vst [vmem:[#allocation3 + $0x90] sm:$0xff] %v4864
    %4935 = vst [vmem:[#allocation3 + $0x98] sm:$0xff] %v4905
    %4936 = vst [vmem:[#allocation3 + $0xa0] sm:$0xff] %v4785
    %4937 = vst [vmem:[#allocation3 + $0xa8] sm:$0xff] %v4826
    %4938 = vst [vmem:[#allocation3 + $0xb0] sm:$0xff] %v4867
    %4939 = vst [vmem:[#allocation3 + $0xb8] sm:$0xff] %v4908
    %4940 = vst [vmem:[#allocation3 + $0xc0] sm:$0xff] %v4788
    %4941 = vst [vmem:[#allocation3 + $0xc8] sm:$0xff] %v4829
    %4942 = vst [vmem:[#allocation3 + $0xd0] sm:$0xff] %v4870
    %4943 = vst [vmem:[#allocation3 + $0xd8] sm:$0xff] %v4911
    %4944 = vst [vmem:[#allocation3 + $0xe0] sm:$0xff] %v4791
    %4945 = vst [vmem:[#allocation3 + $0xe8] sm:$0xff] %v4832
    %4946 = vst [vmem:[#allocation3 + $0xf0] sm:$0xff] %v4873
    %4947 = vst [vmem:[#allocation3 + $0xf8] sm:$0xff] %v4914
    %s4948 = scalar_lea.vmem [#allocation6], 1536
    %v4949 = vld [vmem:[%s4948] sm:$0xff]
    %v4950 = vld [vmem:[%s4948 + $0x8] sm:$0xff]
    %v4951 = vld [vmem:[%s4948 + $0x10] sm:$0xff]
    %v4952 = vld [vmem:[%s4948 + $0x18] sm:$0xff]
    %v4953 = vld [vmem:[%s4948 + $0x20] sm:$0xff]
    %v4954 = vld [vmem:[%s4948 + $0x28] sm:$0xff]
    %v4955 = vld [vmem:[%s4948 + $0x30] sm:$0xff]
    %v4956 = vld [vmem:[%s4948 + $0x38] sm:$0xff]
    %v4957 = vld [vmem:[%s4948 + $0x40] sm:$0xff]
    %v4958 = vld [vmem:[%s4948 + $0x48] sm:$0xff]
    %v4959 = vld [vmem:[%s4948 + $0x50] sm:$0xff]
    %v4960 = vld [vmem:[%s4948 + $0x58] sm:$0xff]
    %v4961 = vld [vmem:[%s4948 + $0x60] sm:$0xff]
    %v4962 = vld [vmem:[%s4948 + $0x68] sm:$0xff]
    %v4963 = vld [vmem:[%s4948 + $0x70] sm:$0xff]
    %v4964 = vld [vmem:[%s4948 + $0x78] sm:$0xff]
    %v4965 = vld [vmem:[%s4948 + $0x80] sm:$0xff]
    %v4966 = vld [vmem:[%s4948 + $0x88] sm:$0xff]
    %v4967 = vld [vmem:[%s4948 + $0x90] sm:$0xff]
    %v4968 = vld [vmem:[%s4948 + $0x98] sm:$0xff]
    %v4969 = vld [vmem:[%s4948 + $0xa0] sm:$0xff]
    %v4970 = vld [vmem:[%s4948 + $0xa8] sm:$0xff]
    %v4971 = vld [vmem:[%s4948 + $0xb0] sm:$0xff]
    %v4972 = vld [vmem:[%s4948 + $0xb8] sm:$0xff]
    %v4973 = vld [vmem:[%s4948 + $0xc0] sm:$0xff]
    %v4974 = vld [vmem:[%s4948 + $0xc8] sm:$0xff]
    %v4975 = vld [vmem:[%s4948 + $0xd0] sm:$0xff]
    %v4976 = vld [vmem:[%s4948 + $0xd8] sm:$0xff]
    %v4977 = vld [vmem:[%s4948 + $0xe0] sm:$0xff]
    %v4978 = vld [vmem:[%s4948 + $0xe8] sm:$0xff]
    %v4979 = vld [vmem:[%s4948 + $0xf0] sm:$0xff]
    %v4980 = vld [vmem:[%s4948 + $0xf8] sm:$0xff]
    %v4981 = vld [vmem:[%s4948 + $0x100] sm:$0xff]
    %v4982 = vld [vmem:[%s4948 + $0x108] sm:$0xff]
    %v4983 = vld [vmem:[%s4948 + $0x110] sm:$0xff]
    %v4984 = vld [vmem:[%s4948 + $0x118] sm:$0xff]
    %v4985 = vld [vmem:[%s4948 + $0x120] sm:$0xff]
    %v4986 = vld [vmem:[%s4948 + $0x128] sm:$0xff]
    %v4987 = vld [vmem:[%s4948 + $0x130] sm:$0xff]
    %v4988 = vld [vmem:[%s4948 + $0x138] sm:$0xff]
    %v4989 = vld [vmem:[%s4948 + $0x140] sm:$0xff]
    %v4990 = vld [vmem:[%s4948 + $0x148] sm:$0xff]
    %v4991 = vld [vmem:[%s4948 + $0x150] sm:$0xff]
    %v4992 = vld [vmem:[%s4948 + $0x158] sm:$0xff]
    %v4993 = vld [vmem:[%s4948 + $0x160] sm:$0xff]
    %v4994 = vld [vmem:[%s4948 + $0x168] sm:$0xff]
    %v4995 = vld [vmem:[%s4948 + $0x170] sm:$0xff]
    %v4996 = vld [vmem:[%s4948 + $0x178] sm:$0xff]
    %v4997 = vld [vmem:[%s4948 + $0x180] sm:$0xff]
    %v4998 = vld [vmem:[%s4948 + $0x188] sm:$0xff]
    %v4999 = vld [vmem:[%s4948 + $0x190] sm:$0xff]
    %v5000 = vld [vmem:[%s4948 + $0x198] sm:$0xff]
    %v5001 = vld [vmem:[%s4948 + $0x1a0] sm:$0xff]
    %v5002 = vld [vmem:[%s4948 + $0x1a8] sm:$0xff]
    %v5003 = vld [vmem:[%s4948 + $0x1b0] sm:$0xff]
    %v5004 = vld [vmem:[%s4948 + $0x1b8] sm:$0xff]
    %v5005 = vld [vmem:[%s4948 + $0x1c0] sm:$0xff]
    %v5006 = vld [vmem:[%s4948 + $0x1c8] sm:$0xff]
    %v5007 = vld [vmem:[%s4948 + $0x1d0] sm:$0xff]
    %v5008 = vld [vmem:[%s4948 + $0x1d8] sm:$0xff]
    %v5009 = vld [vmem:[%s4948 + $0x1e0] sm:$0xff]
    %v5010 = vld [vmem:[%s4948 + $0x1e8] sm:$0xff]
    %v5011 = vld [vmem:[%s4948 + $0x1f0] sm:$0xff]
    %v5012 = vld [vmem:[%s4948 + $0x1f8] sm:$0xff]
    %s5013 = scalar_lea.vmem %s1, 24
    %v5014 = vld [vmem:[%s5013] sm:$0xff]
    %s5015 = scalar_lea.vmem %s2, 24
    %v5016 = vld [vmem:[%s5015] sm:$0xff]
    %v5017 = vld [vmem:[#allocation3] sm:$0xff]
    %v5018 = vld [vmem:[#allocation3 + $0x8] sm:$0xff]
    %v5019 = vld [vmem:[#allocation3 + $0x10] sm:$0xff]
    %v5020 = vld [vmem:[#allocation3 + $0x18] sm:$0xff]
    %5021 = vmatpush.msra.mxu0 %v5009
    %5022 = vmatpush.msra.mxu0 %v5005
    %5023 = vmatpush.msra.mxu0 %v5001
    %5024 = vmatpush.msra.mxu0 %v4997
    %5025 = vmatpush.msra.mxu0 %v4993
    %5026 = vmatpush.msra.mxu0 %v4989
    %5027 = vmatpush.msra.mxu0 %v4985
    %5028 = vmatpush.msra.mxu0 %v4981
    %5029 = vmatpush.msra.mxu0 %v4977
    %5030 = vmatpush.msra.mxu0 %v4973
    %5031 = vmatpush.msra.mxu0 %v4969
    %5032 = vmatpush.msra.mxu0 %v4965
    %5033 = vmatpush.msra.mxu0 %v4961
    %5034 = vmatpush.msra.mxu0 %v4957
    %5035 = vmatpush.msra.mxu0 %v4953
    %5036 = vmatpush.msra.mxu0 %v4949
    %5037 = vmatmul.f32.gmra.mxu0 %v5014
    %v5038 = vpop.f32.mrf.mxu0
    %v5039 = vadd.f32 %v5017, %v5038
    %5040 = vdwg.mxu0
    %5041 = vmatpush.msra.mxu0 %v5010
    %5042 = vmatpush.msra.mxu0 %v5006
    %5043 = vmatpush.msra.mxu0 %v5002
    %5044 = vmatpush.msra.mxu0 %v4998
    %5045 = vmatpush.msra.mxu0 %v4994
    %5046 = vmatpush.msra.mxu0 %v4990
    %5047 = vmatpush.msra.mxu0 %v4986
    %5048 = vmatpush.msra.mxu0 %v4982
    %5049 = vmatpush.msra.mxu0 %v4978
    %5050 = vmatpush.msra.mxu0 %v4974
    %5051 = vmatpush.msra.mxu0 %v4970
    %5052 = vmatpush.msra.mxu0 %v4966
    %5053 = vmatpush.msra.mxu0 %v4962
    %5054 = vmatpush.msra.mxu0 %v4958
    %5055 = vmatpush.msra.mxu0 %v4954
    %5056 = vmatpush.msra.mxu0 %v4950
    %5057 = vmatmul.f32.gmra.mxu0 %v5014
    %v5058 = vpop.f32.mrf.mxu0
    %v5059 = vadd.f32 %v5018, %v5058
    %5060 = vdwg.mxu0
    %5061 = vmatpush.msra.mxu0 %v5011
    %5062 = vmatpush.msra.mxu0 %v5007
    %5063 = vmatpush.msra.mxu0 %v5003
    %5064 = vmatpush.msra.mxu0 %v4999
    %5065 = vmatpush.msra.mxu0 %v4995
    %5066 = vmatpush.msra.mxu0 %v4991
    %5067 = vmatpush.msra.mxu0 %v4987
    %5068 = vmatpush.msra.mxu0 %v4983
    %5069 = vmatpush.msra.mxu0 %v4979
    %5070 = vmatpush.msra.mxu0 %v4975
    %5071 = vmatpush.msra.mxu0 %v4971
    %5072 = vmatpush.msra.mxu0 %v4967
    %5073 = vmatpush.msra.mxu0 %v4963
    %5074 = vmatpush.msra.mxu0 %v4959
    %5075 = vmatpush.msra.mxu0 %v4955
    %5076 = vmatpush.msra.mxu0 %v4951
    %5077 = vmatmul.f32.gmra.mxu0 %v5014
    %v5078 = vpop.f32.mrf.mxu0
    %v5079 = vadd.f32 %v5019, %v5078
    %5080 = vdwg.mxu0
    %5081 = vmatpush.msra.mxu0 %v5012
    %5082 = vmatpush.msra.mxu0 %v5008
    %5083 = vmatpush.msra.mxu0 %v5004
    %5084 = vmatpush.msra.mxu0 %v5000
    %5085 = vmatpush.msra.mxu0 %v4996
    %5086 = vmatpush.msra.mxu0 %v4992
    %5087 = vmatpush.msra.mxu0 %v4988
    %5088 = vmatpush.msra.mxu0 %v4984
    %5089 = vmatpush.msra.mxu0 %v4980
    %5090 = vmatpush.msra.mxu0 %v4976
    %5091 = vmatpush.msra.mxu0 %v4972
    %5092 = vmatpush.msra.mxu0 %v4968
    %5093 = vmatpush.msra.mxu0 %v4964
    %5094 = vmatpush.msra.mxu0 %v4960
    %5095 = vmatpush.msra.mxu0 %v4956
    %5096 = vmatpush.msra.mxu0 %v4952
    %5097 = vmatmul.f32.gmra.mxu0 %v5014
    %v5098 = vpop.f32.mrf.mxu0
    %v5099 = vadd.f32 %v5020, %v5098
    %5100 = vdwg.mxu0
    %v5101 = vxor.u32 %v5039, 2147483648
    %v5102 = vmul.f32 %v5101, 1.442695
    %v5103 = vpow.pop %v5102
    %v5104 = vadd.f32 %v5103, 1.0
    %v5105 = vrcp.pop %v5104
    %v5106 = vmul.f32 %v5104, %v5105
    %v5107 = vsub.f32 1.0, %v5106
    %v5108 = vmul.f32 %v5105, %v5107
    %v5109 = vadd.f32 %v5105, %v5108
    %vm5110 = vweird.f32 %v5104
    %vm5111 = vweird.f32 %v5105
    %vm5112 = vmor %vm5110, %vm5111
    %v5113 = vsel %vm5112, %v5105, %v5109
    %v5114 = vand.u32 2147483647, %v5104
    %vm5115 = vcmp.eq.f32.partialorder %v5114, 8.507059e+37
    %v5116 = vand.u32 %v5104, 2147483648
    %v5117 = vor.u32 1.1754944e-38, %v5116
    %v5118 = vsel %vm5115, %v5117, %v5113
    %v5119 = vmul.f32 1.0, %v5118
    %v5120 = vxor.u32 %v5059, 2147483648
    %v5121 = vmul.f32 %v5120, 1.442695
    %v5122 = vpow.pop %v5121
    %v5123 = vadd.f32 %v5122, 1.0
    %v5124 = vrcp.pop %v5123
    %v5125 = vmul.f32 %v5123, %v5124
    %v5126 = vsub.f32 1.0, %v5125
    %v5127 = vmul.f32 %v5124, %v5126
    %v5128 = vadd.f32 %v5124, %v5127
    %vm5129 = vweird.f32 %v5123
    %vm5130 = vweird.f32 %v5124
    %vm5131 = vmor %vm5129, %vm5130
    %v5132 = vsel %vm5131, %v5124, %v5128
    %v5133 = vand.u32 2147483647, %v5123
    %vm5134 = vcmp.eq.f32.partialorder %v5133, 8.507059e+37
    %v5135 = vand.u32 %v5123, 2147483648
    %v5136 = vor.u32 1.1754944e-38, %v5135
    %v5137 = vsel %vm5134, %v5136, %v5132
    %v5138 = vmul.f32 1.0, %v5137
    %v5139 = vtanh.pop %v5079
    %v5140 = vxor.u32 %v5099, 2147483648
    %v5141 = vmul.f32 %v5140, 1.442695
    %v5142 = vpow.pop %v5141
    %v5143 = vadd.f32 %v5142, 1.0
    %v5144 = vrcp.pop %v5143
    %v5145 = vmul.f32 %v5143, %v5144
    %v5146 = vsub.f32 1.0, %v5145
    %v5147 = vmul.f32 %v5144, %v5146
    %v5148 = vadd.f32 %v5144, %v5147
    %vm5149 = vweird.f32 %v5143
    %vm5150 = vweird.f32 %v5144
    %vm5151 = vmor %vm5149, %vm5150
    %v5152 = vsel %vm5151, %v5144, %v5148
    %v5153 = vand.u32 2147483647, %v5143
    %vm5154 = vcmp.eq.f32.partialorder %v5153, 8.507059e+37
    %v5155 = vand.u32 %v5143, 2147483648
    %v5156 = vor.u32 1.1754944e-38, %v5155
    %v5157 = vsel %vm5154, %v5156, %v5152
    %v5158 = vmul.f32 1.0, %v5157
    %v5159 = vmul.f32 %v5138, %v5016
    %v5160 = vmul.f32 %v5119, %v5139
    %v5161 = vadd.f32 %v5159, %v5160
    %v5162 = vtanh.pop %v5161
    %v5163 = vmul.f32 %v5158, %v5162
    %v5164 = vld [vmem:[#allocation3 + $0x20] sm:$0xff]
    %v5165 = vld [vmem:[#allocation3 + $0x28] sm:$0xff]
    %v5166 = vld [vmem:[#allocation3 + $0x30] sm:$0xff]
    %v5167 = vld [vmem:[#allocation3 + $0x38] sm:$0xff]
    %5168 = vmatpush.msra.mxu0 %v5009
    %5169 = vmatpush.msra.mxu0 %v5005
    %5170 = vmatpush.msra.mxu0 %v5001
    %5171 = vmatpush.msra.mxu0 %v4997
    %5172 = vmatpush.msra.mxu0 %v4993
    %5173 = vmatpush.msra.mxu0 %v4989
    %5174 = vmatpush.msra.mxu0 %v4985
    %5175 = vmatpush.msra.mxu0 %v4981
    %5176 = vmatpush.msra.mxu0 %v4977
    %5177 = vmatpush.msra.mxu0 %v4973
    %5178 = vmatpush.msra.mxu0 %v4969
    %5179 = vmatpush.msra.mxu0 %v4965
    %5180 = vmatpush.msra.mxu0 %v4961
    %5181 = vmatpush.msra.mxu0 %v4957
    %5182 = vmatpush.msra.mxu0 %v4953
    %5183 = vmatpush.msra.mxu0 %v4949
    %5184 = vmatmul.f32.gmra.mxu0 %v5163
    %v5185 = vpop.f32.mrf.mxu0
    %v5186 = vadd.f32 %v5164, %v5185
    %5187 = vdwg.mxu0
    %5188 = vmatpush.msra.mxu0 %v5010
    %5189 = vmatpush.msra.mxu0 %v5006
    %5190 = vmatpush.msra.mxu0 %v5002
    %5191 = vmatpush.msra.mxu0 %v4998
    %5192 = vmatpush.msra.mxu0 %v4994
    %5193 = vmatpush.msra.mxu0 %v4990
    %5194 = vmatpush.msra.mxu0 %v4986
    %5195 = vmatpush.msra.mxu0 %v4982
    %5196 = vmatpush.msra.mxu0 %v4978
    %5197 = vmatpush.msra.mxu0 %v4974
    %5198 = vmatpush.msra.mxu0 %v4970
    %5199 = vmatpush.msra.mxu0 %v4966
    %5200 = vmatpush.msra.mxu0 %v4962
    %5201 = vmatpush.msra.mxu0 %v4958
    %5202 = vmatpush.msra.mxu0 %v4954
    %5203 = vmatpush.msra.mxu0 %v4950
    %5204 = vmatmul.f32.gmra.mxu0 %v5163
    %v5205 = vpop.f32.mrf.mxu0
    %v5206 = vadd.f32 %v5165, %v5205
    %5207 = vdwg.mxu0
    %5208 = vmatpush.msra.mxu0 %v5011
    %5209 = vmatpush.msra.mxu0 %v5007
    %5210 = vmatpush.msra.mxu0 %v5003
    %5211 = vmatpush.msra.mxu0 %v4999
    %5212 = vmatpush.msra.mxu0 %v4995
    %5213 = vmatpush.msra.mxu0 %v4991
    %5214 = vmatpush.msra.mxu0 %v4987
    %5215 = vmatpush.msra.mxu0 %v4983
    %5216 = vmatpush.msra.mxu0 %v4979
    %5217 = vmatpush.msra.mxu0 %v4975
    %5218 = vmatpush.msra.mxu0 %v4971
    %5219 = vmatpush.msra.mxu0 %v4967
    %5220 = vmatpush.msra.mxu0 %v4963
    %5221 = vmatpush.msra.mxu0 %v4959
    %5222 = vmatpush.msra.mxu0 %v4955
    %5223 = vmatpush.msra.mxu0 %v4951
    %5224 = vmatmul.f32.gmra.mxu0 %v5163
    %v5225 = vpop.f32.mrf.mxu0
    %v5226 = vadd.f32 %v5166, %v5225
    %5227 = vdwg.mxu0
    %5228 = vmatpush.msra.mxu0 %v5012
    %5229 = vmatpush.msra.mxu0 %v5008
    %5230 = vmatpush.msra.mxu0 %v5004
    %5231 = vmatpush.msra.mxu0 %v5000
    %5232 = vmatpush.msra.mxu0 %v4996
    %5233 = vmatpush.msra.mxu0 %v4992
    %5234 = vmatpush.msra.mxu0 %v4988
    %5235 = vmatpush.msra.mxu0 %v4984
    %5236 = vmatpush.msra.mxu0 %v4980
    %5237 = vmatpush.msra.mxu0 %v4976
    %5238 = vmatpush.msra.mxu0 %v4972
    %5239 = vmatpush.msra.mxu0 %v4968
    %5240 = vmatpush.msra.mxu0 %v4964
    %5241 = vmatpush.msra.mxu0 %v4960
    %5242 = vmatpush.msra.mxu0 %v4956
    %5243 = vmatpush.msra.mxu0 %v4952
    %5244 = vmatmul.f32.gmra.mxu0 %v5163
    %v5245 = vpop.f32.mrf.mxu0
    %v5246 = vadd.f32 %v5167, %v5245
    %5247 = vdwg.mxu0
    %v5248 = vxor.u32 %v5186, 2147483648
    %v5249 = vmul.f32 %v5248, 1.442695
    %v5250 = vpow.pop %v5249
    %v5251 = vadd.f32 %v5250, 1.0
    %v5252 = vrcp.pop %v5251
    %v5253 = vmul.f32 %v5251, %v5252
    %v5254 = vsub.f32 1.0, %v5253
    %v5255 = vmul.f32 %v5252, %v5254
    %v5256 = vadd.f32 %v5252, %v5255
    %vm5257 = vweird.f32 %v5251
    %vm5258 = vweird.f32 %v5252
    %vm5259 = vmor %vm5257, %vm5258
    %v5260 = vsel %vm5259, %v5252, %v5256
    %v5261 = vand.u32 2147483647, %v5251
    %vm5262 = vcmp.eq.f32.partialorder %v5261, 8.507059e+37
    %v5263 = vand.u32 %v5251, 2147483648
    %v5264 = vor.u32 1.1754944e-38, %v5263
    %v5265 = vsel %vm5262, %v5264, %v5260
    %v5266 = vmul.f32 1.0, %v5265
    %v5267 = vxor.u32 %v5206, 2147483648
    %v5268 = vmul.f32 %v5267, 1.442695
    %v5269 = vpow.pop %v5268
    %v5270 = vadd.f32 %v5269, 1.0
    %v5271 = vrcp.pop %v5270
    %v5272 = vmul.f32 %v5270, %v5271
    %v5273 = vsub.f32 1.0, %v5272
    %v5274 = vmul.f32 %v5271, %v5273
    %v5275 = vadd.f32 %v5271, %v5274
    %vm5276 = vweird.f32 %v5270
    %vm5277 = vweird.f32 %v5271
    %vm5278 = vmor %vm5276, %vm5277
    %v5279 = vsel %vm5278, %v5271, %v5275
    %v5280 = vand.u32 2147483647, %v5270
    %vm5281 = vcmp.eq.f32.partialorder %v5280, 8.507059e+37
    %v5282 = vand.u32 %v5270, 2147483648
    %v5283 = vor.u32 1.1754944e-38, %v5282
    %v5284 = vsel %vm5281, %v5283, %v5279
    %v5285 = vmul.f32 1.0, %v5284
    %v5286 = vtanh.pop %v5226
    %v5287 = vxor.u32 %v5246, 2147483648
    %v5288 = vmul.f32 %v5287, 1.442695
    %v5289 = vpow.pop %v5288
    %v5290 = vadd.f32 %v5289, 1.0
    %v5291 = vrcp.pop %v5290
    %v5292 = vmul.f32 %v5290, %v5291
    %v5293 = vsub.f32 1.0, %v5292
    %v5294 = vmul.f32 %v5291, %v5293
    %v5295 = vadd.f32 %v5291, %v5294
    %vm5296 = vweird.f32 %v5290
    %vm5297 = vweird.f32 %v5291
    %vm5298 = vmor %vm5296, %vm5297
    %v5299 = vsel %vm5298, %v5291, %v5295
    %v5300 = vand.u32 2147483647, %v5290
    %vm5301 = vcmp.eq.f32.partialorder %v5300, 8.507059e+37
    %v5302 = vand.u32 %v5290, 2147483648
    %v5303 = vor.u32 1.1754944e-38, %v5302
    %v5304 = vsel %vm5301, %v5303, %v5299
    %v5305 = vmul.f32 1.0, %v5304
    %v5306 = vmul.f32 %v5285, %v5161
    %v5307 = vmul.f32 %v5266, %v5286
    %v5308 = vadd.f32 %v5306, %v5307
    %v5309 = vtanh.pop %v5308
    %v5310 = vmul.f32 %v5305, %v5309
    %v5311 = vld [vmem:[#allocation3 + $0x40] sm:$0xff]
    %v5312 = vld [vmem:[#allocation3 + $0x48] sm:$0xff]
    %v5313 = vld [vmem:[#allocation3 + $0x50] sm:$0xff]
    %v5314 = vld [vmem:[#allocation3 + $0x58] sm:$0xff]
    %5315 = vmatpush.msra.mxu0 %v5009
    %5316 = vmatpush.msra.mxu0 %v5005
    %5317 = vmatpush.msra.mxu0 %v5001
    %5318 = vmatpush.msra.mxu0 %v4997
    %5319 = vmatpush.msra.mxu0 %v4993
    %5320 = vmatpush.msra.mxu0 %v4989
    %5321 = vmatpush.msra.mxu0 %v4985
    %5322 = vmatpush.msra.mxu0 %v4981
    %5323 = vmatpush.msra.mxu0 %v4977
    %5324 = vmatpush.msra.mxu0 %v4973
    %5325 = vmatpush.msra.mxu0 %v4969
    %5326 = vmatpush.msra.mxu0 %v4965
    %5327 = vmatpush.msra.mxu0 %v4961
    %5328 = vmatpush.msra.mxu0 %v4957
    %5329 = vmatpush.msra.mxu0 %v4953
    %5330 = vmatpush.msra.mxu0 %v4949
    %5331 = vmatmul.f32.gmra.mxu0 %v5310
    %v5332 = vpop.f32.mrf.mxu0
    %v5333 = vadd.f32 %v5311, %v5332
    %5334 = vdwg.mxu0
    %5335 = vmatpush.msra.mxu0 %v5010
    %5336 = vmatpush.msra.mxu0 %v5006
    %5337 = vmatpush.msra.mxu0 %v5002
    %5338 = vmatpush.msra.mxu0 %v4998
    %5339 = vmatpush.msra.mxu0 %v4994
    %5340 = vmatpush.msra.mxu0 %v4990
    %5341 = vmatpush.msra.mxu0 %v4986
    %5342 = vmatpush.msra.mxu0 %v4982
    %5343 = vmatpush.msra.mxu0 %v4978
    %5344 = vmatpush.msra.mxu0 %v4974
    %5345 = vmatpush.msra.mxu0 %v4970
    %5346 = vmatpush.msra.mxu0 %v4966
    %5347 = vmatpush.msra.mxu0 %v4962
    %5348 = vmatpush.msra.mxu0 %v4958
    %5349 = vmatpush.msra.mxu0 %v4954
    %5350 = vmatpush.msra.mxu0 %v4950
    %5351 = vmatmul.f32.gmra.mxu0 %v5310
    %v5352 = vpop.f32.mrf.mxu0
    %v5353 = vadd.f32 %v5312, %v5352
    %5354 = vdwg.mxu0
    %5355 = vmatpush.msra.mxu0 %v5011
    %5356 = vmatpush.msra.mxu0 %v5007
    %5357 = vmatpush.msra.mxu0 %v5003
    %5358 = vmatpush.msra.mxu0 %v4999
    %5359 = vmatpush.msra.mxu0 %v4995
    %5360 = vmatpush.msra.mxu0 %v4991
    %5361 = vmatpush.msra.mxu0 %v4987
    %5362 = vmatpush.msra.mxu0 %v4983
    %5363 = vmatpush.msra.mxu0 %v4979
    %5364 = vmatpush.msra.mxu0 %v4975
    %5365 = vmatpush.msra.mxu0 %v4971
    %5366 = vmatpush.msra.mxu0 %v4967
    %5367 = vmatpush.msra.mxu0 %v4963
    %5368 = vmatpush.msra.mxu0 %v4959
    %5369 = vmatpush.msra.mxu0 %v4955
    %5370 = vmatpush.msra.mxu0 %v4951
    %5371 = vmatmul.f32.gmra.mxu0 %v5310
    %v5372 = vpop.f32.mrf.mxu0
    %v5373 = vadd.f32 %v5313, %v5372
    %5374 = vdwg.mxu0
    %5375 = vmatpush.msra.mxu0 %v5012
    %5376 = vmatpush.msra.mxu0 %v5008
    %5377 = vmatpush.msra.mxu0 %v5004
    %5378 = vmatpush.msra.mxu0 %v5000
    %5379 = vmatpush.msra.mxu0 %v4996
    %5380 = vmatpush.msra.mxu0 %v4992
    %5381 = vmatpush.msra.mxu0 %v4988
    %5382 = vmatpush.msra.mxu0 %v4984
    %5383 = vmatpush.msra.mxu0 %v4980
    %5384 = vmatpush.msra.mxu0 %v4976
    %5385 = vmatpush.msra.mxu0 %v4972
    %5386 = vmatpush.msra.mxu0 %v4968
    %5387 = vmatpush.msra.mxu0 %v4964
    %5388 = vmatpush.msra.mxu0 %v4960
    %5389 = vmatpush.msra.mxu0 %v4956
    %5390 = vmatpush.msra.mxu0 %v4952
    %5391 = vmatmul.f32.gmra.mxu0 %v5310
    %v5392 = vpop.f32.mrf.mxu0
    %v5393 = vadd.f32 %v5314, %v5392
    %5394 = vdwg.mxu0
    %v5395 = vxor.u32 %v5333, 2147483648
    %v5396 = vmul.f32 %v5395, 1.442695
    %v5397 = vpow.pop %v5396
    %v5398 = vadd.f32 %v5397, 1.0
    %v5399 = vrcp.pop %v5398
    %v5400 = vmul.f32 %v5398, %v5399
    %v5401 = vsub.f32 1.0, %v5400
    %v5402 = vmul.f32 %v5399, %v5401
    %v5403 = vadd.f32 %v5399, %v5402
    %vm5404 = vweird.f32 %v5398
    %vm5405 = vweird.f32 %v5399
    %vm5406 = vmor %vm5404, %vm5405
    %v5407 = vsel %vm5406, %v5399, %v5403
    %v5408 = vand.u32 2147483647, %v5398
    %vm5409 = vcmp.eq.f32.partialorder %v5408, 8.507059e+37
    %v5410 = vand.u32 %v5398, 2147483648
    %v5411 = vor.u32 1.1754944e-38, %v5410
    %v5412 = vsel %vm5409, %v5411, %v5407
    %v5413 = vmul.f32 1.0, %v5412
    %v5414 = vxor.u32 %v5353, 2147483648
    %v5415 = vmul.f32 %v5414, 1.442695
    %v5416 = vpow.pop %v5415
    %v5417 = vadd.f32 %v5416, 1.0
    %v5418 = vrcp.pop %v5417
    %v5419 = vmul.f32 %v5417, %v5418
    %v5420 = vsub.f32 1.0, %v5419
    %v5421 = vmul.f32 %v5418, %v5420
    %v5422 = vadd.f32 %v5418, %v5421
    %vm5423 = vweird.f32 %v5417
    %vm5424 = vweird.f32 %v5418
    %vm5425 = vmor %vm5423, %vm5424
    %v5426 = vsel %vm5425, %v5418, %v5422
    %v5427 = vand.u32 2147483647, %v5417
    %vm5428 = vcmp.eq.f32.partialorder %v5427, 8.507059e+37
    %v5429 = vand.u32 %v5417, 2147483648
    %v5430 = vor.u32 1.1754944e-38, %v5429
    %v5431 = vsel %vm5428, %v5430, %v5426
    %v5432 = vmul.f32 1.0, %v5431
    %v5433 = vtanh.pop %v5373
    %v5434 = vxor.u32 %v5393, 2147483648
    %v5435 = vmul.f32 %v5434, 1.442695
    %v5436 = vpow.pop %v5435
    %v5437 = vadd.f32 %v5436, 1.0
    %v5438 = vrcp.pop %v5437
    %v5439 = vmul.f32 %v5437, %v5438
    %v5440 = vsub.f32 1.0, %v5439
    %v5441 = vmul.f32 %v5438, %v5440
    %v5442 = vadd.f32 %v5438, %v5441
    %vm5443 = vweird.f32 %v5437
    %vm5444 = vweird.f32 %v5438
    %vm5445 = vmor %vm5443, %vm5444
    %v5446 = vsel %vm5445, %v5438, %v5442
    %v5447 = vand.u32 2147483647, %v5437
    %vm5448 = vcmp.eq.f32.partialorder %v5447, 8.507059e+37
    %v5449 = vand.u32 %v5437, 2147483648
    %v5450 = vor.u32 1.1754944e-38, %v5449
    %v5451 = vsel %vm5448, %v5450, %v5446
    %v5452 = vmul.f32 1.0, %v5451
    %v5453 = vmul.f32 %v5432, %v5308
    %v5454 = vmul.f32 %v5413, %v5433
    %v5455 = vadd.f32 %v5453, %v5454
    %v5456 = vtanh.pop %v5455
    %v5457 = vmul.f32 %v5452, %v5456
    %v5458 = vld [vmem:[#allocation3 + $0x60] sm:$0xff]
    %v5459 = vld [vmem:[#allocation3 + $0x68] sm:$0xff]
    %v5460 = vld [vmem:[#allocation3 + $0x70] sm:$0xff]
    %v5461 = vld [vmem:[#allocation3 + $0x78] sm:$0xff]
    %5462 = vmatpush.msra.mxu0 %v5009
    %5463 = vmatpush.msra.mxu0 %v5005
    %5464 = vmatpush.msra.mxu0 %v5001
    %5465 = vmatpush.msra.mxu0 %v4997
    %5466 = vmatpush.msra.mxu0 %v4993
    %5467 = vmatpush.msra.mxu0 %v4989
    %5468 = vmatpush.msra.mxu0 %v4985
    %5469 = vmatpush.msra.mxu0 %v4981
    %5470 = vmatpush.msra.mxu0 %v4977
    %5471 = vmatpush.msra.mxu0 %v4973
    %5472 = vmatpush.msra.mxu0 %v4969
    %5473 = vmatpush.msra.mxu0 %v4965
    %5474 = vmatpush.msra.mxu0 %v4961
    %5475 = vmatpush.msra.mxu0 %v4957
    %5476 = vmatpush.msra.mxu0 %v4953
    %5477 = vmatpush.msra.mxu0 %v4949
    %5478 = vmatmul.f32.gmra.mxu0 %v5457
    %v5479 = vpop.f32.mrf.mxu0
    %v5480 = vadd.f32 %v5458, %v5479
    %5481 = vdwg.mxu0
    %5482 = vmatpush.msra.mxu0 %v5010
    %5483 = vmatpush.msra.mxu0 %v5006
    %5484 = vmatpush.msra.mxu0 %v5002
    %5485 = vmatpush.msra.mxu0 %v4998
    %5486 = vmatpush.msra.mxu0 %v4994
    %5487 = vmatpush.msra.mxu0 %v4990
    %5488 = vmatpush.msra.mxu0 %v4986
    %5489 = vmatpush.msra.mxu0 %v4982
    %5490 = vmatpush.msra.mxu0 %v4978
    %5491 = vmatpush.msra.mxu0 %v4974
    %5492 = vmatpush.msra.mxu0 %v4970
    %5493 = vmatpush.msra.mxu0 %v4966
    %5494 = vmatpush.msra.mxu0 %v4962
    %5495 = vmatpush.msra.mxu0 %v4958
    %5496 = vmatpush.msra.mxu0 %v4954
    %5497 = vmatpush.msra.mxu0 %v4950
    %5498 = vmatmul.f32.gmra.mxu0 %v5457
    %v5499 = vpop.f32.mrf.mxu0
    %v5500 = vadd.f32 %v5459, %v5499
    %5501 = vdwg.mxu0
    %5502 = vmatpush.msra.mxu0 %v5011
    %5503 = vmatpush.msra.mxu0 %v5007
    %5504 = vmatpush.msra.mxu0 %v5003
    %5505 = vmatpush.msra.mxu0 %v4999
    %5506 = vmatpush.msra.mxu0 %v4995
    %5507 = vmatpush.msra.mxu0 %v4991
    %5508 = vmatpush.msra.mxu0 %v4987
    %5509 = vmatpush.msra.mxu0 %v4983
    %5510 = vmatpush.msra.mxu0 %v4979
    %5511 = vmatpush.msra.mxu0 %v4975
    %5512 = vmatpush.msra.mxu0 %v4971
    %5513 = vmatpush.msra.mxu0 %v4967
    %5514 = vmatpush.msra.mxu0 %v4963
    %5515 = vmatpush.msra.mxu0 %v4959
    %5516 = vmatpush.msra.mxu0 %v4955
    %5517 = vmatpush.msra.mxu0 %v4951
    %5518 = vmatmul.f32.gmra.mxu0 %v5457
    %v5519 = vpop.f32.mrf.mxu0
    %v5520 = vadd.f32 %v5460, %v5519
    %5521 = vdwg.mxu0
    %5522 = vmatpush.msra.mxu0 %v5012
    %5523 = vmatpush.msra.mxu0 %v5008
    %5524 = vmatpush.msra.mxu0 %v5004
    %5525 = vmatpush.msra.mxu0 %v5000
    %5526 = vmatpush.msra.mxu0 %v4996
    %5527 = vmatpush.msra.mxu0 %v4992
    %5528 = vmatpush.msra.mxu0 %v4988
    %5529 = vmatpush.msra.mxu0 %v4984
    %5530 = vmatpush.msra.mxu0 %v4980
    %5531 = vmatpush.msra.mxu0 %v4976
    %5532 = vmatpush.msra.mxu0 %v4972
    %5533 = vmatpush.msra.mxu0 %v4968
    %5534 = vmatpush.msra.mxu0 %v4964
    %5535 = vmatpush.msra.mxu0 %v4960
    %5536 = vmatpush.msra.mxu0 %v4956
    %5537 = vmatpush.msra.mxu0 %v4952
    %5538 = vmatmul.f32.gmra.mxu0 %v5457
    %v5539 = vpop.f32.mrf.mxu0
    %v5540 = vadd.f32 %v5461, %v5539
    %5541 = vdwg.mxu0
    %v5542 = vxor.u32 %v5480, 2147483648
    %v5543 = vmul.f32 %v5542, 1.442695
    %v5544 = vpow.pop %v5543
    %v5545 = vadd.f32 %v5544, 1.0
    %v5546 = vrcp.pop %v5545
    %v5547 = vmul.f32 %v5545, %v5546
    %v5548 = vsub.f32 1.0, %v5547
    %v5549 = vmul.f32 %v5546, %v5548
    %v5550 = vadd.f32 %v5546, %v5549
    %vm5551 = vweird.f32 %v5545
    %vm5552 = vweird.f32 %v5546
    %vm5553 = vmor %vm5551, %vm5552
    %v5554 = vsel %vm5553, %v5546, %v5550
    %v5555 = vand.u32 2147483647, %v5545
    %vm5556 = vcmp.eq.f32.partialorder %v5555, 8.507059e+37
    %v5557 = vand.u32 %v5545, 2147483648
    %v5558 = vor.u32 1.1754944e-38, %v5557
    %v5559 = vsel %vm5556, %v5558, %v5554
    %v5560 = vmul.f32 1.0, %v5559
    %v5561 = vxor.u32 %v5500, 2147483648
    %v5562 = vmul.f32 %v5561, 1.442695
    %v5563 = vpow.pop %v5562
    %v5564 = vadd.f32 %v5563, 1.0
    %v5565 = vrcp.pop %v5564
    %v5566 = vmul.f32 %v5564, %v5565
    %v5567 = vsub.f32 1.0, %v5566
    %v5568 = vmul.f32 %v5565, %v5567
    %v5569 = vadd.f32 %v5565, %v5568
    %vm5570 = vweird.f32 %v5564
    %vm5571 = vweird.f32 %v5565
    %vm5572 = vmor %vm5570, %vm5571
    %v5573 = vsel %vm5572, %v5565, %v5569
    %v5574 = vand.u32 2147483647, %v5564
    %vm5575 = vcmp.eq.f32.partialorder %v5574, 8.507059e+37
    %v5576 = vand.u32 %v5564, 2147483648
    %v5577 = vor.u32 1.1754944e-38, %v5576
    %v5578 = vsel %vm5575, %v5577, %v5573
    %v5579 = vmul.f32 1.0, %v5578
    %v5580 = vtanh.pop %v5520
    %v5581 = vxor.u32 %v5540, 2147483648
    %v5582 = vmul.f32 %v5581, 1.442695
    %v5583 = vpow.pop %v5582
    %v5584 = vadd.f32 %v5583, 1.0
    %v5585 = vrcp.pop %v5584
    %v5586 = vmul.f32 %v5584, %v5585
    %v5587 = vsub.f32 1.0, %v5586
    %v5588 = vmul.f32 %v5585, %v5587
    %v5589 = vadd.f32 %v5585, %v5588
    %vm5590 = vweird.f32 %v5584
    %vm5591 = vweird.f32 %v5585
    %vm5592 = vmor %vm5590, %vm5591
    %v5593 = vsel %vm5592, %v5585, %v5589
    %v5594 = vand.u32 2147483647, %v5584
    %vm5595 = vcmp.eq.f32.partialorder %v5594, 8.507059e+37
    %v5596 = vand.u32 %v5584, 2147483648
    %v5597 = vor.u32 1.1754944e-38, %v5596
    %v5598 = vsel %vm5595, %v5597, %v5593
    %v5599 = vmul.f32 1.0, %v5598
    %v5600 = vmul.f32 %v5579, %v5455
    %v5601 = vmul.f32 %v5560, %v5580
    %v5602 = vadd.f32 %v5600, %v5601
    %v5603 = vtanh.pop %v5602
    %v5604 = vmul.f32 %v5599, %v5603
    %v5605 = vld [vmem:[#allocation3 + $0x80] sm:$0xff]
    %v5606 = vld [vmem:[#allocation3 + $0x88] sm:$0xff]
    %v5607 = vld [vmem:[#allocation3 + $0x90] sm:$0xff]
    %v5608 = vld [vmem:[#allocation3 + $0x98] sm:$0xff]
    %5609 = vmatpush.msra.mxu0 %v5009
    %5610 = vmatpush.msra.mxu0 %v5005
    %5611 = vmatpush.msra.mxu0 %v5001
    %5612 = vmatpush.msra.mxu0 %v4997
    %5613 = vmatpush.msra.mxu0 %v4993
    %5614 = vmatpush.msra.mxu0 %v4989
    %5615 = vmatpush.msra.mxu0 %v4985
    %5616 = vmatpush.msra.mxu0 %v4981
    %5617 = vmatpush.msra.mxu0 %v4977
    %5618 = vmatpush.msra.mxu0 %v4973
    %5619 = vmatpush.msra.mxu0 %v4969
    %5620 = vmatpush.msra.mxu0 %v4965
    %5621 = vmatpush.msra.mxu0 %v4961
    %5622 = vmatpush.msra.mxu0 %v4957
    %5623 = vmatpush.msra.mxu0 %v4953
    %5624 = vmatpush.msra.mxu0 %v4949
    %5625 = vmatmul.f32.gmra.mxu0 %v5604
    %v5626 = vpop.f32.mrf.mxu0
    %v5627 = vadd.f32 %v5605, %v5626
    %5628 = vdwg.mxu0
    %5629 = vmatpush.msra.mxu0 %v5010
    %5630 = vmatpush.msra.mxu0 %v5006
    %5631 = vmatpush.msra.mxu0 %v5002
    %5632 = vmatpush.msra.mxu0 %v4998
    %5633 = vmatpush.msra.mxu0 %v4994
    %5634 = vmatpush.msra.mxu0 %v4990
    %5635 = vmatpush.msra.mxu0 %v4986
    %5636 = vmatpush.msra.mxu0 %v4982
    %5637 = vmatpush.msra.mxu0 %v4978
    %5638 = vmatpush.msra.mxu0 %v4974
    %5639 = vmatpush.msra.mxu0 %v4970
    %5640 = vmatpush.msra.mxu0 %v4966
    %5641 = vmatpush.msra.mxu0 %v4962
    %5642 = vmatpush.msra.mxu0 %v4958
    %5643 = vmatpush.msra.mxu0 %v4954
    %5644 = vmatpush.msra.mxu0 %v4950
    %5645 = vmatmul.f32.gmra.mxu0 %v5604
    %v5646 = vpop.f32.mrf.mxu0
    %v5647 = vadd.f32 %v5606, %v5646
    %5648 = vdwg.mxu0
    %5649 = vmatpush.msra.mxu0 %v5011
    %5650 = vmatpush.msra.mxu0 %v5007
    %5651 = vmatpush.msra.mxu0 %v5003
    %5652 = vmatpush.msra.mxu0 %v4999
    %5653 = vmatpush.msra.mxu0 %v4995
    %5654 = vmatpush.msra.mxu0 %v4991
    %5655 = vmatpush.msra.mxu0 %v4987
    %5656 = vmatpush.msra.mxu0 %v4983
    %5657 = vmatpush.msra.mxu0 %v4979
    %5658 = vmatpush.msra.mxu0 %v4975
    %5659 = vmatpush.msra.mxu0 %v4971
    %5660 = vmatpush.msra.mxu0 %v4967
    %5661 = vmatpush.msra.mxu0 %v4963
    %5662 = vmatpush.msra.mxu0 %v4959
    %5663 = vmatpush.msra.mxu0 %v4955
    %5664 = vmatpush.msra.mxu0 %v4951
    %5665 = vmatmul.f32.gmra.mxu0 %v5604
    %v5666 = vpop.f32.mrf.mxu0
    %v5667 = vadd.f32 %v5607, %v5666
    %5668 = vdwg.mxu0
    %5669 = vmatpush.msra.mxu0 %v5012
    %5670 = vmatpush.msra.mxu0 %v5008
    %5671 = vmatpush.msra.mxu0 %v5004
    %5672 = vmatpush.msra.mxu0 %v5000
    %5673 = vmatpush.msra.mxu0 %v4996
    %5674 = vmatpush.msra.mxu0 %v4992
    %5675 = vmatpush.msra.mxu0 %v4988
    %5676 = vmatpush.msra.mxu0 %v4984
    %5677 = vmatpush.msra.mxu0 %v4980
    %5678 = vmatpush.msra.mxu0 %v4976
    %5679 = vmatpush.msra.mxu0 %v4972
    %5680 = vmatpush.msra.mxu0 %v4968
    %5681 = vmatpush.msra.mxu0 %v4964
    %5682 = vmatpush.msra.mxu0 %v4960
    %5683 = vmatpush.msra.mxu0 %v4956
    %5684 = vmatpush.msra.mxu0 %v4952
    %5685 = vmatmul.f32.gmra.mxu0 %v5604
    %v5686 = vpop.f32.mrf.mxu0
    %v5687 = vadd.f32 %v5608, %v5686
    %5688 = vdwg.mxu0
    %v5689 = vxor.u32 %v5627, 2147483648
    %v5690 = vmul.f32 %v5689, 1.442695
    %v5691 = vpow.pop %v5690
    %v5692 = vadd.f32 %v5691, 1.0
    %v5693 = vrcp.pop %v5692
    %v5694 = vmul.f32 %v5692, %v5693
    %v5695 = vsub.f32 1.0, %v5694
    %v5696 = vmul.f32 %v5693, %v5695
    %v5697 = vadd.f32 %v5693, %v5696
    %vm5698 = vweird.f32 %v5692
    %vm5699 = vweird.f32 %v5693
    %vm5700 = vmor %vm5698, %vm5699
    %v5701 = vsel %vm5700, %v5693, %v5697
    %v5702 = vand.u32 2147483647, %v5692
    %vm5703 = vcmp.eq.f32.partialorder %v5702, 8.507059e+37
    %v5704 = vand.u32 %v5692, 2147483648
    %v5705 = vor.u32 1.1754944e-38, %v5704
    %v5706 = vsel %vm5703, %v5705, %v5701
    %v5707 = vmul.f32 1.0, %v5706
    %v5708 = vxor.u32 %v5647, 2147483648
    %v5709 = vmul.f32 %v5708, 1.442695
    %v5710 = vpow.pop %v5709
    %v5711 = vadd.f32 %v5710, 1.0
    %v5712 = vrcp.pop %v5711
    %v5713 = vmul.f32 %v5711, %v5712
    %v5714 = vsub.f32 1.0, %v5713
    %v5715 = vmul.f32 %v5712, %v5714
    %v5716 = vadd.f32 %v5712, %v5715
    %vm5717 = vweird.f32 %v5711
    %vm5718 = vweird.f32 %v5712
    %vm5719 = vmor %vm5717, %vm5718
    %v5720 = vsel %vm5719, %v5712, %v5716
    %v5721 = vand.u32 2147483647, %v5711
    %vm5722 = vcmp.eq.f32.partialorder %v5721, 8.507059e+37
    %v5723 = vand.u32 %v5711, 2147483648
    %v5724 = vor.u32 1.1754944e-38, %v5723
    %v5725 = vsel %vm5722, %v5724, %v5720
    %v5726 = vmul.f32 1.0, %v5725
    %v5727 = vtanh.pop %v5667
    %v5728 = vxor.u32 %v5687, 2147483648
    %v5729 = vmul.f32 %v5728, 1.442695
    %v5730 = vpow.pop %v5729
    %v5731 = vadd.f32 %v5730, 1.0
    %v5732 = vrcp.pop %v5731
    %v5733 = vmul.f32 %v5731, %v5732
    %v5734 = vsub.f32 1.0, %v5733
    %v5735 = vmul.f32 %v5732, %v5734
    %v5736 = vadd.f32 %v5732, %v5735
    %vm5737 = vweird.f32 %v5731
    %vm5738 = vweird.f32 %v5732
    %vm5739 = vmor %vm5737, %vm5738
    %v5740 = vsel %vm5739, %v5732, %v5736
    %v5741 = vand.u32 2147483647, %v5731
    %vm5742 = vcmp.eq.f32.partialorder %v5741, 8.507059e+37
    %v5743 = vand.u32 %v5731, 2147483648
    %v5744 = vor.u32 1.1754944e-38, %v5743
    %v5745 = vsel %vm5742, %v5744, %v5740
    %v5746 = vmul.f32 1.0, %v5745
    %v5747 = vmul.f32 %v5726, %v5602
    %v5748 = vmul.f32 %v5707, %v5727
    %v5749 = vadd.f32 %v5747, %v5748
    %v5750 = vtanh.pop %v5749
    %v5751 = vmul.f32 %v5746, %v5750
    %v5752 = vld [vmem:[#allocation3 + $0xa0] sm:$0xff]
    %v5753 = vld [vmem:[#allocation3 + $0xa8] sm:$0xff]
    %v5754 = vld [vmem:[#allocation3 + $0xb0] sm:$0xff]
    %v5755 = vld [vmem:[#allocation3 + $0xb8] sm:$0xff]
    %5756 = vmatpush.msra.mxu0 %v5009
    %5757 = vmatpush.msra.mxu0 %v5005
    %5758 = vmatpush.msra.mxu0 %v5001
    %5759 = vmatpush.msra.mxu0 %v4997
    %5760 = vmatpush.msra.mxu0 %v4993
    %5761 = vmatpush.msra.mxu0 %v4989
    %5762 = vmatpush.msra.mxu0 %v4985
    %5763 = vmatpush.msra.mxu0 %v4981
    %5764 = vmatpush.msra.mxu0 %v4977
    %5765 = vmatpush.msra.mxu0 %v4973
    %5766 = vmatpush.msra.mxu0 %v4969
    %5767 = vmatpush.msra.mxu0 %v4965
    %5768 = vmatpush.msra.mxu0 %v4961
    %5769 = vmatpush.msra.mxu0 %v4957
    %5770 = vmatpush.msra.mxu0 %v4953
    %5771 = vmatpush.msra.mxu0 %v4949
    %5772 = vmatmul.f32.gmra.mxu0 %v5751
    %v5773 = vpop.f32.mrf.mxu0
    %v5774 = vadd.f32 %v5752, %v5773
    %5775 = vdwg.mxu0
    %5776 = vmatpush.msra.mxu0 %v5010
    %5777 = vmatpush.msra.mxu0 %v5006
    %5778 = vmatpush.msra.mxu0 %v5002
    %5779 = vmatpush.msra.mxu0 %v4998
    %5780 = vmatpush.msra.mxu0 %v4994
    %5781 = vmatpush.msra.mxu0 %v4990
    %5782 = vmatpush.msra.mxu0 %v4986
    %5783 = vmatpush.msra.mxu0 %v4982
    %5784 = vmatpush.msra.mxu0 %v4978
    %5785 = vmatpush.msra.mxu0 %v4974
    %5786 = vmatpush.msra.mxu0 %v4970
    %5787 = vmatpush.msra.mxu0 %v4966
    %5788 = vmatpush.msra.mxu0 %v4962
    %5789 = vmatpush.msra.mxu0 %v4958
    %5790 = vmatpush.msra.mxu0 %v4954
    %5791 = vmatpush.msra.mxu0 %v4950
    %5792 = vmatmul.f32.gmra.mxu0 %v5751
    %v5793 = vpop.f32.mrf.mxu0
    %v5794 = vadd.f32 %v5753, %v5793
    %5795 = vdwg.mxu0
    %5796 = vmatpush.msra.mxu0 %v5011
    %5797 = vmatpush.msra.mxu0 %v5007
    %5798 = vmatpush.msra.mxu0 %v5003
    %5799 = vmatpush.msra.mxu0 %v4999
    %5800 = vmatpush.msra.mxu0 %v4995
    %5801 = vmatpush.msra.mxu0 %v4991
    %5802 = vmatpush.msra.mxu0 %v4987
    %5803 = vmatpush.msra.mxu0 %v4983
    %5804 = vmatpush.msra.mxu0 %v4979
    %5805 = vmatpush.msra.mxu0 %v4975
    %5806 = vmatpush.msra.mxu0 %v4971
    %5807 = vmatpush.msra.mxu0 %v4967
    %5808 = vmatpush.msra.mxu0 %v4963
    %5809 = vmatpush.msra.mxu0 %v4959
    %5810 = vmatpush.msra.mxu0 %v4955
    %5811 = vmatpush.msra.mxu0 %v4951
    %5812 = vmatmul.f32.gmra.mxu0 %v5751
    %v5813 = vpop.f32.mrf.mxu0
    %v5814 = vadd.f32 %v5754, %v5813
    %5815 = vdwg.mxu0
    %5816 = vmatpush.msra.mxu0 %v5012
    %5817 = vmatpush.msra.mxu0 %v5008
    %5818 = vmatpush.msra.mxu0 %v5004
    %5819 = vmatpush.msra.mxu0 %v5000
    %5820 = vmatpush.msra.mxu0 %v4996
    %5821 = vmatpush.msra.mxu0 %v4992
    %5822 = vmatpush.msra.mxu0 %v4988
    %5823 = vmatpush.msra.mxu0 %v4984
    %5824 = vmatpush.msra.mxu0 %v4980
    %5825 = vmatpush.msra.mxu0 %v4976
    %5826 = vmatpush.msra.mxu0 %v4972
    %5827 = vmatpush.msra.mxu0 %v4968
    %5828 = vmatpush.msra.mxu0 %v4964
    %5829 = vmatpush.msra.mxu0 %v4960
    %5830 = vmatpush.msra.mxu0 %v4956
    %5831 = vmatpush.msra.mxu0 %v4952
    %5832 = vmatmul.f32.gmra.mxu0 %v5751
    %v5833 = vpop.f32.mrf.mxu0
    %v5834 = vadd.f32 %v5755, %v5833
    %5835 = vdwg.mxu0
    %v5836 = vxor.u32 %v5774, 2147483648
    %v5837 = vmul.f32 %v5836, 1.442695
    %v5838 = vpow.pop %v5837
    %v5839 = vadd.f32 %v5838, 1.0
    %v5840 = vrcp.pop %v5839
    %v5841 = vmul.f32 %v5839, %v5840
    %v5842 = vsub.f32 1.0, %v5841
    %v5843 = vmul.f32 %v5840, %v5842
    %v5844 = vadd.f32 %v5840, %v5843
    %vm5845 = vweird.f32 %v5839
    %vm5846 = vweird.f32 %v5840
    %vm5847 = vmor %vm5845, %vm5846
    %v5848 = vsel %vm5847, %v5840, %v5844
    %v5849 = vand.u32 2147483647, %v5839
    %vm5850 = vcmp.eq.f32.partialorder %v5849, 8.507059e+37
    %v5851 = vand.u32 %v5839, 2147483648
    %v5852 = vor.u32 1.1754944e-38, %v5851
    %v5853 = vsel %vm5850, %v5852, %v5848
    %v5854 = vmul.f32 1.0, %v5853
    %v5855 = vxor.u32 %v5794, 2147483648
    %v5856 = vmul.f32 %v5855, 1.442695
    %v5857 = vpow.pop %v5856
    %v5858 = vadd.f32 %v5857, 1.0
    %v5859 = vrcp.pop %v5858
    %v5860 = vmul.f32 %v5858, %v5859
    %v5861 = vsub.f32 1.0, %v5860
    %v5862 = vmul.f32 %v5859, %v5861
    %v5863 = vadd.f32 %v5859, %v5862
    %vm5864 = vweird.f32 %v5858
    %vm5865 = vweird.f32 %v5859
    %vm5866 = vmor %vm5864, %vm5865
    %v5867 = vsel %vm5866, %v5859, %v5863
    %v5868 = vand.u32 2147483647, %v5858
    %vm5869 = vcmp.eq.f32.partialorder %v5868, 8.507059e+37
    %v5870 = vand.u32 %v5858, 2147483648
    %v5871 = vor.u32 1.1754944e-38, %v5870
    %v5872 = vsel %vm5869, %v5871, %v5867
    %v5873 = vmul.f32 1.0, %v5872
    %v5874 = vtanh.pop %v5814
    %v5875 = vxor.u32 %v5834, 2147483648
    %v5876 = vmul.f32 %v5875, 1.442695
    %v5877 = vpow.pop %v5876
    %v5878 = vadd.f32 %v5877, 1.0
    %v5879 = vrcp.pop %v5878
    %v5880 = vmul.f32 %v5878, %v5879
    %v5881 = vsub.f32 1.0, %v5880
    %v5882 = vmul.f32 %v5879, %v5881
    %v5883 = vadd.f32 %v5879, %v5882
    %vm5884 = vweird.f32 %v5878
    %vm5885 = vweird.f32 %v5879
    %vm5886 = vmor %vm5884, %vm5885
    %v5887 = vsel %vm5886, %v5879, %v5883
    %v5888 = vand.u32 2147483647, %v5878
    %vm5889 = vcmp.eq.f32.partialorder %v5888, 8.507059e+37
    %v5890 = vand.u32 %v5878, 2147483648
    %v5891 = vor.u32 1.1754944e-38, %v5890
    %v5892 = vsel %vm5889, %v5891, %v5887
    %v5893 = vmul.f32 1.0, %v5892
    %v5894 = vmul.f32 %v5873, %v5749
    %v5895 = vmul.f32 %v5854, %v5874
    %v5896 = vadd.f32 %v5894, %v5895
    %v5897 = vtanh.pop %v5896
    %v5898 = vmul.f32 %v5893, %v5897
    %v5899 = vld [vmem:[#allocation3 + $0xc0] sm:$0xff]
    %v5900 = vld [vmem:[#allocation3 + $0xc8] sm:$0xff]
    %v5901 = vld [vmem:[#allocation3 + $0xd0] sm:$0xff]
    %v5902 = vld [vmem:[#allocation3 + $0xd8] sm:$0xff]
    %5903 = vmatpush.msra.mxu0 %v5009
    %5904 = vmatpush.msra.mxu0 %v5005
    %5905 = vmatpush.msra.mxu0 %v5001
    %5906 = vmatpush.msra.mxu0 %v4997
    %5907 = vmatpush.msra.mxu0 %v4993
    %5908 = vmatpush.msra.mxu0 %v4989
    %5909 = vmatpush.msra.mxu0 %v4985
    %5910 = vmatpush.msra.mxu0 %v4981
    %5911 = vmatpush.msra.mxu0 %v4977
    %5912 = vmatpush.msra.mxu0 %v4973
    %5913 = vmatpush.msra.mxu0 %v4969
    %5914 = vmatpush.msra.mxu0 %v4965
    %5915 = vmatpush.msra.mxu0 %v4961
    %5916 = vmatpush.msra.mxu0 %v4957
    %5917 = vmatpush.msra.mxu0 %v4953
    %5918 = vmatpush.msra.mxu0 %v4949
    %5919 = vmatmul.f32.gmra.mxu0 %v5898
    %v5920 = vpop.f32.mrf.mxu0
    %v5921 = vadd.f32 %v5899, %v5920
    %5922 = vdwg.mxu0
    %5923 = vmatpush.msra.mxu0 %v5010
    %5924 = vmatpush.msra.mxu0 %v5006
    %5925 = vmatpush.msra.mxu0 %v5002
    %5926 = vmatpush.msra.mxu0 %v4998
    %5927 = vmatpush.msra.mxu0 %v4994
    %5928 = vmatpush.msra.mxu0 %v4990
    %5929 = vmatpush.msra.mxu0 %v4986
    %5930 = vmatpush.msra.mxu0 %v4982
    %5931 = vmatpush.msra.mxu0 %v4978
    %5932 = vmatpush.msra.mxu0 %v4974
    %5933 = vmatpush.msra.mxu0 %v4970
    %5934 = vmatpush.msra.mxu0 %v4966
    %5935 = vmatpush.msra.mxu0 %v4962
    %5936 = vmatpush.msra.mxu0 %v4958
    %5937 = vmatpush.msra.mxu0 %v4954
    %5938 = vmatpush.msra.mxu0 %v4950
    %5939 = vmatmul.f32.gmra.mxu0 %v5898
    %v5940 = vpop.f32.mrf.mxu0
    %v5941 = vadd.f32 %v5900, %v5940
    %5942 = vdwg.mxu0
    %5943 = vmatpush.msra.mxu0 %v5011
    %5944 = vmatpush.msra.mxu0 %v5007
    %5945 = vmatpush.msra.mxu0 %v5003
    %5946 = vmatpush.msra.mxu0 %v4999
    %5947 = vmatpush.msra.mxu0 %v4995
    %5948 = vmatpush.msra.mxu0 %v4991
    %5949 = vmatpush.msra.mxu0 %v4987
    %5950 = vmatpush.msra.mxu0 %v4983
    %5951 = vmatpush.msra.mxu0 %v4979
    %5952 = vmatpush.msra.mxu0 %v4975
    %5953 = vmatpush.msra.mxu0 %v4971
    %5954 = vmatpush.msra.mxu0 %v4967
    %5955 = vmatpush.msra.mxu0 %v4963
    %5956 = vmatpush.msra.mxu0 %v4959
    %5957 = vmatpush.msra.mxu0 %v4955
    %5958 = vmatpush.msra.mxu0 %v4951
    %5959 = vmatmul.f32.gmra.mxu0 %v5898
    %v5960 = vpop.f32.mrf.mxu0
    %v5961 = vadd.f32 %v5901, %v5960
    %5962 = vdwg.mxu0
    %5963 = vmatpush.msra.mxu0 %v5012
    %5964 = vmatpush.msra.mxu0 %v5008
    %5965 = vmatpush.msra.mxu0 %v5004
    %5966 = vmatpush.msra.mxu0 %v5000
    %5967 = vmatpush.msra.mxu0 %v4996
    %5968 = vmatpush.msra.mxu0 %v4992
    %5969 = vmatpush.msra.mxu0 %v4988
    %5970 = vmatpush.msra.mxu0 %v4984
    %5971 = vmatpush.msra.mxu0 %v4980
    %5972 = vmatpush.msra.mxu0 %v4976
    %5973 = vmatpush.msra.mxu0 %v4972
    %5974 = vmatpush.msra.mxu0 %v4968
    %5975 = vmatpush.msra.mxu0 %v4964
    %5976 = vmatpush.msra.mxu0 %v4960
    %5977 = vmatpush.msra.mxu0 %v4956
    %5978 = vmatpush.msra.mxu0 %v4952
    %5979 = vmatmul.f32.gmra.mxu0 %v5898
    %v5980 = vpop.f32.mrf.mxu0
    %v5981 = vadd.f32 %v5902, %v5980
    %5982 = vdwg.mxu0
    %v5983 = vxor.u32 %v5921, 2147483648
    %v5984 = vmul.f32 %v5983, 1.442695
    %v5985 = vpow.pop %v5984
    %v5986 = vadd.f32 %v5985, 1.0
    %v5987 = vrcp.pop %v5986
    %v5988 = vmul.f32 %v5986, %v5987
    %v5989 = vsub.f32 1.0, %v5988
    %v5990 = vmul.f32 %v5987, %v5989
    %v5991 = vadd.f32 %v5987, %v5990
    %vm5992 = vweird.f32 %v5986
    %vm5993 = vweird.f32 %v5987
    %vm5994 = vmor %vm5992, %vm5993
    %v5995 = vsel %vm5994, %v5987, %v5991
    %v5996 = vand.u32 2147483647, %v5986
    %vm5997 = vcmp.eq.f32.partialorder %v5996, 8.507059e+37
    %v5998 = vand.u32 %v5986, 2147483648
    %v5999 = vor.u32 1.1754944e-38, %v5998
    %v6000 = vsel %vm5997, %v5999, %v5995
    %v6001 = vmul.f32 1.0, %v6000
    %v6002 = vxor.u32 %v5941, 2147483648
    %v6003 = vmul.f32 %v6002, 1.442695
    %v6004 = vpow.pop %v6003
    %v6005 = vadd.f32 %v6004, 1.0
    %v6006 = vrcp.pop %v6005
    %v6007 = vmul.f32 %v6005, %v6006
    %v6008 = vsub.f32 1.0, %v6007
    %v6009 = vmul.f32 %v6006, %v6008
    %v6010 = vadd.f32 %v6006, %v6009
    %vm6011 = vweird.f32 %v6005
    %vm6012 = vweird.f32 %v6006
    %vm6013 = vmor %vm6011, %vm6012
    %v6014 = vsel %vm6013, %v6006, %v6010
    %v6015 = vand.u32 2147483647, %v6005
    %vm6016 = vcmp.eq.f32.partialorder %v6015, 8.507059e+37
    %v6017 = vand.u32 %v6005, 2147483648
    %v6018 = vor.u32 1.1754944e-38, %v6017
    %v6019 = vsel %vm6016, %v6018, %v6014
    %v6020 = vmul.f32 1.0, %v6019
    %v6021 = vtanh.pop %v5961
    %v6022 = vxor.u32 %v5981, 2147483648
    %v6023 = vmul.f32 %v6022, 1.442695
    %v6024 = vpow.pop %v6023
    %v6025 = vadd.f32 %v6024, 1.0
    %v6026 = vrcp.pop %v6025
    %v6027 = vmul.f32 %v6025, %v6026
    %v6028 = vsub.f32 1.0, %v6027
    %v6029 = vmul.f32 %v6026, %v6028
    %v6030 = vadd.f32 %v6026, %v6029
    %vm6031 = vweird.f32 %v6025
    %vm6032 = vweird.f32 %v6026
    %vm6033 = vmor %vm6031, %vm6032
    %v6034 = vsel %vm6033, %v6026, %v6030
    %v6035 = vand.u32 2147483647, %v6025
    %vm6036 = vcmp.eq.f32.partialorder %v6035, 8.507059e+37
    %v6037 = vand.u32 %v6025, 2147483648
    %v6038 = vor.u32 1.1754944e-38, %v6037
    %v6039 = vsel %vm6036, %v6038, %v6034
    %v6040 = vmul.f32 1.0, %v6039
    %v6041 = vmul.f32 %v6020, %v5896
    %v6042 = vmul.f32 %v6001, %v6021
    %v6043 = vadd.f32 %v6041, %v6042
    %v6044 = vtanh.pop %v6043
    %v6045 = vmul.f32 %v6040, %v6044
    %v6046 = vld [vmem:[#allocation3 + $0xe0] sm:$0xff]
    %v6047 = vld [vmem:[#allocation3 + $0xe8] sm:$0xff]
    %v6048 = vld [vmem:[#allocation3 + $0xf0] sm:$0xff]
    %v6049 = vld [vmem:[#allocation3 + $0xf8] sm:$0xff]
    %6050 = vmatpush.msra.mxu0 %v5009
    %6051 = vmatpush.msra.mxu0 %v5005
    %6052 = vmatpush.msra.mxu0 %v5001
    %6053 = vmatpush.msra.mxu0 %v4997
    %6054 = vmatpush.msra.mxu0 %v4993
    %6055 = vmatpush.msra.mxu0 %v4989
    %6056 = vmatpush.msra.mxu0 %v4985
    %6057 = vmatpush.msra.mxu0 %v4981
    %6058 = vmatpush.msra.mxu0 %v4977
    %6059 = vmatpush.msra.mxu0 %v4973
    %6060 = vmatpush.msra.mxu0 %v4969
    %6061 = vmatpush.msra.mxu0 %v4965
    %6062 = vmatpush.msra.mxu0 %v4961
    %6063 = vmatpush.msra.mxu0 %v4957
    %6064 = vmatpush.msra.mxu0 %v4953
    %6065 = vmatpush.msra.mxu0 %v4949
    %6066 = vmatmul.f32.gmra.mxu0 %v6045
    %v6067 = vpop.f32.mrf.mxu0
    %v6068 = vadd.f32 %v6046, %v6067
    %6069 = vdwg.mxu0
    %6070 = vmatpush.msra.mxu0 %v5010
    %6071 = vmatpush.msra.mxu0 %v5006
    %6072 = vmatpush.msra.mxu0 %v5002
    %6073 = vmatpush.msra.mxu0 %v4998
    %6074 = vmatpush.msra.mxu0 %v4994
    %6075 = vmatpush.msra.mxu0 %v4990
    %6076 = vmatpush.msra.mxu0 %v4986
    %6077 = vmatpush.msra.mxu0 %v4982
    %6078 = vmatpush.msra.mxu0 %v4978
    %6079 = vmatpush.msra.mxu0 %v4974
    %6080 = vmatpush.msra.mxu0 %v4970
    %6081 = vmatpush.msra.mxu0 %v4966
    %6082 = vmatpush.msra.mxu0 %v4962
    %6083 = vmatpush.msra.mxu0 %v4958
    %6084 = vmatpush.msra.mxu0 %v4954
    %6085 = vmatpush.msra.mxu0 %v4950
    %6086 = vmatmul.f32.gmra.mxu0 %v6045
    %v6087 = vpop.f32.mrf.mxu0
    %v6088 = vadd.f32 %v6047, %v6087
    %6089 = vdwg.mxu0
    %6090 = vmatpush.msra.mxu0 %v5011
    %6091 = vmatpush.msra.mxu0 %v5007
    %6092 = vmatpush.msra.mxu0 %v5003
    %6093 = vmatpush.msra.mxu0 %v4999
    %6094 = vmatpush.msra.mxu0 %v4995
    %6095 = vmatpush.msra.mxu0 %v4991
    %6096 = vmatpush.msra.mxu0 %v4987
    %6097 = vmatpush.msra.mxu0 %v4983
    %6098 = vmatpush.msra.mxu0 %v4979
    %6099 = vmatpush.msra.mxu0 %v4975
    %6100 = vmatpush.msra.mxu0 %v4971
    %6101 = vmatpush.msra.mxu0 %v4967
    %6102 = vmatpush.msra.mxu0 %v4963
    %6103 = vmatpush.msra.mxu0 %v4959
    %6104 = vmatpush.msra.mxu0 %v4955
    %6105 = vmatpush.msra.mxu0 %v4951
    %6106 = vmatmul.f32.gmra.mxu0 %v6045
    %v6107 = vpop.f32.mrf.mxu0
    %v6108 = vadd.f32 %v6048, %v6107
    %6109 = vdwg.mxu0
    %6110 = vmatpush.msra.mxu0 %v5012
    %6111 = vmatpush.msra.mxu0 %v5008
    %6112 = vmatpush.msra.mxu0 %v5004
    %6113 = vmatpush.msra.mxu0 %v5000
    %6114 = vmatpush.msra.mxu0 %v4996
    %6115 = vmatpush.msra.mxu0 %v4992
    %6116 = vmatpush.msra.mxu0 %v4988
    %6117 = vmatpush.msra.mxu0 %v4984
    %6118 = vmatpush.msra.mxu0 %v4980
    %6119 = vmatpush.msra.mxu0 %v4976
    %6120 = vmatpush.msra.mxu0 %v4972
    %6121 = vmatpush.msra.mxu0 %v4968
    %6122 = vmatpush.msra.mxu0 %v4964
    %6123 = vmatpush.msra.mxu0 %v4960
    %6124 = vmatpush.msra.mxu0 %v4956
    %6125 = vmatpush.msra.mxu0 %v4952
    %6126 = vmatmul.f32.gmra.mxu0 %v6045
    %v6127 = vpop.f32.mrf.mxu0
    %v6128 = vadd.f32 %v6049, %v6127
    %6129 = vdwg.mxu0
    %v6130 = vxor.u32 %v6068, 2147483648
    %v6131 = vmul.f32 %v6130, 1.442695
    %v6132 = vpow.pop %v6131
    %v6133 = vadd.f32 %v6132, 1.0
    %v6134 = vrcp.pop %v6133
    %v6135 = vmul.f32 %v6133, %v6134
    %v6136 = vsub.f32 1.0, %v6135
    %v6137 = vmul.f32 %v6134, %v6136
    %v6138 = vadd.f32 %v6134, %v6137
    %vm6139 = vweird.f32 %v6133
    %vm6140 = vweird.f32 %v6134
    %vm6141 = vmor %vm6139, %vm6140
    %v6142 = vsel %vm6141, %v6134, %v6138
    %v6143 = vand.u32 2147483647, %v6133
    %vm6144 = vcmp.eq.f32.partialorder %v6143, 8.507059e+37
    %v6145 = vand.u32 %v6133, 2147483648
    %v6146 = vor.u32 1.1754944e-38, %v6145
    %v6147 = vsel %vm6144, %v6146, %v6142
    %v6148 = vmul.f32 1.0, %v6147
    %v6149 = vxor.u32 %v6088, 2147483648
    %v6150 = vmul.f32 %v6149, 1.442695
    %v6151 = vpow.pop %v6150
    %v6152 = vadd.f32 %v6151, 1.0
    %v6153 = vrcp.pop %v6152
    %v6154 = vmul.f32 %v6152, %v6153
    %v6155 = vsub.f32 1.0, %v6154
    %v6156 = vmul.f32 %v6153, %v6155
    %v6157 = vadd.f32 %v6153, %v6156
    %vm6158 = vweird.f32 %v6152
    %vm6159 = vweird.f32 %v6153
    %vm6160 = vmor %vm6158, %vm6159
    %v6161 = vsel %vm6160, %v6153, %v6157
    %v6162 = vand.u32 2147483647, %v6152
    %vm6163 = vcmp.eq.f32.partialorder %v6162, 8.507059e+37
    %v6164 = vand.u32 %v6152, 2147483648
    %v6165 = vor.u32 1.1754944e-38, %v6164
    %v6166 = vsel %vm6163, %v6165, %v6161
    %v6167 = vmul.f32 1.0, %v6166
    %v6168 = vtanh.pop %v6108
    %v6169 = vxor.u32 %v6128, 2147483648
    %v6170 = vmul.f32 %v6169, 1.442695
    %v6171 = vpow.pop %v6170
    %v6172 = vadd.f32 %v6171, 1.0
    %v6173 = vrcp.pop %v6172
    %v6174 = vmul.f32 %v6172, %v6173
    %v6175 = vsub.f32 1.0, %v6174
    %v6176 = vmul.f32 %v6173, %v6175
    %v6177 = vadd.f32 %v6173, %v6176
    %vm6178 = vweird.f32 %v6172
    %vm6179 = vweird.f32 %v6173
    %vm6180 = vmor %vm6178, %vm6179
    %v6181 = vsel %vm6180, %v6173, %v6177
    %v6182 = vand.u32 2147483647, %v6172
    %vm6183 = vcmp.eq.f32.partialorder %v6182, 8.507059e+37
    %v6184 = vand.u32 %v6172, 2147483648
    %v6185 = vor.u32 1.1754944e-38, %v6184
    %v6186 = vsel %vm6183, %v6185, %v6181
    %v6187 = vmul.f32 1.0, %v6186
    %v6188 = vmul.f32 %v6167, %v6043
    %v6189 = vmul.f32 %v6148, %v6168
    %v6190 = vadd.f32 %v6188, %v6189
    %v6191 = vtanh.pop %v6190
    %v6192 = vmul.f32 %v6187, %v6191
    %s6193 = scalar_lea.vmem %s9, 24
    %6194 = vst [vmem:[%s6193] sm:$0xff] %v6192
    %s6195 = scalar_lea.vmem %s10, 24
    %6196 = vst [vmem:[%s6195] sm:$0xff] %v6190
    %v6197 = vld [vmem:[%s6] sm:$0xff]
    %v6198 = vld [vmem:[%s6 + $0x8] sm:$0xff]
    %v6199 = vld [vmem:[%s6 + $0x10] sm:$0xff]
    %v6200 = vld [vmem:[%s6 + $0x18] sm:$0xff]
    %v6201 = vld [vmem:[%s6 + $0x20] sm:$0xff]
    %v6202 = vld [vmem:[%s6 + $0x28] sm:$0xff]
    %v6203 = vld [vmem:[%s6 + $0x30] sm:$0xff]
    %v6204 = vld [vmem:[%s6 + $0x38] sm:$0xff]
    %v6205 = vld [vmem:[%s6 + $0x40] sm:$0xff]
    %v6206 = vld [vmem:[%s6 + $0x48] sm:$0xff]
    %v6207 = vld [vmem:[%s6 + $0x50] sm:$0xff]
    %v6208 = vld [vmem:[%s6 + $0x58] sm:$0xff]
    %v6209 = vld [vmem:[%s6 + $0x60] sm:$0xff]
    %v6210 = vld [vmem:[%s6 + $0x68] sm:$0xff]
    %v6211 = vld [vmem:[%s6 + $0x70] sm:$0xff]
    %v6212 = vld [vmem:[%s6 + $0x78] sm:$0xff]
    %v6213 = vld [vmem:[%s7] sm:$0x1]
    %v6215 = vperm.slane %v6213, 0
    %6217 = vmatpush.msra.mxu0 %v6212
    %6218 = vmatpush.msra.mxu0 %v6211
    %6219 = vmatpush.msra.mxu0 %v6210
    %6220 = vmatpush.msra.mxu0 %v6209
    %6221 = vmatpush.msra.mxu0 %v6208
    %6222 = vmatpush.msra.mxu0 %v6207
    %6223 = vmatpush.msra.mxu0 %v6206
    %6224 = vmatpush.msra.mxu0 %v6205
    %6225 = vmatpush.msra.mxu0 %v6204
    %6226 = vmatpush.msra.mxu0 %v6203
    %6227 = vmatpush.msra.mxu0 %v6202
    %6228 = vmatpush.msra.mxu0 %v6201
    %6229 = vmatpush.msra.mxu0 %v6200
    %6230 = vmatpush.msra.mxu0 %v6199
    %6231 = vmatpush.msra.mxu0 %v6198
    %6232 = vmatpush.msra.mxu0 %v6197
    %6233 = vmatmul.f32.gmra.mxu0 %v6192
    %v6234 = vpop.f32.mrf.mxu0
    %v6235 = vadd.f32 %v6215, %v6234
    %6236 = vdwg.mxu0
    %s6237 = scalar_lea.vmem %s6, 128
    %v6238 = vld [vmem:[%s6237] sm:$0xff]
    %v6239 = vld [vmem:[%s6237 + $0x8] sm:$0xff]
    %v6240 = vld [vmem:[%s6237 + $0x10] sm:$0xff]
    %v6241 = vld [vmem:[%s6237 + $0x18] sm:$0xff]
    %v6242 = vld [vmem:[%s6237 + $0x20] sm:$0xff]
    %v6243 = vld [vmem:[%s6237 + $0x28] sm:$0xff]
    %v6244 = vld [vmem:[%s6237 + $0x30] sm:$0xff]
    %v6245 = vld [vmem:[%s6237 + $0x38] sm:$0xff]
    %v6246 = vld [vmem:[%s6237 + $0x40] sm:$0xff]
    %v6247 = vld [vmem:[%s6237 + $0x48] sm:$0xff]
    %v6248 = vld [vmem:[%s6237 + $0x50] sm:$0xff]
    %v6249 = vld [vmem:[%s6237 + $0x58] sm:$0xff]
    %v6250 = vld [vmem:[%s6237 + $0x60] sm:$0xff]
    %v6251 = vld [vmem:[%s6237 + $0x68] sm:$0xff]
    %v6252 = vld [vmem:[%s6237 + $0x70] sm:$0xff]
    %v6253 = vld [vmem:[%s6237 + $0x78] sm:$0xff]
    %s6254 = scalar_lea.vmem %s7, 1
    %v6255 = vld [vmem:[%s6254] sm:$0x1]
    %v6257 = vperm.slane %v6255, 0
    %6259 = vmatpush.msra.mxu0 %v6253
    %6260 = vmatpush.msra.mxu0 %v6252
    %6261 = vmatpush.msra.mxu0 %v6251
    %6262 = vmatpush.msra.mxu0 %v6250
    %6263 = vmatpush.msra.mxu0 %v6249
    %6264 = vmatpush.msra.mxu0 %v6248
    %6265 = vmatpush.msra.mxu0 %v6247
    %6266 = vmatpush.msra.mxu0 %v6246
    %6267 = vmatpush.msra.mxu0 %v6245
    %6268 = vmatpush.msra.mxu0 %v6244
    %6269 = vmatpush.msra.mxu0 %v6243
    %6270 = vmatpush.msra.mxu0 %v6242
    %6271 = vmatpush.msra.mxu0 %v6241
    %6272 = vmatpush.msra.mxu0 %v6240
    %6273 = vmatpush.msra.mxu0 %v6239
    %6274 = vmatpush.msra.mxu0 %v6238
    %6275 = vmatmul.f32.gmra.mxu0 %v6235
    %v6276 = vpop.f32.mrf.mxu0
    %v6277 = vadd.f32 %v6257, %v6276
    %6278 = vdwg.mxu0
    %v6279 = vxor.u32 %v6277, 2147483648
    %v6280 = vmul.f32 %v6279, 1.442695
    %v6281 = vpow.pop %v6280
    %v6282 = vadd.f32 %v6281, 1.0
    %v6283 = vrcp.pop %v6282
    %v6284 = vmul.f32 %v6282, %v6283
    %v6285 = vsub.f32 1.0, %v6284
    %v6286 = vmul.f32 %v6283, %v6285
    %v6287 = vadd.f32 %v6283, %v6286
    %vm6288 = vweird.f32 %v6282
    %vm6289 = vweird.f32 %v6283
    %vm6290 = vmor %vm6288, %vm6289
    %v6291 = vsel %vm6290, %v6283, %v6287
    %v6292 = vand.u32 2147483647, %v6282
    %vm6293 = vcmp.eq.f32.partialorder %v6292, 8.507059e+37
    %v6294 = vand.u32 %v6282, 2147483648
    %v6295 = vor.u32 1.1754944e-38, %v6294
    %v6296 = vsel %vm6293, %v6295, %v6291
    %v6297 = vmul.f32 1.0, %v6296
    %6298 = vst [vmem:[%s8] sm:$0xff] %v6297
    // Predicated region
    $region42: #{sentiment_forward.1} parent=1 // pred_check
      _
    $region43: #{sentiment_forward.1} parent=1 // pred_check_branch
      %6300 = sbr.rel (0) target = $region45
    $region44: #{sentiment_forward.1} parent=1 // pred_region
      _
    $region45: #{sentiment_forward.1} parent=1 // pred_fallthru
      _
    // Predicated region
    $region46: #{sentiment_forward.1} parent=1 // pred_check
      _
    $region47: #{sentiment_forward.1} parent=1 // pred_check_branch
      %6302 = sbr.rel (0) target = $region49
    $region48: #{sentiment_forward.1} parent=1 // pred_region
      _
    $region49: #{sentiment_forward.1} parent=1 // pred_fallthru
      _
    // Predicated region
    $region50: #{sentiment_forward.1} parent=1 // pred_check
      _
    $region51: #{sentiment_forward.1} parent=1 // pred_check_branch
      %6304 = sbr.rel (0) target = $region53
    $region52: #{sentiment_forward.1} parent=1 // pred_region
      _
    $region53: #{sentiment_forward.1} parent=1 // pred_fallthru
      _
    // Predicated region
    $region54: #{sentiment_forward.1} parent=1 // pred_check
      _
    $region55: #{sentiment_forward.1} parent=1 // pred_check_branch
      %6306 = sbr.rel (0) target = $region57
    $region56: #{sentiment_forward.1} parent=1 // pred_region
      _
    $region57: #{sentiment_forward.1} parent=1 // pred_fallthru
      _
    // Predicated region
    $region58: #{sentiment_forward.1} parent=1 // pred_check
      _
    $region59: #{sentiment_forward.1} parent=1 // pred_check_branch
      %6308 = sbr.rel (0) target = $region61
    $region60: #{sentiment_forward.1} parent=1 // pred_region
      _
    $region61: #{sentiment_forward.1} parent=1 // pred_fallthru
      _
    // Predicated region
    $region62: #{sentiment_forward.1} parent=1 // pred_check
      _
    $region63: #{sentiment_forward.1} parent=1 // pred_check_branch
      %6310 = sbr.rel (0) target = $region65
    $region64: #{sentiment_forward.1} parent=1 // pred_region
      _
    $region65: #{sentiment_forward.1} parent=1 // pred_fallthru
      _
    %6311 = vsyncpa [#allocation5], 1
    %6312 = vsyncpa [#allocation7], 1

</llo_original>
